<compile_context>
chip_gen: v6e
topology: v6e:2x2x1
jax: 0.10.0
libtpu: 0.0.40
codegen_flags: <defaults>
</compile_context>

<pallas_src>
import functools

import jax
import jax.numpy as jnp
from jax import lax
from jax.experimental import pallas as pl
from jax.experimental.pallas import tpu as pltpu


# ----------------------------------------------------------------------------- helpers
def _full_spec(shape):
    # whole-array block (block_shape == full array dims satisfies the (8,128) rule)
    return pl.BlockSpec(shape, lambda i: (0,) * len(shape))


def _layernorm(x, g, b, eps=1e-5):
    mu = jnp.mean(x, axis=-1, keepdims=True)
    var = jnp.mean((x - mu) ** 2, axis=-1, keepdims=True)
    return (x - mu) * lax.rsqrt(var + eps) * g + b


def _softmax_lastdim(logits):
    m = jnp.max(logits, axis=-1, keepdims=True)
    e = jnp.exp(logits - m)
    # reciprocal on the EUP slot (free vs a VPU divide)
    return e * pl.reciprocal(jnp.sum(e, axis=-1, keepdims=True), approx=True)


def _mha_core(q, k, v, Wo, bo, bias, nheads):
    """Multi-head attention on already-projected q/k/v.

    Per-head logits contract the last dims (no transpose feeding the MXU); head outputs
    are concatenated once and fed to a single (Q,C)@(C,C) output projection (instead of
    per-head (Q,dh)@(dh,C) accumulation).  `bias` is an optional (Q,P) additive logit
    bias shared across heads (broadcast in-register, the (H,Q,P) tensor never exists).
    """
    C = q.shape[-1]
    dh = C // nheads
    scale = 1.0 / float(dh) ** 0.5
    heads = []
    for h in range(nheads):
        sl = slice(h * dh, (h + 1) * dh)
        logits = lax.dot_general(q[:, sl], k[:, sl], (((1,), (1,)), ((), ())),
                                 preferred_element_type=jnp.float32) * scale
        if bias is not None:
            logits = logits + bias
        p = _softmax_lastdim(logits)
        heads.append(jnp.dot(p, v[:, sl], preferred_element_type=jnp.float32))
    head_cat = jnp.concatenate(heads, axis=-1)                                # (Q, C)
    return jnp.dot(head_cat, Wo, preferred_element_type=jnp.float32) + bo


# ----------------------------------------------------------------------------- fused kernel
def _fused_forward_kernel(
        coors_ref, feats_ref, query_ref, qpe_ref, kern_ref, mkern_ref,
        peB_ref, Wmf_ref, bmf_ref, Wsrc_ref, bsrc_ref,
        dn_ref, Wcls_ref, bcls_ref, Wm_ref, bm_ref,
        Wc_ref, bc_ref,
        Wsqk_ref, bsqk_ref, Wsv_ref, bsv_ref, Wso_ref, bso_ref,
        W1_ref, b1_ref, W2_ref, b2_ref, ln_ref,
        masks_out, clsq_out,
        *, nheads, nlayers, nlevels):
    P = coors_ref.shape[0]
    C = query_ref.shape[1]

    # ----------------- encode: positional encoding + mask_feat_proj + input_proj ------
    # TODO(synk): PositionalEncoder assumed to be a Fourier-feature encoder of xyz coords.
    feats = feats_ref[...]                                                    # (P, Cin)
    proj = jnp.dot(coors_ref[...], peB_ref[...],
                   preferred_element_type=jnp.float32) * (2.0 * jnp.pi)       # (P, C//2)
    pe = jnp.concatenate([jnp.sin(proj), jnp.cos(proj)], axis=-1)             # (P, C)
    mask_features = (jnp.dot(feats, Wmf_ref[...], preferred_element_type=jnp.float32)
                     + bmf_ref[...] + pe)                                     # (P, C)
    src = [jnp.dot(feats, Wsrc_ref[l], preferred_element_type=jnp.float32)
           + bsrc_ref[l:l + 1] for l in range(nlevels)]                       # L x (P, C)

    kern = kern_ref[...]       # (Q, P) log-space gaussian bias for cross attention
    mkern = mkern_ref[...]     # (Q, P) exp-gaussian kernel for the prediction heads
    qpe = qpe_ref[...]         # (Q, C) query positional embedding
    tgt = query_ref[...]       # (Q, C) query state (kept resident for the whole kernel)

    # head weights loaded once (hoisted out of the per-layer unrolled loop)
    dn = dn_ref[...]
    Wcls = Wcls_ref[...]
    bcls = bcls_ref[...]
    Wm = Wm_ref[...]
    bm = bm_ref[...]

    def pred_heads(out):
        dec = _layernorm(out, dn[0:1], dn[1:2])                               # (Q, C)
        cls = jnp.dot(dec, Wcls, preferred_element_type=jnp.float32) + bcls   # (Q, ncls)
        me = dec
        for j in range(3):                                                    # 3-layer MLP
            me = jnp.dot(me, Wm[j], preferred_element_type=jnp.float32) + bm[j:j + 1]
            if j < 2:
                me = jnp.maximum(me, 0.0)
        # outputs_mask computed ONCE, in the lane-dense (Q, P) orientation; the torch
        # (b, p, q) layout is recovered by a wrapper-side transpose.
        omask = lax.dot_general(me, mask_features, (((1,), (1,)), ((), ())),
                                preferred_element_type=jnp.float32)           # (Q, P)
        sig = pl.reciprocal(1.0 + jnp.exp(-omask), approx=True)               # sigmoid (EUP)
        attn = sig + mkern
        amin = jnp.min(jnp.min(attn, axis=1, keepdims=True), axis=0, keepdims=True)
        attn = attn - amin
        amax = jnp.max(jnp.max(attn, axis=1, keepdims=True), axis=0, keepdims=True)
        attn = attn / amax       # NOTE: torch reference divides by max with no epsilon
        amask = (attn < 0.5).astype(jnp.float32)                              # 1 == masked
        return cls, omask, amask

    def write(idx, out, cls, omask):
        masks_out[idx] = omask                                                # (Q, P) slab
        clsq_out[idx] = jnp.concatenate([out, cls], axis=-1)                  # (Q, C+ncls)

    cls, omask, amask = pred_heads(tgt)
    write(0, tgt, cls, omask)

    for i in range(nlayers):                                   # static unrolled layer loop
        li = i % nlevels
        mem = src[li]
        Wc = Wc_ref[i]                                          # (4, C, C) cross Q,K,V,O
        bc = bc_ref[i]                                          # (4, C)
        ln = ln_ref[i]                                          # (6, C)

        # un-mask fully masked rows: attn_mask[attn_mask.sum(-1) == P] = False
        row_sum = jnp.sum(amask, axis=-1, keepdims=True)
        amask_i = jnp.where(row_sum >= (P - 0.5), 0.0, amask)
        bias = kern - 1e9 * amask_i                             # (Q, P) additive logit bias

        # ---- cross attention (post-norm): q = tgt+query_pos, k = mem+pos, v = mem ----
        # TODO(synk): blocks.PositionCrossAttentionLayer assumed to add the gaussian
        # kernel as an additive logit bias with post-norm residual structure.
        q = jnp.dot(tgt + qpe, Wc[0], preferred_element_type=jnp.float32) + bc[0:1]
        k = jnp.dot(mem + pe, Wc[1], preferred_element_type=jnp.float32) + bc[1:2]
        v = jnp.dot(mem, Wc[2], preferred_element_type=jnp.float32) + bc[2:3]
        attn_out = _mha_core(q, k, v, Wc[3], bc[3:4], bias, nheads)
        tgt = _layernorm(tgt + attn_out, ln[0:1], ln[1:2])

        # ---- self attention (post-norm): fused Q|K projection (same input) ----
        qk = (jnp.dot(tgt + qpe, Wsqk_ref[i], preferred_element_type=jnp.float32)
              + bsqk_ref[i])                                                   # (Q, 2C)
        v = jnp.dot(tgt, Wsv_ref[i], preferred_element_type=jnp.float32) + bsv_ref[i]
        attn_out = _mha_core(qk[:, :C], qk[:, C:], v, Wso_ref[i], bso_ref[i], None, nheads)
        tgt = _layernorm(tgt + attn_out, ln[2:3], ln[3:4])

        # ---- FFN (post-norm) ----
        h = jnp.maximum(jnp.dot(tgt, W1_ref[i], preferred_element_type=jnp.float32)
                        + b1_ref[i], 0.0)
        y = jnp.dot(h, W2_ref[i], preferred_element_type=jnp.float32) + b2_ref[i]
        tgt = _layernorm(tgt + y, ln[4:5], ln[5:6])

        cls, omask, amask = pred_heads(tgt)
        write(i + 1, tgt, cls, omask)


def pallas_forward(params, cfg, coors2d, feats2d, query, query_pe, kern_qp, mkern_qp):
    C = cfg["hidden"]
    H = cfg["nheads"]
    L = cfg["feature_levels"]
    nlayers = L * cfg["dec_blocks"]
    ncls = params["heads"]["Wcls"].shape[1]
    P = feats2d.shape[0]
    Q = query.shape[0]

    kernel = functools.partial(_fused_forward_kernel,
                               nheads=H, nlayers=nlayers, nlevels=L)

    in_arrays = (
        coors2d, feats2d, query, query_pe, kern_qp, mkern_qp,
        params["pe_B"], params["Wmf"], params["bmf"], params["Wsrc"], params["bsrc"],
        params["heads"]["dn"], params["heads"]["Wcls"], params["heads"]["bcls"],
        params["heads"]["Wm"], params["heads"]["bm"],
        params["Wc"], params["bc"],
        params["Ws_qk"], params["bs_qk"], params["Ws_v"], params["bs_v"],
        params["Ws_o"], params["bs_o"],
        params["W1"], params["b1"], params["W2"], params["b2"], params["ln"],
    )
    in_specs = [_full_spec(a.shape) for a in in_arrays]

    return pl.pallas_call(
        kernel,
        grid=(1,),
        in_specs=in_specs,
        out_specs=[_full_spec((nlayers + 1, Q, P)),
                   _full_spec((nlayers + 1, Q, C + ncls))],
        out_shape=[jax.ShapeDtypeStruct((nlayers + 1, Q, P), jnp.float32),
                   jax.ShapeDtypeStruct((nlayers + 1, Q, C + ncls), jnp.float32)],
        compiler_params=pltpu.CompilerParams(dimension_semantics=("arbitrary",)),
    )(*in_arrays)


# ----------------------------------------------------------------------------- gaussian kernel (hoisted)
def compute_gauss_kernels(nq, center, coors, size_xy, angle, Qtot, P):
    """Loop-invariant: depends only on centers/coors/size/angle. Returns (Q,P) layouts:
    raw (log-space) kernel for the cross-attn bias and exp(kernel) for the mask heads.
    Tiny (Qe,P) elementwise math is left to XLA fusion (cheaper than a pallas launch)."""
    if Qtot <= nq:
        z = jnp.zeros((Qtot, P), jnp.float32)
        return z, z
    cx = center[nq:, 0]
    cy = center[nq:, 1]
    px = coors[0, :, 0]
    py = coors[0, :, 1]
    dx = jnp.abs(cx[:, None] - px[None, :])     # cdist on 1-D points == |x_q - x_p|, (Qe,P)
    dy = jnp.abs(cy[:, None] - py[None, :])
    sx = size_xy[nq:, 0]
    sy = size_xy[nq:, 1]
    ang = angle[nq:]
    # TODO(synk): misc.getcovs assumed to be R(angle) @ diag(sx^2, sy^2) @ R(angle)^T;
    # inverse computed in closed form instead of torch.linalg.inv.
    cos = jnp.cos(ang)
    sin = jnp.sin(ang)
    isx = 1.0 / (sx * sx)
    isy = 1.0 / (sy * sy)
    ia = cos * cos * isx + sin * sin * isy
    ib = cos * sin * (isx - isy)
    idd = sin * sin * isx + cos * cos * isy
    kw = -0.5 * (ia[:, None] * dx * dx + 2.0 * ib[:, None] * dx * dy + idd[:, None] * dy * dy)
    kern = jnp.zeros((Qtot, P), jnp.float32).at[nq:].set(kw)
    kern_exp = jnp.zeros((Qtot, P), jnp.float32).at[nq:].set(jnp.exp(kw))
    return kern, kern_exp


# ----------------------------------------------------------------------------- forward
def forward(params, cfg, feats, coors, query, query_pe, center, size_xy, angle):
    C = cfg["hidden"]
    nq = cfg["num_queries"]
    L = cfg["feature_levels"]
    nlayers = L * cfg["dec_blocks"]
    P = feats.shape[1]
    Qtot = query.shape[0]

    # loop-invariant gaussian kernels, hoisted out of the decoder loop (XLA-fused prep)
    kern_qp, mask_kern_exp_qp = compute_gauss_kernels(
        nq, center, coors, size_xy, angle, Qtot, P)

    # mirrors torch: output.shape[-1] (== hidden dim) compared against num_queries
    if C > nq:
        mkern_qp = mask_kern_exp_qp
    else:
        mkern_qp = jnp.zeros((Qtot, P), jnp.float32)

    # ONE fused pallas_call for encode + all decoder layers + all prediction heads
    masks_all, clsq_all = pallas_forward(params, cfg, coors[0], feats[0],
                                         query, query_pe, kern_qp, mkern_qp)

    masks_pq = jnp.transpose(masks_all, (0, 2, 1))          # (nl+1, P, Q) torch layout
    queries_all = clsq_all[:, :, :C]                        # (nl+1, Q, C)
    cls_all = clsq_all[:, :, C:]                            # (nl+1, Q, ncls)

    out = {
        "pred_logits": cls_all[nlayers][None],
        "pred_masks": masks_pq[nlayers][None],
        "queries": queries_all[nlayers][None],
    }
    out["aux_outputs"] = [
        {"pred_logits": cls_all[i][None], "pred_masks": masks_pq[i][None],
         "queries": queries_all[i][None]}
        for i in range(nlayers)
    ]
    return out


# ----------------------------------------------------------------------------- params
def init_params(key, cfg):
    C = cfg["hidden"]
    F = cfg["ffn"]
    Cin = cfg["bb_ch"]
    nclass = cfg["num_classes"] + 1
    L = cfg["feature_levels"]
    nl = L * cfg["dec_blocks"]

    keys = iter(jax.random.split(key, 256))

    def nrm(shape, scale=0.02):
        return scale * jax.random.normal(next(keys), shape, jnp.float32)

    # (6, C) = [g, b] x 3 layernorms, tiled per layer
    ln_layer = jnp.stack([jnp.ones((C,), jnp.float32), jnp.zeros((C,), jnp.float32)] * 3,
                         axis=0)
    dn = jnp.stack([jnp.ones((C,), jnp.float32), jnp.zeros((C,), jnp.float32)], axis=0)

    return {
        "pe_B": nrm((3, C // 2), 1.0),
        "Wmf": nrm((Cin, C)), "bmf": jnp.zeros((1, C), jnp.float32),
        "Wsrc": nrm((L, Cin, C)), "bsrc": jnp.zeros((L, C), jnp.float32),
        "heads": {
            "dn": dn,                                                   # (2, C)
            "Wcls": nrm((C, nclass)), "bcls": jnp.zeros((1, nclass), jnp.float32),
            "Wm": nrm((3, C, C)), "bm": jnp.zeros((3, C), jnp.float32),
        },
        # stacked per-layer weights (leading axis = layer index)
        "Wc": nrm((nl, 4, C, C)), "bc": jnp.zeros((nl, 4, C), jnp.float32),   # cross Q,K,V,O
        "Ws_qk": nrm((nl, C, 2 * C)), "bs_qk": jnp.zeros((nl, 1, 2 * C), jnp.float32),
        "Ws_v": nrm((nl, C, C)), "bs_v": jnp.zeros((nl, 1, C), jnp.float32),
        "Ws_o": nrm((nl, C, C)), "bs_o": jnp.zeros((nl, 1, C), jnp.float32),
        "W1": nrm((nl, C, F)), "b1": jnp.zeros((nl, 1, F), jnp.float32),
        "W2": nrm((nl, F, C)), "b2": jnp.zeros((nl, 1, C), jnp.float32),
        "ln": jnp.tile(ln_layer[None], (nl, 1, 1)),                           # (nl, 6, C)
    }


# ----------------------------------------------------------------------------- main
if __name__ == "__main__":
    cfg = {
        "hidden": 32,           # HIDDEN_DIM
        "nheads": 4,            # NHEADS
        "num_queries": 8,       # NUM_QUERIES
        "feature_levels": 1,    # FEATURE_LEVELS
        "dec_blocks": 2,        # DEC_BLOCKS  -> num_layers = 2
        "ffn": 64,              # DIM_FEEDFORWARD
        "num_classes": 5,       # data_cfg.NUM_CLASSES
        "bb_ch": 16,            # bb_cfg.CHANNELS[0]  (!= hidden -> Linear projections)
    }
    P = 64                      # number of points
    Qtot = 12                   # total queries (8 base + 4 tracked instances)

    key = jax.random.PRNGKey(0)
    k_feat, k_coor, k_q, k_qpe, k_ctr, k_sz, k_ang, k_par = jax.random.split(key, 8)

    feats = jax.random.normal(k_feat, (1, P, cfg["bb_ch"]), jnp.float32)
    coors = jax.random.normal(k_coor, (1, P, 3), jnp.float32)
    query = jax.random.normal(k_q, (Qtot, cfg["hidden"]), jnp.float32)
    query_pe = jax.random.normal(k_qpe, (Qtot, cfg["hidden"]), jnp.float32)
    center = jax.random.normal(k_ctr, (Qtot, 3), jnp.float32)
    size_xy = jnp.abs(jax.random.normal(k_sz, (Qtot, 2), jnp.float32)) + 0.5
    angle = jax.random.normal(k_ang, (Qtot,), jnp.float32)

    params = init_params(k_par, cfg)

    @jax.jit
    def run(params, feats, coors, query, query_pe, center, size_xy, angle):
        return forward(params, cfg, feats, coors, query, query_pe, center, size_xy, angle)

    out = run(params, feats, coors, query, query_pe, center, size_xy, angle)
    jax.block_until_ready(out)

    assert out["pred_logits"].shape == (1, Qtot, cfg["num_classes"] + 1)
    assert out["pred_masks"].shape == (1, P, Qtot)
    assert out["queries"].shape == (1, Qtot, cfg["hidden"])
    assert len(out["aux_outputs"]) == cfg["feature_levels"] * cfg["dec_blocks"]
    print("KERNEL_OK")
</pallas_src>

<mosaic_0001>
module attributes {stable_mosaic.version = 11 : i64} {
  func.func @_fused_forward_kernel(%arg0: i32, %arg1: memref<64x3xf32, #tpu.memory_space<vmem>>, %arg2: memref<64x16xf32, #tpu.memory_space<vmem>>, %arg3: memref<12x32xf32, #tpu.memory_space<vmem>>, %arg4: memref<12x32xf32, #tpu.memory_space<vmem>>, %arg5: memref<12x64xf32, #tpu.memory_space<vmem>>, %arg6: memref<12x64xf32, #tpu.memory_space<vmem>>, %arg7: memref<3x16xf32, #tpu.memory_space<vmem>>, %arg8: memref<16x32xf32, #tpu.memory_space<vmem>>, %arg9: memref<1x32xf32, #tpu.memory_space<vmem>>, %arg10: memref<1x16x32xf32, #tpu.memory_space<vmem>>, %arg11: memref<1x32xf32, #tpu.memory_space<vmem>>, %arg12: memref<2x32xf32, #tpu.memory_space<vmem>>, %arg13: memref<32x6xf32, #tpu.memory_space<vmem>>, %arg14: memref<1x6xf32, #tpu.memory_space<vmem>>, %arg15: memref<3x32x32xf32, #tpu.memory_space<vmem>>, %arg16: memref<3x32xf32, #tpu.memory_space<vmem>>, %arg17: memref<2x4x32x32xf32, #tpu.memory_space<vmem>>, %arg18: memref<2x4x32xf32, #tpu.memory_space<vmem>>, %arg19: memref<2x32x64xf32, #tpu.memory_space<vmem>>, %arg20: memref<2x1x64xf32, #tpu.memory_space<vmem>>, %arg21: memref<2x32x32xf32, #tpu.memory_space<vmem>>, %arg22: memref<2x1x32xf32, #tpu.memory_space<vmem>>, %arg23: memref<2x32x32xf32, #tpu.memory_space<vmem>>, %arg24: memref<2x1x32xf32, #tpu.memory_space<vmem>>, %arg25: memref<2x32x64xf32, #tpu.memory_space<vmem>>, %arg26: memref<2x1x64xf32, #tpu.memory_space<vmem>>, %arg27: memref<2x64x32xf32, #tpu.memory_space<vmem>>, %arg28: memref<2x1x32xf32, #tpu.memory_space<vmem>>, %arg29: memref<2x6x32xf32, #tpu.memory_space<vmem>>, %arg30: memref<3x12x64xf32, #tpu.memory_space<vmem>>, %arg31: memref<3x12x38xf32, #tpu.memory_space<vmem>>) attributes {dimension_semantics = [#tpu.dimension_semantics<arbitrary>], iteration_bounds = array<i64: 1>, scalar_prefetch = 0 : i64, scratch_operands = 0 : i64, tpu.core_type = #tpu.core_type<tc>, window_params = [{pipeline_mode = #tpu.pipeline_mode<synchronous>, transform_indices = @transform_0, window_bounds = array<i64: 64, 3>}, {pipeline_mode = #tpu.pipeline_mode<synchronous>, transform_indices = @transform_1, window_bounds = array<i64: 64, 16>}, {pipeline_mode = #tpu.pipeline_mode<synchronous>, transform_indices = @transform_2, window_bounds = array<i64: 12, 32>}, {pipeline_mode = #tpu.pipeline_mode<synchronous>, transform_indices = @transform_3, window_bounds = array<i64: 12, 32>}, {pipeline_mode = #tpu.pipeline_mode<synchronous>, transform_indices = @transform_4, window_bounds = array<i64: 12, 64>}, {pipeline_mode = #tpu.pipeline_mode<synchronous>, transform_indices = @transform_5, window_bounds = array<i64: 12, 64>}, {pipeline_mode = #tpu.pipeline_mode<synchronous>, transform_indices = @transform_6, window_bounds = array<i64: 3, 16>}, {pipeline_mode = #tpu.pipeline_mode<synchronous>, transform_indices = @transform_7, window_bounds = array<i64: 16, 32>}, {pipeline_mode = #tpu.pipeline_mode<synchronous>, transform_indices = @transform_8, window_bounds = array<i64: 1, 32>}, {pipeline_mode = #tpu.pipeline_mode<synchronous>, transform_indices = @transform_9, window_bounds = array<i64: 1, 16, 32>}, {pipeline_mode = #tpu.pipeline_mode<synchronous>, transform_indices = @transform_10, window_bounds = array<i64: 1, 32>}, {pipeline_mode = #tpu.pipeline_mode<synchronous>, transform_indices = @transform_11, window_bounds = array<i64: 2, 32>}, {pipeline_mode = #tpu.pipeline_mode<synchronous>, transform_indices = @transform_12, window_bounds = array<i64: 32, 6>}, {pipeline_mode = #tpu.pipeline_mode<synchronous>, transform_indices = @transform_13, window_bounds = array<i64: 1, 6>}, {pipeline_mode = #tpu.pipeline_mode<synchronous>, transform_indices = @transform_14, window_bounds = array<i64: 3, 32, 32>}, {pipeline_mode = #tpu.pipeline_mode<synchronous>, transform_indices = @transform_15, window_bounds = array<i64: 3, 32>}, {pipeline_mode = #tpu.pipeline_mode<synchronous>, transform_indices = @transform_16, window_bounds = array<i64: 2, 4, 32, 32>}, {pipeline_mode = #tpu.pipeline_mode<synchronous>, transform_indices = @transform_17, window_bounds = array<i64: 2, 4, 32>}, {pipeline_mode = #tpu.pipeline_mode<synchronous>, transform_indices = @transform_18, window_bounds = array<i64: 2, 32, 64>}, {pipeline_mode = #tpu.pipeline_mode<synchronous>, transform_indices = @transform_19, window_bounds = array<i64: 2, 1, 64>}, {pipeline_mode = #tpu.pipeline_mode<synchronous>, transform_indices = @transform_20, window_bounds = array<i64: 2, 32, 32>}, {pipeline_mode = #tpu.pipeline_mode<synchronous>, transform_indices = @transform_21, window_bounds = array<i64: 2, 1, 32>}, {pipeline_mode = #tpu.pipeline_mode<synchronous>, transform_indices = @transform_22, window_bounds = array<i64: 2, 32, 32>}, {pipeline_mode = #tpu.pipeline_mode<synchronous>, transform_indices = @transform_23, window_bounds = array<i64: 2, 1, 32>}, {pipeline_mode = #tpu.pipeline_mode<synchronous>, transform_indices = @transform_24, window_bounds = array<i64: 2, 32, 64>}, {pipeline_mode = #tpu.pipeline_mode<synchronous>, transform_indices = @transform_25, window_bounds = array<i64: 2, 1, 64>}, {pipeline_mode = #tpu.pipeline_mode<synchronous>, transform_indices = @transform_26, window_bounds = array<i64: 2, 64, 32>}, {pipeline_mode = #tpu.pipeline_mode<synchronous>, transform_indices = @transform_27, window_bounds = array<i64: 2, 1, 32>}, {pipeline_mode = #tpu.pipeline_mode<synchronous>, transform_indices = @transform_28, window_bounds = array<i64: 2, 6, 32>}, {pipeline_mode = #tpu.pipeline_mode<synchronous>, transform_indices = @transform_29, window_bounds = array<i64: 3, 12, 64>}, {pipeline_mode = #tpu.pipeline_mode<synchronous>, transform_indices = @transform_30, window_bounds = array<i64: 3, 12, 38>}]} {
    %c0 = arith.constant 0 : index
    %c0_0 = arith.constant 0 : index
    %0 = vector.load %arg2[%c0, %c0_0] : memref<64x16xf32, #tpu.memory_space<vmem>>, vector<64x16xf32>
    %c0_1 = arith.constant 0 : index
    %c0_2 = arith.constant 0 : index
    %1 = vector.load %arg1[%c0_1, %c0_2] : memref<64x3xf32, #tpu.memory_space<vmem>>, vector<64x3xf32>
    %c0_3 = arith.constant 0 : index
    %c0_4 = arith.constant 0 : index
    %2 = vector.load %arg7[%c0_3, %c0_4] : memref<3x16xf32, #tpu.memory_space<vmem>>, vector<3x16xf32>
    %cst = arith.constant dense<0.000000e+00> : vector<64x16xf32>
    %3 = tpu.matmul %1, %2, %cst {dimension_numbers = #tpu.dot_dimension_numbers<[1], [0], [0], [1], [0, 0, 1, 1], [], []>} : vector<64x3xf32>, vector<3x16xf32>, vector<64x16xf32> -> vector<64x16xf32>
    %cst_5 = arith.constant 6.28318548 : f32
    %4 = vector.broadcast %cst_5 : f32 to vector<64x16xf32>
    %5 = arith.mulf %3, %4 : vector<64x16xf32>
    %6 = math.sin %5 : vector<64x16xf32>
    %7 = math.cos %5 : vector<64x16xf32>
    %8 = tpu.concatenate %6, %7 in 1 : vector<64x16xf32>, vector<64x16xf32> -> vector<64x32xf32>
    %c0_6 = arith.constant 0 : index
    %c0_7 = arith.constant 0 : index
    %9 = vector.load %arg8[%c0_6, %c0_7] : memref<16x32xf32, #tpu.memory_space<vmem>>, vector<16x32xf32>
    %cst_8 = arith.constant dense<0.000000e+00> : vector<64x32xf32>
    %10 = tpu.matmul %0, %9, %cst_8 {dimension_numbers = #tpu.dot_dimension_numbers<[1], [0], [0], [1], [0, 0, 1, 1], [], []>} : vector<64x16xf32>, vector<16x32xf32>, vector<64x32xf32> -> vector<64x32xf32>
    %c0_9 = arith.constant 0 : index
    %c0_10 = arith.constant 0 : index
    %11 = vector.load %arg9[%c0_9, %c0_10] : memref<1x32xf32, #tpu.memory_space<vmem>>, vector<1x32xf32>
    %12 = vector.broadcast %11 : vector<1x32xf32> to vector<64x32xf32>
    %13 = arith.addf %10, %12 : vector<64x32xf32>
    %14 = arith.addf %13, %8 : vector<64x32xf32>
    %c0_11 = arith.constant 0 : index
    %c0_12 = arith.constant 0 : index
    %c0_13 = arith.constant 0 : index
    %15 = vector.load %arg10[%c0_11, %c0_12, %c0_13] : memref<1x16x32xf32, #tpu.memory_space<vmem>>, vector<1x16x32xf32>
    %16 = vector.shape_cast %15 : vector<1x16x32xf32> to vector<16x32xf32>
    %cst_14 = arith.constant dense<0.000000e+00> : vector<64x32xf32>
    %17 = tpu.matmul %0, %16, %cst_14 {dimension_numbers = #tpu.dot_dimension_numbers<[1], [0], [0], [1], [0, 0, 1, 1], [], []>} : vector<64x16xf32>, vector<16x32xf32>, vector<64x32xf32> -> vector<64x32xf32>
    %c0_15 = arith.constant 0 : index
    %c0_16 = arith.constant 0 : index
    %18 = vector.load %arg11[%c0_15, %c0_16] : memref<1x32xf32, #tpu.memory_space<vmem>>, vector<1x32xf32>
    %19 = vector.broadcast %18 : vector<1x32xf32> to vector<64x32xf32>
    %20 = arith.addf %17, %19 : vector<64x32xf32>
    %c0_17 = arith.constant 0 : index
    %c0_18 = arith.constant 0 : index
    %21 = vector.load %arg5[%c0_17, %c0_18] : memref<12x64xf32, #tpu.memory_space<vmem>>, vector<12x64xf32>
    %c0_19 = arith.constant 0 : index
    %c0_20 = arith.constant 0 : index
    %22 = vector.load %arg6[%c0_19, %c0_20] : memref<12x64xf32, #tpu.memory_space<vmem>>, vector<12x64xf32>
    %c0_21 = arith.constant 0 : index
    %c0_22 = arith.constant 0 : index
    %23 = vector.load %arg4[%c0_21, %c0_22] : memref<12x32xf32, #tpu.memory_space<vmem>>, vector<12x32xf32>
    %c0_23 = arith.constant 0 : index
    %c0_24 = arith.constant 0 : index
    %24 = vector.load %arg3[%c0_23, %c0_24] : memref<12x32xf32, #tpu.memory_space<vmem>>, vector<12x32xf32>
    %c0_25 = arith.constant 0 : index
    %c0_26 = arith.constant 0 : index
    %25 = vector.load %arg12[%c0_25, %c0_26] : memref<2x32xf32, #tpu.memory_space<vmem>>, vector<2x32xf32>
    %c0_27 = arith.constant 0 : index
    %c0_28 = arith.constant 0 : index
    %26 = vector.load %arg13[%c0_27, %c0_28] : memref<32x6xf32, #tpu.memory_space<vmem>>, vector<32x6xf32>
    %c0_29 = arith.constant 0 : index
    %c0_30 = arith.constant 0 : index
    %27 = vector.load %arg14[%c0_29, %c0_30] : memref<1x6xf32, #tpu.memory_space<vmem>>, vector<1x6xf32>
    %c0_31 = arith.constant 0 : index
    %c0_32 = arith.constant 0 : index
    %c0_33 = arith.constant 0 : index
    %28 = vector.load %arg15[%c0_31, %c0_32, %c0_33] : memref<3x32x32xf32, #tpu.memory_space<vmem>>, vector<3x32x32xf32>
    %c0_34 = arith.constant 0 : index
    %c0_35 = arith.constant 0 : index
    %29 = vector.load %arg16[%c0_34, %c0_35] : memref<3x32xf32, #tpu.memory_space<vmem>>, vector<3x32xf32>
    %30 = vector.extract_strided_slice %25 {offsets = [0, 0], sizes = [1, 32], strides = [1, 1]} : vector<2x32xf32> to vector<1x32xf32>
    %31 = vector.extract_strided_slice %25 {offsets = [1, 0], sizes = [1, 32], strides = [1, 1]} : vector<2x32xf32> to vector<1x32xf32>
    %cst_36 = arith.constant dense<0.000000e+00> : vector<12xf32>
    %32 = vector.multi_reduction <add>, %24, %cst_36 [1] : vector<12x32xf32> to vector<12xf32>
    %33 = vector.shape_cast %32 : vector<12xf32> to vector<12x1xf32>
    %cst_37 = arith.constant 3.200000e+01 : f32
    %34 = vector.broadcast %cst_37 : f32 to vector<12x1xf32>
    %35 = arith.divf %33, %34 : vector<12x1xf32>
    %36 = vector.broadcast %35 : vector<12x1xf32> to vector<12x32xf32>
    %37 = arith.subf %24, %36 : vector<12x32xf32>
    %38 = arith.mulf %37, %37 : vector<12x32xf32>
    %cst_38 = arith.constant dense<0.000000e+00> : vector<12xf32>
    %39 = vector.multi_reduction <add>, %38, %cst_38 [1] : vector<12x32xf32> to vector<12xf32>
    %40 = vector.shape_cast %39 : vector<12xf32> to vector<12x1xf32>
    %cst_39 = arith.constant 3.200000e+01 : f32
    %41 = vector.broadcast %cst_39 : f32 to vector<12x1xf32>
    %42 = arith.divf %40, %41 : vector<12x1xf32>
    %43 = vector.broadcast %35 : vector<12x1xf32> to vector<12x32xf32>
    %44 = arith.subf %24, %43 : vector<12x32xf32>
    %cst_40 = arith.constant 9.99999974E-6 : f32
    %45 = vector.broadcast %cst_40 : f32 to vector<12x1xf32>
    %46 = arith.addf %42, %45 : vector<12x1xf32>
    %47 = math.rsqrt %46 : vector<12x1xf32>
    %48 = vector.broadcast %47 : vector<12x1xf32> to vector<12x32xf32>
    %49 = arith.mulf %44, %48 : vector<12x32xf32>
    %50 = vector.broadcast %30 : vector<1x32xf32> to vector<12x32xf32>
    %51 = arith.mulf %49, %50 : vector<12x32xf32>
    %52 = vector.broadcast %31 : vector<1x32xf32> to vector<12x32xf32>
    %53 = arith.addf %51, %52 : vector<12x32xf32>
    %cst_41 = arith.constant dense<0.000000e+00> : vector<12x6xf32>
    %54 = tpu.matmul %53, %26, %cst_41 {dimension_numbers = #tpu.dot_dimension_numbers<[1], [0], [0], [1], [0, 0, 1, 1], [], []>} : vector<12x32xf32>, vector<32x6xf32>, vector<12x6xf32> -> vector<12x6xf32>
    %55 = vector.broadcast %27 : vector<1x6xf32> to vector<12x6xf32>
    %56 = arith.addf %54, %55 : vector<12x6xf32>
    %57 = vector.extract_strided_slice %28 {offsets = [0, 0, 0], sizes = [1, 32, 32], strides = [1, 1, 1]} : vector<3x32x32xf32> to vector<1x32x32xf32>
    %58 = vector.shape_cast %57 : vector<1x32x32xf32> to vector<32x32xf32>
    %cst_42 = arith.constant dense<0.000000e+00> : vector<12x32xf32>
    %59 = tpu.matmul %53, %58, %cst_42 {dimension_numbers = #tpu.dot_dimension_numbers<[1], [0], [0], [1], [0, 0, 1, 1], [], []>} : vector<12x32xf32>, vector<32x32xf32>, vector<12x32xf32> -> vector<12x32xf32>
    %60 = vector.extract_strided_slice %29 {offsets = [0, 0], sizes = [1, 32], strides = [1, 1]} : vector<3x32xf32> to vector<1x32xf32>
    %61 = vector.broadcast %60 : vector<1x32xf32> to vector<12x32xf32>
    %62 = arith.addf %59, %61 : vector<12x32xf32>
    %cst_43 = arith.constant 0.000000e+00 : f32
    %63 = vector.broadcast %cst_43 : f32 to vector<12x32xf32>
    %64 = arith.maximumf %62, %63 : vector<12x32xf32>
    %65 = vector.extract_strided_slice %28 {offsets = [1, 0, 0], sizes = [1, 32, 32], strides = [1, 1, 1]} : vector<3x32x32xf32> to vector<1x32x32xf32>
    %66 = vector.shape_cast %65 : vector<1x32x32xf32> to vector<32x32xf32>
    %cst_44 = arith.constant dense<0.000000e+00> : vector<12x32xf32>
    %67 = tpu.matmul %64, %66, %cst_44 {dimension_numbers = #tpu.dot_dimension_numbers<[1], [0], [0], [1], [0, 0, 1, 1], [], []>} : vector<12x32xf32>, vector<32x32xf32>, vector<12x32xf32> -> vector<12x32xf32>
    %68 = vector.extract_strided_slice %29 {offsets = [1, 0], sizes = [1, 32], strides = [1, 1]} : vector<3x32xf32> to vector<1x32xf32>
    %69 = vector.broadcast %68 : vector<1x32xf32> to vector<12x32xf32>
    %70 = arith.addf %67, %69 : vector<12x32xf32>
    %cst_45 = arith.constant 0.000000e+00 : f32
    %71 = vector.broadcast %cst_45 : f32 to vector<12x32xf32>
    %72 = arith.maximumf %70, %71 : vector<12x32xf32>
    %73 = vector.extract_strided_slice %28 {offsets = [2, 0, 0], sizes = [1, 32, 32], strides = [1, 1, 1]} : vector<3x32x32xf32> to vector<1x32x32xf32>
    %74 = vector.shape_cast %73 : vector<1x32x32xf32> to vector<32x32xf32>
    %cst_46 = arith.constant dense<0.000000e+00> : vector<12x32xf32>
    %75 = tpu.matmul %72, %74, %cst_46 {dimension_numbers = #tpu.dot_dimension_numbers<[1], [0], [0], [1], [0, 0, 1, 1], [], []>} : vector<12x32xf32>, vector<32x32xf32>, vector<12x32xf32> -> vector<12x32xf32>
    %76 = vector.extract_strided_slice %29 {offsets = [2, 0], sizes = [1, 32], strides = [1, 1]} : vector<3x32xf32> to vector<1x32xf32>
    %77 = vector.broadcast %76 : vector<1x32xf32> to vector<12x32xf32>
    %78 = arith.addf %75, %77 : vector<12x32xf32>
    %cst_47 = arith.constant dense<0.000000e+00> : vector<12x64xf32>
    %79 = tpu.matmul %78, %14, %cst_47 {dimension_numbers = #tpu.dot_dimension_numbers<[1], [1], [0], [0], [0, 0, 1, 0], [], []>} : vector<12x32xf32>, vector<64x32xf32>, vector<12x64xf32> -> vector<12x64xf32>
    %cst_48 = arith.constant 0.000000e+00 : f32
    %80 = vector.broadcast %cst_48 : f32 to vector<12x64xf32>
    %81 = arith.subf %80, %79 : vector<12x64xf32>
    %82 = math.exp %81 : vector<12x64xf32>
    %cst_49 = arith.constant 1.000000e+00 : f32
    %83 = vector.broadcast %cst_49 : f32 to vector<12x64xf32>
    %84 = arith.addf %83, %82 : vector<12x64xf32>
    %85 = tpu.reciprocal %84 {approx = true} : vector<12x64xf32> -> vector<12x64xf32>
    %86 = arith.addf %85, %22 : vector<12x64xf32>
    %cst_50 = arith.constant dense<0x7F800000> : vector<12xf32>
    %87 = vector.multi_reduction <minimumf>, %86, %cst_50 [1] : vector<12x64xf32> to vector<12xf32>
    %88 = vector.shape_cast %87 : vector<12xf32> to vector<12x1xf32>
    %cst_51 = arith.constant dense<0x7F800000> : vector<1xf32>
    %89 = vector.multi_reduction <minimumf>, %88, %cst_51 [0] : vector<12x1xf32> to vector<1xf32>
    %90 = vector.shape_cast %89 : vector<1xf32> to vector<1x1xf32>
    %91 = vector.broadcast %90 : vector<1x1xf32> to vector<12x64xf32>
    %92 = arith.subf %86, %91 : vector<12x64xf32>
    %cst_52 = arith.constant dense<0xFF800000> : vector<12xf32>
    %93 = vector.multi_reduction <maximumf>, %92, %cst_52 [1] : vector<12x64xf32> to vector<12xf32>
    %94 = vector.shape_cast %93 : vector<12xf32> to vector<12x1xf32>
    %cst_53 = arith.constant dense<0xFF800000> : vector<1xf32>
    %95 = vector.multi_reduction <maximumf>, %94, %cst_53 [0] : vector<12x1xf32> to vector<1xf32>
    %96 = vector.shape_cast %95 : vector<1xf32> to vector<1x1xf32>
    %97 = vector.broadcast %96 : vector<1x1xf32> to vector<12x64xf32>
    %98 = arith.divf %92, %97 : vector<12x64xf32>
    %cst_54 = arith.constant 5.000000e-01 : f32
    %99 = vector.broadcast %cst_54 : f32 to vector<12x64xf32>
    %100 = arith.cmpf olt, %98, %99 : vector<12x64xf32>
    %101 = arith.extui %100 : vector<12x64xi1> to vector<12x64xi32>
    %102 = arith.sitofp %101 : vector<12x64xi32> to vector<12x64xf32>
    %c0_55 = arith.constant 0 : index
    %c0_56 = arith.constant 0 : index
    %c0_57 = arith.constant 0 : index
    %103 = vector.load %arg30[%c0_55, %c0_56, %c0_57] : memref<3x12x64xf32, #tpu.memory_space<vmem>>, vector<1x12x64xf32>
    %104 = vector.shape_cast %103 : vector<1x12x64xf32> to vector<12x64xf32>
    %105 = vector.shape_cast %79 : vector<12x64xf32> to vector<1x12x64xf32>
    tpu.vector_store %arg30[%c0_55, %c0_56, %c0_57], %105 {strides = array<i32>} : memref<3x12x64xf32, #tpu.memory_space<vmem>>, vector<1x12x64xf32>,
    %106 = tpu.concatenate %24, %56 in 1 : vector<12x32xf32>, vector<12x6xf32> -> vector<12x38xf32>
    %c0_58 = arith.constant 0 : index
    %c0_59 = arith.constant 0 : index
    %c0_60 = arith.constant 0 : index
    %107 = vector.load %arg31[%c0_58, %c0_59, %c0_60] : memref<3x12x38xf32, #tpu.memory_space<vmem>>, vector<1x12x38xf32>
    %108 = vector.shape_cast %107 : vector<1x12x38xf32> to vector<12x38xf32>
    %109 = vector.shape_cast %106 : vector<12x38xf32> to vector<1x12x38xf32>
    tpu.vector_store %arg31[%c0_58, %c0_59, %c0_60], %109 {strides = array<i32>} : memref<3x12x38xf32, #tpu.memory_space<vmem>>, vector<1x12x38xf32>,
    %c0_61 = arith.constant 0 : index
    %c0_62 = arith.constant 0 : index
    %c0_63 = arith.constant 0 : index
    %c0_64 = arith.constant 0 : index
    %110 = vector.load %arg17[%c0_61, %c0_62, %c0_63, %c0_64] : memref<2x4x32x32xf32, #tpu.memory_space<vmem>>, vector<1x4x32x32xf32>
    %111 = vector.shape_cast %110 : vector<1x4x32x32xf32> to vector<4x32x32xf32>
    %c0_65 = arith.constant 0 : index
    %c0_66 = arith.constant 0 : index
    %c0_67 = arith.constant 0 : index
    %112 = vector.load %arg18[%c0_65, %c0_66, %c0_67] : memref<2x4x32xf32, #tpu.memory_space<vmem>>, vector<1x4x32xf32>
    %113 = vector.shape_cast %112 : vector<1x4x32xf32> to vector<4x32xf32>
    %c0_68 = arith.constant 0 : index
    %c0_69 = arith.constant 0 : index
    %c0_70 = arith.constant 0 : index
    %114 = vector.load %arg29[%c0_68, %c0_69, %c0_70] : memref<2x6x32xf32, #tpu.memory_space<vmem>>, vector<1x6x32xf32>
    %115 = vector.shape_cast %114 : vector<1x6x32xf32> to vector<6x32xf32>
    %cst_71 = arith.constant dense<0.000000e+00> : vector<12xf32>
    %116 = vector.multi_reduction <add>, %102, %cst_71 [1] : vector<12x64xf32> to vector<12xf32>
    %117 = vector.shape_cast %116 : vector<12xf32> to vector<12x1xf32>
    %cst_72 = arith.constant 6.350000e+01 : f32
    %118 = vector.broadcast %cst_72 : f32 to vector<12x1xf32>
    %119 = arith.cmpf oge, %117, %118 : vector<12x1xf32>
    %cst_73 = arith.constant 0.000000e+00 : f32
    %120 = vector.shape_cast %119 : vector<12x1xi1> to vector<12x1xi1>
    %121 = vector.broadcast %120 : vector<12x1xi1> to vector<12x64xi1>
    %122 = vector.broadcast %cst_73 : f32 to vector<12x64xf32>
    %123 = arith.select %121, %122, %102 : vector<12x64xi1>, vector<12x64xf32>
    %cst_74 = arith.constant 1.000000e+09 : f32
    %124 = vector.broadcast %cst_74 : f32 to vector<12x64xf32>
    %125 = arith.mulf %124, %123 : vector<12x64xf32>
    %126 = arith.subf %21, %125 : vector<12x64xf32>
    %127 = arith.addf %24, %23 : vector<12x32xf32>
    %128 = vector.extract_strided_slice %111 {offsets = [0, 0, 0], sizes = [1, 32, 32], strides = [1, 1, 1]} : vector<4x32x32xf32> to vector<1x32x32xf32>
    %129 = vector.shape_cast %128 : vector<1x32x32xf32> to vector<32x32xf32>
    %cst_75 = arith.constant dense<0.000000e+00> : vector<12x32xf32>
    %130 = tpu.matmul %127, %129, %cst_75 {dimension_numbers = #tpu.dot_dimension_numbers<[1], [0], [0], [1], [0, 0, 1, 1], [], []>} : vector<12x32xf32>, vector<32x32xf32>, vector<12x32xf32> -> vector<12x32xf32>
    %131 = vector.extract_strided_slice %113 {offsets = [0, 0], sizes = [1, 32], strides = [1, 1]} : vector<4x32xf32> to vector<1x32xf32>
    %132 = vector.broadcast %131 : vector<1x32xf32> to vector<12x32xf32>
    %133 = arith.addf %130, %132 : vector<12x32xf32>
    %134 = arith.addf %20, %8 : vector<64x32xf32>
    %135 = vector.extract_strided_slice %111 {offsets = [1, 0, 0], sizes = [1, 32, 32], strides = [1, 1, 1]} : vector<4x32x32xf32> to vector<1x32x32xf32>
    %136 = vector.shape_cast %135 : vector<1x32x32xf32> to vector<32x32xf32>
    %cst_76 = arith.constant dense<0.000000e+00> : vector<64x32xf32>
    %137 = tpu.matmul %134, %136, %cst_76 {dimension_numbers = #tpu.dot_dimension_numbers<[1], [0], [0], [1], [0, 0, 1, 1], [], []>} : vector<64x32xf32>, vector<32x32xf32>, vector<64x32xf32> -> vector<64x32xf32>
    %138 = vector.extract_strided_slice %113 {offsets = [1, 0], sizes = [1, 32], strides = [1, 1]} : vector<4x32xf32> to vector<1x32xf32>
    %139 = vector.broadcast %138 : vector<1x32xf32> to vector<64x32xf32>
    %140 = arith.addf %137, %139 : vector<64x32xf32>
    %141 = vector.extract_strided_slice %111 {offsets = [2, 0, 0], sizes = [1, 32, 32], strides = [1, 1, 1]} : vector<4x32x32xf32> to vector<1x32x32xf32>
    %142 = vector.shape_cast %141 : vector<1x32x32xf32> to vector<32x32xf32>
    %cst_77 = arith.constant dense<0.000000e+00> : vector<64x32xf32>
    %143 = tpu.matmul %20, %142, %cst_77 {dimension_numbers = #tpu.dot_dimension_numbers<[1], [0], [0], [1], [0, 0, 1, 1], [], []>} : vector<64x32xf32>, vector<32x32xf32>, vector<64x32xf32> -> vector<64x32xf32>
    %144 = vector.extract_strided_slice %113 {offsets = [2, 0], sizes = [1, 32], strides = [1, 1]} : vector<4x32xf32> to vector<1x32xf32>
    %145 = vector.broadcast %144 : vector<1x32xf32> to vector<64x32xf32>
    %146 = arith.addf %143, %145 : vector<64x32xf32>
    %147 = vector.extract_strided_slice %111 {offsets = [3, 0, 0], sizes = [1, 32, 32], strides = [1, 1, 1]} : vector<4x32x32xf32> to vector<1x32x32xf32>
    %148 = vector.shape_cast %147 : vector<1x32x32xf32> to vector<32x32xf32>
    %149 = vector.extract_strided_slice %113 {offsets = [3, 0], sizes = [1, 32], strides = [1, 1]} : vector<4x32xf32> to vector<1x32xf32>
    %150 = vector.extract_strided_slice %133 {offsets = [0, 0], sizes = [12, 8], strides = [1, 1]} : vector<12x32xf32> to vector<12x8xf32>
    %151 = vector.extract_strided_slice %140 {offsets = [0, 0], sizes = [64, 8], strides = [1, 1]} : vector<64x32xf32> to vector<64x8xf32>
    %cst_78 = arith.constant dense<0.000000e+00> : vector<12x64xf32>
    %152 = tpu.matmul %150, %151, %cst_78 {dimension_numbers = #tpu.dot_dimension_numbers<[1], [1], [0], [0], [0, 0, 1, 0], [], []>} : vector<12x8xf32>, vector<64x8xf32>, vector<12x64xf32> -> vector<12x64xf32>
    %cst_79 = arith.constant 0.353553385 : f32
    %153 = vector.broadcast %cst_79 : f32 to vector<12x64xf32>
    %154 = arith.mulf %152, %153 : vector<12x64xf32>
    %155 = arith.addf %154, %126 : vector<12x64xf32>
    %cst_80 = arith.constant dense<0xFF800000> : vector<12xf32>
    %156 = vector.multi_reduction <maximumf>, %155, %cst_80 [1] : vector<12x64xf32> to vector<12xf32>
    %157 = vector.shape_cast %156 : vector<12xf32> to vector<12x1xf32>
    %158 = vector.broadcast %157 : vector<12x1xf32> to vector<12x64xf32>
    %159 = arith.subf %155, %158 : vector<12x64xf32>
    %160 = math.exp %159 : vector<12x64xf32>
    %cst_81 = arith.constant dense<0.000000e+00> : vector<12xf32>
    %161 = vector.multi_reduction <add>, %160, %cst_81 [1] : vector<12x64xf32> to vector<12xf32>
    %162 = vector.shape_cast %161 : vector<12xf32> to vector<12x1xf32>
    %163 = tpu.reciprocal %162 {approx = true} : vector<12x1xf32> -> vector<12x1xf32>
    %164 = vector.broadcast %163 : vector<12x1xf32> to vector<12x64xf32>
    %165 = arith.mulf %160, %164 : vector<12x64xf32>
    %166 = vector.extract_strided_slice %146 {offsets = [0, 0], sizes = [64, 8], strides = [1, 1]} : vector<64x32xf32> to vector<64x8xf32>
    %cst_82 = arith.constant dense<0.000000e+00> : vector<12x8xf32>
    %167 = tpu.matmul %165, %166, %cst_82 {dimension_numbers = #tpu.dot_dimension_numbers<[1], [0], [0], [1], [0, 0, 1, 1], [], []>} : vector<12x64xf32>, vector<64x8xf32>, vector<12x8xf32> -> vector<12x8xf32>
    %168 = vector.extract_strided_slice %133 {offsets = [0, 8], sizes = [12, 8], strides = [1, 1]} : vector<12x32xf32> to vector<12x8xf32>
    %169 = vector.extract_strided_slice %140 {offsets = [0, 8], sizes = [64, 8], strides = [1, 1]} : vector<64x32xf32> to vector<64x8xf32>
    %cst_83 = arith.constant dense<0.000000e+00> : vector<12x64xf32>
    %170 = tpu.matmul %168, %169, %cst_83 {dimension_numbers = #tpu.dot_dimension_numbers<[1], [1], [0], [0], [0, 0, 1, 0], [], []>} : vector<12x8xf32>, vector<64x8xf32>, vector<12x64xf32> -> vector<12x64xf32>
    %cst_84 = arith.constant 0.353553385 : f32
    %171 = vector.broadcast %cst_84 : f32 to vector<12x64xf32>
    %172 = arith.mulf %170, %171 : vector<12x64xf32>
    %173 = arith.addf %172, %126 : vector<12x64xf32>
    %cst_85 = arith.constant dense<0xFF800000> : vector<12xf32>
    %174 = vector.multi_reduction <maximumf>, %173, %cst_85 [1] : vector<12x64xf32> to vector<12xf32>
    %175 = vector.shape_cast %174 : vector<12xf32> to vector<12x1xf32>
    %176 = vector.broadcast %175 : vector<12x1xf32> to vector<12x64xf32>
    %177 = arith.subf %173, %176 : vector<12x64xf32>
    %178 = math.exp %177 : vector<12x64xf32>
    %cst_86 = arith.constant dense<0.000000e+00> : vector<12xf32>
    %179 = vector.multi_reduction <add>, %178, %cst_86 [1] : vector<12x64xf32> to vector<12xf32>
    %180 = vector.shape_cast %179 : vector<12xf32> to vector<12x1xf32>
    %181 = tpu.reciprocal %180 {approx = true} : vector<12x1xf32> -> vector<12x1xf32>
    %182 = vector.broadcast %181 : vector<12x1xf32> to vector<12x64xf32>
    %183 = arith.mulf %178, %182 : vector<12x64xf32>
    %184 = vector.extract_strided_slice %146 {offsets = [0, 8], sizes = [64, 8], strides = [1, 1]} : vector<64x32xf32> to vector<64x8xf32>
    %cst_87 = arith.constant dense<0.000000e+00> : vector<12x8xf32>
    %185 = tpu.matmul %183, %184, %cst_87 {dimension_numbers = #tpu.dot_dimension_numbers<[1], [0], [0], [1], [0, 0, 1, 1], [], []>} : vector<12x64xf32>, vector<64x8xf32>, vector<12x8xf32> -> vector<12x8xf32>
    %186 = vector.extract_strided_slice %133 {offsets = [0, 16], sizes = [12, 8], strides = [1, 1]} : vector<12x32xf32> to vector<12x8xf32>
    %187 = vector.extract_strided_slice %140 {offsets = [0, 16], sizes = [64, 8], strides = [1, 1]} : vector<64x32xf32> to vector<64x8xf32>
    %cst_88 = arith.constant dense<0.000000e+00> : vector<12x64xf32>
    %188 = tpu.matmul %186, %187, %cst_88 {dimension_numbers = #tpu.dot_dimension_numbers<[1], [1], [0], [0], [0, 0, 1, 0], [], []>} : vector<12x8xf32>, vector<64x8xf32>, vector<12x64xf32> -> vector<12x64xf32>
    %cst_89 = arith.constant 0.353553385 : f32
    %189 = vector.broadcast %cst_89 : f32 to vector<12x64xf32>
    %190 = arith.mulf %188, %189 : vector<12x64xf32>
    %191 = arith.addf %190, %126 : vector<12x64xf32>
    %cst_90 = arith.constant dense<0xFF800000> : vector<12xf32>
    %192 = vector.multi_reduction <maximumf>, %191, %cst_90 [1] : vector<12x64xf32> to vector<12xf32>
    %193 = vector.shape_cast %192 : vector<12xf32> to vector<12x1xf32>
    %194 = vector.broadcast %193 : vector<12x1xf32> to vector<12x64xf32>
    %195 = arith.subf %191, %194 : vector<12x64xf32>
    %196 = math.exp %195 : vector<12x64xf32>
    %cst_91 = arith.constant dense<0.000000e+00> : vector<12xf32>
    %197 = vector.multi_reduction <add>, %196, %cst_91 [1] : vector<12x64xf32> to vector<12xf32>
    %198 = vector.shape_cast %197 : vector<12xf32> to vector<12x1xf32>
    %199 = tpu.reciprocal %198 {approx = true} : vector<12x1xf32> -> vector<12x1xf32>
    %200 = vector.broadcast %199 : vector<12x1xf32> to vector<12x64xf32>
    %201 = arith.mulf %196, %200 : vector<12x64xf32>
    %202 = vector.extract_strided_slice %146 {offsets = [0, 16], sizes = [64, 8], strides = [1, 1]} : vector<64x32xf32> to vector<64x8xf32>
    %cst_92 = arith.constant dense<0.000000e+00> : vector<12x8xf32>
    %203 = tpu.matmul %201, %202, %cst_92 {dimension_numbers = #tpu.dot_dimension_numbers<[1], [0], [0], [1], [0, 0, 1, 1], [], []>} : vector<12x64xf32>, vector<64x8xf32>, vector<12x8xf32> -> vector<12x8xf32>
    %204 = vector.extract_strided_slice %133 {offsets = [0, 24], sizes = [12, 8], strides = [1, 1]} : vector<12x32xf32> to vector<12x8xf32>
    %205 = vector.extract_strided_slice %140 {offsets = [0, 24], sizes = [64, 8], strides = [1, 1]} : vector<64x32xf32> to vector<64x8xf32>
    %cst_93 = arith.constant dense<0.000000e+00> : vector<12x64xf32>
    %206 = tpu.matmul %204, %205, %cst_93 {dimension_numbers = #tpu.dot_dimension_numbers<[1], [1], [0], [0], [0, 0, 1, 0], [], []>} : vector<12x8xf32>, vector<64x8xf32>, vector<12x64xf32> -> vector<12x64xf32>
    %cst_94 = arith.constant 0.353553385 : f32
    %207 = vector.broadcast %cst_94 : f32 to vector<12x64xf32>
    %208 = arith.mulf %206, %207 : vector<12x64xf32>
    %209 = arith.addf %208, %126 : vector<12x64xf32>
    %cst_95 = arith.constant dense<0xFF800000> : vector<12xf32>
    %210 = vector.multi_reduction <maximumf>, %209, %cst_95 [1] : vector<12x64xf32> to vector<12xf32>
    %211 = vector.shape_cast %210 : vector<12xf32> to vector<12x1xf32>
    %212 = vector.broadcast %211 : vector<12x1xf32> to vector<12x64xf32>
    %213 = arith.subf %209, %212 : vector<12x64xf32>
    %214 = math.exp %213 : vector<12x64xf32>
    %cst_96 = arith.constant dense<0.000000e+00> : vector<12xf32>
    %215 = vector.multi_reduction <add>, %214, %cst_96 [1] : vector<12x64xf32> to vector<12xf32>
    %216 = vector.shape_cast %215 : vector<12xf32> to vector<12x1xf32>
    %217 = tpu.reciprocal %216 {approx = true} : vector<12x1xf32> -> vector<12x1xf32>
    %218 = vector.broadcast %217 : vector<12x1xf32> to vector<12x64xf32>
    %219 = arith.mulf %214, %218 : vector<12x64xf32>
    %220 = vector.extract_strided_slice %146 {offsets = [0, 24], sizes = [64, 8], strides = [1, 1]} : vector<64x32xf32> to vector<64x8xf32>
    %cst_97 = arith.constant dense<0.000000e+00> : vector<12x8xf32>
    %221 = tpu.matmul %219, %220, %cst_97 {dimension_numbers = #tpu.dot_dimension_numbers<[1], [0], [0], [1], [0, 0, 1, 1], [], []>} : vector<12x64xf32>, vector<64x8xf32>, vector<12x8xf32> -> vector<12x8xf32>
    %222 = tpu.concatenate %167, %185, %203, %221 in 1 : vector<12x8xf32>, vector<12x8xf32>, vector<12x8xf32>, vector<12x8xf32> -> vector<12x32xf32>
    %cst_98 = arith.constant dense<0.000000e+00> : vector<12x32xf32>
    %223 = tpu.matmul %222, %148, %cst_98 {dimension_numbers = #tpu.dot_dimension_numbers<[1], [0], [0], [1], [0, 0, 1, 1], [], []>} : vector<12x32xf32>, vector<32x32xf32>, vector<12x32xf32> -> vector<12x32xf32>
    %224 = vector.broadcast %149 : vector<1x32xf32> to vector<12x32xf32>
    %225 = arith.addf %223, %224 : vector<12x32xf32>
    %226 = arith.addf %24, %225 : vector<12x32xf32>
    %227 = vector.extract_strided_slice %115 {offsets = [0, 0], sizes = [1, 32], strides = [1, 1]} : vector<6x32xf32> to vector<1x32xf32>
    %228 = vector.extract_strided_slice %115 {offsets = [1, 0], sizes = [1, 32], strides = [1, 1]} : vector<6x32xf32> to vector<1x32xf32>
    %cst_99 = arith.constant dense<0.000000e+00> : vector<12xf32>
    %229 = vector.multi_reduction <add>, %226, %cst_99 [1] : vector<12x32xf32> to vector<12xf32>
    %230 = vector.shape_cast %229 : vector<12xf32> to vector<12x1xf32>
    %cst_100 = arith.constant 3.200000e+01 : f32
    %231 = vector.broadcast %cst_100 : f32 to vector<12x1xf32>
    %232 = arith.divf %230, %231 : vector<12x1xf32>
    %233 = vector.broadcast %232 : vector<12x1xf32> to vector<12x32xf32>
    %234 = arith.subf %226, %233 : vector<12x32xf32>
    %235 = arith.mulf %234, %234 : vector<12x32xf32>
    %cst_101 = arith.constant dense<0.000000e+00> : vector<12xf32>
    %236 = vector.multi_reduction <add>, %235, %cst_101 [1] : vector<12x32xf32> to vector<12xf32>
    %237 = vector.shape_cast %236 : vector<12xf32> to vector<12x1xf32>
    %cst_102 = arith.constant 3.200000e+01 : f32
    %238 = vector.broadcast %cst_102 : f32 to vector<12x1xf32>
    %239 = arith.divf %237, %238 : vector<12x1xf32>
    %240 = vector.broadcast %232 : vector<12x1xf32> to vector<12x32xf32>
    %241 = arith.subf %226, %240 : vector<12x32xf32>
    %cst_103 = arith.constant 9.99999974E-6 : f32
    %242 = vector.broadcast %cst_103 : f32 to vector<12x1xf32>
    %243 = arith.addf %239, %242 : vector<12x1xf32>
    %244 = math.rsqrt %243 : vector<12x1xf32>
    %245 = vector.broadcast %244 : vector<12x1xf32> to vector<12x32xf32>
    %246 = arith.mulf %241, %245 : vector<12x32xf32>
    %247 = vector.broadcast %227 : vector<1x32xf32> to vector<12x32xf32>
    %248 = arith.mulf %246, %247 : vector<12x32xf32>
    %249 = vector.broadcast %228 : vector<1x32xf32> to vector<12x32xf32>
    %250 = arith.addf %248, %249 : vector<12x32xf32>
    %251 = arith.addf %250, %23 : vector<12x32xf32>
    %c0_104 = arith.constant 0 : index
    %c0_105 = arith.constant 0 : index
    %c0_106 = arith.constant 0 : index
    %252 = vector.load %arg19[%c0_104, %c0_105, %c0_106] : memref<2x32x64xf32, #tpu.memory_space<vmem>>, vector<1x32x64xf32>
    %253 = vector.shape_cast %252 : vector<1x32x64xf32> to vector<32x64xf32>
    %cst_107 = arith.constant dense<0.000000e+00> : vector<12x64xf32>
    %254 = tpu.matmul %251, %253, %cst_107 {dimension_numbers = #tpu.dot_dimension_numbers<[1], [0], [0], [1], [0, 0, 1, 1], [], []>} : vector<12x32xf32>, vector<32x64xf32>, vector<12x64xf32> -> vector<12x64xf32>
    %c0_108 = arith.constant 0 : index
    %c0_109 = arith.constant 0 : index
    %c0_110 = arith.constant 0 : index
    %255 = vector.load %arg20[%c0_108, %c0_109, %c0_110] : memref<2x1x64xf32, #tpu.memory_space<vmem>>, vector<1x1x64xf32>
    %256 = vector.shape_cast %255 : vector<1x1x64xf32> to vector<1x64xf32>
    %257 = vector.broadcast %256 : vector<1x64xf32> to vector<12x64xf32>
    %258 = arith.addf %254, %257 : vector<12x64xf32>
    %c0_111 = arith.constant 0 : index
    %c0_112 = arith.constant 0 : index
    %c0_113 = arith.constant 0 : index
    %259 = vector.load %arg21[%c0_111, %c0_112, %c0_113] : memref<2x32x32xf32, #tpu.memory_space<vmem>>, vector<1x32x32xf32>
    %260 = vector.shape_cast %259 : vector<1x32x32xf32> to vector<32x32xf32>
    %cst_114 = arith.constant dense<0.000000e+00> : vector<12x32xf32>
    %261 = tpu.matmul %250, %260, %cst_114 {dimension_numbers = #tpu.dot_dimension_numbers<[1], [0], [0], [1], [0, 0, 1, 1], [], []>} : vector<12x32xf32>, vector<32x32xf32>, vector<12x32xf32> -> vector<12x32xf32>
    %c0_115 = arith.constant 0 : index
    %c0_116 = arith.constant 0 : index
    %c0_117 = arith.constant 0 : index
    %262 = vector.load %arg22[%c0_115, %c0_116, %c0_117] : memref<2x1x32xf32, #tpu.memory_space<vmem>>, vector<1x1x32xf32>
    %263 = vector.shape_cast %262 : vector<1x1x32xf32> to vector<1x32xf32>
    %264 = vector.broadcast %263 : vector<1x32xf32> to vector<12x32xf32>
    %265 = arith.addf %261, %264 : vector<12x32xf32>
    %266 = vector.extract_strided_slice %258 {offsets = [0, 0], sizes = [12, 32], strides = [1, 1]} : vector<12x64xf32> to vector<12x32xf32>
    %267 = vector.extract_strided_slice %258 {offsets = [0, 32], sizes = [12, 32], strides = [1, 1]} : vector<12x64xf32> to vector<12x32xf32>
    %c0_118 = arith.constant 0 : index
    %c0_119 = arith.constant 0 : index
    %c0_120 = arith.constant 0 : index
    %268 = vector.load %arg23[%c0_118, %c0_119, %c0_120] : memref<2x32x32xf32, #tpu.memory_space<vmem>>, vector<1x32x32xf32>
    %269 = vector.shape_cast %268 : vector<1x32x32xf32> to vector<32x32xf32>
    %c0_121 = arith.constant 0 : index
    %c0_122 = arith.constant 0 : index
    %c0_123 = arith.constant 0 : index
    %270 = vector.load %arg24[%c0_121, %c0_122, %c0_123] : memref<2x1x32xf32, #tpu.memory_space<vmem>>, vector<1x1x32xf32>
    %271 = vector.shape_cast %270 : vector<1x1x32xf32> to vector<1x32xf32>
    %272 = vector.extract_strided_slice %266 {offsets = [0, 0], sizes = [12, 8], strides = [1, 1]} : vector<12x32xf32> to vector<12x8xf32>
    %273 = vector.extract_strided_slice %267 {offsets = [0, 0], sizes = [12, 8], strides = [1, 1]} : vector<12x32xf32> to vector<12x8xf32>
    %cst_124 = arith.constant dense<0.000000e+00> : vector<12x12xf32>
    %274 = tpu.matmul %272, %273, %cst_124 {dimension_numbers = #tpu.dot_dimension_numbers<[1], [1], [0], [0], [0, 0, 1, 0], [], []>} : vector<12x8xf32>, vector<12x8xf32>, vector<12x12xf32> -> vector<12x12xf32>
    %cst_125 = arith.constant 0.353553385 : f32
    %275 = vector.broadcast %cst_125 : f32 to vector<12x12xf32>
    %276 = arith.mulf %274, %275 : vector<12x12xf32>
    %cst_126 = arith.constant dense<0xFF800000> : vector<12xf32>
    %277 = vector.multi_reduction <maximumf>, %276, %cst_126 [1] : vector<12x12xf32> to vector<12xf32>
    %278 = vector.shape_cast %277 : vector<12xf32> to vector<12x1xf32>
    %279 = vector.broadcast %278 : vector<12x1xf32> to vector<12x12xf32>
    %280 = arith.subf %276, %279 : vector<12x12xf32>
    %281 = math.exp %280 : vector<12x12xf32>
    %cst_127 = arith.constant dense<0.000000e+00> : vector<12xf32>
    %282 = vector.multi_reduction <add>, %281, %cst_127 [1] : vector<12x12xf32> to vector<12xf32>
    %283 = vector.shape_cast %282 : vector<12xf32> to vector<12x1xf32>
    %284 = tpu.reciprocal %283 {approx = true} : vector<12x1xf32> -> vector<12x1xf32>
    %285 = vector.broadcast %284 : vector<12x1xf32> to vector<12x12xf32>
    %286 = arith.mulf %281, %285 : vector<12x12xf32>
    %287 = vector.extract_strided_slice %265 {offsets = [0, 0], sizes = [12, 8], strides = [1, 1]} : vector<12x32xf32> to vector<12x8xf32>
    %cst_128 = arith.constant dense<0.000000e+00> : vector<12x8xf32>
    %288 = tpu.matmul %286, %287, %cst_128 {dimension_numbers = #tpu.dot_dimension_numbers<[1], [0], [0], [1], [0, 0, 1, 1], [], []>} : vector<12x12xf32>, vector<12x8xf32>, vector<12x8xf32> -> vector<12x8xf32>
    %289 = vector.extract_strided_slice %266 {offsets = [0, 8], sizes = [12, 8], strides = [1, 1]} : vector<12x32xf32> to vector<12x8xf32>
    %290 = vector.extract_strided_slice %267 {offsets = [0, 8], sizes = [12, 8], strides = [1, 1]} : vector<12x32xf32> to vector<12x8xf32>
    %cst_129 = arith.constant dense<0.000000e+00> : vector<12x12xf32>
    %291 = tpu.matmul %289, %290, %cst_129 {dimension_numbers = #tpu.dot_dimension_numbers<[1], [1], [0], [0], [0, 0, 1, 0], [], []>} : vector<12x8xf32>, vector<12x8xf32>, vector<12x12xf32> -> vector<12x12xf32>
    %cst_130 = arith.constant 0.353553385 : f32
    %292 = vector.broadcast %cst_130 : f32 to vector<12x12xf32>
    %293 = arith.mulf %291, %292 : vector<12x12xf32>
    %cst_131 = arith.constant dense<0xFF800000> : vector<12xf32>
    %294 = vector.multi_reduction <maximumf>, %293, %cst_131 [1] : vector<12x12xf32> to vector<12xf32>
    %295 = vector.shape_cast %294 : vector<12xf32> to vector<12x1xf32>
    %296 = vector.broadcast %295 : vector<12x1xf32> to vector<12x12xf32>
    %297 = arith.subf %293, %296 : vector<12x12xf32>
    %298 = math.exp %297 : vector<12x12xf32>
    %cst_132 = arith.constant dense<0.000000e+00> : vector<12xf32>
    %299 = vector.multi_reduction <add>, %298, %cst_132 [1] : vector<12x12xf32> to vector<12xf32>
    %300 = vector.shape_cast %299 : vector<12xf32> to vector<12x1xf32>
    %301 = tpu.reciprocal %300 {approx = true} : vector<12x1xf32> -> vector<12x1xf32>
    %302 = vector.broadcast %301 : vector<12x1xf32> to vector<12x12xf32>
    %303 = arith.mulf %298, %302 : vector<12x12xf32>
    %304 = vector.extract_strided_slice %265 {offsets = [0, 8], sizes = [12, 8], strides = [1, 1]} : vector<12x32xf32> to vector<12x8xf32>
    %cst_133 = arith.constant dense<0.000000e+00> : vector<12x8xf32>
    %305 = tpu.matmul %303, %304, %cst_133 {dimension_numbers = #tpu.dot_dimension_numbers<[1], [0], [0], [1], [0, 0, 1, 1], [], []>} : vector<12x12xf32>, vector<12x8xf32>, vector<12x8xf32> -> vector<12x8xf32>
    %306 = vector.extract_strided_slice %266 {offsets = [0, 16], sizes = [12, 8], strides = [1, 1]} : vector<12x32xf32> to vector<12x8xf32>
    %307 = vector.extract_strided_slice %267 {offsets = [0, 16], sizes = [12, 8], strides = [1, 1]} : vector<12x32xf32> to vector<12x8xf32>
    %cst_134 = arith.constant dense<0.000000e+00> : vector<12x12xf32>
    %308 = tpu.matmul %306, %307, %cst_134 {dimension_numbers = #tpu.dot_dimension_numbers<[1], [1], [0], [0], [0, 0, 1, 0], [], []>} : vector<12x8xf32>, vector<12x8xf32>, vector<12x12xf32> -> vector<12x12xf32>
    %cst_135 = arith.constant 0.353553385 : f32
    %309 = vector.broadcast %cst_135 : f32 to vector<12x12xf32>
    %310 = arith.mulf %308, %309 : vector<12x12xf32>
    %cst_136 = arith.constant dense<0xFF800000> : vector<12xf32>
    %311 = vector.multi_reduction <maximumf>, %310, %cst_136 [1] : vector<12x12xf32> to vector<12xf32>
    %312 = vector.shape_cast %311 : vector<12xf32> to vector<12x1xf32>
    %313 = vector.broadcast %312 : vector<12x1xf32> to vector<12x12xf32>
    %314 = arith.subf %310, %313 : vector<12x12xf32>
    %315 = math.exp %314 : vector<12x12xf32>
    %cst_137 = arith.constant dense<0.000000e+00> : vector<12xf32>
    %316 = vector.multi_reduction <add>, %315, %cst_137 [1] : vector<12x12xf32> to vector<12xf32>
    %317 = vector.shape_cast %316 : vector<12xf32> to vector<12x1xf32>
    %318 = tpu.reciprocal %317 {approx = true} : vector<12x1xf32> -> vector<12x1xf32>
    %319 = vector.broadcast %318 : vector<12x1xf32> to vector<12x12xf32>
    %320 = arith.mulf %315, %319 : vector<12x12xf32>
    %321 = vector.extract_strided_slice %265 {offsets = [0, 16], sizes = [12, 8], strides = [1, 1]} : vector<12x32xf32> to vector<12x8xf32>
    %cst_138 = arith.constant dense<0.000000e+00> : vector<12x8xf32>
    %322 = tpu.matmul %320, %321, %cst_138 {dimension_numbers = #tpu.dot_dimension_numbers<[1], [0], [0], [1], [0, 0, 1, 1], [], []>} : vector<12x12xf32>, vector<12x8xf32>, vector<12x8xf32> -> vector<12x8xf32>
    %323 = vector.extract_strided_slice %266 {offsets = [0, 24], sizes = [12, 8], strides = [1, 1]} : vector<12x32xf32> to vector<12x8xf32>
    %324 = vector.extract_strided_slice %267 {offsets = [0, 24], sizes = [12, 8], strides = [1, 1]} : vector<12x32xf32> to vector<12x8xf32>
    %cst_139 = arith.constant dense<0.000000e+00> : vector<12x12xf32>
    %325 = tpu.matmul %323, %324, %cst_139 {dimension_numbers = #tpu.dot_dimension_numbers<[1], [1], [0], [0], [0, 0, 1, 0], [], []>} : vector<12x8xf32>, vector<12x8xf32>, vector<12x12xf32> -> vector<12x12xf32>
    %cst_140 = arith.constant 0.353553385 : f32
    %326 = vector.broadcast %cst_140 : f32 to vector<12x12xf32>
    %327 = arith.mulf %325, %326 : vector<12x12xf32>
    %cst_141 = arith.constant dense<0xFF800000> : vector<12xf32>
    %328 = vector.multi_reduction <maximumf>, %327, %cst_141 [1] : vector<12x12xf32> to vector<12xf32>
    %329 = vector.shape_cast %328 : vector<12xf32> to vector<12x1xf32>
    %330 = vector.broadcast %329 : vector<12x1xf32> to vector<12x12xf32>
    %331 = arith.subf %327, %330 : vector<12x12xf32>
    %332 = math.exp %331 : vector<12x12xf32>
    %cst_142 = arith.constant dense<0.000000e+00> : vector<12xf32>
    %333 = vector.multi_reduction <add>, %332, %cst_142 [1] : vector<12x12xf32> to vector<12xf32>
    %334 = vector.shape_cast %333 : vector<12xf32> to vector<12x1xf32>
    %335 = tpu.reciprocal %334 {approx = true} : vector<12x1xf32> -> vector<12x1xf32>
    %336 = vector.broadcast %335 : vector<12x1xf32> to vector<12x12xf32>
    %337 = arith.mulf %332, %336 : vector<12x12xf32>
    %338 = vector.extract_strided_slice %265 {offsets = [0, 24], sizes = [12, 8], strides = [1, 1]} : vector<12x32xf32> to vector<12x8xf32>
    %cst_143 = arith.constant dense<0.000000e+00> : vector<12x8xf32>
    %339 = tpu.matmul %337, %338, %cst_143 {dimension_numbers = #tpu.dot_dimension_numbers<[1], [0], [0], [1], [0, 0, 1, 1], [], []>} : vector<12x12xf32>, vector<12x8xf32>, vector<12x8xf32> -> vector<12x8xf32>
    %340 = tpu.concatenate %288, %305, %322, %339 in 1 : vector<12x8xf32>, vector<12x8xf32>, vector<12x8xf32>, vector<12x8xf32> -> vector<12x32xf32>
    %cst_144 = arith.constant dense<0.000000e+00> : vector<12x32xf32>
    %341 = tpu.matmul %340, %269, %cst_144 {dimension_numbers = #tpu.dot_dimension_numbers<[1], [0], [0], [1], [0, 0, 1, 1], [], []>} : vector<12x32xf32>, vector<32x32xf32>, vector<12x32xf32> -> vector<12x32xf32>
    %342 = vector.broadcast %271 : vector<1x32xf32> to vector<12x32xf32>
    %343 = arith.addf %341, %342 : vector<12x32xf32>
    %344 = arith.addf %250, %343 : vector<12x32xf32>
    %345 = vector.extract_strided_slice %115 {offsets = [2, 0], sizes = [1, 32], strides = [1, 1]} : vector<6x32xf32> to vector<1x32xf32>
    %346 = vector.extract_strided_slice %115 {offsets = [3, 0], sizes = [1, 32], strides = [1, 1]} : vector<6x32xf32> to vector<1x32xf32>
    %cst_145 = arith.constant dense<0.000000e+00> : vector<12xf32>
    %347 = vector.multi_reduction <add>, %344, %cst_145 [1] : vector<12x32xf32> to vector<12xf32>
    %348 = vector.shape_cast %347 : vector<12xf32> to vector<12x1xf32>
    %cst_146 = arith.constant 3.200000e+01 : f32
    %349 = vector.broadcast %cst_146 : f32 to vector<12x1xf32>
    %350 = arith.divf %348, %349 : vector<12x1xf32>
    %351 = vector.broadcast %350 : vector<12x1xf32> to vector<12x32xf32>
    %352 = arith.subf %344, %351 : vector<12x32xf32>
    %353 = arith.mulf %352, %352 : vector<12x32xf32>
    %cst_147 = arith.constant dense<0.000000e+00> : vector<12xf32>
    %354 = vector.multi_reduction <add>, %353, %cst_147 [1] : vector<12x32xf32> to vector<12xf32>
    %355 = vector.shape_cast %354 : vector<12xf32> to vector<12x1xf32>
    %cst_148 = arith.constant 3.200000e+01 : f32
    %356 = vector.broadcast %cst_148 : f32 to vector<12x1xf32>
    %357 = arith.divf %355, %356 : vector<12x1xf32>
    %358 = vector.broadcast %350 : vector<12x1xf32> to vector<12x32xf32>
    %359 = arith.subf %344, %358 : vector<12x32xf32>
    %cst_149 = arith.constant 9.99999974E-6 : f32
    %360 = vector.broadcast %cst_149 : f32 to vector<12x1xf32>
    %361 = arith.addf %357, %360 : vector<12x1xf32>
    %362 = math.rsqrt %361 : vector<12x1xf32>
    %363 = vector.broadcast %362 : vector<12x1xf32> to vector<12x32xf32>
    %364 = arith.mulf %359, %363 : vector<12x32xf32>
    %365 = vector.broadcast %345 : vector<1x32xf32> to vector<12x32xf32>
    %366 = arith.mulf %364, %365 : vector<12x32xf32>
    %367 = vector.broadcast %346 : vector<1x32xf32> to vector<12x32xf32>
    %368 = arith.addf %366, %367 : vector<12x32xf32>
    %c0_150 = arith.constant 0 : index
    %c0_151 = arith.constant 0 : index
    %c0_152 = arith.constant 0 : index
    %369 = vector.load %arg25[%c0_150, %c0_151, %c0_152] : memref<2x32x64xf32, #tpu.memory_space<vmem>>, vector<1x32x64xf32>
    %370 = vector.shape_cast %369 : vector<1x32x64xf32> to vector<32x64xf32>
    %cst_153 = arith.constant dense<0.000000e+00> : vector<12x64xf32>
    %371 = tpu.matmul %368, %370, %cst_153 {dimension_numbers = #tpu.dot_dimension_numbers<[1], [0], [0], [1], [0, 0, 1, 1], [], []>} : vector<12x32xf32>, vector<32x64xf32>, vector<12x64xf32> -> vector<12x64xf32>
    %c0_154 = arith.constant 0 : index
    %c0_155 = arith.constant 0 : index
    %c0_156 = arith.constant 0 : index
    %372 = vector.load %arg26[%c0_154, %c0_155, %c0_156] : memref<2x1x64xf32, #tpu.memory_space<vmem>>, vector<1x1x64xf32>
    %373 = vector.shape_cast %372 : vector<1x1x64xf32> to vector<1x64xf32>
    %374 = vector.broadcast %373 : vector<1x64xf32> to vector<12x64xf32>
    %375 = arith.addf %371, %374 : vector<12x64xf32>
    %cst_157 = arith.constant 0.000000e+00 : f32
    %376 = vector.broadcast %cst_157 : f32 to vector<12x64xf32>
    %377 = arith.maximumf %375, %376 : vector<12x64xf32>
    %c0_158 = arith.constant 0 : index
    %c0_159 = arith.constant 0 : index
    %c0_160 = arith.constant 0 : index
    %378 = vector.load %arg27[%c0_158, %c0_159, %c0_160] : memref<2x64x32xf32, #tpu.memory_space<vmem>>, vector<1x64x32xf32>
    %379 = vector.shape_cast %378 : vector<1x64x32xf32> to vector<64x32xf32>
    %cst_161 = arith.constant dense<0.000000e+00> : vector<12x32xf32>
    %380 = tpu.matmul %377, %379, %cst_161 {dimension_numbers = #tpu.dot_dimension_numbers<[1], [0], [0], [1], [0, 0, 1, 1], [], []>} : vector<12x64xf32>, vector<64x32xf32>, vector<12x32xf32> -> vector<12x32xf32>
    %c0_162 = arith.constant 0 : index
    %c0_163 = arith.constant 0 : index
    %c0_164 = arith.constant 0 : index
    %381 = vector.load %arg28[%c0_162, %c0_163, %c0_164] : memref<2x1x32xf32, #tpu.memory_space<vmem>>, vector<1x1x32xf32>
    %382 = vector.shape_cast %381 : vector<1x1x32xf32> to vector<1x32xf32>
    %383 = vector.broadcast %382 : vector<1x32xf32> to vector<12x32xf32>
    %384 = arith.addf %380, %383 : vector<12x32xf32>
    %385 = arith.addf %368, %384 : vector<12x32xf32>
    %386 = vector.extract_strided_slice %115 {offsets = [4, 0], sizes = [1, 32], strides = [1, 1]} : vector<6x32xf32> to vector<1x32xf32>
    %387 = vector.extract_strided_slice %115 {offsets = [5, 0], sizes = [1, 32], strides = [1, 1]} : vector<6x32xf32> to vector<1x32xf32>
    %cst_165 = arith.constant dense<0.000000e+00> : vector<12xf32>
    %388 = vector.multi_reduction <add>, %385, %cst_165 [1] : vector<12x32xf32> to vector<12xf32>
    %389 = vector.shape_cast %388 : vector<12xf32> to vector<12x1xf32>
    %cst_166 = arith.constant 3.200000e+01 : f32
    %390 = vector.broadcast %cst_166 : f32 to vector<12x1xf32>
    %391 = arith.divf %389, %390 : vector<12x1xf32>
    %392 = vector.broadcast %391 : vector<12x1xf32> to vector<12x32xf32>
    %393 = arith.subf %385, %392 : vector<12x32xf32>
    %394 = arith.mulf %393, %393 : vector<12x32xf32>
    %cst_167 = arith.constant dense<0.000000e+00> : vector<12xf32>
    %395 = vector.multi_reduction <add>, %394, %cst_167 [1] : vector<12x32xf32> to vector<12xf32>
    %396 = vector.shape_cast %395 : vector<12xf32> to vector<12x1xf32>
    %cst_168 = arith.constant 3.200000e+01 : f32
    %397 = vector.broadcast %cst_168 : f32 to vector<12x1xf32>
    %398 = arith.divf %396, %397 : vector<12x1xf32>
    %399 = vector.broadcast %391 : vector<12x1xf32> to vector<12x32xf32>
    %400 = arith.subf %385, %399 : vector<12x32xf32>
    %cst_169 = arith.constant 9.99999974E-6 : f32
    %401 = vector.broadcast %cst_169 : f32 to vector<12x1xf32>
    %402 = arith.addf %398, %401 : vector<12x1xf32>
    %403 = math.rsqrt %402 : vector<12x1xf32>
    %404 = vector.broadcast %403 : vector<12x1xf32> to vector<12x32xf32>
    %405 = arith.mulf %400, %404 : vector<12x32xf32>
    %406 = vector.broadcast %386 : vector<1x32xf32> to vector<12x32xf32>
    %407 = arith.mulf %405, %406 : vector<12x32xf32>
    %408 = vector.broadcast %387 : vector<1x32xf32> to vector<12x32xf32>
    %409 = arith.addf %407, %408 : vector<12x32xf32>
    %410 = vector.extract_strided_slice %25 {offsets = [0, 0], sizes = [1, 32], strides = [1, 1]} : vector<2x32xf32> to vector<1x32xf32>
    %411 = vector.extract_strided_slice %25 {offsets = [1, 0], sizes = [1, 32], strides = [1, 1]} : vector<2x32xf32> to vector<1x32xf32>
    %cst_170 = arith.constant dense<0.000000e+00> : vector<12xf32>
    %412 = vector.multi_reduction <add>, %409, %cst_170 [1] : vector<12x32xf32> to vector<12xf32>
    %413 = vector.shape_cast %412 : vector<12xf32> to vector<12x1xf32>
    %cst_171 = arith.constant 3.200000e+01 : f32
    %414 = vector.broadcast %cst_171 : f32 to vector<12x1xf32>
    %415 = arith.divf %413, %414 : vector<12x1xf32>
    %416 = vector.broadcast %415 : vector<12x1xf32> to vector<12x32xf32>
    %417 = arith.subf %409, %416 : vector<12x32xf32>
    %418 = arith.mulf %417, %417 : vector<12x32xf32>
    %cst_172 = arith.constant dense<0.000000e+00> : vector<12xf32>
    %419 = vector.multi_reduction <add>, %418, %cst_172 [1] : vector<12x32xf32> to vector<12xf32>
    %420 = vector.shape_cast %419 : vector<12xf32> to vector<12x1xf32>
    %cst_173 = arith.constant 3.200000e+01 : f32
    %421 = vector.broadcast %cst_173 : f32 to vector<12x1xf32>
    %422 = arith.divf %420, %421 : vector<12x1xf32>
    %423 = vector.broadcast %415 : vector<12x1xf32> to vector<12x32xf32>
    %424 = arith.subf %409, %423 : vector<12x32xf32>
    %cst_174 = arith.constant 9.99999974E-6 : f32
    %425 = vector.broadcast %cst_174 : f32 to vector<12x1xf32>
    %426 = arith.addf %422, %425 : vector<12x1xf32>
    %427 = math.rsqrt %426 : vector<12x1xf32>
    %428 = vector.broadcast %427 : vector<12x1xf32> to vector<12x32xf32>
    %429 = arith.mulf %424, %428 : vector<12x32xf32>
    %430 = vector.broadcast %410 : vector<1x32xf32> to vector<12x32xf32>
    %431 = arith.mulf %429, %430 : vector<12x32xf32>
    %432 = vector.broadcast %411 : vector<1x32xf32> to vector<12x32xf32>
    %433 = arith.addf %431, %432 : vector<12x32xf32>
    %cst_175 = arith.constant dense<0.000000e+00> : vector<12x6xf32>
    %434 = tpu.matmul %433, %26, %cst_175 {dimension_numbers = #tpu.dot_dimension_numbers<[1], [0], [0], [1], [0, 0, 1, 1], [], []>} : vector<12x32xf32>, vector<32x6xf32>, vector<12x6xf32> -> vector<12x6xf32>
    %435 = vector.broadcast %27 : vector<1x6xf32> to vector<12x6xf32>
    %436 = arith.addf %434, %435 : vector<12x6xf32>
    %437 = vector.extract_strided_slice %28 {offsets = [0, 0, 0], sizes = [1, 32, 32], strides = [1, 1, 1]} : vector<3x32x32xf32> to vector<1x32x32xf32>
    %438 = vector.shape_cast %437 : vector<1x32x32xf32> to vector<32x32xf32>
    %cst_176 = arith.constant dense<0.000000e+00> : vector<12x32xf32>
    %439 = tpu.matmul %433, %438, %cst_176 {dimension_numbers = #tpu.dot_dimension_numbers<[1], [0], [0], [1], [0, 0, 1, 1], [], []>} : vector<12x32xf32>, vector<32x32xf32>, vector<12x32xf32> -> vector<12x32xf32>
    %440 = vector.extract_strided_slice %29 {offsets = [0, 0], sizes = [1, 32], strides = [1, 1]} : vector<3x32xf32> to vector<1x32xf32>
    %441 = vector.broadcast %440 : vector<1x32xf32> to vector<12x32xf32>
    %442 = arith.addf %439, %441 : vector<12x32xf32>
    %cst_177 = arith.constant 0.000000e+00 : f32
    %443 = vector.broadcast %cst_177 : f32 to vector<12x32xf32>
    %444 = arith.maximumf %442, %443 : vector<12x32xf32>
    %445 = vector.extract_strided_slice %28 {offsets = [1, 0, 0], sizes = [1, 32, 32], strides = [1, 1, 1]} : vector<3x32x32xf32> to vector<1x32x32xf32>
    %446 = vector.shape_cast %445 : vector<1x32x32xf32> to vector<32x32xf32>
    %cst_178 = arith.constant dense<0.000000e+00> : vector<12x32xf32>
    %447 = tpu.matmul %444, %446, %cst_178 {dimension_numbers = #tpu.dot_dimension_numbers<[1], [0], [0], [1], [0, 0, 1, 1], [], []>} : vector<12x32xf32>, vector<32x32xf32>, vector<12x32xf32> -> vector<12x32xf32>
    %448 = vector.extract_strided_slice %29 {offsets = [1, 0], sizes = [1, 32], strides = [1, 1]} : vector<3x32xf32> to vector<1x32xf32>
    %449 = vector.broadcast %448 : vector<1x32xf32> to vector<12x32xf32>
    %450 = arith.addf %447, %449 : vector<12x32xf32>
    %cst_179 = arith.constant 0.000000e+00 : f32
    %451 = vector.broadcast %cst_179 : f32 to vector<12x32xf32>
    %452 = arith.maximumf %450, %451 : vector<12x32xf32>
    %453 = vector.extract_strided_slice %28 {offsets = [2, 0, 0], sizes = [1, 32, 32], strides = [1, 1, 1]} : vector<3x32x32xf32> to vector<1x32x32xf32>
    %454 = vector.shape_cast %453 : vector<1x32x32xf32> to vector<32x32xf32>
    %cst_180 = arith.constant dense<0.000000e+00> : vector<12x32xf32>
    %455 = tpu.matmul %452, %454, %cst_180 {dimension_numbers = #tpu.dot_dimension_numbers<[1], [0], [0], [1], [0, 0, 1, 1], [], []>} : vector<12x32xf32>, vector<32x32xf32>, vector<12x32xf32> -> vector<12x32xf32>
    %456 = vector.extract_strided_slice %29 {offsets = [2, 0], sizes = [1, 32], strides = [1, 1]} : vector<3x32xf32> to vector<1x32xf32>
    %457 = vector.broadcast %456 : vector<1x32xf32> to vector<12x32xf32>
    %458 = arith.addf %455, %457 : vector<12x32xf32>
    %cst_181 = arith.constant dense<0.000000e+00> : vector<12x64xf32>
    %459 = tpu.matmul %458, %14, %cst_181 {dimension_numbers = #tpu.dot_dimension_numbers<[1], [1], [0], [0], [0, 0, 1, 0], [], []>} : vector<12x32xf32>, vector<64x32xf32>, vector<12x64xf32> -> vector<12x64xf32>
    %cst_182 = arith.constant 0.000000e+00 : f32
    %460 = vector.broadcast %cst_182 : f32 to vector<12x64xf32>
    %461 = arith.subf %460, %459 : vector<12x64xf32>
    %462 = math.exp %461 : vector<12x64xf32>
    %cst_183 = arith.constant 1.000000e+00 : f32
    %463 = vector.broadcast %cst_183 : f32 to vector<12x64xf32>
    %464 = arith.addf %463, %462 : vector<12x64xf32>
    %465 = tpu.reciprocal %464 {approx = true} : vector<12x64xf32> -> vector<12x64xf32>
    %466 = arith.addf %465, %22 : vector<12x64xf32>
    %cst_184 = arith.constant dense<0x7F800000> : vector<12xf32>
    %467 = vector.multi_reduction <minimumf>, %466, %cst_184 [1] : vector<12x64xf32> to vector<12xf32>
    %468 = vector.shape_cast %467 : vector<12xf32> to vector<12x1xf32>
    %cst_185 = arith.constant dense<0x7F800000> : vector<1xf32>
    %469 = vector.multi_reduction <minimumf>, %468, %cst_185 [0] : vector<12x1xf32> to vector<1xf32>
    %470 = vector.shape_cast %469 : vector<1xf32> to vector<1x1xf32>
    %471 = vector.broadcast %470 : vector<1x1xf32> to vector<12x64xf32>
    %472 = arith.subf %466, %471 : vector<12x64xf32>
    %cst_186 = arith.constant dense<0xFF800000> : vector<12xf32>
    %473 = vector.multi_reduction <maximumf>, %472, %cst_186 [1] : vector<12x64xf32> to vector<12xf32>
    %474 = vector.shape_cast %473 : vector<12xf32> to vector<12x1xf32>
    %cst_187 = arith.constant dense<0xFF800000> : vector<1xf32>
    %475 = vector.multi_reduction <maximumf>, %474, %cst_187 [0] : vector<12x1xf32> to vector<1xf32>
    %476 = vector.shape_cast %475 : vector<1xf32> to vector<1x1xf32>
    %477 = vector.broadcast %476 : vector<1x1xf32> to vector<12x64xf32>
    %478 = arith.divf %472, %477 : vector<12x64xf32>
    %cst_188 = arith.constant 5.000000e-01 : f32
    %479 = vector.broadcast %cst_188 : f32 to vector<12x64xf32>
    %480 = arith.cmpf olt, %478, %479 : vector<12x64xf32>
    %481 = arith.extui %480 : vector<12x64xi1> to vector<12x64xi32>
    %482 = arith.sitofp %481 : vector<12x64xi32> to vector<12x64xf32>
    %c1 = arith.constant 1 : index
    %c0_189 = arith.constant 0 : index
    %c0_190 = arith.constant 0 : index
    %483 = vector.load %arg30[%c1, %c0_189, %c0_190] : memref<3x12x64xf32, #tpu.memory_space<vmem>>, vector<1x12x64xf32>
    %484 = vector.shape_cast %483 : vector<1x12x64xf32> to vector<12x64xf32>
    %485 = vector.shape_cast %459 : vector<12x64xf32> to vector<1x12x64xf32>
    tpu.vector_store %arg30[%c1, %c0_189, %c0_190], %485 {strides = array<i32>} : memref<3x12x64xf32, #tpu.memory_space<vmem>>, vector<1x12x64xf32>,
    %486 = tpu.concatenate %409, %436 in 1 : vector<12x32xf32>, vector<12x6xf32> -> vector<12x38xf32>
    %c1_191 = arith.constant 1 : index
    %c0_192 = arith.constant 0 : index
    %c0_193 = arith.constant 0 : index
    %487 = vector.load %arg31[%c1_191, %c0_192, %c0_193] : memref<3x12x38xf32, #tpu.memory_space<vmem>>, vector<1x12x38xf32>
    %488 = vector.shape_cast %487 : vector<1x12x38xf32> to vector<12x38xf32>
    %489 = vector.shape_cast %486 : vector<12x38xf32> to vector<1x12x38xf32>
    tpu.vector_store %arg31[%c1_191, %c0_192, %c0_193], %489 {strides = array<i32>} : memref<3x12x38xf32, #tpu.memory_space<vmem>>, vector<1x12x38xf32>,
    %c1_194 = arith.constant 1 : index
    %c0_195 = arith.constant 0 : index
    %c0_196 = arith.constant 0 : index
    %c0_197 = arith.constant 0 : index
    %490 = vector.load %arg17[%c1_194, %c0_195, %c0_196, %c0_197] : memref<2x4x32x32xf32, #tpu.memory_space<vmem>>, vector<1x4x32x32xf32>
    %491 = vector.shape_cast %490 : vector<1x4x32x32xf32> to vector<4x32x32xf32>
    %c1_198 = arith.constant 1 : index
    %c0_199 = arith.constant 0 : index
    %c0_200 = arith.constant 0 : index
    %492 = vector.load %arg18[%c1_198, %c0_199, %c0_200] : memref<2x4x32xf32, #tpu.memory_space<vmem>>, vector<1x4x32xf32>
    %493 = vector.shape_cast %492 : vector<1x4x32xf32> to vector<4x32xf32>
    %c1_201 = arith.constant 1 : index
    %c0_202 = arith.constant 0 : index
    %c0_203 = arith.constant 0 : index
    %494 = vector.load %arg29[%c1_201, %c0_202, %c0_203] : memref<2x6x32xf32, #tpu.memory_space<vmem>>, vector<1x6x32xf32>
    %495 = vector.shape_cast %494 : vector<1x6x32xf32> to vector<6x32xf32>
    %cst_204 = arith.constant dense<0.000000e+00> : vector<12xf32>
    %496 = vector.multi_reduction <add>, %482, %cst_204 [1] : vector<12x64xf32> to vector<12xf32>
    %497 = vector.shape_cast %496 : vector<12xf32> to vector<12x1xf32>
    %cst_205 = arith.constant 6.350000e+01 : f32
    %498 = vector.broadcast %cst_205 : f32 to vector<12x1xf32>
    %499 = arith.cmpf oge, %497, %498 : vector<12x1xf32>
    %cst_206 = arith.constant 0.000000e+00 : f32
    %500 = vector.shape_cast %499 : vector<12x1xi1> to vector<12x1xi1>
    %501 = vector.broadcast %500 : vector<12x1xi1> to vector<12x64xi1>
    %502 = vector.broadcast %cst_206 : f32 to vector<12x64xf32>
    %503 = arith.select %501, %502, %482 : vector<12x64xi1>, vector<12x64xf32>
    %cst_207 = arith.constant 1.000000e+09 : f32
    %504 = vector.broadcast %cst_207 : f32 to vector<12x64xf32>
    %505 = arith.mulf %504, %503 : vector<12x64xf32>
    %506 = arith.subf %21, %505 : vector<12x64xf32>
    %507 = arith.addf %409, %23 : vector<12x32xf32>
    %508 = vector.extract_strided_slice %491 {offsets = [0, 0, 0], sizes = [1, 32, 32], strides = [1, 1, 1]} : vector<4x32x32xf32> to vector<1x32x32xf32>
    %509 = vector.shape_cast %508 : vector<1x32x32xf32> to vector<32x32xf32>
    %cst_208 = arith.constant dense<0.000000e+00> : vector<12x32xf32>
    %510 = tpu.matmul %507, %509, %cst_208 {dimension_numbers = #tpu.dot_dimension_numbers<[1], [0], [0], [1], [0, 0, 1, 1], [], []>} : vector<12x32xf32>, vector<32x32xf32>, vector<12x32xf32> -> vector<12x32xf32>
    %511 = vector.extract_strided_slice %493 {offsets = [0, 0], sizes = [1, 32], strides = [1, 1]} : vector<4x32xf32> to vector<1x32xf32>
    %512 = vector.broadcast %511 : vector<1x32xf32> to vector<12x32xf32>
    %513 = arith.addf %510, %512 : vector<12x32xf32>
    %514 = arith.addf %20, %8 : vector<64x32xf32>
    %515 = vector.extract_strided_slice %491 {offsets = [1, 0, 0], sizes = [1, 32, 32], strides = [1, 1, 1]} : vector<4x32x32xf32> to vector<1x32x32xf32>
    %516 = vector.shape_cast %515 : vector<1x32x32xf32> to vector<32x32xf32>
    %cst_209 = arith.constant dense<0.000000e+00> : vector<64x32xf32>
    %517 = tpu.matmul %514, %516, %cst_209 {dimension_numbers = #tpu.dot_dimension_numbers<[1], [0], [0], [1], [0, 0, 1, 1], [], []>} : vector<64x32xf32>, vector<32x32xf32>, vector<64x32xf32> -> vector<64x32xf32>
    %518 = vector.extract_strided_slice %493 {offsets = [1, 0], sizes = [1, 32], strides = [1, 1]} : vector<4x32xf32> to vector<1x32xf32>
    %519 = vector.broadcast %518 : vector<1x32xf32> to vector<64x32xf32>
    %520 = arith.addf %517, %519 : vector<64x32xf32>
    %521 = vector.extract_strided_slice %491 {offsets = [2, 0, 0], sizes = [1, 32, 32], strides = [1, 1, 1]} : vector<4x32x32xf32> to vector<1x32x32xf32>
    %522 = vector.shape_cast %521 : vector<1x32x32xf32> to vector<32x32xf32>
    %cst_210 = arith.constant dense<0.000000e+00> : vector<64x32xf32>
    %523 = tpu.matmul %20, %522, %cst_210 {dimension_numbers = #tpu.dot_dimension_numbers<[1], [0], [0], [1], [0, 0, 1, 1], [], []>} : vector<64x32xf32>, vector<32x32xf32>, vector<64x32xf32> -> vector<64x32xf32>
    %524 = vector.extract_strided_slice %493 {offsets = [2, 0], sizes = [1, 32], strides = [1, 1]} : vector<4x32xf32> to vector<1x32xf32>
    %525 = vector.broadcast %524 : vector<1x32xf32> to vector<64x32xf32>
    %526 = arith.addf %523, %525 : vector<64x32xf32>
    %527 = vector.extract_strided_slice %491 {offsets = [3, 0, 0], sizes = [1, 32, 32], strides = [1, 1, 1]} : vector<4x32x32xf32> to vector<1x32x32xf32>
    %528 = vector.shape_cast %527 : vector<1x32x32xf32> to vector<32x32xf32>
    %529 = vector.extract_strided_slice %493 {offsets = [3, 0], sizes = [1, 32], strides = [1, 1]} : vector<4x32xf32> to vector<1x32xf32>
    %530 = vector.extract_strided_slice %513 {offsets = [0, 0], sizes = [12, 8], strides = [1, 1]} : vector<12x32xf32> to vector<12x8xf32>
    %531 = vector.extract_strided_slice %520 {offsets = [0, 0], sizes = [64, 8], strides = [1, 1]} : vector<64x32xf32> to vector<64x8xf32>
    %cst_211 = arith.constant dense<0.000000e+00> : vector<12x64xf32>
    %532 = tpu.matmul %530, %531, %cst_211 {dimension_numbers = #tpu.dot_dimension_numbers<[1], [1], [0], [0], [0, 0, 1, 0], [], []>} : vector<12x8xf32>, vector<64x8xf32>, vector<12x64xf32> -> vector<12x64xf32>
    %cst_212 = arith.constant 0.353553385 : f32
    %533 = vector.broadcast %cst_212 : f32 to vector<12x64xf32>
    %534 = arith.mulf %532, %533 : vector<12x64xf32>
    %535 = arith.addf %534, %506 : vector<12x64xf32>
    %cst_213 = arith.constant dense<0xFF800000> : vector<12xf32>
    %536 = vector.multi_reduction <maximumf>, %535, %cst_213 [1] : vector<12x64xf32> to vector<12xf32>
    %537 = vector.shape_cast %536 : vector<12xf32> to vector<12x1xf32>
    %538 = vector.broadcast %537 : vector<12x1xf32> to vector<12x64xf32>
    %539 = arith.subf %535, %538 : vector<12x64xf32>
    %540 = math.exp %539 : vector<12x64xf32>
    %cst_214 = arith.constant dense<0.000000e+00> : vector<12xf32>
    %541 = vector.multi_reduction <add>, %540, %cst_214 [1] : vector<12x64xf32> to vector<12xf32>
    %542 = vector.shape_cast %541 : vector<12xf32> to vector<12x1xf32>
    %543 = tpu.reciprocal %542 {approx = true} : vector<12x1xf32> -> vector<12x1xf32>
    %544 = vector.broadcast %543 : vector<12x1xf32> to vector<12x64xf32>
    %545 = arith.mulf %540, %544 : vector<12x64xf32>
    %546 = vector.extract_strided_slice %526 {offsets = [0, 0], sizes = [64, 8], strides = [1, 1]} : vector<64x32xf32> to vector<64x8xf32>
    %cst_215 = arith.constant dense<0.000000e+00> : vector<12x8xf32>
    %547 = tpu.matmul %545, %546, %cst_215 {dimension_numbers = #tpu.dot_dimension_numbers<[1], [0], [0], [1], [0, 0, 1, 1], [], []>} : vector<12x64xf32>, vector<64x8xf32>, vector<12x8xf32> -> vector<12x8xf32>
    %548 = vector.extract_strided_slice %513 {offsets = [0, 8], sizes = [12, 8], strides = [1, 1]} : vector<12x32xf32> to vector<12x8xf32>
    %549 = vector.extract_strided_slice %520 {offsets = [0, 8], sizes = [64, 8], strides = [1, 1]} : vector<64x32xf32> to vector<64x8xf32>
    %cst_216 = arith.constant dense<0.000000e+00> : vector<12x64xf32>
    %550 = tpu.matmul %548, %549, %cst_216 {dimension_numbers = #tpu.dot_dimension_numbers<[1], [1], [0], [0], [0, 0, 1, 0], [], []>} : vector<12x8xf32>, vector<64x8xf32>, vector<12x64xf32> -> vector<12x64xf32>
    %cst_217 = arith.constant 0.353553385 : f32
    %551 = vector.broadcast %cst_217 : f32 to vector<12x64xf32>
    %552 = arith.mulf %550, %551 : vector<12x64xf32>
    %553 = arith.addf %552, %506 : vector<12x64xf32>
    %cst_218 = arith.constant dense<0xFF800000> : vector<12xf32>
    %554 = vector.multi_reduction <maximumf>, %553, %cst_218 [1] : vector<12x64xf32> to vector<12xf32>
    %555 = vector.shape_cast %554 : vector<12xf32> to vector<12x1xf32>
    %556 = vector.broadcast %555 : vector<12x1xf32> to vector<12x64xf32>
    %557 = arith.subf %553, %556 : vector<12x64xf32>
    %558 = math.exp %557 : vector<12x64xf32>
    %cst_219 = arith.constant dense<0.000000e+00> : vector<12xf32>
    %559 = vector.multi_reduction <add>, %558, %cst_219 [1] : vector<12x64xf32> to vector<12xf32>
    %560 = vector.shape_cast %559 : vector<12xf32> to vector<12x1xf32>
    %561 = tpu.reciprocal %560 {approx = true} : vector<12x1xf32> -> vector<12x1xf32>
    %562 = vector.broadcast %561 : vector<12x1xf32> to vector<12x64xf32>
    %563 = arith.mulf %558, %562 : vector<12x64xf32>
    %564 = vector.extract_strided_slice %526 {offsets = [0, 8], sizes = [64, 8], strides = [1, 1]} : vector<64x32xf32> to vector<64x8xf32>
    %cst_220 = arith.constant dense<0.000000e+00> : vector<12x8xf32>
    %565 = tpu.matmul %563, %564, %cst_220 {dimension_numbers = #tpu.dot_dimension_numbers<[1], [0], [0], [1], [0, 0, 1, 1], [], []>} : vector<12x64xf32>, vector<64x8xf32>, vector<12x8xf32> -> vector<12x8xf32>
    %566 = vector.extract_strided_slice %513 {offsets = [0, 16], sizes = [12, 8], strides = [1, 1]} : vector<12x32xf32> to vector<12x8xf32>
    %567 = vector.extract_strided_slice %520 {offsets = [0, 16], sizes = [64, 8], strides = [1, 1]} : vector<64x32xf32> to vector<64x8xf32>
    %cst_221 = arith.constant dense<0.000000e+00> : vector<12x64xf32>
    %568 = tpu.matmul %566, %567, %cst_221 {dimension_numbers = #tpu.dot_dimension_numbers<[1], [1], [0], [0], [0, 0, 1, 0], [], []>} : vector<12x8xf32>, vector<64x8xf32>, vector<12x64xf32> -> vector<12x64xf32>
    %cst_222 = arith.constant 0.353553385 : f32
    %569 = vector.broadcast %cst_222 : f32 to vector<12x64xf32>
    %570 = arith.mulf %568, %569 : vector<12x64xf32>
    %571 = arith.addf %570, %506 : vector<12x64xf32>
    %cst_223 = arith.constant dense<0xFF800000> : vector<12xf32>
    %572 = vector.multi_reduction <maximumf>, %571, %cst_223 [1] : vector<12x64xf32> to vector<12xf32>
    %573 = vector.shape_cast %572 : vector<12xf32> to vector<12x1xf32>
    %574 = vector.broadcast %573 : vector<12x1xf32> to vector<12x64xf32>
    %575 = arith.subf %571, %574 : vector<12x64xf32>
    %576 = math.exp %575 : vector<12x64xf32>
    %cst_224 = arith.constant dense<0.000000e+00> : vector<12xf32>
    %577 = vector.multi_reduction <add>, %576, %cst_224 [1] : vector<12x64xf32> to vector<12xf32>
    %578 = vector.shape_cast %577 : vector<12xf32> to vector<12x1xf32>
    %579 = tpu.reciprocal %578 {approx = true} : vector<12x1xf32> -> vector<12x1xf32>
    %580 = vector.broadcast %579 : vector<12x1xf32> to vector<12x64xf32>
    %581 = arith.mulf %576, %580 : vector<12x64xf32>
    %582 = vector.extract_strided_slice %526 {offsets = [0, 16], sizes = [64, 8], strides = [1, 1]} : vector<64x32xf32> to vector<64x8xf32>
    %cst_225 = arith.constant dense<0.000000e+00> : vector<12x8xf32>
    %583 = tpu.matmul %581, %582, %cst_225 {dimension_numbers = #tpu.dot_dimension_numbers<[1], [0], [0], [1], [0, 0, 1, 1], [], []>} : vector<12x64xf32>, vector<64x8xf32>, vector<12x8xf32> -> vector<12x8xf32>
    %584 = vector.extract_strided_slice %513 {offsets = [0, 24], sizes = [12, 8], strides = [1, 1]} : vector<12x32xf32> to vector<12x8xf32>
    %585 = vector.extract_strided_slice %520 {offsets = [0, 24], sizes = [64, 8], strides = [1, 1]} : vector<64x32xf32> to vector<64x8xf32>
    %cst_226 = arith.constant dense<0.000000e+00> : vector<12x64xf32>
    %586 = tpu.matmul %584, %585, %cst_226 {dimension_numbers = #tpu.dot_dimension_numbers<[1], [1], [0], [0], [0, 0, 1, 0], [], []>} : vector<12x8xf32>, vector<64x8xf32>, vector<12x64xf32> -> vector<12x64xf32>
    %cst_227 = arith.constant 0.353553385 : f32
    %587 = vector.broadcast %cst_227 : f32 to vector<12x64xf32>
    %588 = arith.mulf %586, %587 : vector<12x64xf32>
    %589 = arith.addf %588, %506 : vector<12x64xf32>
    %cst_228 = arith.constant dense<0xFF800000> : vector<12xf32>
    %590 = vector.multi_reduction <maximumf>, %589, %cst_228 [1] : vector<12x64xf32> to vector<12xf32>
    %591 = vector.shape_cast %590 : vector<12xf32> to vector<12x1xf32>
    %592 = vector.broadcast %591 : vector<12x1xf32> to vector<12x64xf32>
    %593 = arith.subf %589, %592 : vector<12x64xf32>
    %594 = math.exp %593 : vector<12x64xf32>
    %cst_229 = arith.constant dense<0.000000e+00> : vector<12xf32>
    %595 = vector.multi_reduction <add>, %594, %cst_229 [1] : vector<12x64xf32> to vector<12xf32>
    %596 = vector.shape_cast %595 : vector<12xf32> to vector<12x1xf32>
    %597 = tpu.reciprocal %596 {approx = true} : vector<12x1xf32> -> vector<12x1xf32>
    %598 = vector.broadcast %597 : vector<12x1xf32> to vector<12x64xf32>
    %599 = arith.mulf %594, %598 : vector<12x64xf32>
    %600 = vector.extract_strided_slice %526 {offsets = [0, 24], sizes = [64, 8], strides = [1, 1]} : vector<64x32xf32> to vector<64x8xf32>
    %cst_230 = arith.constant dense<0.000000e+00> : vector<12x8xf32>
    %601 = tpu.matmul %599, %600, %cst_230 {dimension_numbers = #tpu.dot_dimension_numbers<[1], [0], [0], [1], [0, 0, 1, 1], [], []>} : vector<12x64xf32>, vector<64x8xf32>, vector<12x8xf32> -> vector<12x8xf32>
    %602 = tpu.concatenate %547, %565, %583, %601 in 1 : vector<12x8xf32>, vector<12x8xf32>, vector<12x8xf32>, vector<12x8xf32> -> vector<12x32xf32>
    %cst_231 = arith.constant dense<0.000000e+00> : vector<12x32xf32>
    %603 = tpu.matmul %602, %528, %cst_231 {dimension_numbers = #tpu.dot_dimension_numbers<[1], [0], [0], [1], [0, 0, 1, 1], [], []>} : vector<12x32xf32>, vector<32x32xf32>, vector<12x32xf32> -> vector<12x32xf32>
    %604 = vector.broadcast %529 : vector<1x32xf32> to vector<12x32xf32>
    %605 = arith.addf %603, %604 : vector<12x32xf32>
    %606 = arith.addf %409, %605 : vector<12x32xf32>
    %607 = vector.extract_strided_slice %495 {offsets = [0, 0], sizes = [1, 32], strides = [1, 1]} : vector<6x32xf32> to vector<1x32xf32>
    %608 = vector.extract_strided_slice %495 {offsets = [1, 0], sizes = [1, 32], strides = [1, 1]} : vector<6x32xf32> to vector<1x32xf32>
    %cst_232 = arith.constant dense<0.000000e+00> : vector<12xf32>
    %609 = vector.multi_reduction <add>, %606, %cst_232 [1] : vector<12x32xf32> to vector<12xf32>
    %610 = vector.shape_cast %609 : vector<12xf32> to vector<12x1xf32>
    %cst_233 = arith.constant 3.200000e+01 : f32
    %611 = vector.broadcast %cst_233 : f32 to vector<12x1xf32>
    %612 = arith.divf %610, %611 : vector<12x1xf32>
    %613 = vector.broadcast %612 : vector<12x1xf32> to vector<12x32xf32>
    %614 = arith.subf %606, %613 : vector<12x32xf32>
    %615 = arith.mulf %614, %614 : vector<12x32xf32>
    %cst_234 = arith.constant dense<0.000000e+00> : vector<12xf32>
    %616 = vector.multi_reduction <add>, %615, %cst_234 [1] : vector<12x32xf32> to vector<12xf32>
    %617 = vector.shape_cast %616 : vector<12xf32> to vector<12x1xf32>
    %cst_235 = arith.constant 3.200000e+01 : f32
    %618 = vector.broadcast %cst_235 : f32 to vector<12x1xf32>
    %619 = arith.divf %617, %618 : vector<12x1xf32>
    %620 = vector.broadcast %612 : vector<12x1xf32> to vector<12x32xf32>
    %621 = arith.subf %606, %620 : vector<12x32xf32>
    %cst_236 = arith.constant 9.99999974E-6 : f32
    %622 = vector.broadcast %cst_236 : f32 to vector<12x1xf32>
    %623 = arith.addf %619, %622 : vector<12x1xf32>
    %624 = math.rsqrt %623 : vector<12x1xf32>
    %625 = vector.broadcast %624 : vector<12x1xf32> to vector<12x32xf32>
    %626 = arith.mulf %621, %625 : vector<12x32xf32>
    %627 = vector.broadcast %607 : vector<1x32xf32> to vector<12x32xf32>
    %628 = arith.mulf %626, %627 : vector<12x32xf32>
    %629 = vector.broadcast %608 : vector<1x32xf32> to vector<12x32xf32>
    %630 = arith.addf %628, %629 : vector<12x32xf32>
    %631 = arith.addf %630, %23 : vector<12x32xf32>
    %c1_237 = arith.constant 1 : index
    %c0_238 = arith.constant 0 : index
    %c0_239 = arith.constant 0 : index
    %632 = vector.load %arg19[%c1_237, %c0_238, %c0_239] : memref<2x32x64xf32, #tpu.memory_space<vmem>>, vector<1x32x64xf32>
    %633 = vector.shape_cast %632 : vector<1x32x64xf32> to vector<32x64xf32>
    %cst_240 = arith.constant dense<0.000000e+00> : vector<12x64xf32>
    %634 = tpu.matmul %631, %633, %cst_240 {dimension_numbers = #tpu.dot_dimension_numbers<[1], [0], [0], [1], [0, 0, 1, 1], [], []>} : vector<12x32xf32>, vector<32x64xf32>, vector<12x64xf32> -> vector<12x64xf32>
    %c1_241 = arith.constant 1 : index
    %c0_242 = arith.constant 0 : index
    %c0_243 = arith.constant 0 : index
    %635 = vector.load %arg20[%c1_241, %c0_242, %c0_243] : memref<2x1x64xf32, #tpu.memory_space<vmem>>, vector<1x1x64xf32>
    %636 = vector.shape_cast %635 : vector<1x1x64xf32> to vector<1x64xf32>
    %637 = vector.broadcast %636 : vector<1x64xf32> to vector<12x64xf32>
    %638 = arith.addf %634, %637 : vector<12x64xf32>
    %c1_244 = arith.constant 1 : index
    %c0_245 = arith.constant 0 : index
    %c0_246 = arith.constant 0 : index
    %639 = vector.load %arg21[%c1_244, %c0_245, %c0_246] : memref<2x32x32xf32, #tpu.memory_space<vmem>>, vector<1x32x32xf32>
    %640 = vector.shape_cast %639 : vector<1x32x32xf32> to vector<32x32xf32>
    %cst_247 = arith.constant dense<0.000000e+00> : vector<12x32xf32>
    %641 = tpu.matmul %630, %640, %cst_247 {dimension_numbers = #tpu.dot_dimension_numbers<[1], [0], [0], [1], [0, 0, 1, 1], [], []>} : vector<12x32xf32>, vector<32x32xf32>, vector<12x32xf32> -> vector<12x32xf32>
    %c1_248 = arith.constant 1 : index
    %c0_249 = arith.constant 0 : index
    %c0_250 = arith.constant 0 : index
    %642 = vector.load %arg22[%c1_248, %c0_249, %c0_250] : memref<2x1x32xf32, #tpu.memory_space<vmem>>, vector<1x1x32xf32>
    %643 = vector.shape_cast %642 : vector<1x1x32xf32> to vector<1x32xf32>
    %644 = vector.broadcast %643 : vector<1x32xf32> to vector<12x32xf32>
    %645 = arith.addf %641, %644 : vector<12x32xf32>
    %646 = vector.extract_strided_slice %638 {offsets = [0, 0], sizes = [12, 32], strides = [1, 1]} : vector<12x64xf32> to vector<12x32xf32>
    %647 = vector.extract_strided_slice %638 {offsets = [0, 32], sizes = [12, 32], strides = [1, 1]} : vector<12x64xf32> to vector<12x32xf32>
    %c1_251 = arith.constant 1 : index
    %c0_252 = arith.constant 0 : index
    %c0_253 = arith.constant 0 : index
    %648 = vector.load %arg23[%c1_251, %c0_252, %c0_253] : memref<2x32x32xf32, #tpu.memory_space<vmem>>, vector<1x32x32xf32>
    %649 = vector.shape_cast %648 : vector<1x32x32xf32> to vector<32x32xf32>
    %c1_254 = arith.constant 1 : index
    %c0_255 = arith.constant 0 : index
    %c0_256 = arith.constant 0 : index
    %650 = vector.load %arg24[%c1_254, %c0_255, %c0_256] : memref<2x1x32xf32, #tpu.memory_space<vmem>>, vector<1x1x32xf32>
    %651 = vector.shape_cast %650 : vector<1x1x32xf32> to vector<1x32xf32>
    %652 = vector.extract_strided_slice %646 {offsets = [0, 0], sizes = [12, 8], strides = [1, 1]} : vector<12x32xf32> to vector<12x8xf32>
    %653 = vector.extract_strided_slice %647 {offsets = [0, 0], sizes = [12, 8], strides = [1, 1]} : vector<12x32xf32> to vector<12x8xf32>
    %cst_257 = arith.constant dense<0.000000e+00> : vector<12x12xf32>
    %654 = tpu.matmul %652, %653, %cst_257 {dimension_numbers = #tpu.dot_dimension_numbers<[1], [1], [0], [0], [0, 0, 1, 0], [], []>} : vector<12x8xf32>, vector<12x8xf32>, vector<12x12xf32> -> vector<12x12xf32>
    %cst_258 = arith.constant 0.353553385 : f32
    %655 = vector.broadcast %cst_258 : f32 to vector<12x12xf32>
    %656 = arith.mulf %654, %655 : vector<12x12xf32>
    %cst_259 = arith.constant dense<0xFF800000> : vector<12xf32>
    %657 = vector.multi_reduction <maximumf>, %656, %cst_259 [1] : vector<12x12xf32> to vector<12xf32>
    %658 = vector.shape_cast %657 : vector<12xf32> to vector<12x1xf32>
    %659 = vector.broadcast %658 : vector<12x1xf32> to vector<12x12xf32>
    %660 = arith.subf %656, %659 : vector<12x12xf32>
    %661 = math.exp %660 : vector<12x12xf32>
    %cst_260 = arith.constant dense<0.000000e+00> : vector<12xf32>
    %662 = vector.multi_reduction <add>, %661, %cst_260 [1] : vector<12x12xf32> to vector<12xf32>
    %663 = vector.shape_cast %662 : vector<12xf32> to vector<12x1xf32>
    %664 = tpu.reciprocal %663 {approx = true} : vector<12x1xf32> -> vector<12x1xf32>
    %665 = vector.broadcast %664 : vector<12x1xf32> to vector<12x12xf32>
    %666 = arith.mulf %661, %665 : vector<12x12xf32>
    %667 = vector.extract_strided_slice %645 {offsets = [0, 0], sizes = [12, 8], strides = [1, 1]} : vector<12x32xf32> to vector<12x8xf32>
    %cst_261 = arith.constant dense<0.000000e+00> : vector<12x8xf32>
    %668 = tpu.matmul %666, %667, %cst_261 {dimension_numbers = #tpu.dot_dimension_numbers<[1], [0], [0], [1], [0, 0, 1, 1], [], []>} : vector<12x12xf32>, vector<12x8xf32>, vector<12x8xf32> -> vector<12x8xf32>
    %669 = vector.extract_strided_slice %646 {offsets = [0, 8], sizes = [12, 8], strides = [1, 1]} : vector<12x32xf32> to vector<12x8xf32>
    %670 = vector.extract_strided_slice %647 {offsets = [0, 8], sizes = [12, 8], strides = [1, 1]} : vector<12x32xf32> to vector<12x8xf32>
    %cst_262 = arith.constant dense<0.000000e+00> : vector<12x12xf32>
    %671 = tpu.matmul %669, %670, %cst_262 {dimension_numbers = #tpu.dot_dimension_numbers<[1], [1], [0], [0], [0, 0, 1, 0], [], []>} : vector<12x8xf32>, vector<12x8xf32>, vector<12x12xf32> -> vector<12x12xf32>
    %cst_263 = arith.constant 0.353553385 : f32
    %672 = vector.broadcast %cst_263 : f32 to vector<12x12xf32>
    %673 = arith.mulf %671, %672 : vector<12x12xf32>
    %cst_264 = arith.constant dense<0xFF800000> : vector<12xf32>
    %674 = vector.multi_reduction <maximumf>, %673, %cst_264 [1] : vector<12x12xf32> to vector<12xf32>
    %675 = vector.shape_cast %674 : vector<12xf32> to vector<12x1xf32>
    %676 = vector.broadcast %675 : vector<12x1xf32> to vector<12x12xf32>
    %677 = arith.subf %673, %676 : vector<12x12xf32>
    %678 = math.exp %677 : vector<12x12xf32>
    %cst_265 = arith.constant dense<0.000000e+00> : vector<12xf32>
    %679 = vector.multi_reduction <add>, %678, %cst_265 [1] : vector<12x12xf32> to vector<12xf32>
    %680 = vector.shape_cast %679 : vector<12xf32> to vector<12x1xf32>
    %681 = tpu.reciprocal %680 {approx = true} : vector<12x1xf32> -> vector<12x1xf32>
    %682 = vector.broadcast %681 : vector<12x1xf32> to vector<12x12xf32>
    %683 = arith.mulf %678, %682 : vector<12x12xf32>
    %684 = vector.extract_strided_slice %645 {offsets = [0, 8], sizes = [12, 8], strides = [1, 1]} : vector<12x32xf32> to vector<12x8xf32>
    %cst_266 = arith.constant dense<0.000000e+00> : vector<12x8xf32>
    %685 = tpu.matmul %683, %684, %cst_266 {dimension_numbers = #tpu.dot_dimension_numbers<[1], [0], [0], [1], [0, 0, 1, 1], [], []>} : vector<12x12xf32>, vector<12x8xf32>, vector<12x8xf32> -> vector<12x8xf32>
    %686 = vector.extract_strided_slice %646 {offsets = [0, 16], sizes = [12, 8], strides = [1, 1]} : vector<12x32xf32> to vector<12x8xf32>
    %687 = vector.extract_strided_slice %647 {offsets = [0, 16], sizes = [12, 8], strides = [1, 1]} : vector<12x32xf32> to vector<12x8xf32>
    %cst_267 = arith.constant dense<0.000000e+00> : vector<12x12xf32>
    %688 = tpu.matmul %686, %687, %cst_267 {dimension_numbers = #tpu.dot_dimension_numbers<[1], [1], [0], [0], [0, 0, 1, 0], [], []>} : vector<12x8xf32>, vector<12x8xf32>, vector<12x12xf32> -> vector<12x12xf32>
    %cst_268 = arith.constant 0.353553385 : f32
    %689 = vector.broadcast %cst_268 : f32 to vector<12x12xf32>
    %690 = arith.mulf %688, %689 : vector<12x12xf32>
    %cst_269 = arith.constant dense<0xFF800000> : vector<12xf32>
    %691 = vector.multi_reduction <maximumf>, %690, %cst_269 [1] : vector<12x12xf32> to vector<12xf32>
    %692 = vector.shape_cast %691 : vector<12xf32> to vector<12x1xf32>
    %693 = vector.broadcast %692 : vector<12x1xf32> to vector<12x12xf32>
    %694 = arith.subf %690, %693 : vector<12x12xf32>
    %695 = math.exp %694 : vector<12x12xf32>
    %cst_270 = arith.constant dense<0.000000e+00> : vector<12xf32>
    %696 = vector.multi_reduction <add>, %695, %cst_270 [1] : vector<12x12xf32> to vector<12xf32>
    %697 = vector.shape_cast %696 : vector<12xf32> to vector<12x1xf32>
    %698 = tpu.reciprocal %697 {approx = true} : vector<12x1xf32> -> vector<12x1xf32>
    %699 = vector.broadcast %698 : vector<12x1xf32> to vector<12x12xf32>
    %700 = arith.mulf %695, %699 : vector<12x12xf32>
    %701 = vector.extract_strided_slice %645 {offsets = [0, 16], sizes = [12, 8], strides = [1, 1]} : vector<12x32xf32> to vector<12x8xf32>
    %cst_271 = arith.constant dense<0.000000e+00> : vector<12x8xf32>
    %702 = tpu.matmul %700, %701, %cst_271 {dimension_numbers = #tpu.dot_dimension_numbers<[1], [0], [0], [1], [0, 0, 1, 1], [], []>} : vector<12x12xf32>, vector<12x8xf32>, vector<12x8xf32> -> vector<12x8xf32>
    %703 = vector.extract_strided_slice %646 {offsets = [0, 24], sizes = [12, 8], strides = [1, 1]} : vector<12x32xf32> to vector<12x8xf32>
    %704 = vector.extract_strided_slice %647 {offsets = [0, 24], sizes = [12, 8], strides = [1, 1]} : vector<12x32xf32> to vector<12x8xf32>
    %cst_272 = arith.constant dense<0.000000e+00> : vector<12x12xf32>
    %705 = tpu.matmul %703, %704, %cst_272 {dimension_numbers = #tpu.dot_dimension_numbers<[1], [1], [0], [0], [0, 0, 1, 0], [], []>} : vector<12x8xf32>, vector<12x8xf32>, vector<12x12xf32> -> vector<12x12xf32>
    %cst_273 = arith.constant 0.353553385 : f32
    %706 = vector.broadcast %cst_273 : f32 to vector<12x12xf32>
    %707 = arith.mulf %705, %706 : vector<12x12xf32>
    %cst_274 = arith.constant dense<0xFF800000> : vector<12xf32>
    %708 = vector.multi_reduction <maximumf>, %707, %cst_274 [1] : vector<12x12xf32> to vector<12xf32>
    %709 = vector.shape_cast %708 : vector<12xf32> to vector<12x1xf32>
    %710 = vector.broadcast %709 : vector<12x1xf32> to vector<12x12xf32>
    %711 = arith.subf %707, %710 : vector<12x12xf32>
    %712 = math.exp %711 : vector<12x12xf32>
    %cst_275 = arith.constant dense<0.000000e+00> : vector<12xf32>
    %713 = vector.multi_reduction <add>, %712, %cst_275 [1] : vector<12x12xf32> to vector<12xf32>
    %714 = vector.shape_cast %713 : vector<12xf32> to vector<12x1xf32>
    %715 = tpu.reciprocal %714 {approx = true} : vector<12x1xf32> -> vector<12x1xf32>
    %716 = vector.broadcast %715 : vector<12x1xf32> to vector<12x12xf32>
    %717 = arith.mulf %712, %716 : vector<12x12xf32>
    %718 = vector.extract_strided_slice %645 {offsets = [0, 24], sizes = [12, 8], strides = [1, 1]} : vector<12x32xf32> to vector<12x8xf32>
    %cst_276 = arith.constant dense<0.000000e+00> : vector<12x8xf32>
    %719 = tpu.matmul %717, %718, %cst_276 {dimension_numbers = #tpu.dot_dimension_numbers<[1], [0], [0], [1], [0, 0, 1, 1], [], []>} : vector<12x12xf32>, vector<12x8xf32>, vector<12x8xf32> -> vector<12x8xf32>
    %720 = tpu.concatenate %668, %685, %702, %719 in 1 : vector<12x8xf32>, vector<12x8xf32>, vector<12x8xf32>, vector<12x8xf32> -> vector<12x32xf32>
    %cst_277 = arith.constant dense<0.000000e+00> : vector<12x32xf32>
    %721 = tpu.matmul %720, %649, %cst_277 {dimension_numbers = #tpu.dot_dimension_numbers<[1], [0], [0], [1], [0, 0, 1, 1], [], []>} : vector<12x32xf32>, vector<32x32xf32>, vector<12x32xf32> -> vector<12x32xf32>
    %722 = vector.broadcast %651 : vector<1x32xf32> to vector<12x32xf32>
    %723 = arith.addf %721, %722 : vector<12x32xf32>
    %724 = arith.addf %630, %723 : vector<12x32xf32>
    %725 = vector.extract_strided_slice %495 {offsets = [2, 0], sizes = [1, 32], strides = [1, 1]} : vector<6x32xf32> to vector<1x32xf32>
    %726 = vector.extract_strided_slice %495 {offsets = [3, 0], sizes = [1, 32], strides = [1, 1]} : vector<6x32xf32> to vector<1x32xf32>
    %cst_278 = arith.constant dense<0.000000e+00> : vector<12xf32>
    %727 = vector.multi_reduction <add>, %724, %cst_278 [1] : vector<12x32xf32> to vector<12xf32>
    %728 = vector.shape_cast %727 : vector<12xf32> to vector<12x1xf32>
    %cst_279 = arith.constant 3.200000e+01 : f32
    %729 = vector.broadcast %cst_279 : f32 to vector<12x1xf32>
    %730 = arith.divf %728, %729 : vector<12x1xf32>
    %731 = vector.broadcast %730 : vector<12x1xf32> to vector<12x32xf32>
    %732 = arith.subf %724, %731 : vector<12x32xf32>
    %733 = arith.mulf %732, %732 : vector<12x32xf32>
    %cst_280 = arith.constant dense<0.000000e+00> : vector<12xf32>
    %734 = vector.multi_reduction <add>, %733, %cst_280 [1] : vector<12x32xf32> to vector<12xf32>
    %735 = vector.shape_cast %734 : vector<12xf32> to vector<12x1xf32>
    %cst_281 = arith.constant 3.200000e+01 : f32
    %736 = vector.broadcast %cst_281 : f32 to vector<12x1xf32>
    %737 = arith.divf %735, %736 : vector<12x1xf32>
    %738 = vector.broadcast %730 : vector<12x1xf32> to vector<12x32xf32>
    %739 = arith.subf %724, %738 : vector<12x32xf32>
    %cst_282 = arith.constant 9.99999974E-6 : f32
    %740 = vector.broadcast %cst_282 : f32 to vector<12x1xf32>
    %741 = arith.addf %737, %740 : vector<12x1xf32>
    %742 = math.rsqrt %741 : vector<12x1xf32>
    %743 = vector.broadcast %742 : vector<12x1xf32> to vector<12x32xf32>
    %744 = arith.mulf %739, %743 : vector<12x32xf32>
    %745 = vector.broadcast %725 : vector<1x32xf32> to vector<12x32xf32>
    %746 = arith.mulf %744, %745 : vector<12x32xf32>
    %747 = vector.broadcast %726 : vector<1x32xf32> to vector<12x32xf32>
    %748 = arith.addf %746, %747 : vector<12x32xf32>
    %c1_283 = arith.constant 1 : index
    %c0_284 = arith.constant 0 : index
    %c0_285 = arith.constant 0 : index
    %749 = vector.load %arg25[%c1_283, %c0_284, %c0_285] : memref<2x32x64xf32, #tpu.memory_space<vmem>>, vector<1x32x64xf32>
    %750 = vector.shape_cast %749 : vector<1x32x64xf32> to vector<32x64xf32>
    %cst_286 = arith.constant dense<0.000000e+00> : vector<12x64xf32>
    %751 = tpu.matmul %748, %750, %cst_286 {dimension_numbers = #tpu.dot_dimension_numbers<[1], [0], [0], [1], [0, 0, 1, 1], [], []>} : vector<12x32xf32>, vector<32x64xf32>, vector<12x64xf32> -> vector<12x64xf32>
    %c1_287 = arith.constant 1 : index
    %c0_288 = arith.constant 0 : index
    %c0_289 = arith.constant 0 : index
    %752 = vector.load %arg26[%c1_287, %c0_288, %c0_289] : memref<2x1x64xf32, #tpu.memory_space<vmem>>, vector<1x1x64xf32>
    %753 = vector.shape_cast %752 : vector<1x1x64xf32> to vector<1x64xf32>
    %754 = vector.broadcast %753 : vector<1x64xf32> to vector<12x64xf32>
    %755 = arith.addf %751, %754 : vector<12x64xf32>
    %cst_290 = arith.constant 0.000000e+00 : f32
    %756 = vector.broadcast %cst_290 : f32 to vector<12x64xf32>
    %757 = arith.maximumf %755, %756 : vector<12x64xf32>
    %c1_291 = arith.constant 1 : index
    %c0_292 = arith.constant 0 : index
    %c0_293 = arith.constant 0 : index
    %758 = vector.load %arg27[%c1_291, %c0_292, %c0_293] : memref<2x64x32xf32, #tpu.memory_space<vmem>>, vector<1x64x32xf32>
    %759 = vector.shape_cast %758 : vector<1x64x32xf32> to vector<64x32xf32>
    %cst_294 = arith.constant dense<0.000000e+00> : vector<12x32xf32>
    %760 = tpu.matmul %757, %759, %cst_294 {dimension_numbers = #tpu.dot_dimension_numbers<[1], [0], [0], [1], [0, 0, 1, 1], [], []>} : vector<12x64xf32>, vector<64x32xf32>, vector<12x32xf32> -> vector<12x32xf32>
    %c1_295 = arith.constant 1 : index
    %c0_296 = arith.constant 0 : index
    %c0_297 = arith.constant 0 : index
    %761 = vector.load %arg28[%c1_295, %c0_296, %c0_297] : memref<2x1x32xf32, #tpu.memory_space<vmem>>, vector<1x1x32xf32>
    %762 = vector.shape_cast %761 : vector<1x1x32xf32> to vector<1x32xf32>
    %763 = vector.broadcast %762 : vector<1x32xf32> to vector<12x32xf32>
    %764 = arith.addf %760, %763 : vector<12x32xf32>
    %765 = arith.addf %748, %764 : vector<12x32xf32>
    %766 = vector.extract_strided_slice %495 {offsets = [4, 0], sizes = [1, 32], strides = [1, 1]} : vector<6x32xf32> to vector<1x32xf32>
    %767 = vector.extract_strided_slice %495 {offsets = [5, 0], sizes = [1, 32], strides = [1, 1]} : vector<6x32xf32> to vector<1x32xf32>
    %cst_298 = arith.constant dense<0.000000e+00> : vector<12xf32>
    %768 = vector.multi_reduction <add>, %765, %cst_298 [1] : vector<12x32xf32> to vector<12xf32>
    %769 = vector.shape_cast %768 : vector<12xf32> to vector<12x1xf32>
    %cst_299 = arith.constant 3.200000e+01 : f32
    %770 = vector.broadcast %cst_299 : f32 to vector<12x1xf32>
    %771 = arith.divf %769, %770 : vector<12x1xf32>
    %772 = vector.broadcast %771 : vector<12x1xf32> to vector<12x32xf32>
    %773 = arith.subf %765, %772 : vector<12x32xf32>
    %774 = arith.mulf %773, %773 : vector<12x32xf32>
    %cst_300 = arith.constant dense<0.000000e+00> : vector<12xf32>
    %775 = vector.multi_reduction <add>, %774, %cst_300 [1] : vector<12x32xf32> to vector<12xf32>
    %776 = vector.shape_cast %775 : vector<12xf32> to vector<12x1xf32>
    %cst_301 = arith.constant 3.200000e+01 : f32
    %777 = vector.broadcast %cst_301 : f32 to vector<12x1xf32>
    %778 = arith.divf %776, %777 : vector<12x1xf32>
    %779 = vector.broadcast %771 : vector<12x1xf32> to vector<12x32xf32>
    %780 = arith.subf %765, %779 : vector<12x32xf32>
    %cst_302 = arith.constant 9.99999974E-6 : f32
    %781 = vector.broadcast %cst_302 : f32 to vector<12x1xf32>
    %782 = arith.addf %778, %781 : vector<12x1xf32>
    %783 = math.rsqrt %782 : vector<12x1xf32>
    %784 = vector.broadcast %783 : vector<12x1xf32> to vector<12x32xf32>
    %785 = arith.mulf %780, %784 : vector<12x32xf32>
    %786 = vector.broadcast %766 : vector<1x32xf32> to vector<12x32xf32>
    %787 = arith.mulf %785, %786 : vector<12x32xf32>
    %788 = vector.broadcast %767 : vector<1x32xf32> to vector<12x32xf32>
    %789 = arith.addf %787, %788 : vector<12x32xf32>
    %790 = vector.extract_strided_slice %25 {offsets = [0, 0], sizes = [1, 32], strides = [1, 1]} : vector<2x32xf32> to vector<1x32xf32>
    %791 = vector.extract_strided_slice %25 {offsets = [1, 0], sizes = [1, 32], strides = [1, 1]} : vector<2x32xf32> to vector<1x32xf32>
    %cst_303 = arith.constant dense<0.000000e+00> : vector<12xf32>
    %792 = vector.multi_reduction <add>, %789, %cst_303 [1] : vector<12x32xf32> to vector<12xf32>
    %793 = vector.shape_cast %792 : vector<12xf32> to vector<12x1xf32>
    %cst_304 = arith.constant 3.200000e+01 : f32
    %794 = vector.broadcast %cst_304 : f32 to vector<12x1xf32>
    %795 = arith.divf %793, %794 : vector<12x1xf32>
    %796 = vector.broadcast %795 : vector<12x1xf32> to vector<12x32xf32>
    %797 = arith.subf %789, %796 : vector<12x32xf32>
    %798 = arith.mulf %797, %797 : vector<12x32xf32>
    %cst_305 = arith.constant dense<0.000000e+00> : vector<12xf32>
    %799 = vector.multi_reduction <add>, %798, %cst_305 [1] : vector<12x32xf32> to vector<12xf32>
    %800 = vector.shape_cast %799 : vector<12xf32> to vector<12x1xf32>
    %cst_306 = arith.constant 3.200000e+01 : f32
    %801 = vector.broadcast %cst_306 : f32 to vector<12x1xf32>
    %802 = arith.divf %800, %801 : vector<12x1xf32>
    %803 = vector.broadcast %795 : vector<12x1xf32> to vector<12x32xf32>
    %804 = arith.subf %789, %803 : vector<12x32xf32>
    %cst_307 = arith.constant 9.99999974E-6 : f32
    %805 = vector.broadcast %cst_307 : f32 to vector<12x1xf32>
    %806 = arith.addf %802, %805 : vector<12x1xf32>
    %807 = math.rsqrt %806 : vector<12x1xf32>
    %808 = vector.broadcast %807 : vector<12x1xf32> to vector<12x32xf32>
    %809 = arith.mulf %804, %808 : vector<12x32xf32>
    %810 = vector.broadcast %790 : vector<1x32xf32> to vector<12x32xf32>
    %811 = arith.mulf %809, %810 : vector<12x32xf32>
    %812 = vector.broadcast %791 : vector<1x32xf32> to vector<12x32xf32>
    %813 = arith.addf %811, %812 : vector<12x32xf32>
    %cst_308 = arith.constant dense<0.000000e+00> : vector<12x6xf32>
    %814 = tpu.matmul %813, %26, %cst_308 {dimension_numbers = #tpu.dot_dimension_numbers<[1], [0], [0], [1], [0, 0, 1, 1], [], []>} : vector<12x32xf32>, vector<32x6xf32>, vector<12x6xf32> -> vector<12x6xf32>
    %815 = vector.broadcast %27 : vector<1x6xf32> to vector<12x6xf32>
    %816 = arith.addf %814, %815 : vector<12x6xf32>
    %817 = vector.extract_strided_slice %28 {offsets = [0, 0, 0], sizes = [1, 32, 32], strides = [1, 1, 1]} : vector<3x32x32xf32> to vector<1x32x32xf32>
    %818 = vector.shape_cast %817 : vector<1x32x32xf32> to vector<32x32xf32>
    %cst_309 = arith.constant dense<0.000000e+00> : vector<12x32xf32>
    %819 = tpu.matmul %813, %818, %cst_309 {dimension_numbers = #tpu.dot_dimension_numbers<[1], [0], [0], [1], [0, 0, 1, 1], [], []>} : vector<12x32xf32>, vector<32x32xf32>, vector<12x32xf32> -> vector<12x32xf32>
    %820 = vector.extract_strided_slice %29 {offsets = [0, 0], sizes = [1, 32], strides = [1, 1]} : vector<3x32xf32> to vector<1x32xf32>
    %821 = vector.broadcast %820 : vector<1x32xf32> to vector<12x32xf32>
    %822 = arith.addf %819, %821 : vector<12x32xf32>
    %cst_310 = arith.constant 0.000000e+00 : f32
    %823 = vector.broadcast %cst_310 : f32 to vector<12x32xf32>
    %824 = arith.maximumf %822, %823 : vector<12x32xf32>
    %825 = vector.extract_strided_slice %28 {offsets = [1, 0, 0], sizes = [1, 32, 32], strides = [1, 1, 1]} : vector<3x32x32xf32> to vector<1x32x32xf32>
    %826 = vector.shape_cast %825 : vector<1x32x32xf32> to vector<32x32xf32>
    %cst_311 = arith.constant dense<0.000000e+00> : vector<12x32xf32>
    %827 = tpu.matmul %824, %826, %cst_311 {dimension_numbers = #tpu.dot_dimension_numbers<[1], [0], [0], [1], [0, 0, 1, 1], [], []>} : vector<12x32xf32>, vector<32x32xf32>, vector<12x32xf32> -> vector<12x32xf32>
    %828 = vector.extract_strided_slice %29 {offsets = [1, 0], sizes = [1, 32], strides = [1, 1]} : vector<3x32xf32> to vector<1x32xf32>
    %829 = vector.broadcast %828 : vector<1x32xf32> to vector<12x32xf32>
    %830 = arith.addf %827, %829 : vector<12x32xf32>
    %cst_312 = arith.constant 0.000000e+00 : f32
    %831 = vector.broadcast %cst_312 : f32 to vector<12x32xf32>
    %832 = arith.maximumf %830, %831 : vector<12x32xf32>
    %833 = vector.extract_strided_slice %28 {offsets = [2, 0, 0], sizes = [1, 32, 32], strides = [1, 1, 1]} : vector<3x32x32xf32> to vector<1x32x32xf32>
    %834 = vector.shape_cast %833 : vector<1x32x32xf32> to vector<32x32xf32>
    %cst_313 = arith.constant dense<0.000000e+00> : vector<12x32xf32>
    %835 = tpu.matmul %832, %834, %cst_313 {dimension_numbers = #tpu.dot_dimension_numbers<[1], [0], [0], [1], [0, 0, 1, 1], [], []>} : vector<12x32xf32>, vector<32x32xf32>, vector<12x32xf32> -> vector<12x32xf32>
    %836 = vector.extract_strided_slice %29 {offsets = [2, 0], sizes = [1, 32], strides = [1, 1]} : vector<3x32xf32> to vector<1x32xf32>
    %837 = vector.broadcast %836 : vector<1x32xf32> to vector<12x32xf32>
    %838 = arith.addf %835, %837 : vector<12x32xf32>
    %cst_314 = arith.constant dense<0.000000e+00> : vector<12x64xf32>
    %839 = tpu.matmul %838, %14, %cst_314 {dimension_numbers = #tpu.dot_dimension_numbers<[1], [1], [0], [0], [0, 0, 1, 0], [], []>} : vector<12x32xf32>, vector<64x32xf32>, vector<12x64xf32> -> vector<12x64xf32>
    %c2 = arith.constant 2 : index
    %c0_315 = arith.constant 0 : index
    %c0_316 = arith.constant 0 : index
    %840 = vector.load %arg30[%c2, %c0_315, %c0_316] : memref<3x12x64xf32, #tpu.memory_space<vmem>>, vector<1x12x64xf32>
    %841 = vector.shape_cast %840 : vector<1x12x64xf32> to vector<12x64xf32>
    %842 = vector.shape_cast %839 : vector<12x64xf32> to vector<1x12x64xf32>
    tpu.vector_store %arg30[%c2, %c0_315, %c0_316], %842 {strides = array<i32>} : memref<3x12x64xf32, #tpu.memory_space<vmem>>, vector<1x12x64xf32>,
    %843 = tpu.concatenate %789, %816 in 1 : vector<12x32xf32>, vector<12x6xf32> -> vector<12x38xf32>
    %c2_317 = arith.constant 2 : index
    %c0_318 = arith.constant 0 : index
    %c0_319 = arith.constant 0 : index
    %844 = vector.load %arg31[%c2_317, %c0_318, %c0_319] : memref<3x12x38xf32, #tpu.memory_space<vmem>>, vector<1x12x38xf32>
    %845 = vector.shape_cast %844 : vector<1x12x38xf32> to vector<12x38xf32>
    %846 = vector.shape_cast %843 : vector<12x38xf32> to vector<1x12x38xf32>
    tpu.vector_store %arg31[%c2_317, %c0_318, %c0_319], %846 {strides = array<i32>} : memref<3x12x38xf32, #tpu.memory_space<vmem>>, vector<1x12x38xf32>,
    return
  }
  func.func @transform_0(%arg0: i32) -> (i32, i32) {
    %c0_i32 = arith.constant 0 : i32
    %c0_i32_0 = arith.constant 0 : i32
    %c0_i32_1 = arith.constant 0 : i32
    return %c0_i32, %c0_i32_0 : i32, i32
  }
  func.func @transform_1(%arg0: i32) -> (i32, i32) {
    %c0_i32 = arith.constant 0 : i32
    %c0_i32_0 = arith.constant 0 : i32
    %c0_i32_1 = arith.constant 0 : i32
    return %c0_i32, %c0_i32_0 : i32, i32
  }
  func.func @transform_2(%arg0: i32) -> (i32, i32) {
    %c0_i32 = arith.constant 0 : i32
    %c0_i32_0 = arith.constant 0 : i32
    %c0_i32_1 = arith.constant 0 : i32
    return %c0_i32, %c0_i32_0 : i32, i32
  }
  func.func @transform_3(%arg0: i32) -> (i32, i32) {
    %c0_i32 = arith.constant 0 : i32
    %c0_i32_0 = arith.constant 0 : i32
    %c0_i32_1 = arith.constant 0 : i32
    return %c0_i32, %c0_i32_0 : i32, i32
  }
  func.func @transform_4(%arg0: i32) -> (i32, i32) {
    %c0_i32 = arith.constant 0 : i32
    %c0_i32_0 = arith.constant 0 : i32
    %c0_i32_1 = arith.constant 0 : i32
    return %c0_i32, %c0_i32_0 : i32, i32
  }
  func.func @transform_5(%arg0: i32) -> (i32, i32) {
    %c0_i32 = arith.constant 0 : i32
    %c0_i32_0 = arith.constant 0 : i32
    %c0_i32_1 = arith.constant 0 : i32
    return %c0_i32, %c0_i32_0 : i32, i32
  }
  func.func @transform_6(%arg0: i32) -> (i32, i32) {
    %c0_i32 = arith.constant 0 : i32
    %c0_i32_0 = arith.constant 0 : i32
    %c0_i32_1 = arith.constant 0 : i32
    return %c0_i32, %c0_i32_0 : i32, i32
  }
  func.func @transform_7(%arg0: i32) -> (i32, i32) {
    %c0_i32 = arith.constant 0 : i32
    %c0_i32_0 = arith.constant 0 : i32
    %c0_i32_1 = arith.constant 0 : i32
    return %c0_i32, %c0_i32_0 : i32, i32
  }
  func.func @transform_8(%arg0: i32) -> (i32, i32) {
    %c0_i32 = arith.constant 0 : i32
    %c0_i32_0 = arith.constant 0 : i32
    %c0_i32_1 = arith.constant 0 : i32
    return %c0_i32, %c0_i32_0 : i32, i32
  }
  func.func @transform_9(%arg0: i32) -> (i32, i32, i32) {
    %c0_i32 = arith.constant 0 : i32
    %c0_i32_0 = arith.constant 0 : i32
    %c0_i32_1 = arith.constant 0 : i32
    %c0_i32_2 = arith.constant 0 : i32
    return %c0_i32, %c0_i32_0, %c0_i32_1 : i32, i32, i32
  }
  func.func @transform_10(%arg0: i32) -> (i32, i32) {
    %c0_i32 = arith.constant 0 : i32
    %c0_i32_0 = arith.constant 0 : i32
    %c0_i32_1 = arith.constant 0 : i32
    return %c0_i32, %c0_i32_0 : i32, i32
  }
  func.func @transform_11(%arg0: i32) -> (i32, i32) {
    %c0_i32 = arith.constant 0 : i32
    %c0_i32_0 = arith.constant 0 : i32
    %c0_i32_1 = arith.constant 0 : i32
    return %c0_i32, %c0_i32_0 : i32, i32
  }
  func.func @transform_12(%arg0: i32) -> (i32, i32) {
    %c0_i32 = arith.constant 0 : i32
    %c0_i32_0 = arith.constant 0 : i32
    %c0_i32_1 = arith.constant 0 : i32
    return %c0_i32, %c0_i32_0 : i32, i32
  }
  func.func @transform_13(%arg0: i32) -> (i32, i32) {
    %c0_i32 = arith.constant 0 : i32
    %c0_i32_0 = arith.constant 0 : i32
    %c0_i32_1 = arith.constant 0 : i32
    return %c0_i32, %c0_i32_0 : i32, i32
  }
  func.func @transform_14(%arg0: i32) -> (i32, i32, i32) {
    %c0_i32 = arith.constant 0 : i32
    %c0_i32_0 = arith.constant 0 : i32
    %c0_i32_1 = arith.constant 0 : i32
    %c0_i32_2 = arith.constant 0 : i32
    return %c0_i32, %c0_i32_0, %c0_i32_1 : i32, i32, i32
  }
  func.func @transform_15(%arg0: i32) -> (i32, i32) {
    %c0_i32 = arith.constant 0 : i32
    %c0_i32_0 = arith.constant 0 : i32
    %c0_i32_1 = arith.constant 0 : i32
    return %c0_i32, %c0_i32_0 : i32, i32
  }
  func.func @transform_16(%arg0: i32) -> (i32, i32, i32, i32) {
    %c0_i32 = arith.constant 0 : i32
    %c0_i32_0 = arith.constant 0 : i32
    %c0_i32_1 = arith.constant 0 : i32
    %c0_i32_2 = arith.constant 0 : i32
    %c0_i32_3 = arith.constant 0 : i32
    return %c0_i32, %c0_i32_0, %c0_i32_1, %c0_i32_2 : i32, i32, i32, i32
  }
  func.func @transform_17(%arg0: i32) -> (i32, i32, i32) {
    %c0_i32 = arith.constant 0 : i32
    %c0_i32_0 = arith.constant 0 : i32
    %c0_i32_1 = arith.constant 0 : i32
    %c0_i32_2 = arith.constant 0 : i32
    return %c0_i32, %c0_i32_0, %c0_i32_1 : i32, i32, i32
  }
  func.func @transform_18(%arg0: i32) -> (i32, i32, i32) {
    %c0_i32 = arith.constant 0 : i32
    %c0_i32_0 = arith.constant 0 : i32
    %c0_i32_1 = arith.constant 0 : i32
    %c0_i32_2 = arith.constant 0 : i32
    return %c0_i32, %c0_i32_0, %c0_i32_1 : i32, i32, i32
  }
  func.func @transform_19(%arg0: i32) -> (i32, i32, i32) {
    %c0_i32 = arith.constant 0 : i32
    %c0_i32_0 = arith.constant 0 : i32
    %c0_i32_1 = arith.constant 0 : i32
    %c0_i32_2 = arith.constant 0 : i32
    return %c0_i32, %c0_i32_0, %c0_i32_1 : i32, i32, i32
  }
  func.func @transform_20(%arg0: i32) -> (i32, i32, i32) {
    %c0_i32 = arith.constant 0 : i32
    %c0_i32_0 = arith.constant 0 : i32
    %c0_i32_1 = arith.constant 0 : i32
    %c0_i32_2 = arith.constant 0 : i32
    return %c0_i32, %c0_i32_0, %c0_i32_1 : i32, i32, i32
  }
  func.func @transform_21(%arg0: i32) -> (i32, i32, i32) {
    %c0_i32 = arith.constant 0 : i32
    %c0_i32_0 = arith.constant 0 : i32
    %c0_i32_1 = arith.constant 0 : i32
    %c0_i32_2 = arith.constant 0 : i32
    return %c0_i32, %c0_i32_0, %c0_i32_1 : i32, i32, i32
  }
  func.func @transform_22(%arg0: i32) -> (i32, i32, i32) {
    %c0_i32 = arith.constant 0 : i32
    %c0_i32_0 = arith.constant 0 : i32
    %c0_i32_1 = arith.constant 0 : i32
    %c0_i32_2 = arith.constant 0 : i32
    return %c0_i32, %c0_i32_0, %c0_i32_1 : i32, i32, i32
  }
  func.func @transform_23(%arg0: i32) -> (i32, i32, i32) {
    %c0_i32 = arith.constant 0 : i32
    %c0_i32_0 = arith.constant 0 : i32
    %c0_i32_1 = arith.constant 0 : i32
    %c0_i32_2 = arith.constant 0 : i32
    return %c0_i32, %c0_i32_0, %c0_i32_1 : i32, i32, i32
  }
  func.func @transform_24(%arg0: i32) -> (i32, i32, i32) {
    %c0_i32 = arith.constant 0 : i32
    %c0_i32_0 = arith.constant 0 : i32
    %c0_i32_1 = arith.constant 0 : i32
    %c0_i32_2 = arith.constant 0 : i32
    return %c0_i32, %c0_i32_0, %c0_i32_1 : i32, i32, i32
  }
  func.func @transform_25(%arg0: i32) -> (i32, i32, i32) {
    %c0_i32 = arith.constant 0 : i32
    %c0_i32_0 = arith.constant 0 : i32
    %c0_i32_1 = arith.constant 0 : i32
    %c0_i32_2 = arith.constant 0 : i32
    return %c0_i32, %c0_i32_0, %c0_i32_1 : i32, i32, i32
  }
  func.func @transform_26(%arg0: i32) -> (i32, i32, i32) {
    %c0_i32 = arith.constant 0 : i32
    %c0_i32_0 = arith.constant 0 : i32
    %c0_i32_1 = arith.constant 0 : i32
    %c0_i32_2 = arith.constant 0 : i32
    return %c0_i32, %c0_i32_0, %c0_i32_1 : i32, i32, i32
  }
  func.func @transform_27(%arg0: i32) -> (i32, i32, i32) {
    %c0_i32 = arith.constant 0 : i32
    %c0_i32_0 = arith.constant 0 : i32
    %c0_i32_1 = arith.constant 0 : i32
    %c0_i32_2 = arith.constant 0 : i32
    return %c0_i32, %c0_i32_0, %c0_i32_1 : i32, i32, i32
  }
  func.func @transform_28(%arg0: i32) -> (i32, i32, i32) {
    %c0_i32 = arith.constant 0 : i32
    %c0_i32_0 = arith.constant 0 : i32
    %c0_i32_1 = arith.constant 0 : i32
    %c0_i32_2 = arith.constant 0 : i32
    return %c0_i32, %c0_i32_0, %c0_i32_1 : i32, i32, i32
  }
  func.func @transform_29(%arg0: i32) -> (i32, i32, i32) {
    %c0_i32 = arith.constant 0 : i32
    %c0_i32_0 = arith.constant 0 : i32
    %c0_i32_1 = arith.constant 0 : i32
    %c0_i32_2 = arith.constant 0 : i32
    return %c0_i32, %c0_i32_0, %c0_i32_1 : i32, i32, i32
  }
  func.func @transform_30(%arg0: i32) -> (i32, i32, i32) {
    %c0_i32 = arith.constant 0 : i32
    %c0_i32_0 = arith.constant 0 : i32
    %c0_i32_1 = arith.constant 0 : i32
    %c0_i32_2 = arith.constant 0 : i32
    return %c0_i32, %c0_i32_0, %c0_i32_1 : i32, i32, i32
  }
}

</mosaic_0001>

<llo_original>
// kernel: run.1
$region0: #{run.1}
  #allocation0 [shape = 'u32[]', space=smem, size = 0x4, offset = 0x4, fixed_abs, tag = 'smem constant byte address 0x4 - core index']
  #allocation1 [shape = 'u32[144,128]{1,0:T(1,128)}', space=vmem, size = 0x12000, scoped, tag = 'internal scratch']
  %s0 = inlined_call_operand.smem [shape: u32[31], index: -1, kind: input, shape index: {}]
  %s1 = sld [smem:[%s0]]
  %s2 = scalar_lea.smem %s0, 1
  %s3 = sld [smem:[%s2]]
  %s4 = scalar_lea.smem %s0, 2
  %s5 = sld [smem:[%s4]]
  %s6 = scalar_lea.smem %s0, 3
  %s7 = sld [smem:[%s6]]
  %s8 = scalar_lea.smem %s0, 4
  %s9 = sld [smem:[%s8]]
  %s10 = scalar_lea.smem %s0, 5
  %s11 = sld [smem:[%s10]]
  %s12 = scalar_lea.smem %s0, 6
  %s13 = sld [smem:[%s12]]
  %s14 = scalar_lea.smem %s0, 7
  %s15 = sld [smem:[%s14]]
  %s16 = scalar_lea.smem %s0, 8
  %s17 = sld [smem:[%s16]]
  %s18 = scalar_lea.smem %s0, 9
  %s19 = sld [smem:[%s18]]
  %s20 = scalar_lea.smem %s0, 10
  %s21 = sld [smem:[%s20]]
  %s22 = scalar_lea.smem %s0, 11
  %s23 = sld [smem:[%s22]]
  %s24 = scalar_lea.smem %s0, 12
  %s25 = sld [smem:[%s24]]
  %s26 = scalar_lea.smem %s0, 13
  %s27 = sld [smem:[%s26]]
  %s28 = scalar_lea.smem %s0, 14
  %s29 = sld [smem:[%s28]]
  %s30 = scalar_lea.smem %s0, 15
  %s31 = sld [smem:[%s30]]
  %s32 = scalar_lea.smem %s0, 16
  %s33 = sld [smem:[%s32]]
  %s34 = scalar_lea.smem %s0, 17
  %s35 = sld [smem:[%s34]]
  %s36 = scalar_lea.smem %s0, 18
  %s37 = sld [smem:[%s36]]
  %s38 = scalar_lea.smem %s0, 19
  %s39 = sld [smem:[%s38]]
  %s40 = scalar_lea.smem %s0, 20
  %s41 = sld [smem:[%s40]]
  %s42 = scalar_lea.smem %s0, 21
  %s43 = sld [smem:[%s42]]
  %s44 = scalar_lea.smem %s0, 22
  %s45 = sld [smem:[%s44]]
  %s46 = scalar_lea.smem %s0, 23
  %s47 = sld [smem:[%s46]]
  %s48 = scalar_lea.smem %s0, 24
  %s49 = sld [smem:[%s48]]
  %s50 = scalar_lea.smem %s0, 25
  %s51 = sld [smem:[%s50]]
  %s52 = scalar_lea.smem %s0, 26
  %s53 = sld [smem:[%s52]]
  %s54 = scalar_lea.smem %s0, 27
  %s55 = sld [smem:[%s54]]
  %s56 = scalar_lea.smem %s0, 28
  %s57 = sld [smem:[%s56]]
  %s58 = scalar_lea.smem %s0, 29
  %s59 = sld [smem:[%s58]]
  %s60 = scalar_lea.smem %s0, 30
  %s61 = sld [smem:[%s60]]
  %62 = xla_tuple %s59, %s61
  %s63 = sld [smem:[#allocation0]]
  $region190: #{run.1} parent=0
    _
  %s65 = ssub.s32 1, %s63
  %s66 = scalar_select 0, %s65, %s63
  $region1: #{run.1} parent=0
    #allocation2 [shape = 'u8[8192]{0}', space=vmem, size = 0x2000, scoped, tag = 'input window, operand 7, single buffered']
    #allocation3 [shape = 's32[1]{0}', space=sflag, size = 0x4, scoped, tag = 'scoped memory for run.1']
    #allocation4 [shape = 'u8[8192]{0}', space=vmem, size = 0x2000, scoped, tag = 'input window, operand 9, single buffered']
    #allocation5 [shape = 's32[1]{0}', space=sflag, size = 0x4, scoped, tag = 'scoped memory for run.1']
    #allocation6 [shape = 'u8[512]{0}', space=vmem, size = 0x400, scoped, tag = 'input window, operand 10, single buffered']
    #allocation7 [shape = 'u8[1024]{0}', space=vmem, size = 0x400, scoped, tag = 'input window, operand 11, single buffered']
    #allocation8 [shape = 's32[1]{0}', space=sflag, size = 0x4, scoped, tag = 'scoped memory for run.1']
    #allocation9 [shape = 'u8[512]{0}', space=vmem, size = 0x400, scoped, tag = 'input window, operand 13, single buffered']
    #allocation10 [shape = 'u8[2048]{0}', space=vmem, size = 0x800, scoped, tag = 'input window, operand 15, single buffered']
    #allocation11 [shape = 's32[1]{0}', space=sflag, size = 0x4, scoped, tag = 'scoped memory for run.1']
    #allocation12 [shape = 'u8[4096]{0}', space=vmem, size = 0x1000, scoped, tag = 'input window, operand 17, single buffered']
    #allocation13 [shape = 'u8[1024]{0}', space=vmem, size = 0x400, scoped, tag = 'input window, operand 19, single buffered']
    #allocation14 [shape = 's32[1]{0}', space=sflag, size = 0x4, scoped, tag = 'scoped memory for run.1']
    #allocation15 [shape = 'u8[1024]{0}', space=vmem, size = 0x400, scoped, tag = 'input window, operand 21, single buffered']
    #allocation16 [shape = 'u8[32768]{0}', space=vmem, size = 0x8000, scoped, tag = 'input window, operand 22, single buffered']
    #allocation17 [shape = 's32[1]{0}', space=sflag, size = 0x4, scoped, tag = 'scoped memory for run.1']
    #allocation18 [shape = 'u8[1024]{0}', space=vmem, size = 0x400, scoped, tag = 'input window, operand 23, single buffered']
    #allocation19 [shape = 'u8[32768]{0}', space=vmem, size = 0x8000, scoped, tag = 'input window, operand 24, single buffered']
    #allocation20 [shape = 's32[1]{0}', space=sflag, size = 0x4, scoped, tag = 'scoped memory for run.1']
    #allocation21 [shape = 'u8[1024]{0}', space=vmem, size = 0x400, scoped, tag = 'input window, operand 25, single buffered']
    #allocation22 [shape = 'u8[1024]{0}', space=vmem, size = 0x400, scoped, tag = 'input window, operand 27, single buffered']
    #allocation23 [shape = 's32[1]{0}', space=sflag, size = 0x4, scoped, tag = 'scoped memory for run.1']
    %67 = vsyncpa [#allocation3], 0
    %68 = vsyncpa [#allocation5], 0
    %69 = vsyncpa [#allocation8], 0
    %70 = vsyncpa [#allocation11], 0
    %71 = vsyncpa [#allocation14], 0
    %72 = vsyncpa [#allocation17], 0
    %73 = vsyncpa [#allocation20], 0
    %74 = vsyncpa [#allocation23], 0
    // Predicated region
    $region2: #{run.1} parent=1 // pred_check
      _
    $region3: #{run.1} parent=1 // pred_check_branch
      %76 = sbr.rel (0) target = $region5
    $region4: #{run.1} parent=1 // pred_region
      _
    $region5: #{run.1} parent=1 // pred_fallthru
      _
    // Predicated region
    $region6: #{run.1} parent=1 // pred_check
      _
    $region7: #{run.1} parent=1 // pred_check_branch
      %78 = sbr.rel (0) target = $region9
    $region8: #{run.1} parent=1 // pred_region
      _
    $region9: #{run.1} parent=1 // pred_fallthru
      _
    // Predicated region
    $region10: #{run.1} parent=1 // pred_check
      _
    $region11: #{run.1} parent=1 // pred_check_branch
      %80 = sbr.rel (0) target = $region13
    $region12: #{run.1} parent=1 // pred_region
      _
    $region13: #{run.1} parent=1 // pred_fallthru
      _
    // Predicated region
    $region14: #{run.1} parent=1 // pred_check
      _
    $region15: #{run.1} parent=1 // pred_check_branch
      %82 = sbr.rel (0) target = $region17
    $region16: #{run.1} parent=1 // pred_region
      _
    $region17: #{run.1} parent=1 // pred_fallthru
      _
    // Predicated region
    $region18: #{run.1} parent=1 // pred_check
      _
    $region19: #{run.1} parent=1 // pred_check_branch
      %84 = sbr.rel (0) target = $region21
    $region20: #{run.1} parent=1 // pred_region
      _
    $region21: #{run.1} parent=1 // pred_fallthru
      _
    // Predicated region
    $region22: #{run.1} parent=1 // pred_check
      _
    $region23: #{run.1} parent=1 // pred_check_branch
      %86 = sbr.rel (0) target = $region25
    $region24: #{run.1} parent=1 // pred_region
      _
    $region25: #{run.1} parent=1 // pred_fallthru
      _
    // Predicated region
    $region26: #{run.1} parent=1 // pred_check
      _
    $region27: #{run.1} parent=1 // pred_check_branch
      %88 = sbr.rel (0) target = $region29
    $region28: #{run.1} parent=1 // pred_region
      _
    $region29: #{run.1} parent=1 // pred_fallthru
      _
    // Predicated region
    $region30: #{run.1} parent=1 // pred_check
      _
    $region31: #{run.1} parent=1 // pred_check_branch
      %90 = sbr.rel (0) target = $region33
    $region32: #{run.1} parent=1 // pred_region
      %s92 = ssub.s32 256, 256
      %93 = vsyncadd [#allocation3], %s92
      %s94 = sshll.u32 [#allocation2], 4
      %s95 = int_to_ptr.vmem [resolvable:$true] %s94
      %100 = dma.hbm_to_vmem [thread:$0]  %s15, 256, %s95, [#allocation3], 128, 128, 8
    $region33: #{run.1} parent=1 // pred_fallthru
      _
    // Predicated region
    $region34: #{run.1} parent=1 // pred_check
      _
    $region35: #{run.1} parent=1 // pred_check_branch
      %102 = sbr.rel (0) target = $region37
    $region36: #{run.1} parent=1 // pred_region
      _
    $region37: #{run.1} parent=1 // pred_fallthru
      _
    // Predicated region
    $region38: #{run.1} parent=1 // pred_check
      _
    $region39: #{run.1} parent=1 // pred_check_branch
      %104 = sbr.rel (0) target = $region41
    $region40: #{run.1} parent=1 // pred_region
      %s106 = ssub.s32 256, 256
      %107 = vsyncadd [#allocation5], %s106
      %s108 = sshll.u32 [#allocation4], 4
      %s109 = int_to_ptr.vmem [resolvable:$true] %s108
      %114 = dma.hbm_to_vmem [thread:$0]  %s19, 256, %s109, [#allocation5], 128, 128, 8
    $region41: #{run.1} parent=1 // pred_fallthru
      _
    // Predicated region
    $region42: #{run.1} parent=1 // pred_check
      _
    $region43: #{run.1} parent=1 // pred_check_branch
      %116 = sbr.rel (0) target = $region45
    $region44: #{run.1} parent=1 // pred_region
      %s118 = ssub.s32 16, 16
      %119 = vsyncadd [#allocation5], %s118
      %s121 = sshll.u32 [#allocation6], 4
      %s122 = int_to_ptr.vmem [resolvable:$true] %s121
      %124 = dma.hbm_to_vmem [thread:$0]  %s21, 16, %s122, [#allocation5]
    $region45: #{run.1} parent=1 // pred_fallthru
      _
    // Predicated region
    $region46: #{run.1} parent=1 // pred_check
      _
    $region47: #{run.1} parent=1 // pred_check_branch
      %126 = sbr.rel (0) target = $region49
    $region48: #{run.1} parent=1 // pred_region
      %s128 = ssub.s32 32, 32
      %129 = vsyncadd [#allocation8], %s128
      %s131 = sshll.u32 [#allocation7], 4
      %s132 = int_to_ptr.vmem [resolvable:$true] %s131
      %134 = dma.hbm_to_vmem [thread:$0]  %s23, 32, %s132, [#allocation8]
    $region49: #{run.1} parent=1 // pred_fallthru
      _
    // Predicated region
    $region50: #{run.1} parent=1 // pred_check
      _
    $region51: #{run.1} parent=1 // pred_check_branch
      %136 = sbr.rel (0) target = $region53
    $region52: #{run.1} parent=1 // pred_region
      _
    $region53: #{run.1} parent=1 // pred_fallthru
      _
    // Predicated region
    $region54: #{run.1} parent=1 // pred_check
      _
    $region55: #{run.1} parent=1 // pred_check_branch
      %138 = sbr.rel (0) target = $region57
    $region56: #{run.1} parent=1 // pred_region
      %s140 = ssub.s32 16, 16
      %141 = vsyncadd [#allocation8], %s140
      %s143 = sshll.u32 [#allocation9], 4
      %s144 = int_to_ptr.vmem [resolvable:$true] %s143
      %146 = dma.hbm_to_vmem [thread:$0]  %s27, 16, %s144, [#allocation8]
    $region57: #{run.1} parent=1 // pred_fallthru
      _
    // Predicated region
    $region58: #{run.1} parent=1 // pred_check
      _
    $region59: #{run.1} parent=1 // pred_check_branch
      %148 = sbr.rel (0) target = $region61
    $region60: #{run.1} parent=1 // pred_region
      _
    $region61: #{run.1} parent=1 // pred_fallthru
      _
    // Predicated region
    $region62: #{run.1} parent=1 // pred_check
      _
    $region63: #{run.1} parent=1 // pred_check_branch
      %150 = sbr.rel (0) target = $region65
    $region64: #{run.1} parent=1 // pred_region
      %s152 = ssub.s32 64, 64
      %153 = vsyncadd [#allocation11], %s152
      %s155 = sshll.u32 [#allocation10], 4
      %s156 = int_to_ptr.vmem [resolvable:$true] %s155
      %158 = dma.hbm_to_vmem [thread:$0]  %s31, 64, %s156, [#allocation11]
    $region65: #{run.1} parent=1 // pred_fallthru
      _
    // Predicated region
    $region66: #{run.1} parent=1 // pred_check
      _
    $region67: #{run.1} parent=1 // pred_check_branch
      %160 = sbr.rel (0) target = $region69
    $region68: #{run.1} parent=1 // pred_region
      _
    $region69: #{run.1} parent=1 // pred_fallthru
      _
    // Predicated region
    $region70: #{run.1} parent=1 // pred_check
      _
    $region71: #{run.1} parent=1 // pred_check_branch
      %162 = sbr.rel (0) target = $region73
    $region72: #{run.1} parent=1 // pred_region
      %s164 = ssub.s32 128, 128
      %165 = vsyncadd [#allocation11], %s164
      %s166 = sshll.u32 [#allocation12], 4
      %s167 = int_to_ptr.vmem [resolvable:$true] %s166
      %172 = dma.hbm_to_vmem [thread:$0]  %s35, 128, %s167, [#allocation11], 64, 64, 4
    $region73: #{run.1} parent=1 // pred_fallthru
      _
    // Predicated region
    $region74: #{run.1} parent=1 // pred_check
      _
    $region75: #{run.1} parent=1 // pred_check_branch
      %174 = sbr.rel (0) target = $region77
    $region76: #{run.1} parent=1 // pred_region
      _
    $region77: #{run.1} parent=1 // pred_fallthru
      _
    // Predicated region
    $region78: #{run.1} parent=1 // pred_check
      _
    $region79: #{run.1} parent=1 // pred_check_branch
      %176 = sbr.rel (0) target = $region81
    $region80: #{run.1} parent=1 // pred_region
      %s178 = ssub.s32 32, 32
      %179 = vsyncadd [#allocation14], %s178
      %s180 = sshll.u32 [#allocation13], 4
      %s181 = int_to_ptr.vmem [resolvable:$true] %s180
      %186 = dma.hbm_to_vmem [thread:$0]  %s39, 32, %s181, [#allocation14], 16, 16, 1
    $region81: #{run.1} parent=1 // pred_fallthru
      _
    // Predicated region
    $region82: #{run.1} parent=1 // pred_check
      _
    $region83: #{run.1} parent=1 // pred_check_branch
      %188 = sbr.rel (0) target = $region85
    $region84: #{run.1} parent=1 // pred_region
      _
    $region85: #{run.1} parent=1 // pred_fallthru
      _
    // Predicated region
    $region86: #{run.1} parent=1 // pred_check
      _
    $region87: #{run.1} parent=1 // pred_check_branch
      %190 = sbr.rel (0) target = $region89
    $region88: #{run.1} parent=1 // pred_region
      %s192 = ssub.s32 32, 32
      %193 = vsyncadd [#allocation14], %s192
      %s194 = sshll.u32 [#allocation15], 4
      %s195 = int_to_ptr.vmem [resolvable:$true] %s194
      %200 = dma.hbm_to_vmem [thread:$0]  %s43, 32, %s195, [#allocation14], 16, 16, 1
    $region89: #{run.1} parent=1 // pred_fallthru
      _
    // Predicated region
    $region90: #{run.1} parent=1 // pred_check
      _
    $region91: #{run.1} parent=1 // pred_check_branch
      %202 = sbr.rel (0) target = $region93
    $region92: #{run.1} parent=1 // pred_region
      %s204 = ssub.s32 1024, 1024
      %205 = vsyncadd [#allocation17], %s204
      %s206 = sshll.u32 [#allocation16], 4
      %s207 = int_to_ptr.vmem [resolvable:$true] %s206
      %212 = dma.hbm_to_vmem [thread:$0]  %s45, 1024, %s207, [#allocation17], 128, 128, 8
    $region93: #{run.1} parent=1 // pred_fallthru
      _
    // Predicated region
    $region94: #{run.1} parent=1 // pred_check
      _
    $region95: #{run.1} parent=1 // pred_check_branch
      %214 = sbr.rel (0) target = $region97
    $region96: #{run.1} parent=1 // pred_region
      %s216 = ssub.s32 32, 32
      %217 = vsyncadd [#allocation17], %s216
      %s218 = sshll.u32 [#allocation18], 4
      %s219 = int_to_ptr.vmem [resolvable:$true] %s218
      %224 = dma.hbm_to_vmem [thread:$0]  %s47, 32, %s219, [#allocation17], 16, 16, 1
    $region97: #{run.1} parent=1 // pred_fallthru
      _
    // Predicated region
    $region98: #{run.1} parent=1 // pred_check
      _
    $region99: #{run.1} parent=1 // pred_check_branch
      %226 = sbr.rel (0) target = $region101
    $region100: #{run.1} parent=1 // pred_region
      %s228 = ssub.s32 1024, 1024
      %229 = vsyncadd [#allocation20], %s228
      %s230 = sshll.u32 [#allocation19], 4
      %s231 = int_to_ptr.vmem [resolvable:$true] %s230
      %236 = dma.hbm_to_vmem [thread:$0]  %s49, 1024, %s231, [#allocation20], 128, 128, 8
    $region101: #{run.1} parent=1 // pred_fallthru
      _
    // Predicated region
    $region102: #{run.1} parent=1 // pred_check
      _
    $region103: #{run.1} parent=1 // pred_check_branch
      %238 = sbr.rel (0) target = $region105
    $region104: #{run.1} parent=1 // pred_region
      %s240 = ssub.s32 32, 32
      %241 = vsyncadd [#allocation20], %s240
      %s242 = sshll.u32 [#allocation21], 4
      %s243 = int_to_ptr.vmem [resolvable:$true] %s242
      %248 = dma.hbm_to_vmem [thread:$0]  %s51, 32, %s243, [#allocation20], 16, 16, 1
    $region105: #{run.1} parent=1 // pred_fallthru
      _
    // Predicated region
    $region106: #{run.1} parent=1 // pred_check
      _
    $region107: #{run.1} parent=1 // pred_check_branch
      %250 = sbr.rel (0) target = $region109
    $region108: #{run.1} parent=1 // pred_region
      _
    $region109: #{run.1} parent=1 // pred_fallthru
      _
    // Predicated region
    $region110: #{run.1} parent=1 // pred_check
      _
    $region111: #{run.1} parent=1 // pred_check_branch
      %252 = sbr.rel (0) target = $region113
    $region112: #{run.1} parent=1 // pred_region
      %s254 = ssub.s32 32, 32
      %255 = vsyncadd [#allocation23], %s254
      %s256 = sshll.u32 [#allocation22], 4
      %s257 = int_to_ptr.vmem [resolvable:$true] %s256
      %262 = dma.hbm_to_vmem [thread:$0]  %s55, 32, %s257, [#allocation23], 16, 16, 1
    $region113: #{run.1} parent=1 // pred_fallthru
      _
    // Predicated region
    $region114: #{run.1} parent=1 // pred_check
      _
    $region115: #{run.1} parent=1 // pred_check_branch
      %264 = sbr.rel (0) target = $region117
    $region116: #{run.1} parent=1 // pred_region
      _
    $region117: #{run.1} parent=1 // pred_fallthru
      _
    // Predicated region
    $region118: #{run.1} parent=1 // pred_check
      _
    $region119: #{run.1} parent=1 // pred_check_branch
      %266 = sbr.rel (0) target = $region121
    $region120: #{run.1} parent=1 // pred_region
      %267 = dma.done [#allocation3], 256
    $region121: #{run.1} parent=1 // pred_fallthru
      _
    // Predicated region
    $region122: #{run.1} parent=1 // pred_check
      _
    $region123: #{run.1} parent=1 // pred_check_branch
      %269 = sbr.rel (0) target = $region125
    $region124: #{run.1} parent=1 // pred_region
      %270 = dma.done [#allocation5], 256
    $region125: #{run.1} parent=1 // pred_fallthru
      _
    // Predicated region
    $region126: #{run.1} parent=1 // pred_check
      _
    $region127: #{run.1} parent=1 // pred_check_branch
      %272 = sbr.rel (0) target = $region129
    $region128: #{run.1} parent=1 // pred_region
      %273 = dma.done [#allocation5], 16
    $region129: #{run.1} parent=1 // pred_fallthru
      _
    // Predicated region
    $region130: #{run.1} parent=1 // pred_check
      _
    $region131: #{run.1} parent=1 // pred_check_branch
      %275 = sbr.rel (0) target = $region133
    $region132: #{run.1} parent=1 // pred_region
      %276 = dma.done [#allocation8], 32
    $region133: #{run.1} parent=1 // pred_fallthru
      _
    // Predicated region
    $region134: #{run.1} parent=1 // pred_check
      _
    $region135: #{run.1} parent=1 // pred_check_branch
      %278 = sbr.rel (0) target = $region137
    $region136: #{run.1} parent=1 // pred_region
      %279 = dma.done [#allocation8], 16
    $region137: #{run.1} parent=1 // pred_fallthru
      _
    // Predicated region
    $region138: #{run.1} parent=1 // pred_check
      _
    $region139: #{run.1} parent=1 // pred_check_branch
      %281 = sbr.rel (0) target = $region141
    $region140: #{run.1} parent=1 // pred_region
      %282 = dma.done [#allocation11], 64
    $region141: #{run.1} parent=1 // pred_fallthru
      _
    // Predicated region
    $region142: #{run.1} parent=1 // pred_check
      _
    $region143: #{run.1} parent=1 // pred_check_branch
      %284 = sbr.rel (0) target = $region145
    $region144: #{run.1} parent=1 // pred_region
      %285 = dma.done [#allocation11], 128
    $region145: #{run.1} parent=1 // pred_fallthru
      _
    // Predicated region
    $region146: #{run.1} parent=1 // pred_check
      _
    $region147: #{run.1} parent=1 // pred_check_branch
      %287 = sbr.rel (0) target = $region149
    $region148: #{run.1} parent=1 // pred_region
      %288 = dma.done [#allocation14], 32
    $region149: #{run.1} parent=1 // pred_fallthru
      _
    // Predicated region
    $region150: #{run.1} parent=1 // pred_check
      _
    $region151: #{run.1} parent=1 // pred_check_branch
      %290 = sbr.rel (0) target = $region153
    $region152: #{run.1} parent=1 // pred_region
      %291 = dma.done [#allocation14], 32
    $region153: #{run.1} parent=1 // pred_fallthru
      _
    // Predicated region
    $region154: #{run.1} parent=1 // pred_check
      _
    $region155: #{run.1} parent=1 // pred_check_branch
      %293 = sbr.rel (0) target = $region157
    $region156: #{run.1} parent=1 // pred_region
      %294 = dma.done [#allocation17], 1024
    $region157: #{run.1} parent=1 // pred_fallthru
      _
    // Predicated region
    $region158: #{run.1} parent=1 // pred_check
      _
    $region159: #{run.1} parent=1 // pred_check_branch
      %296 = sbr.rel (0) target = $region161
    $region160: #{run.1} parent=1 // pred_region
      %297 = dma.done [#allocation17], 32
    $region161: #{run.1} parent=1 // pred_fallthru
      _
    // Predicated region
    $region162: #{run.1} parent=1 // pred_check
      _
    $region163: #{run.1} parent=1 // pred_check_branch
      %299 = sbr.rel (0) target = $region165
    $region164: #{run.1} parent=1 // pred_region
      %300 = dma.done [#allocation20], 1024
    $region165: #{run.1} parent=1 // pred_fallthru
      _
    // Predicated region
    $region166: #{run.1} parent=1 // pred_check
      _
    $region167: #{run.1} parent=1 // pred_check_branch
      %302 = sbr.rel (0) target = $region169
    $region168: #{run.1} parent=1 // pred_region
      %303 = dma.done [#allocation20], 32
    $region169: #{run.1} parent=1 // pred_fallthru
      _
    // Predicated region
    $region170: #{run.1} parent=1 // pred_check
      _
    $region171: #{run.1} parent=1 // pred_check_branch
      %305 = sbr.rel (0) target = $region173
    $region172: #{run.1} parent=1 // pred_region
      %306 = dma.done [#allocation23], 32
    $region173: #{run.1} parent=1 // pred_fallthru
      _
    %v307 = vld [vmem:[%s3] sm:$0xff]
    %v308 = vld [vmem:[%s3 + $0x8] sm:$0xff]
    %v309 = vld [vmem:[%s3 + $0x10] sm:$0xff]
    %v310 = vld [vmem:[%s3 + $0x18] sm:$0xff]
    %v311 = vld [vmem:[%s3 + $0x20] sm:$0xff]
    %v312 = vld [vmem:[%s3 + $0x28] sm:$0xff]
    %v313 = vld [vmem:[%s3 + $0x30] sm:$0xff]
    %v314 = vld [vmem:[%s3 + $0x38] sm:$0xff]
    %v315 = vld [vmem:[%s1] sm:$0xff]
    %v316 = vld [vmem:[%s1 + $0x8] sm:$0xff]
    %v317 = vld [vmem:[%s1 + $0x10] sm:$0xff]
    %v318 = vld [vmem:[%s1 + $0x18] sm:$0xff]
    %v319 = vld [vmem:[%s1 + $0x20] sm:$0xff]
    %v320 = vld [vmem:[%s1 + $0x28] sm:$0xff]
    %v321 = vld [vmem:[%s1 + $0x30] sm:$0xff]
    %v322 = vld [vmem:[%s1 + $0x38] sm:$0xff]
    %v323 = vld [vmem:[%s13] sm:$0x7]
    %vm324 = vcmask 23552
    %v326 = vsel %vm324, %v315, 0
    %v329 = vsel %vm324, %v316, 0
    %v332 = vsel %vm324, %v317, 0
    %v335 = vsel %vm324, %v318, 0
    %v338 = vsel %vm324, %v319, 0
    %v341 = vsel %vm324, %v320, 0
    %v344 = vsel %vm324, %v321, 0
    %v347 = vsel %vm324, %v322, 0
    %vm349 = vcmask 1042432
    %v351 = vsel %vm349, %v323, 0
    %353 = vmatprep.subr.mxu0 0.0
    %354 = vmatpush1.msra.mxu0 0.0
    %355 = vmatprep.subr.mxu0 0.0
    %356 = vmatpush1.msra.mxu0 0.0
    %357 = vmatprep.subr.mxu0 0.0
    %358 = vmatpush1.msra.mxu0 0.0
    %359 = vmatprep.subr.mxu0 0.0
    %360 = vmatpush1.msra.mxu0 0.0
    %361 = vmatprep.subr.mxu0 0.0
    %362 = vmatpush1.msra.mxu0 0.0
    %363 = vmatprep.subr.mxu0 0.0
    %364 = vmatpush1.msra.mxu0 0.0
    %365 = vmatprep.subr.mxu0 0.0
    %366 = vmatpush1.msra.mxu0 0.0
    %367 = vmatprep.subr.mxu0 0.0
    %368 = vmatpush1.msra.mxu0 0.0
    %369 = vmatprep.subr.mxu0 0.0
    %370 = vmatpush1.msra.mxu0 0.0
    %371 = vmatprep.subr.mxu0 0.0
    %372 = vmatpush1.msra.mxu0 0.0
    %373 = vmatprep.subr.mxu0 0.0
    %374 = vmatpush1.msra.mxu0 0.0
    %375 = vmatprep.subr.mxu0 0.0
    %376 = vmatpush1.msra.mxu0 0.0
    %377 = vmatprep.subr.mxu0 0.0
    %378 = vmatpush1.msra.mxu0 0.0
    %379 = vmatprep.subr.mxu0 0.0
    %380 = vmatpush1.msra.mxu0 0.0
    %381 = vmatprep.subr.mxu0 0.0
    %382 = vmatpush1.msra.mxu0 0.0
    %383 = vmatprep.subr.mxu0 0.0
    %384 = vmatpush1.msra.mxu0 %v351
    %385 = vmatprep.subr.mxu0 0.0
    %386 = vmatpush2.msra.mxu0 0.0
    %387 = vmatprep.subr.mxu0 0.0
    %388 = vmatpush2.msra.mxu0 0.0
    %389 = vmatprep.subr.mxu0 0.0
    %390 = vmatpush2.msra.mxu0 0.0
    %391 = vmatprep.subr.mxu0 0.0
    %392 = vmatpush2.msra.mxu0 0.0
    %393 = vmatprep.subr.mxu0 0.0
    %394 = vmatpush2.msra.mxu0 0.0
    %395 = vmatprep.subr.mxu0 0.0
    %396 = vmatpush2.msra.mxu0 0.0
    %397 = vmatprep.subr.mxu0 0.0
    %398 = vmatpush2.msra.mxu0 0.0
    %399 = vmatprep.subr.mxu0 0.0
    %400 = vmatpush2.msra.mxu0 0.0
    %401 = vmatprep.subr.mxu0 0.0
    %402 = vmatpush2.msra.mxu0 0.0
    %403 = vmatprep.subr.mxu0 0.0
    %404 = vmatpush2.msra.mxu0 0.0
    %405 = vmatprep.subr.mxu0 0.0
    %406 = vmatpush2.msra.mxu0 0.0
    %407 = vmatprep.subr.mxu0 0.0
    %408 = vmatpush2.msra.mxu0 0.0
    %409 = vmatprep.subr.mxu0 0.0
    %410 = vmatpush2.msra.mxu0 0.0
    %411 = vmatprep.subr.mxu0 0.0
    %412 = vmatpush2.msra.mxu0 0.0
    %413 = vmatprep.subr.mxu0 0.0
    %414 = vmatpush2.msra.mxu0 0.0
    %415 = vmatprep.subr.mxu0 0.0
    %416 = vmatpush2.msra.mxu0 0.0
    %417 = vmatprep.mubr.f32.mxu0 0.0
    %418 = vmatmul.mubr.f32.gmra.mxu0 %v326
    %v419 = vpop.f32.mrf.mxu0
    %v420 = vadd.f32 0.0, %v419
    %v421 = vpop.f32.mrf.mxu0
    %422 = vmatprep.mubr.f32.mxu0 0.0
    %423 = vmatmul.mubr.f32.gmra.mxu0 %v329
    %v424 = vpop.f32.mrf.mxu0
    %v425 = vadd.f32 0.0, %v424
    %v426 = vpop.f32.mrf.mxu0
    %427 = vmatprep.mubr.f32.mxu0 0.0
    %428 = vmatmul.mubr.f32.gmra.mxu0 %v332
    %v429 = vpop.f32.mrf.mxu0
    %v430 = vadd.f32 0.0, %v429
    %v431 = vpop.f32.mrf.mxu0
    %432 = vmatprep.mubr.f32.mxu0 0.0
    %433 = vmatmul.mubr.f32.gmra.mxu0 %v335
    %v434 = vpop.f32.mrf.mxu0
    %v435 = vadd.f32 0.0, %v434
    %v436 = vpop.f32.mrf.mxu0
    %437 = vmatprep.mubr.f32.mxu0 0.0
    %438 = vmatmul.mubr.f32.gmra.mxu0 %v338
    %v439 = vpop.f32.mrf.mxu0
    %v440 = vadd.f32 0.0, %v439
    %v441 = vpop.f32.mrf.mxu0
    %442 = vmatprep.mubr.f32.mxu0 0.0
    %443 = vmatmul.mubr.f32.gmra.mxu0 %v341
    %v444 = vpop.f32.mrf.mxu0
    %v445 = vadd.f32 0.0, %v444
    %v446 = vpop.f32.mrf.mxu0
    %447 = vmatprep.mubr.f32.mxu0 0.0
    %448 = vmatmul.mubr.f32.gmra.mxu0 %v344
    %v449 = vpop.f32.mrf.mxu0
    %v450 = vadd.f32 0.0, %v449
    %v451 = vpop.f32.mrf.mxu0
    %452 = vmatprep.mubr.f32.mxu0 0.0
    %453 = vmatmul.mubr.f32.gmra.mxu0 %v347
    %v454 = vpop.f32.mrf.mxu0
    %v455 = vadd.f32 0.0, %v454
    %v456 = vpop.f32.mrf.mxu0
    %457 = vdwg.mxu0
    %v458 = vmul.f32 %v420, 6.2831855
    %v459 = vmul.f32 %v425, 6.2831855
    %v460 = vmul.f32 %v430, 6.2831855
    %v461 = vmul.f32 %v435, 6.2831855
    %v462 = vmul.f32 %v440, 6.2831855
    %v463 = vmul.f32 %v445, 6.2831855
    %v464 = vmul.f32 %v450, 6.2831855
    %v465 = vmul.f32 %v455, 6.2831855
    %v466 = vand.u32 2147483647, %v458
    %vm467 = vcmp.le.f32.partialorder %v466, 0.7853982
    %vm468 = vcmp.lt.s32.totalorder %v458, 0
    %v469 = vand.u32 %v458, 2139095040
    %v470 = vshrl.u32 %v469, 23
    %v471 = vsub.s32 %v470, 127
    %v472 = vand.u32 2147483647, %v458
    %v473 = vand.u32 %v472, 8388607
    %v474 = vor.u32 %v473, 8388608
    %v475 = vsub.s32 0, %v474
    %v476 = vadd.s32 %v471, 1
    %vm477 = vcmp.gt.s32.totalorder %v476, 0
    %v478 = vsel %vm477, %v476, 0
    %v479 = vshrl.u32 %v478, 5
    %v480 = vand.u32 %v478, 31
    %v481 = vsub.s32 32, %v480
    %v482 = vshrl.u32 683565275, %v481
    %v483 = vshll.u32 683565275, %v480
    %v484 = vshrl.u32 2475754826, %v481
    %v485 = vor.u32 %v483, %v484
    %v486 = vshll.u32 2475754826, %v480
    %v487 = vshrl.u32 2131351028, %v481
    %v488 = vor.u32 %v486, %v487
    %v489 = vshll.u32 2131351028, %v480
    %v490 = vshrl.u32 2102212464, %v481
    %v491 = vor.u32 %v489, %v490
    %v492 = vshll.u32 2102212464, %v480
    %v493 = vshrl.u32 920167782, %v481
    %v494 = vor.u32 %v492, %v493
    %v495 = vshll.u32 920167782, %v480
    %v496 = vshrl.u32 1326507024, %v481
    %v497 = vor.u32 %v495, %v496
    %vm498 = vcmp.lt.s32.totalorder %v479, 1
    %vm499 = vcmp.lt.s32.totalorder %v479, 2
    %vm500 = vcmp.lt.s32.totalorder %v479, 3
    %vm501 = vcmp.lt.s32.totalorder %v479, 4
    %v502 = vsel %vm498, %v482, %v485
    %v503 = vsel %vm501, %v491, 2102212464
    %v504 = vsel %vm500, %v488, %v503
    %v505 = vsel %vm499, %v502, %v504
    %v506 = vsel %vm498, %v485, %v488
    %v507 = vsel %vm501, %v494, 920167782
    %v508 = vsel %vm500, %v491, %v507
    %v509 = vsel %vm499, %v506, %v508
    %v510 = vsel %vm498, %v488, %v491
    %v511 = vsel %vm501, %v497, 1326507024
    %v512 = vsel %vm500, %v494, %v511
    %v513 = vsel %vm499, %v510, %v512
    %v514 = vshll.u32 %v474, 8
    %v515 = vmul.u32.u64.compose %v514, %v513
    %v516 = vextract.low.u32 %v515
    %v517 = vextract.high.u32 %v515
    %v518 = vmul.u32.u64.compose %v514, %v509
    %v519 = vextract.low.u32 %v518
    %v520 = vextract.high.u32 %v518
    %v521 = vmul.u32 %v514, %v505
    %v522 = vadd.s32 %v517, %v519
    %vm523 = vc.u32 %v517, %v519
    %v524 = vadd.s32 %v520, 1
    %v525 = vsel %vm523, %v524, %v520
    %v526 = vadd.s32 %v521, %v525
    %v527 = vadd.s32 %v526, 536870912
    %v528 = vshrl.u32 %v527, 30
    %v529 = vshll.u32 %v528, 30
    %v530 = vsub.s32 %v526, %v529
    %vm531 = vcmp.lt.s32.totalorder %v530, 0
    %v532 = vsub.s32 0, %v530
    %v533 = vsel %vm531, %v532, %v530
    %v534 = vclz %v533
    %v535 = vsub.s32 %v534, 2
    %vm536 = vcmp.gt.s32.totalorder 0, %v535
    %v537 = vsel %vm536, 0, %v535
    %v538 = vsub.s32 32, %v537
    %v539 = vshll.u32 %v530, %v537
    %v540 = vshrl.u32 %v522, %v538
    %v541 = vor.u32 %v539, %v540
    %v542 = vsub.s32 4294967266, %v537
    %v543 = vadd.s32 %v542, 127
    %v544 = vshll.u32 %v543, 23
    %v545 = vor.u32 4788187, %v544
    %v546 = vand.u32 2147483647, %v545
    %v548 = vcvt.s32.f32 %v541
    %v549 = vmul.f32 %v548, %v546
    %v550 = vxor.u32 %v549, 2147483648
    %v551 = vsel %vm468, %v550, %v549
    %v552 = vsub.s32 4, %v528
    %v553 = vsel %vm468, %v552, %v528
    %v554 = vsel %vm467, %v458, %v551
    %v555 = vsel %vm467, 0, %v553
    %v556 = vcosq.f32.pop %v554
    %v557 = vsinq.f32.pop %v554
    %vm558 = vweird.f32 %v458
    %v559 = vadd.s32 %v555, 3
    %v560 = vand.u32 %v559, 3
    %vm561 = vcmp.lt.s32.totalorder %v560, 2
    %vm562 = vcmp.eq.s32.totalorder %v560, 0
    %v563 = vxor.u32 %v557, 2147483648
    %v564 = vsel %vm562, %v556, %v563
    %vm565 = vcmp.eq.s32.totalorder %v560, 2
    %v566 = vxor.u32 %v556, 2147483648
    %v567 = vsel %vm565, %v566, %v557
    %v568 = vsel %vm561, %v564, %v567
    %v569 = vsel %vm558, nan, %v568
    %v570 = vand.u32 2147483647, %v459
    %vm571 = vcmp.le.f32.partialorder %v570, 0.7853982
    %vm572 = vcmp.lt.s32.totalorder %v459, 0
    %v573 = vand.u32 %v459, 2139095040
    %v574 = vshrl.u32 %v573, 23
    %v575 = vsub.s32 %v574, 127
    %v576 = vand.u32 2147483647, %v459
    %v577 = vand.u32 %v576, 8388607
    %v578 = vor.u32 %v577, 8388608
    %v579 = vsub.s32 0, %v578
    %v580 = vadd.s32 %v575, 1
    %vm581 = vcmp.gt.s32.totalorder %v580, 0
    %v582 = vsel %vm581, %v580, 0
    %v583 = vshrl.u32 %v582, 5
    %v584 = vand.u32 %v582, 31
    %v585 = vsub.s32 32, %v584
    %v586 = vshrl.u32 683565275, %v585
    %v587 = vshll.u32 683565275, %v584
    %v588 = vshrl.u32 2475754826, %v585
    %v589 = vor.u32 %v587, %v588
    %v590 = vshll.u32 2475754826, %v584
    %v591 = vshrl.u32 2131351028, %v585
    %v592 = vor.u32 %v590, %v591
    %v593 = vshll.u32 2131351028, %v584
    %v594 = vshrl.u32 2102212464, %v585
    %v595 = vor.u32 %v593, %v594
    %v596 = vshll.u32 2102212464, %v584
    %v597 = vshrl.u32 920167782, %v585
    %v598 = vor.u32 %v596, %v597
    %v599 = vshll.u32 920167782, %v584
    %v600 = vshrl.u32 1326507024, %v585
    %v601 = vor.u32 %v599, %v600
    %vm602 = vcmp.lt.s32.totalorder %v583, 1
    %vm603 = vcmp.lt.s32.totalorder %v583, 2
    %vm604 = vcmp.lt.s32.totalorder %v583, 3
    %vm605 = vcmp.lt.s32.totalorder %v583, 4
    %v606 = vsel %vm602, %v586, %v589
    %v607 = vsel %vm605, %v595, 2102212464
    %v608 = vsel %vm604, %v592, %v607
    %v609 = vsel %vm603, %v606, %v608
    %v610 = vsel %vm602, %v589, %v592
    %v611 = vsel %vm605, %v598, 920167782
    %v612 = vsel %vm604, %v595, %v611
    %v613 = vsel %vm603, %v610, %v612
    %v614 = vsel %vm602, %v592, %v595
    %v615 = vsel %vm605, %v601, 1326507024
    %v616 = vsel %vm604, %v598, %v615
    %v617 = vsel %vm603, %v614, %v616
    %v618 = vshll.u32 %v578, 8
    %v619 = vmul.u32.u64.compose %v618, %v617
    %v620 = vextract.low.u32 %v619
    %v621 = vextract.high.u32 %v619
    %v622 = vmul.u32.u64.compose %v618, %v613
    %v623 = vextract.low.u32 %v622
    %v624 = vextract.high.u32 %v622
    %v625 = vmul.u32 %v618, %v609
    %v626 = vadd.s32 %v621, %v623
    %vm627 = vc.u32 %v621, %v623
    %v628 = vadd.s32 %v624, 1
    %v629 = vsel %vm627, %v628, %v624
    %v630 = vadd.s32 %v625, %v629
    %v631 = vadd.s32 %v630, 536870912
    %v632 = vshrl.u32 %v631, 30
    %v633 = vshll.u32 %v632, 30
    %v634 = vsub.s32 %v630, %v633
    %vm635 = vcmp.lt.s32.totalorder %v634, 0
    %v636 = vsub.s32 0, %v634
    %v637 = vsel %vm635, %v636, %v634
    %v638 = vclz %v637
    %v639 = vsub.s32 %v638, 2
    %vm640 = vcmp.gt.s32.totalorder 0, %v639
    %v641 = vsel %vm640, 0, %v639
    %v642 = vsub.s32 32, %v641
    %v643 = vshll.u32 %v634, %v641
    %v644 = vshrl.u32 %v626, %v642
    %v645 = vor.u32 %v643, %v644
    %v646 = vsub.s32 4294967266, %v641
    %v647 = vadd.s32 %v646, 127
    %v648 = vshll.u32 %v647, 23
    %v649 = vor.u32 4788187, %v648
    %v650 = vand.u32 2147483647, %v649
    %v652 = vcvt.s32.f32 %v645
    %v653 = vmul.f32 %v652, %v650
    %v654 = vxor.u32 %v653, 2147483648
    %v655 = vsel %vm572, %v654, %v653
    %v656 = vsub.s32 4, %v632
    %v657 = vsel %vm572, %v656, %v632
    %v658 = vsel %vm571, %v459, %v655
    %v659 = vsel %vm571, 0, %v657
    %v660 = vcosq.f32.pop %v658
    %v661 = vsinq.f32.pop %v658
    %vm662 = vweird.f32 %v459
    %v663 = vadd.s32 %v659, 3
    %v664 = vand.u32 %v663, 3
    %vm665 = vcmp.lt.s32.totalorder %v664, 2
    %vm666 = vcmp.eq.s32.totalorder %v664, 0
    %v667 = vxor.u32 %v661, 2147483648
    %v668 = vsel %vm666, %v660, %v667
    %vm669 = vcmp.eq.s32.totalorder %v664, 2
    %v670 = vxor.u32 %v660, 2147483648
    %v671 = vsel %vm669, %v670, %v661
    %v672 = vsel %vm665, %v668, %v671
    %v673 = vsel %vm662, nan, %v672
    %v674 = vand.u32 2147483647, %v460
    %vm675 = vcmp.le.f32.partialorder %v674, 0.7853982
    %vm676 = vcmp.lt.s32.totalorder %v460, 0
    %v677 = vand.u32 %v460, 2139095040
    %v678 = vshrl.u32 %v677, 23
    %v679 = vsub.s32 %v678, 127
    %v680 = vand.u32 2147483647, %v460
    %v681 = vand.u32 %v680, 8388607
    %v682 = vor.u32 %v681, 8388608
    %v683 = vsub.s32 0, %v682
    %v684 = vadd.s32 %v679, 1
    %vm685 = vcmp.gt.s32.totalorder %v684, 0
    %v686 = vsel %vm685, %v684, 0
    %v687 = vshrl.u32 %v686, 5
    %v688 = vand.u32 %v686, 31
    %v689 = vsub.s32 32, %v688
    %v690 = vshrl.u32 683565275, %v689
    %v691 = vshll.u32 683565275, %v688
    %v692 = vshrl.u32 2475754826, %v689
    %v693 = vor.u32 %v691, %v692
    %v694 = vshll.u32 2475754826, %v688
    %v695 = vshrl.u32 2131351028, %v689
    %v696 = vor.u32 %v694, %v695
    %v697 = vshll.u32 2131351028, %v688
    %v698 = vshrl.u32 2102212464, %v689
    %v699 = vor.u32 %v697, %v698
    %v700 = vshll.u32 2102212464, %v688
    %v701 = vshrl.u32 920167782, %v689
    %v702 = vor.u32 %v700, %v701
    %v703 = vshll.u32 920167782, %v688
    %v704 = vshrl.u32 1326507024, %v689
    %v705 = vor.u32 %v703, %v704
    %vm706 = vcmp.lt.s32.totalorder %v687, 1
    %vm707 = vcmp.lt.s32.totalorder %v687, 2
    %vm708 = vcmp.lt.s32.totalorder %v687, 3
    %vm709 = vcmp.lt.s32.totalorder %v687, 4
    %v710 = vsel %vm706, %v690, %v693
    %v711 = vsel %vm709, %v699, 2102212464
    %v712 = vsel %vm708, %v696, %v711
    %v713 = vsel %vm707, %v710, %v712
    %v714 = vsel %vm706, %v693, %v696
    %v715 = vsel %vm709, %v702, 920167782
    %v716 = vsel %vm708, %v699, %v715
    %v717 = vsel %vm707, %v714, %v716
    %v718 = vsel %vm706, %v696, %v699
    %v719 = vsel %vm709, %v705, 1326507024
    %v720 = vsel %vm708, %v702, %v719
    %v721 = vsel %vm707, %v718, %v720
    %v722 = vshll.u32 %v682, 8
    %v723 = vmul.u32.u64.compose %v722, %v721
    %v724 = vextract.low.u32 %v723
    %v725 = vextract.high.u32 %v723
    %v726 = vmul.u32.u64.compose %v722, %v717
    %v727 = vextract.low.u32 %v726
    %v728 = vextract.high.u32 %v726
    %v729 = vmul.u32 %v722, %v713
    %v730 = vadd.s32 %v725, %v727
    %vm731 = vc.u32 %v725, %v727
    %v732 = vadd.s32 %v728, 1
    %v733 = vsel %vm731, %v732, %v728
    %v734 = vadd.s32 %v729, %v733
    %v735 = vadd.s32 %v734, 536870912
    %v736 = vshrl.u32 %v735, 30
    %v737 = vshll.u32 %v736, 30
    %v738 = vsub.s32 %v734, %v737
    %vm739 = vcmp.lt.s32.totalorder %v738, 0
    %v740 = vsub.s32 0, %v738
    %v741 = vsel %vm739, %v740, %v738
    %v742 = vclz %v741
    %v743 = vsub.s32 %v742, 2
    %vm744 = vcmp.gt.s32.totalorder 0, %v743
    %v745 = vsel %vm744, 0, %v743
    %v746 = vsub.s32 32, %v745
    %v747 = vshll.u32 %v738, %v745
    %v748 = vshrl.u32 %v730, %v746
    %v749 = vor.u32 %v747, %v748
    %v750 = vsub.s32 4294967266, %v745
    %v751 = vadd.s32 %v750, 127
    %v752 = vshll.u32 %v751, 23
    %v753 = vor.u32 4788187, %v752
    %v754 = vand.u32 2147483647, %v753
    %v756 = vcvt.s32.f32 %v749
    %v757 = vmul.f32 %v756, %v754
    %v758 = vxor.u32 %v757, 2147483648
    %v759 = vsel %vm676, %v758, %v757
    %v760 = vsub.s32 4, %v736
    %v761 = vsel %vm676, %v760, %v736
    %v762 = vsel %vm675, %v460, %v759
    %v763 = vsel %vm675, 0, %v761
    %v764 = vcosq.f32.pop %v762
    %v765 = vsinq.f32.pop %v762
    %vm766 = vweird.f32 %v460
    %v767 = vadd.s32 %v763, 3
    %v768 = vand.u32 %v767, 3
    %vm769 = vcmp.lt.s32.totalorder %v768, 2
    %vm770 = vcmp.eq.s32.totalorder %v768, 0
    %v771 = vxor.u32 %v765, 2147483648
    %v772 = vsel %vm770, %v764, %v771
    %vm773 = vcmp.eq.s32.totalorder %v768, 2
    %v774 = vxor.u32 %v764, 2147483648
    %v775 = vsel %vm773, %v774, %v765
    %v776 = vsel %vm769, %v772, %v775
    %v777 = vsel %vm766, nan, %v776
    %v778 = vand.u32 2147483647, %v461
    %vm779 = vcmp.le.f32.partialorder %v778, 0.7853982
    %vm780 = vcmp.lt.s32.totalorder %v461, 0
    %v781 = vand.u32 %v461, 2139095040
    %v782 = vshrl.u32 %v781, 23
    %v783 = vsub.s32 %v782, 127
    %v784 = vand.u32 2147483647, %v461
    %v785 = vand.u32 %v784, 8388607
    %v786 = vor.u32 %v785, 8388608
    %v787 = vsub.s32 0, %v786
    %v788 = vadd.s32 %v783, 1
    %vm789 = vcmp.gt.s32.totalorder %v788, 0
    %v790 = vsel %vm789, %v788, 0
    %v791 = vshrl.u32 %v790, 5
    %v792 = vand.u32 %v790, 31
    %v793 = vsub.s32 32, %v792
    %v794 = vshrl.u32 683565275, %v793
    %v795 = vshll.u32 683565275, %v792
    %v796 = vshrl.u32 2475754826, %v793
    %v797 = vor.u32 %v795, %v796
    %v798 = vshll.u32 2475754826, %v792
    %v799 = vshrl.u32 2131351028, %v793
    %v800 = vor.u32 %v798, %v799
    %v801 = vshll.u32 2131351028, %v792
    %v802 = vshrl.u32 2102212464, %v793
    %v803 = vor.u32 %v801, %v802
    %v804 = vshll.u32 2102212464, %v792
    %v805 = vshrl.u32 920167782, %v793
    %v806 = vor.u32 %v804, %v805
    %v807 = vshll.u32 920167782, %v792
    %v808 = vshrl.u32 1326507024, %v793
    %v809 = vor.u32 %v807, %v808
    %vm810 = vcmp.lt.s32.totalorder %v791, 1
    %vm811 = vcmp.lt.s32.totalorder %v791, 2
    %vm812 = vcmp.lt.s32.totalorder %v791, 3
    %vm813 = vcmp.lt.s32.totalorder %v791, 4
    %v814 = vsel %vm810, %v794, %v797
    %v815 = vsel %vm813, %v803, 2102212464
    %v816 = vsel %vm812, %v800, %v815
    %v817 = vsel %vm811, %v814, %v816
    %v818 = vsel %vm810, %v797, %v800
    %v819 = vsel %vm813, %v806, 920167782
    %v820 = vsel %vm812, %v803, %v819
    %v821 = vsel %vm811, %v818, %v820
    %v822 = vsel %vm810, %v800, %v803
    %v823 = vsel %vm813, %v809, 1326507024
    %v824 = vsel %vm812, %v806, %v823
    %v825 = vsel %vm811, %v822, %v824
    %v826 = vshll.u32 %v786, 8
    %v827 = vmul.u32.u64.compose %v826, %v825
    %v828 = vextract.low.u32 %v827
    %v829 = vextract.high.u32 %v827
    %v830 = vmul.u32.u64.compose %v826, %v821
    %v831 = vextract.low.u32 %v830
    %v832 = vextract.high.u32 %v830
    %v833 = vmul.u32 %v826, %v817
    %v834 = vadd.s32 %v829, %v831
    %vm835 = vc.u32 %v829, %v831
    %v836 = vadd.s32 %v832, 1
    %v837 = vsel %vm835, %v836, %v832
    %v838 = vadd.s32 %v833, %v837
    %v839 = vadd.s32 %v838, 536870912
    %v840 = vshrl.u32 %v839, 30
    %v841 = vshll.u32 %v840, 30
    %v842 = vsub.s32 %v838, %v841
    %vm843 = vcmp.lt.s32.totalorder %v842, 0
    %v844 = vsub.s32 0, %v842
    %v845 = vsel %vm843, %v844, %v842
    %v846 = vclz %v845
    %v847 = vsub.s32 %v846, 2
    %vm848 = vcmp.gt.s32.totalorder 0, %v847
    %v849 = vsel %vm848, 0, %v847
    %v850 = vsub.s32 32, %v849
    %v851 = vshll.u32 %v842, %v849
    %v852 = vshrl.u32 %v834, %v850
    %v853 = vor.u32 %v851, %v852
    %v854 = vsub.s32 4294967266, %v849
    %v855 = vadd.s32 %v854, 127
    %v856 = vshll.u32 %v855, 23
    %v857 = vor.u32 4788187, %v856
    %v858 = vand.u32 2147483647, %v857
    %v860 = vcvt.s32.f32 %v853
    %v861 = vmul.f32 %v860, %v858
    %v862 = vxor.u32 %v861, 2147483648
    %v863 = vsel %vm780, %v862, %v861
    %v864 = vsub.s32 4, %v840
    %v865 = vsel %vm780, %v864, %v840
    %v866 = vsel %vm779, %v461, %v863
    %v867 = vsel %vm779, 0, %v865
    %v868 = vcosq.f32.pop %v866
    %v869 = vsinq.f32.pop %v866
    %vm870 = vweird.f32 %v461
    %v871 = vadd.s32 %v867, 3
    %v872 = vand.u32 %v871, 3
    %vm873 = vcmp.lt.s32.totalorder %v872, 2
    %vm874 = vcmp.eq.s32.totalorder %v872, 0
    %v875 = vxor.u32 %v869, 2147483648
    %v876 = vsel %vm874, %v868, %v875
    %vm877 = vcmp.eq.s32.totalorder %v872, 2
    %v878 = vxor.u32 %v868, 2147483648
    %v879 = vsel %vm877, %v878, %v869
    %v880 = vsel %vm873, %v876, %v879
    %v881 = vsel %vm870, nan, %v880
    %v882 = vand.u32 2147483647, %v462
    %vm883 = vcmp.le.f32.partialorder %v882, 0.7853982
    %vm884 = vcmp.lt.s32.totalorder %v462, 0
    %v885 = vand.u32 %v462, 2139095040
    %v886 = vshrl.u32 %v885, 23
    %v887 = vsub.s32 %v886, 127
    %v888 = vand.u32 2147483647, %v462
    %v889 = vand.u32 %v888, 8388607
    %v890 = vor.u32 %v889, 8388608
    %v891 = vsub.s32 0, %v890
    %v892 = vadd.s32 %v887, 1
    %vm893 = vcmp.gt.s32.totalorder %v892, 0
    %v894 = vsel %vm893, %v892, 0
    %v895 = vshrl.u32 %v894, 5
    %v896 = vand.u32 %v894, 31
    %v897 = vsub.s32 32, %v896
    %v898 = vshrl.u32 683565275, %v897
    %v899 = vshll.u32 683565275, %v896
    %v900 = vshrl.u32 2475754826, %v897
    %v901 = vor.u32 %v899, %v900
    %v902 = vshll.u32 2475754826, %v896
    %v903 = vshrl.u32 2131351028, %v897
    %v904 = vor.u32 %v902, %v903
    %v905 = vshll.u32 2131351028, %v896
    %v906 = vshrl.u32 2102212464, %v897
    %v907 = vor.u32 %v905, %v906
    %v908 = vshll.u32 2102212464, %v896
    %v909 = vshrl.u32 920167782, %v897
    %v910 = vor.u32 %v908, %v909
    %v911 = vshll.u32 920167782, %v896
    %v912 = vshrl.u32 1326507024, %v897
    %v913 = vor.u32 %v911, %v912
    %vm914 = vcmp.lt.s32.totalorder %v895, 1
    %vm915 = vcmp.lt.s32.totalorder %v895, 2
    %vm916 = vcmp.lt.s32.totalorder %v895, 3
    %vm917 = vcmp.lt.s32.totalorder %v895, 4
    %v918 = vsel %vm914, %v898, %v901
    %v919 = vsel %vm917, %v907, 2102212464
    %v920 = vsel %vm916, %v904, %v919
    %v921 = vsel %vm915, %v918, %v920
    %v922 = vsel %vm914, %v901, %v904
    %v923 = vsel %vm917, %v910, 920167782
    %v924 = vsel %vm916, %v907, %v923
    %v925 = vsel %vm915, %v922, %v924
    %v926 = vsel %vm914, %v904, %v907
    %v927 = vsel %vm917, %v913, 1326507024
    %v928 = vsel %vm916, %v910, %v927
    %v929 = vsel %vm915, %v926, %v928
    %v930 = vshll.u32 %v890, 8
    %v931 = vmul.u32.u64.compose %v930, %v929
    %v932 = vextract.low.u32 %v931
    %v933 = vextract.high.u32 %v931
    %v934 = vmul.u32.u64.compose %v930, %v925
    %v935 = vextract.low.u32 %v934
    %v936 = vextract.high.u32 %v934
    %v937 = vmul.u32 %v930, %v921
    %v938 = vadd.s32 %v933, %v935
    %vm939 = vc.u32 %v933, %v935
    %v940 = vadd.s32 %v936, 1
    %v941 = vsel %vm939, %v940, %v936
    %v942 = vadd.s32 %v937, %v941
    %v943 = vadd.s32 %v942, 536870912
    %v944 = vshrl.u32 %v943, 30
    %v945 = vshll.u32 %v944, 30
    %v946 = vsub.s32 %v942, %v945
    %vm947 = vcmp.lt.s32.totalorder %v946, 0
    %v948 = vsub.s32 0, %v946
    %v949 = vsel %vm947, %v948, %v946
    %v950 = vclz %v949
    %v951 = vsub.s32 %v950, 2
    %vm952 = vcmp.gt.s32.totalorder 0, %v951
    %v953 = vsel %vm952, 0, %v951
    %v954 = vsub.s32 32, %v953
    %v955 = vshll.u32 %v946, %v953
    %v956 = vshrl.u32 %v938, %v954
    %v957 = vor.u32 %v955, %v956
    %v958 = vsub.s32 4294967266, %v953
    %v959 = vadd.s32 %v958, 127
    %v960 = vshll.u32 %v959, 23
    %v961 = vor.u32 4788187, %v960
    %v962 = vand.u32 2147483647, %v961
    %v964 = vcvt.s32.f32 %v957
    %v965 = vmul.f32 %v964, %v962
    %v966 = vxor.u32 %v965, 2147483648
    %v967 = vsel %vm884, %v966, %v965
    %v968 = vsub.s32 4, %v944
    %v969 = vsel %vm884, %v968, %v944
    %v970 = vsel %vm883, %v462, %v967
    %v971 = vsel %vm883, 0, %v969
    %v972 = vcosq.f32.pop %v970
    %v973 = vsinq.f32.pop %v970
    %vm974 = vweird.f32 %v462
    %v975 = vadd.s32 %v971, 3
    %v976 = vand.u32 %v975, 3
    %vm977 = vcmp.lt.s32.totalorder %v976, 2
    %vm978 = vcmp.eq.s32.totalorder %v976, 0
    %v979 = vxor.u32 %v973, 2147483648
    %v980 = vsel %vm978, %v972, %v979
    %vm981 = vcmp.eq.s32.totalorder %v976, 2
    %v982 = vxor.u32 %v972, 2147483648
    %v983 = vsel %vm981, %v982, %v973
    %v984 = vsel %vm977, %v980, %v983
    %v985 = vsel %vm974, nan, %v984
    %v986 = vand.u32 2147483647, %v463
    %vm987 = vcmp.le.f32.partialorder %v986, 0.7853982
    %vm988 = vcmp.lt.s32.totalorder %v463, 0
    %v989 = vand.u32 %v463, 2139095040
    %v990 = vshrl.u32 %v989, 23
    %v991 = vsub.s32 %v990, 127
    %v992 = vand.u32 2147483647, %v463
    %v993 = vand.u32 %v992, 8388607
    %v994 = vor.u32 %v993, 8388608
    %v995 = vsub.s32 0, %v994
    %v996 = vadd.s32 %v991, 1
    %vm997 = vcmp.gt.s32.totalorder %v996, 0
    %v998 = vsel %vm997, %v996, 0
    %v999 = vshrl.u32 %v998, 5
    %v1000 = vand.u32 %v998, 31
    %v1001 = vsub.s32 32, %v1000
    %v1002 = vshrl.u32 683565275, %v1001
    %v1003 = vshll.u32 683565275, %v1000
    %v1004 = vshrl.u32 2475754826, %v1001
    %v1005 = vor.u32 %v1003, %v1004
    %v1006 = vshll.u32 2475754826, %v1000
    %v1007 = vshrl.u32 2131351028, %v1001
    %v1008 = vor.u32 %v1006, %v1007
    %v1009 = vshll.u32 2131351028, %v1000
    %v1010 = vshrl.u32 2102212464, %v1001
    %v1011 = vor.u32 %v1009, %v1010
    %v1012 = vshll.u32 2102212464, %v1000
    %v1013 = vshrl.u32 920167782, %v1001
    %v1014 = vor.u32 %v1012, %v1013
    %v1015 = vshll.u32 920167782, %v1000
    %v1016 = vshrl.u32 1326507024, %v1001
    %v1017 = vor.u32 %v1015, %v1016
    %vm1018 = vcmp.lt.s32.totalorder %v999, 1
    %vm1019 = vcmp.lt.s32.totalorder %v999, 2
    %vm1020 = vcmp.lt.s32.totalorder %v999, 3
    %vm1021 = vcmp.lt.s32.totalorder %v999, 4
    %v1022 = vsel %vm1018, %v1002, %v1005
    %v1023 = vsel %vm1021, %v1011, 2102212464
    %v1024 = vsel %vm1020, %v1008, %v1023
    %v1025 = vsel %vm1019, %v1022, %v1024
    %v1026 = vsel %vm1018, %v1005, %v1008
    %v1027 = vsel %vm1021, %v1014, 920167782
    %v1028 = vsel %vm1020, %v1011, %v1027
    %v1029 = vsel %vm1019, %v1026, %v1028
    %v1030 = vsel %vm1018, %v1008, %v1011
    %v1031 = vsel %vm1021, %v1017, 1326507024
    %v1032 = vsel %vm1020, %v1014, %v1031
    %v1033 = vsel %vm1019, %v1030, %v1032
    %v1034 = vshll.u32 %v994, 8
    %v1035 = vmul.u32.u64.compose %v1034, %v1033
    %v1036 = vextract.low.u32 %v1035
    %v1037 = vextract.high.u32 %v1035
    %v1038 = vmul.u32.u64.compose %v1034, %v1029
    %v1039 = vextract.low.u32 %v1038
    %v1040 = vextract.high.u32 %v1038
    %v1041 = vmul.u32 %v1034, %v1025
    %v1042 = vadd.s32 %v1037, %v1039
    %vm1043 = vc.u32 %v1037, %v1039
    %v1044 = vadd.s32 %v1040, 1
    %v1045 = vsel %vm1043, %v1044, %v1040
    %v1046 = vadd.s32 %v1041, %v1045
    %v1047 = vadd.s32 %v1046, 536870912
    %v1048 = vshrl.u32 %v1047, 30
    %v1049 = vshll.u32 %v1048, 30
    %v1050 = vsub.s32 %v1046, %v1049
    %vm1051 = vcmp.lt.s32.totalorder %v1050, 0
    %v1052 = vsub.s32 0, %v1050
    %v1053 = vsel %vm1051, %v1052, %v1050
    %v1054 = vclz %v1053
    %v1055 = vsub.s32 %v1054, 2
    %vm1056 = vcmp.gt.s32.totalorder 0, %v1055
    %v1057 = vsel %vm1056, 0, %v1055
    %v1058 = vsub.s32 32, %v1057
    %v1059 = vshll.u32 %v1050, %v1057
    %v1060 = vshrl.u32 %v1042, %v1058
    %v1061 = vor.u32 %v1059, %v1060
    %v1062 = vsub.s32 4294967266, %v1057
    %v1063 = vadd.s32 %v1062, 127
    %v1064 = vshll.u32 %v1063, 23
    %v1065 = vor.u32 4788187, %v1064
    %v1066 = vand.u32 2147483647, %v1065
    %v1068 = vcvt.s32.f32 %v1061
    %v1069 = vmul.f32 %v1068, %v1066
    %v1070 = vxor.u32 %v1069, 2147483648
    %v1071 = vsel %vm988, %v1070, %v1069
    %v1072 = vsub.s32 4, %v1048
    %v1073 = vsel %vm988, %v1072, %v1048
    %v1074 = vsel %vm987, %v463, %v1071
    %v1075 = vsel %vm987, 0, %v1073
    %v1076 = vcosq.f32.pop %v1074
    %v1077 = vsinq.f32.pop %v1074
    %vm1078 = vweird.f32 %v463
    %v1079 = vadd.s32 %v1075, 3
    %v1080 = vand.u32 %v1079, 3
    %vm1081 = vcmp.lt.s32.totalorder %v1080, 2
    %vm1082 = vcmp.eq.s32.totalorder %v1080, 0
    %v1083 = vxor.u32 %v1077, 2147483648
    %v1084 = vsel %vm1082, %v1076, %v1083
    %vm1085 = vcmp.eq.s32.totalorder %v1080, 2
    %v1086 = vxor.u32 %v1076, 2147483648
    %v1087 = vsel %vm1085, %v1086, %v1077
    %v1088 = vsel %vm1081, %v1084, %v1087
    %v1089 = vsel %vm1078, nan, %v1088
    %v1090 = vand.u32 2147483647, %v464
    %vm1091 = vcmp.le.f32.partialorder %v1090, 0.7853982
    %vm1092 = vcmp.lt.s32.totalorder %v464, 0
    %v1093 = vand.u32 %v464, 2139095040
    %v1094 = vshrl.u32 %v1093, 23
    %v1095 = vsub.s32 %v1094, 127
    %v1096 = vand.u32 2147483647, %v464
    %v1097 = vand.u32 %v1096, 8388607
    %v1098 = vor.u32 %v1097, 8388608
    %v1099 = vsub.s32 0, %v1098
    %v1100 = vadd.s32 %v1095, 1
    %vm1101 = vcmp.gt.s32.totalorder %v1100, 0
    %v1102 = vsel %vm1101, %v1100, 0
    %v1103 = vshrl.u32 %v1102, 5
    %v1104 = vand.u32 %v1102, 31
    %v1105 = vsub.s32 32, %v1104
    %v1106 = vshrl.u32 683565275, %v1105
    %v1107 = vshll.u32 683565275, %v1104
    %v1108 = vshrl.u32 2475754826, %v1105
    %v1109 = vor.u32 %v1107, %v1108
    %v1110 = vshll.u32 2475754826, %v1104
    %v1111 = vshrl.u32 2131351028, %v1105
    %v1112 = vor.u32 %v1110, %v1111
    %v1113 = vshll.u32 2131351028, %v1104
    %v1114 = vshrl.u32 2102212464, %v1105
    %v1115 = vor.u32 %v1113, %v1114
    %v1116 = vshll.u32 2102212464, %v1104
    %v1117 = vshrl.u32 920167782, %v1105
    %v1118 = vor.u32 %v1116, %v1117
    %v1119 = vshll.u32 920167782, %v1104
    %v1120 = vshrl.u32 1326507024, %v1105
    %v1121 = vor.u32 %v1119, %v1120
    %vm1122 = vcmp.lt.s32.totalorder %v1103, 1
    %vm1123 = vcmp.lt.s32.totalorder %v1103, 2
    %vm1124 = vcmp.lt.s32.totalorder %v1103, 3
    %vm1125 = vcmp.lt.s32.totalorder %v1103, 4
    %v1126 = vsel %vm1122, %v1106, %v1109
    %v1127 = vsel %vm1125, %v1115, 2102212464
    %v1128 = vsel %vm1124, %v1112, %v1127
    %v1129 = vsel %vm1123, %v1126, %v1128
    %v1130 = vsel %vm1122, %v1109, %v1112
    %v1131 = vsel %vm1125, %v1118, 920167782
    %v1132 = vsel %vm1124, %v1115, %v1131
    %v1133 = vsel %vm1123, %v1130, %v1132
    %v1134 = vsel %vm1122, %v1112, %v1115
    %v1135 = vsel %vm1125, %v1121, 1326507024
    %v1136 = vsel %vm1124, %v1118, %v1135
    %v1137 = vsel %vm1123, %v1134, %v1136
    %v1138 = vshll.u32 %v1098, 8
    %v1139 = vmul.u32.u64.compose %v1138, %v1137
    %v1140 = vextract.low.u32 %v1139
    %v1141 = vextract.high.u32 %v1139
    %v1142 = vmul.u32.u64.compose %v1138, %v1133
    %v1143 = vextract.low.u32 %v1142
    %v1144 = vextract.high.u32 %v1142
    %v1145 = vmul.u32 %v1138, %v1129
    %v1146 = vadd.s32 %v1141, %v1143
    %vm1147 = vc.u32 %v1141, %v1143
    %v1148 = vadd.s32 %v1144, 1
    %v1149 = vsel %vm1147, %v1148, %v1144
    %v1150 = vadd.s32 %v1145, %v1149
    %v1151 = vadd.s32 %v1150, 536870912
    %v1152 = vshrl.u32 %v1151, 30
    %v1153 = vshll.u32 %v1152, 30
    %v1154 = vsub.s32 %v1150, %v1153
    %vm1155 = vcmp.lt.s32.totalorder %v1154, 0
    %v1156 = vsub.s32 0, %v1154
    %v1157 = vsel %vm1155, %v1156, %v1154
    %v1158 = vclz %v1157
    %v1159 = vsub.s32 %v1158, 2
    %vm1160 = vcmp.gt.s32.totalorder 0, %v1159
    %v1161 = vsel %vm1160, 0, %v1159
    %v1162 = vsub.s32 32, %v1161
    %v1163 = vshll.u32 %v1154, %v1161
    %v1164 = vshrl.u32 %v1146, %v1162
    %v1165 = vor.u32 %v1163, %v1164
    %v1166 = vsub.s32 4294967266, %v1161
    %v1167 = vadd.s32 %v1166, 127
    %v1168 = vshll.u32 %v1167, 23
    %v1169 = vor.u32 4788187, %v1168
    %v1170 = vand.u32 2147483647, %v1169
    %v1172 = vcvt.s32.f32 %v1165
    %v1173 = vmul.f32 %v1172, %v1170
    %v1174 = vxor.u32 %v1173, 2147483648
    %v1175 = vsel %vm1092, %v1174, %v1173
    %v1176 = vsub.s32 4, %v1152
    %v1177 = vsel %vm1092, %v1176, %v1152
    %v1178 = vsel %vm1091, %v464, %v1175
    %v1179 = vsel %vm1091, 0, %v1177
    %v1180 = vcosq.f32.pop %v1178
    %v1181 = vsinq.f32.pop %v1178
    %vm1182 = vweird.f32 %v464
    %v1183 = vadd.s32 %v1179, 3
    %v1184 = vand.u32 %v1183, 3
    %vm1185 = vcmp.lt.s32.totalorder %v1184, 2
    %vm1186 = vcmp.eq.s32.totalorder %v1184, 0
    %v1187 = vxor.u32 %v1181, 2147483648
    %v1188 = vsel %vm1186, %v1180, %v1187
    %vm1189 = vcmp.eq.s32.totalorder %v1184, 2
    %v1190 = vxor.u32 %v1180, 2147483648
    %v1191 = vsel %vm1189, %v1190, %v1181
    %v1192 = vsel %vm1185, %v1188, %v1191
    %v1193 = vsel %vm1182, nan, %v1192
    %v1194 = vand.u32 2147483647, %v465
    %vm1195 = vcmp.le.f32.partialorder %v1194, 0.7853982
    %vm1196 = vcmp.lt.s32.totalorder %v465, 0
    %v1197 = vand.u32 %v465, 2139095040
    %v1198 = vshrl.u32 %v1197, 23
    %v1199 = vsub.s32 %v1198, 127
    %v1200 = vand.u32 2147483647, %v465
    %v1201 = vand.u32 %v1200, 8388607
    %v1202 = vor.u32 %v1201, 8388608
    %v1203 = vsub.s32 0, %v1202
    %v1204 = vadd.s32 %v1199, 1
    %vm1205 = vcmp.gt.s32.totalorder %v1204, 0
    %v1206 = vsel %vm1205, %v1204, 0
    %v1207 = vshrl.u32 %v1206, 5
    %v1208 = vand.u32 %v1206, 31
    %v1209 = vsub.s32 32, %v1208
    %v1210 = vshrl.u32 683565275, %v1209
    %v1211 = vshll.u32 683565275, %v1208
    %v1212 = vshrl.u32 2475754826, %v1209
    %v1213 = vor.u32 %v1211, %v1212
    %v1214 = vshll.u32 2475754826, %v1208
    %v1215 = vshrl.u32 2131351028, %v1209
    %v1216 = vor.u32 %v1214, %v1215
    %v1217 = vshll.u32 2131351028, %v1208
    %v1218 = vshrl.u32 2102212464, %v1209
    %v1219 = vor.u32 %v1217, %v1218
    %v1220 = vshll.u32 2102212464, %v1208
    %v1221 = vshrl.u32 920167782, %v1209
    %v1222 = vor.u32 %v1220, %v1221
    %v1223 = vshll.u32 920167782, %v1208
    %v1224 = vshrl.u32 1326507024, %v1209
    %v1225 = vor.u32 %v1223, %v1224
    %vm1226 = vcmp.lt.s32.totalorder %v1207, 1
    %vm1227 = vcmp.lt.s32.totalorder %v1207, 2
    %vm1228 = vcmp.lt.s32.totalorder %v1207, 3
    %vm1229 = vcmp.lt.s32.totalorder %v1207, 4
    %v1230 = vsel %vm1226, %v1210, %v1213
    %v1231 = vsel %vm1229, %v1219, 2102212464
    %v1232 = vsel %vm1228, %v1216, %v1231
    %v1233 = vsel %vm1227, %v1230, %v1232
    %v1234 = vsel %vm1226, %v1213, %v1216
    %v1235 = vsel %vm1229, %v1222, 920167782
    %v1236 = vsel %vm1228, %v1219, %v1235
    %v1237 = vsel %vm1227, %v1234, %v1236
    %v1238 = vsel %vm1226, %v1216, %v1219
    %v1239 = vsel %vm1229, %v1225, 1326507024
    %v1240 = vsel %vm1228, %v1222, %v1239
    %v1241 = vsel %vm1227, %v1238, %v1240
    %v1242 = vshll.u32 %v1202, 8
    %v1243 = vmul.u32.u64.compose %v1242, %v1241
    %v1244 = vextract.low.u32 %v1243
    %v1245 = vextract.high.u32 %v1243
    %v1246 = vmul.u32.u64.compose %v1242, %v1237
    %v1247 = vextract.low.u32 %v1246
    %v1248 = vextract.high.u32 %v1246
    %v1249 = vmul.u32 %v1242, %v1233
    %v1250 = vadd.s32 %v1245, %v1247
    %vm1251 = vc.u32 %v1245, %v1247
    %v1252 = vadd.s32 %v1248, 1
    %v1253 = vsel %vm1251, %v1252, %v1248
    %v1254 = vadd.s32 %v1249, %v1253
    %v1255 = vadd.s32 %v1254, 536870912
    %v1256 = vshrl.u32 %v1255, 30
    %v1257 = vshll.u32 %v1256, 30
    %v1258 = vsub.s32 %v1254, %v1257
    %vm1259 = vcmp.lt.s32.totalorder %v1258, 0
    %v1260 = vsub.s32 0, %v1258
    %v1261 = vsel %vm1259, %v1260, %v1258
    %v1262 = vclz %v1261
    %v1263 = vsub.s32 %v1262, 2
    %vm1264 = vcmp.gt.s32.totalorder 0, %v1263
    %v1265 = vsel %vm1264, 0, %v1263
    %v1266 = vsub.s32 32, %v1265
    %v1267 = vshll.u32 %v1258, %v1265
    %v1268 = vshrl.u32 %v1250, %v1266
    %v1269 = vor.u32 %v1267, %v1268
    %v1270 = vsub.s32 4294967266, %v1265
    %v1271 = vadd.s32 %v1270, 127
    %v1272 = vshll.u32 %v1271, 23
    %v1273 = vor.u32 4788187, %v1272
    %v1274 = vand.u32 2147483647, %v1273
    %v1276 = vcvt.s32.f32 %v1269
    %v1277 = vmul.f32 %v1276, %v1274
    %v1278 = vxor.u32 %v1277, 2147483648
    %v1279 = vsel %vm1196, %v1278, %v1277
    %v1280 = vsub.s32 4, %v1256
    %v1281 = vsel %vm1196, %v1280, %v1256
    %v1282 = vsel %vm1195, %v465, %v1279
    %v1283 = vsel %vm1195, 0, %v1281
    %v1284 = vcosq.f32.pop %v1282
    %v1285 = vsinq.f32.pop %v1282
    %vm1286 = vweird.f32 %v465
    %v1287 = vadd.s32 %v1283, 3
    %v1288 = vand.u32 %v1287, 3
    %vm1289 = vcmp.lt.s32.totalorder %v1288, 2
    %vm1290 = vcmp.eq.s32.totalorder %v1288, 0
    %v1291 = vxor.u32 %v1285, 2147483648
    %v1292 = vsel %vm1290, %v1284, %v1291
    %vm1293 = vcmp.eq.s32.totalorder %v1288, 2
    %v1294 = vxor.u32 %v1284, 2147483648
    %v1295 = vsel %vm1293, %v1294, %v1285
    %v1296 = vsel %vm1289, %v1292, %v1295
    %v1297 = vsel %vm1286, nan, %v1296
    %v1298 = vand.u32 2147483647, %v458
    %vm1299 = vcmp.le.f32.partialorder %v1298, 0.7853982
    %vm1300 = vcmp.lt.s32.totalorder %v458, 0
    %v1301 = vand.u32 %v458, 2139095040
    %v1302 = vshrl.u32 %v1301, 23
    %v1303 = vsub.s32 %v1302, 127
    %v1304 = vand.u32 2147483647, %v458
    %v1305 = vand.u32 %v1304, 8388607
    %v1306 = vor.u32 %v1305, 8388608
    %v1307 = vsub.s32 0, %v1306
    %v1308 = vadd.s32 %v1303, 1
    %vm1309 = vcmp.gt.s32.totalorder %v1308, 0
    %v1310 = vsel %vm1309, %v1308, 0
    %v1311 = vshrl.u32 %v1310, 5
    %v1312 = vand.u32 %v1310, 31
    %v1313 = vsub.s32 32, %v1312
    %v1314 = vshrl.u32 683565275, %v1313
    %v1315 = vshll.u32 683565275, %v1312
    %v1316 = vshrl.u32 2475754826, %v1313
    %v1317 = vor.u32 %v1315, %v1316
    %v1318 = vshll.u32 2475754826, %v1312
    %v1319 = vshrl.u32 2131351028, %v1313
    %v1320 = vor.u32 %v1318, %v1319
    %v1321 = vshll.u32 2131351028, %v1312
    %v1322 = vshrl.u32 2102212464, %v1313
    %v1323 = vor.u32 %v1321, %v1322
    %v1324 = vshll.u32 2102212464, %v1312
    %v1325 = vshrl.u32 920167782, %v1313
    %v1326 = vor.u32 %v1324, %v1325
    %v1327 = vshll.u32 920167782, %v1312
    %v1328 = vshrl.u32 1326507024, %v1313
    %v1329 = vor.u32 %v1327, %v1328
    %vm1330 = vcmp.lt.s32.totalorder %v1311, 1
    %vm1331 = vcmp.lt.s32.totalorder %v1311, 2
    %vm1332 = vcmp.lt.s32.totalorder %v1311, 3
    %vm1333 = vcmp.lt.s32.totalorder %v1311, 4
    %v1334 = vsel %vm1330, %v1314, %v1317
    %v1335 = vsel %vm1333, %v1323, 2102212464
    %v1336 = vsel %vm1332, %v1320, %v1335
    %v1337 = vsel %vm1331, %v1334, %v1336
    %v1338 = vsel %vm1330, %v1317, %v1320
    %v1339 = vsel %vm1333, %v1326, 920167782
    %v1340 = vsel %vm1332, %v1323, %v1339
    %v1341 = vsel %vm1331, %v1338, %v1340
    %v1342 = vsel %vm1330, %v1320, %v1323
    %v1343 = vsel %vm1333, %v1329, 1326507024
    %v1344 = vsel %vm1332, %v1326, %v1343
    %v1345 = vsel %vm1331, %v1342, %v1344
    %v1346 = vshll.u32 %v1306, 8
    %v1347 = vmul.u32.u64.compose %v1346, %v1345
    %v1348 = vextract.low.u32 %v1347
    %v1349 = vextract.high.u32 %v1347
    %v1350 = vmul.u32.u64.compose %v1346, %v1341
    %v1351 = vextract.low.u32 %v1350
    %v1352 = vextract.high.u32 %v1350
    %v1353 = vmul.u32 %v1346, %v1337
    %v1354 = vadd.s32 %v1349, %v1351
    %vm1355 = vc.u32 %v1349, %v1351
    %v1356 = vadd.s32 %v1352, 1
    %v1357 = vsel %vm1355, %v1356, %v1352
    %v1358 = vadd.s32 %v1353, %v1357
    %v1359 = vadd.s32 %v1358, 536870912
    %v1360 = vshrl.u32 %v1359, 30
    %v1361 = vshll.u32 %v1360, 30
    %v1362 = vsub.s32 %v1358, %v1361
    %vm1363 = vcmp.lt.s32.totalorder %v1362, 0
    %v1364 = vsub.s32 0, %v1362
    %v1365 = vsel %vm1363, %v1364, %v1362
    %v1366 = vclz %v1365
    %v1367 = vsub.s32 %v1366, 2
    %vm1368 = vcmp.gt.s32.totalorder 0, %v1367
    %v1369 = vsel %vm1368, 0, %v1367
    %v1370 = vsub.s32 32, %v1369
    %v1371 = vshll.u32 %v1362, %v1369
    %v1372 = vshrl.u32 %v1354, %v1370
    %v1373 = vor.u32 %v1371, %v1372
    %v1374 = vsub.s32 4294967266, %v1369
    %v1375 = vadd.s32 %v1374, 127
    %v1376 = vshll.u32 %v1375, 23
    %v1377 = vor.u32 4788187, %v1376
    %v1378 = vand.u32 2147483647, %v1377
    %v1380 = vcvt.s32.f32 %v1373
    %v1381 = vmul.f32 %v1380, %v1378
    %v1382 = vxor.u32 %v1381, 2147483648
    %v1383 = vsel %vm1300, %v1382, %v1381
    %v1384 = vsub.s32 4, %v1360
    %v1385 = vsel %vm1300, %v1384, %v1360
    %v1386 = vsel %vm1299, %v458, %v1383
    %v1387 = vsel %vm1299, 0, %v1385
    %v1388 = vcosq.f32.pop %v1386
    %v1389 = vsinq.f32.pop %v1386
    %vm1390 = vweird.f32 %v458
    %v1391 = vand.u32 %v1387, 3
    %vm1392 = vcmp.lt.s32.totalorder %v1391, 2
    %vm1393 = vcmp.eq.s32.totalorder %v1391, 0
    %v1394 = vxor.u32 %v1389, 2147483648
    %v1395 = vsel %vm1393, %v1388, %v1394
    %vm1396 = vcmp.eq.s32.totalorder %v1391, 2
    %v1397 = vxor.u32 %v1388, 2147483648
    %v1398 = vsel %vm1396, %v1397, %v1389
    %v1399 = vsel %vm1392, %v1395, %v1398
    %v1400 = vsel %vm1390, nan, %v1399
    %v1401 = vand.u32 2147483647, %v459
    %vm1402 = vcmp.le.f32.partialorder %v1401, 0.7853982
    %vm1403 = vcmp.lt.s32.totalorder %v459, 0
    %v1404 = vand.u32 %v459, 2139095040
    %v1405 = vshrl.u32 %v1404, 23
    %v1406 = vsub.s32 %v1405, 127
    %v1407 = vand.u32 2147483647, %v459
    %v1408 = vand.u32 %v1407, 8388607
    %v1409 = vor.u32 %v1408, 8388608
    %v1410 = vsub.s32 0, %v1409
    %v1411 = vadd.s32 %v1406, 1
    %vm1412 = vcmp.gt.s32.totalorder %v1411, 0
    %v1413 = vsel %vm1412, %v1411, 0
    %v1414 = vshrl.u32 %v1413, 5
    %v1415 = vand.u32 %v1413, 31
    %v1416 = vsub.s32 32, %v1415
    %v1417 = vshrl.u32 683565275, %v1416
    %v1418 = vshll.u32 683565275, %v1415
    %v1419 = vshrl.u32 2475754826, %v1416
    %v1420 = vor.u32 %v1418, %v1419
    %v1421 = vshll.u32 2475754826, %v1415
    %v1422 = vshrl.u32 2131351028, %v1416
    %v1423 = vor.u32 %v1421, %v1422
    %v1424 = vshll.u32 2131351028, %v1415
    %v1425 = vshrl.u32 2102212464, %v1416
    %v1426 = vor.u32 %v1424, %v1425
    %v1427 = vshll.u32 2102212464, %v1415
    %v1428 = vshrl.u32 920167782, %v1416
    %v1429 = vor.u32 %v1427, %v1428
    %v1430 = vshll.u32 920167782, %v1415
    %v1431 = vshrl.u32 1326507024, %v1416
    %v1432 = vor.u32 %v1430, %v1431
    %vm1433 = vcmp.lt.s32.totalorder %v1414, 1
    %vm1434 = vcmp.lt.s32.totalorder %v1414, 2
    %vm1435 = vcmp.lt.s32.totalorder %v1414, 3
    %vm1436 = vcmp.lt.s32.totalorder %v1414, 4
    %v1437 = vsel %vm1433, %v1417, %v1420
    %v1438 = vsel %vm1436, %v1426, 2102212464
    %v1439 = vsel %vm1435, %v1423, %v1438
    %v1440 = vsel %vm1434, %v1437, %v1439
    %v1441 = vsel %vm1433, %v1420, %v1423
    %v1442 = vsel %vm1436, %v1429, 920167782
    %v1443 = vsel %vm1435, %v1426, %v1442
    %v1444 = vsel %vm1434, %v1441, %v1443
    %v1445 = vsel %vm1433, %v1423, %v1426
    %v1446 = vsel %vm1436, %v1432, 1326507024
    %v1447 = vsel %vm1435, %v1429, %v1446
    %v1448 = vsel %vm1434, %v1445, %v1447
    %v1449 = vshll.u32 %v1409, 8
    %v1450 = vmul.u32.u64.compose %v1449, %v1448
    %v1451 = vextract.low.u32 %v1450
    %v1452 = vextract.high.u32 %v1450
    %v1453 = vmul.u32.u64.compose %v1449, %v1444
    %v1454 = vextract.low.u32 %v1453
    %v1455 = vextract.high.u32 %v1453
    %v1456 = vmul.u32 %v1449, %v1440
    %v1457 = vadd.s32 %v1452, %v1454
    %vm1458 = vc.u32 %v1452, %v1454
    %v1459 = vadd.s32 %v1455, 1
    %v1460 = vsel %vm1458, %v1459, %v1455
    %v1461 = vadd.s32 %v1456, %v1460
    %v1462 = vadd.s32 %v1461, 536870912
    %v1463 = vshrl.u32 %v1462, 30
    %v1464 = vshll.u32 %v1463, 30
    %v1465 = vsub.s32 %v1461, %v1464
    %vm1466 = vcmp.lt.s32.totalorder %v1465, 0
    %v1467 = vsub.s32 0, %v1465
    %v1468 = vsel %vm1466, %v1467, %v1465
    %v1469 = vclz %v1468
    %v1470 = vsub.s32 %v1469, 2
    %vm1471 = vcmp.gt.s32.totalorder 0, %v1470
    %v1472 = vsel %vm1471, 0, %v1470
    %v1473 = vsub.s32 32, %v1472
    %v1474 = vshll.u32 %v1465, %v1472
    %v1475 = vshrl.u32 %v1457, %v1473
    %v1476 = vor.u32 %v1474, %v1475
    %v1477 = vsub.s32 4294967266, %v1472
    %v1478 = vadd.s32 %v1477, 127
    %v1479 = vshll.u32 %v1478, 23
    %v1480 = vor.u32 4788187, %v1479
    %v1481 = vand.u32 2147483647, %v1480
    %v1483 = vcvt.s32.f32 %v1476
    %v1484 = vmul.f32 %v1483, %v1481
    %v1485 = vxor.u32 %v1484, 2147483648
    %v1486 = vsel %vm1403, %v1485, %v1484
    %v1487 = vsub.s32 4, %v1463
    %v1488 = vsel %vm1403, %v1487, %v1463
    %v1489 = vsel %vm1402, %v459, %v1486
    %v1490 = vsel %vm1402, 0, %v1488
    %v1491 = vcosq.f32.pop %v1489
    %v1492 = vsinq.f32.pop %v1489
    %vm1493 = vweird.f32 %v459
    %v1494 = vand.u32 %v1490, 3
    %vm1495 = vcmp.lt.s32.totalorder %v1494, 2
    %vm1496 = vcmp.eq.s32.totalorder %v1494, 0
    %v1497 = vxor.u32 %v1492, 2147483648
    %v1498 = vsel %vm1496, %v1491, %v1497
    %vm1499 = vcmp.eq.s32.totalorder %v1494, 2
    %v1500 = vxor.u32 %v1491, 2147483648
    %v1501 = vsel %vm1499, %v1500, %v1492
    %v1502 = vsel %vm1495, %v1498, %v1501
    %v1503 = vsel %vm1493, nan, %v1502
    %v1504 = vand.u32 2147483647, %v460
    %vm1505 = vcmp.le.f32.partialorder %v1504, 0.7853982
    %vm1506 = vcmp.lt.s32.totalorder %v460, 0
    %v1507 = vand.u32 %v460, 2139095040
    %v1508 = vshrl.u32 %v1507, 23
    %v1509 = vsub.s32 %v1508, 127
    %v1510 = vand.u32 2147483647, %v460
    %v1511 = vand.u32 %v1510, 8388607
    %v1512 = vor.u32 %v1511, 8388608
    %v1513 = vsub.s32 0, %v1512
    %v1514 = vadd.s32 %v1509, 1
    %vm1515 = vcmp.gt.s32.totalorder %v1514, 0
    %v1516 = vsel %vm1515, %v1514, 0
    %v1517 = vshrl.u32 %v1516, 5
    %v1518 = vand.u32 %v1516, 31
    %v1519 = vsub.s32 32, %v1518
    %v1520 = vshrl.u32 683565275, %v1519
    %v1521 = vshll.u32 683565275, %v1518
    %v1522 = vshrl.u32 2475754826, %v1519
    %v1523 = vor.u32 %v1521, %v1522
    %v1524 = vshll.u32 2475754826, %v1518
    %v1525 = vshrl.u32 2131351028, %v1519
    %v1526 = vor.u32 %v1524, %v1525
    %v1527 = vshll.u32 2131351028, %v1518
    %v1528 = vshrl.u32 2102212464, %v1519
    %v1529 = vor.u32 %v1527, %v1528
    %v1530 = vshll.u32 2102212464, %v1518
    %v1531 = vshrl.u32 920167782, %v1519
    %v1532 = vor.u32 %v1530, %v1531
    %v1533 = vshll.u32 920167782, %v1518
    %v1534 = vshrl.u32 1326507024, %v1519
    %v1535 = vor.u32 %v1533, %v1534
    %vm1536 = vcmp.lt.s32.totalorder %v1517, 1
    %vm1537 = vcmp.lt.s32.totalorder %v1517, 2
    %vm1538 = vcmp.lt.s32.totalorder %v1517, 3
    %vm1539 = vcmp.lt.s32.totalorder %v1517, 4
    %v1540 = vsel %vm1536, %v1520, %v1523
    %v1541 = vsel %vm1539, %v1529, 2102212464
    %v1542 = vsel %vm1538, %v1526, %v1541
    %v1543 = vsel %vm1537, %v1540, %v1542
    %v1544 = vsel %vm1536, %v1523, %v1526
    %v1545 = vsel %vm1539, %v1532, 920167782
    %v1546 = vsel %vm1538, %v1529, %v1545
    %v1547 = vsel %vm1537, %v1544, %v1546
    %v1548 = vsel %vm1536, %v1526, %v1529
    %v1549 = vsel %vm1539, %v1535, 1326507024
    %v1550 = vsel %vm1538, %v1532, %v1549
    %v1551 = vsel %vm1537, %v1548, %v1550
    %v1552 = vshll.u32 %v1512, 8
    %v1553 = vmul.u32.u64.compose %v1552, %v1551
    %v1554 = vextract.low.u32 %v1553
    %v1555 = vextract.high.u32 %v1553
    %v1556 = vmul.u32.u64.compose %v1552, %v1547
    %v1557 = vextract.low.u32 %v1556
    %v1558 = vextract.high.u32 %v1556
    %v1559 = vmul.u32 %v1552, %v1543
    %v1560 = vadd.s32 %v1555, %v1557
    %vm1561 = vc.u32 %v1555, %v1557
    %v1562 = vadd.s32 %v1558, 1
    %v1563 = vsel %vm1561, %v1562, %v1558
    %v1564 = vadd.s32 %v1559, %v1563
    %v1565 = vadd.s32 %v1564, 536870912
    %v1566 = vshrl.u32 %v1565, 30
    %v1567 = vshll.u32 %v1566, 30
    %v1568 = vsub.s32 %v1564, %v1567
    %vm1569 = vcmp.lt.s32.totalorder %v1568, 0
    %v1570 = vsub.s32 0, %v1568
    %v1571 = vsel %vm1569, %v1570, %v1568
    %v1572 = vclz %v1571
    %v1573 = vsub.s32 %v1572, 2
    %vm1574 = vcmp.gt.s32.totalorder 0, %v1573
    %v1575 = vsel %vm1574, 0, %v1573
    %v1576 = vsub.s32 32, %v1575
    %v1577 = vshll.u32 %v1568, %v1575
    %v1578 = vshrl.u32 %v1560, %v1576
    %v1579 = vor.u32 %v1577, %v1578
    %v1580 = vsub.s32 4294967266, %v1575
    %v1581 = vadd.s32 %v1580, 127
    %v1582 = vshll.u32 %v1581, 23
    %v1583 = vor.u32 4788187, %v1582
    %v1584 = vand.u32 2147483647, %v1583
    %v1586 = vcvt.s32.f32 %v1579
    %v1587 = vmul.f32 %v1586, %v1584
    %v1588 = vxor.u32 %v1587, 2147483648
    %v1589 = vsel %vm1506, %v1588, %v1587
    %v1590 = vsub.s32 4, %v1566
    %v1591 = vsel %vm1506, %v1590, %v1566
    %v1592 = vsel %vm1505, %v460, %v1589
    %v1593 = vsel %vm1505, 0, %v1591
    %v1594 = vcosq.f32.pop %v1592
    %v1595 = vsinq.f32.pop %v1592
    %vm1596 = vweird.f32 %v460
    %v1597 = vand.u32 %v1593, 3
    %vm1598 = vcmp.lt.s32.totalorder %v1597, 2
    %vm1599 = vcmp.eq.s32.totalorder %v1597, 0
    %v1600 = vxor.u32 %v1595, 2147483648
    %v1601 = vsel %vm1599, %v1594, %v1600
    %vm1602 = vcmp.eq.s32.totalorder %v1597, 2
    %v1603 = vxor.u32 %v1594, 2147483648
    %v1604 = vsel %vm1602, %v1603, %v1595
    %v1605 = vsel %vm1598, %v1601, %v1604
    %v1606 = vsel %vm1596, nan, %v1605
    %v1607 = vand.u32 2147483647, %v461
    %vm1608 = vcmp.le.f32.partialorder %v1607, 0.7853982
    %vm1609 = vcmp.lt.s32.totalorder %v461, 0
    %v1610 = vand.u32 %v461, 2139095040
    %v1611 = vshrl.u32 %v1610, 23
    %v1612 = vsub.s32 %v1611, 127
    %v1613 = vand.u32 2147483647, %v461
    %v1614 = vand.u32 %v1613, 8388607
    %v1615 = vor.u32 %v1614, 8388608
    %v1616 = vsub.s32 0, %v1615
    %v1617 = vadd.s32 %v1612, 1
    %vm1618 = vcmp.gt.s32.totalorder %v1617, 0
    %v1619 = vsel %vm1618, %v1617, 0
    %v1620 = vshrl.u32 %v1619, 5
    %v1621 = vand.u32 %v1619, 31
    %v1622 = vsub.s32 32, %v1621
    %v1623 = vshrl.u32 683565275, %v1622
    %v1624 = vshll.u32 683565275, %v1621
    %v1625 = vshrl.u32 2475754826, %v1622
    %v1626 = vor.u32 %v1624, %v1625
    %v1627 = vshll.u32 2475754826, %v1621
    %v1628 = vshrl.u32 2131351028, %v1622
    %v1629 = vor.u32 %v1627, %v1628
    %v1630 = vshll.u32 2131351028, %v1621
    %v1631 = vshrl.u32 2102212464, %v1622
    %v1632 = vor.u32 %v1630, %v1631
    %v1633 = vshll.u32 2102212464, %v1621
    %v1634 = vshrl.u32 920167782, %v1622
    %v1635 = vor.u32 %v1633, %v1634
    %v1636 = vshll.u32 920167782, %v1621
    %v1637 = vshrl.u32 1326507024, %v1622
    %v1638 = vor.u32 %v1636, %v1637
    %vm1639 = vcmp.lt.s32.totalorder %v1620, 1
    %vm1640 = vcmp.lt.s32.totalorder %v1620, 2
    %vm1641 = vcmp.lt.s32.totalorder %v1620, 3
    %vm1642 = vcmp.lt.s32.totalorder %v1620, 4
    %v1643 = vsel %vm1639, %v1623, %v1626
    %v1644 = vsel %vm1642, %v1632, 2102212464
    %v1645 = vsel %vm1641, %v1629, %v1644
    %v1646 = vsel %vm1640, %v1643, %v1645
    %v1647 = vsel %vm1639, %v1626, %v1629
    %v1648 = vsel %vm1642, %v1635, 920167782
    %v1649 = vsel %vm1641, %v1632, %v1648
    %v1650 = vsel %vm1640, %v1647, %v1649
    %v1651 = vsel %vm1639, %v1629, %v1632
    %v1652 = vsel %vm1642, %v1638, 1326507024
    %v1653 = vsel %vm1641, %v1635, %v1652
    %v1654 = vsel %vm1640, %v1651, %v1653
    %v1655 = vshll.u32 %v1615, 8
    %v1656 = vmul.u32.u64.compose %v1655, %v1654
    %v1657 = vextract.low.u32 %v1656
    %v1658 = vextract.high.u32 %v1656
    %v1659 = vmul.u32.u64.compose %v1655, %v1650
    %v1660 = vextract.low.u32 %v1659
    %v1661 = vextract.high.u32 %v1659
    %v1662 = vmul.u32 %v1655, %v1646
    %v1663 = vadd.s32 %v1658, %v1660
    %vm1664 = vc.u32 %v1658, %v1660
    %v1665 = vadd.s32 %v1661, 1
    %v1666 = vsel %vm1664, %v1665, %v1661
    %v1667 = vadd.s32 %v1662, %v1666
    %v1668 = vadd.s32 %v1667, 536870912
    %v1669 = vshrl.u32 %v1668, 30
    %v1670 = vshll.u32 %v1669, 30
    %v1671 = vsub.s32 %v1667, %v1670
    %vm1672 = vcmp.lt.s32.totalorder %v1671, 0
    %v1673 = vsub.s32 0, %v1671
    %v1674 = vsel %vm1672, %v1673, %v1671
    %v1675 = vclz %v1674
    %v1676 = vsub.s32 %v1675, 2
    %vm1677 = vcmp.gt.s32.totalorder 0, %v1676
    %v1678 = vsel %vm1677, 0, %v1676
    %v1679 = vsub.s32 32, %v1678
    %v1680 = vshll.u32 %v1671, %v1678
    %v1681 = vshrl.u32 %v1663, %v1679
    %v1682 = vor.u32 %v1680, %v1681
    %v1683 = vsub.s32 4294967266, %v1678
    %v1684 = vadd.s32 %v1683, 127
    %v1685 = vshll.u32 %v1684, 23
    %v1686 = vor.u32 4788187, %v1685
    %v1687 = vand.u32 2147483647, %v1686
    %v1689 = vcvt.s32.f32 %v1682
    %v1690 = vmul.f32 %v1689, %v1687
    %v1691 = vxor.u32 %v1690, 2147483648
    %v1692 = vsel %vm1609, %v1691, %v1690
    %v1693 = vsub.s32 4, %v1669
    %v1694 = vsel %vm1609, %v1693, %v1669
    %v1695 = vsel %vm1608, %v461, %v1692
    %v1696 = vsel %vm1608, 0, %v1694
    %v1697 = vcosq.f32.pop %v1695
    %v1698 = vsinq.f32.pop %v1695
    %vm1699 = vweird.f32 %v461
    %v1700 = vand.u32 %v1696, 3
    %vm1701 = vcmp.lt.s32.totalorder %v1700, 2
    %vm1702 = vcmp.eq.s32.totalorder %v1700, 0
    %v1703 = vxor.u32 %v1698, 2147483648
    %v1704 = vsel %vm1702, %v1697, %v1703
    %vm1705 = vcmp.eq.s32.totalorder %v1700, 2
    %v1706 = vxor.u32 %v1697, 2147483648
    %v1707 = vsel %vm1705, %v1706, %v1698
    %v1708 = vsel %vm1701, %v1704, %v1707
    %v1709 = vsel %vm1699, nan, %v1708
    %v1710 = vand.u32 2147483647, %v462
    %vm1711 = vcmp.le.f32.partialorder %v1710, 0.7853982
    %vm1712 = vcmp.lt.s32.totalorder %v462, 0
    %v1713 = vand.u32 %v462, 2139095040
    %v1714 = vshrl.u32 %v1713, 23
    %v1715 = vsub.s32 %v1714, 127
    %v1716 = vand.u32 2147483647, %v462
    %v1717 = vand.u32 %v1716, 8388607
    %v1718 = vor.u32 %v1717, 8388608
    %v1719 = vsub.s32 0, %v1718
    %v1720 = vadd.s32 %v1715, 1
    %vm1721 = vcmp.gt.s32.totalorder %v1720, 0
    %v1722 = vsel %vm1721, %v1720, 0
    %v1723 = vshrl.u32 %v1722, 5
    %v1724 = vand.u32 %v1722, 31
    %v1725 = vsub.s32 32, %v1724
    %v1726 = vshrl.u32 683565275, %v1725
    %v1727 = vshll.u32 683565275, %v1724
    %v1728 = vshrl.u32 2475754826, %v1725
    %v1729 = vor.u32 %v1727, %v1728
    %v1730 = vshll.u32 2475754826, %v1724
    %v1731 = vshrl.u32 2131351028, %v1725
    %v1732 = vor.u32 %v1730, %v1731
    %v1733 = vshll.u32 2131351028, %v1724
    %v1734 = vshrl.u32 2102212464, %v1725
    %v1735 = vor.u32 %v1733, %v1734
    %v1736 = vshll.u32 2102212464, %v1724
    %v1737 = vshrl.u32 920167782, %v1725
    %v1738 = vor.u32 %v1736, %v1737
    %v1739 = vshll.u32 920167782, %v1724
    %v1740 = vshrl.u32 1326507024, %v1725
    %v1741 = vor.u32 %v1739, %v1740
    %vm1742 = vcmp.lt.s32.totalorder %v1723, 1
    %vm1743 = vcmp.lt.s32.totalorder %v1723, 2
    %vm1744 = vcmp.lt.s32.totalorder %v1723, 3
    %vm1745 = vcmp.lt.s32.totalorder %v1723, 4
    %v1746 = vsel %vm1742, %v1726, %v1729
    %v1747 = vsel %vm1745, %v1735, 2102212464
    %v1748 = vsel %vm1744, %v1732, %v1747
    %v1749 = vsel %vm1743, %v1746, %v1748
    %v1750 = vsel %vm1742, %v1729, %v1732
    %v1751 = vsel %vm1745, %v1738, 920167782
    %v1752 = vsel %vm1744, %v1735, %v1751
    %v1753 = vsel %vm1743, %v1750, %v1752
    %v1754 = vsel %vm1742, %v1732, %v1735
    %v1755 = vsel %vm1745, %v1741, 1326507024
    %v1756 = vsel %vm1744, %v1738, %v1755
    %v1757 = vsel %vm1743, %v1754, %v1756
    %v1758 = vshll.u32 %v1718, 8
    %v1759 = vmul.u32.u64.compose %v1758, %v1757
    %v1760 = vextract.low.u32 %v1759
    %v1761 = vextract.high.u32 %v1759
    %v1762 = vmul.u32.u64.compose %v1758, %v1753
    %v1763 = vextract.low.u32 %v1762
    %v1764 = vextract.high.u32 %v1762
    %v1765 = vmul.u32 %v1758, %v1749
    %v1766 = vadd.s32 %v1761, %v1763
    %vm1767 = vc.u32 %v1761, %v1763
    %v1768 = vadd.s32 %v1764, 1
    %v1769 = vsel %vm1767, %v1768, %v1764
    %v1770 = vadd.s32 %v1765, %v1769
    %v1771 = vadd.s32 %v1770, 536870912
    %v1772 = vshrl.u32 %v1771, 30
    %v1773 = vshll.u32 %v1772, 30
    %v1774 = vsub.s32 %v1770, %v1773
    %vm1775 = vcmp.lt.s32.totalorder %v1774, 0
    %v1776 = vsub.s32 0, %v1774
    %v1777 = vsel %vm1775, %v1776, %v1774
    %v1778 = vclz %v1777
    %v1779 = vsub.s32 %v1778, 2
    %vm1780 = vcmp.gt.s32.totalorder 0, %v1779
    %v1781 = vsel %vm1780, 0, %v1779
    %v1782 = vsub.s32 32, %v1781
    %v1783 = vshll.u32 %v1774, %v1781
    %v1784 = vshrl.u32 %v1766, %v1782
    %v1785 = vor.u32 %v1783, %v1784
    %v1786 = vsub.s32 4294967266, %v1781
    %v1787 = vadd.s32 %v1786, 127
    %v1788 = vshll.u32 %v1787, 23
    %v1789 = vor.u32 4788187, %v1788
    %v1790 = vand.u32 2147483647, %v1789
    %v1792 = vcvt.s32.f32 %v1785
    %v1793 = vmul.f32 %v1792, %v1790
    %v1794 = vxor.u32 %v1793, 2147483648
    %v1795 = vsel %vm1712, %v1794, %v1793
    %v1796 = vsub.s32 4, %v1772
    %v1797 = vsel %vm1712, %v1796, %v1772
    %v1798 = vsel %vm1711, %v462, %v1795
    %v1799 = vsel %vm1711, 0, %v1797
    %v1800 = vcosq.f32.pop %v1798
    %v1801 = vsinq.f32.pop %v1798
    %vm1802 = vweird.f32 %v462
    %v1803 = vand.u32 %v1799, 3
    %vm1804 = vcmp.lt.s32.totalorder %v1803, 2
    %vm1805 = vcmp.eq.s32.totalorder %v1803, 0
    %v1806 = vxor.u32 %v1801, 2147483648
    %v1807 = vsel %vm1805, %v1800, %v1806
    %vm1808 = vcmp.eq.s32.totalorder %v1803, 2
    %v1809 = vxor.u32 %v1800, 2147483648
    %v1810 = vsel %vm1808, %v1809, %v1801
    %v1811 = vsel %vm1804, %v1807, %v1810
    %v1812 = vsel %vm1802, nan, %v1811
    %v1813 = vand.u32 2147483647, %v463
    %vm1814 = vcmp.le.f32.partialorder %v1813, 0.7853982
    %vm1815 = vcmp.lt.s32.totalorder %v463, 0
    %v1816 = vand.u32 %v463, 2139095040
    %v1817 = vshrl.u32 %v1816, 23
    %v1818 = vsub.s32 %v1817, 127
    %v1819 = vand.u32 2147483647, %v463
    %v1820 = vand.u32 %v1819, 8388607
    %v1821 = vor.u32 %v1820, 8388608
    %v1822 = vsub.s32 0, %v1821
    %v1823 = vadd.s32 %v1818, 1
    %vm1824 = vcmp.gt.s32.totalorder %v1823, 0
    %v1825 = vsel %vm1824, %v1823, 0
    %v1826 = vshrl.u32 %v1825, 5
    %v1827 = vand.u32 %v1825, 31
    %v1828 = vsub.s32 32, %v1827
    %v1829 = vshrl.u32 683565275, %v1828
    %v1830 = vshll.u32 683565275, %v1827
    %v1831 = vshrl.u32 2475754826, %v1828
    %v1832 = vor.u32 %v1830, %v1831
    %v1833 = vshll.u32 2475754826, %v1827
    %v1834 = vshrl.u32 2131351028, %v1828
    %v1835 = vor.u32 %v1833, %v1834
    %v1836 = vshll.u32 2131351028, %v1827
    %v1837 = vshrl.u32 2102212464, %v1828
    %v1838 = vor.u32 %v1836, %v1837
    %v1839 = vshll.u32 2102212464, %v1827
    %v1840 = vshrl.u32 920167782, %v1828
    %v1841 = vor.u32 %v1839, %v1840
    %v1842 = vshll.u32 920167782, %v1827
    %v1843 = vshrl.u32 1326507024, %v1828
    %v1844 = vor.u32 %v1842, %v1843
    %vm1845 = vcmp.lt.s32.totalorder %v1826, 1
    %vm1846 = vcmp.lt.s32.totalorder %v1826, 2
    %vm1847 = vcmp.lt.s32.totalorder %v1826, 3
    %vm1848 = vcmp.lt.s32.totalorder %v1826, 4
    %v1849 = vsel %vm1845, %v1829, %v1832
    %v1850 = vsel %vm1848, %v1838, 2102212464
    %v1851 = vsel %vm1847, %v1835, %v1850
    %v1852 = vsel %vm1846, %v1849, %v1851
    %v1853 = vsel %vm1845, %v1832, %v1835
    %v1854 = vsel %vm1848, %v1841, 920167782
    %v1855 = vsel %vm1847, %v1838, %v1854
    %v1856 = vsel %vm1846, %v1853, %v1855
    %v1857 = vsel %vm1845, %v1835, %v1838
    %v1858 = vsel %vm1848, %v1844, 1326507024
    %v1859 = vsel %vm1847, %v1841, %v1858
    %v1860 = vsel %vm1846, %v1857, %v1859
    %v1861 = vshll.u32 %v1821, 8
    %v1862 = vmul.u32.u64.compose %v1861, %v1860
    %v1863 = vextract.low.u32 %v1862
    %v1864 = vextract.high.u32 %v1862
    %v1865 = vmul.u32.u64.compose %v1861, %v1856
    %v1866 = vextract.low.u32 %v1865
    %v1867 = vextract.high.u32 %v1865
    %v1868 = vmul.u32 %v1861, %v1852
    %v1869 = vadd.s32 %v1864, %v1866
    %vm1870 = vc.u32 %v1864, %v1866
    %v1871 = vadd.s32 %v1867, 1
    %v1872 = vsel %vm1870, %v1871, %v1867
    %v1873 = vadd.s32 %v1868, %v1872
    %v1874 = vadd.s32 %v1873, 536870912
    %v1875 = vshrl.u32 %v1874, 30
    %v1876 = vshll.u32 %v1875, 30
    %v1877 = vsub.s32 %v1873, %v1876
    %vm1878 = vcmp.lt.s32.totalorder %v1877, 0
    %v1879 = vsub.s32 0, %v1877
    %v1880 = vsel %vm1878, %v1879, %v1877
    %v1881 = vclz %v1880
    %v1882 = vsub.s32 %v1881, 2
    %vm1883 = vcmp.gt.s32.totalorder 0, %v1882
    %v1884 = vsel %vm1883, 0, %v1882
    %v1885 = vsub.s32 32, %v1884
    %v1886 = vshll.u32 %v1877, %v1884
    %v1887 = vshrl.u32 %v1869, %v1885
    %v1888 = vor.u32 %v1886, %v1887
    %v1889 = vsub.s32 4294967266, %v1884
    %v1890 = vadd.s32 %v1889, 127
    %v1891 = vshll.u32 %v1890, 23
    %v1892 = vor.u32 4788187, %v1891
    %v1893 = vand.u32 2147483647, %v1892
    %v1895 = vcvt.s32.f32 %v1888
    %v1896 = vmul.f32 %v1895, %v1893
    %v1897 = vxor.u32 %v1896, 2147483648
    %v1898 = vsel %vm1815, %v1897, %v1896
    %v1899 = vsub.s32 4, %v1875
    %v1900 = vsel %vm1815, %v1899, %v1875
    %v1901 = vsel %vm1814, %v463, %v1898
    %v1902 = vsel %vm1814, 0, %v1900
    %v1903 = vcosq.f32.pop %v1901
    %v1904 = vsinq.f32.pop %v1901
    %vm1905 = vweird.f32 %v463
    %v1906 = vand.u32 %v1902, 3
    %vm1907 = vcmp.lt.s32.totalorder %v1906, 2
    %vm1908 = vcmp.eq.s32.totalorder %v1906, 0
    %v1909 = vxor.u32 %v1904, 2147483648
    %v1910 = vsel %vm1908, %v1903, %v1909
    %vm1911 = vcmp.eq.s32.totalorder %v1906, 2
    %v1912 = vxor.u32 %v1903, 2147483648
    %v1913 = vsel %vm1911, %v1912, %v1904
    %v1914 = vsel %vm1907, %v1910, %v1913
    %v1915 = vsel %vm1905, nan, %v1914
    %v1916 = vand.u32 2147483647, %v464
    %vm1917 = vcmp.le.f32.partialorder %v1916, 0.7853982
    %vm1918 = vcmp.lt.s32.totalorder %v464, 0
    %v1919 = vand.u32 %v464, 2139095040
    %v1920 = vshrl.u32 %v1919, 23
    %v1921 = vsub.s32 %v1920, 127
    %v1922 = vand.u32 2147483647, %v464
    %v1923 = vand.u32 %v1922, 8388607
    %v1924 = vor.u32 %v1923, 8388608
    %v1925 = vsub.s32 0, %v1924
    %v1926 = vadd.s32 %v1921, 1
    %vm1927 = vcmp.gt.s32.totalorder %v1926, 0
    %v1928 = vsel %vm1927, %v1926, 0
    %v1929 = vshrl.u32 %v1928, 5
    %v1930 = vand.u32 %v1928, 31
    %v1931 = vsub.s32 32, %v1930
    %v1932 = vshrl.u32 683565275, %v1931
    %v1933 = vshll.u32 683565275, %v1930
    %v1934 = vshrl.u32 2475754826, %v1931
    %v1935 = vor.u32 %v1933, %v1934
    %v1936 = vshll.u32 2475754826, %v1930
    %v1937 = vshrl.u32 2131351028, %v1931
    %v1938 = vor.u32 %v1936, %v1937
    %v1939 = vshll.u32 2131351028, %v1930
    %v1940 = vshrl.u32 2102212464, %v1931
    %v1941 = vor.u32 %v1939, %v1940
    %v1942 = vshll.u32 2102212464, %v1930
    %v1943 = vshrl.u32 920167782, %v1931
    %v1944 = vor.u32 %v1942, %v1943
    %v1945 = vshll.u32 920167782, %v1930
    %v1946 = vshrl.u32 1326507024, %v1931
    %v1947 = vor.u32 %v1945, %v1946
    %vm1948 = vcmp.lt.s32.totalorder %v1929, 1
    %vm1949 = vcmp.lt.s32.totalorder %v1929, 2
    %vm1950 = vcmp.lt.s32.totalorder %v1929, 3
    %vm1951 = vcmp.lt.s32.totalorder %v1929, 4
    %v1952 = vsel %vm1948, %v1932, %v1935
    %v1953 = vsel %vm1951, %v1941, 2102212464
    %v1954 = vsel %vm1950, %v1938, %v1953
    %v1955 = vsel %vm1949, %v1952, %v1954
    %v1956 = vsel %vm1948, %v1935, %v1938
    %v1957 = vsel %vm1951, %v1944, 920167782
    %v1958 = vsel %vm1950, %v1941, %v1957
    %v1959 = vsel %vm1949, %v1956, %v1958
    %v1960 = vsel %vm1948, %v1938, %v1941
    %v1961 = vsel %vm1951, %v1947, 1326507024
    %v1962 = vsel %vm1950, %v1944, %v1961
    %v1963 = vsel %vm1949, %v1960, %v1962
    %v1964 = vshll.u32 %v1924, 8
    %v1965 = vmul.u32.u64.compose %v1964, %v1963
    %v1966 = vextract.low.u32 %v1965
    %v1967 = vextract.high.u32 %v1965
    %v1968 = vmul.u32.u64.compose %v1964, %v1959
    %v1969 = vextract.low.u32 %v1968
    %v1970 = vextract.high.u32 %v1968
    %v1971 = vmul.u32 %v1964, %v1955
    %v1972 = vadd.s32 %v1967, %v1969
    %vm1973 = vc.u32 %v1967, %v1969
    %v1974 = vadd.s32 %v1970, 1
    %v1975 = vsel %vm1973, %v1974, %v1970
    %v1976 = vadd.s32 %v1971, %v1975
    %v1977 = vadd.s32 %v1976, 536870912
    %v1978 = vshrl.u32 %v1977, 30
    %v1979 = vshll.u32 %v1978, 30
    %v1980 = vsub.s32 %v1976, %v1979
    %vm1981 = vcmp.lt.s32.totalorder %v1980, 0
    %v1982 = vsub.s32 0, %v1980
    %v1983 = vsel %vm1981, %v1982, %v1980
    %v1984 = vclz %v1983
    %v1985 = vsub.s32 %v1984, 2
    %vm1986 = vcmp.gt.s32.totalorder 0, %v1985
    %v1987 = vsel %vm1986, 0, %v1985
    %v1988 = vsub.s32 32, %v1987
    %v1989 = vshll.u32 %v1980, %v1987
    %v1990 = vshrl.u32 %v1972, %v1988
    %v1991 = vor.u32 %v1989, %v1990
    %v1992 = vsub.s32 4294967266, %v1987
    %v1993 = vadd.s32 %v1992, 127
    %v1994 = vshll.u32 %v1993, 23
    %v1995 = vor.u32 4788187, %v1994
    %v1996 = vand.u32 2147483647, %v1995
    %v1998 = vcvt.s32.f32 %v1991
    %v1999 = vmul.f32 %v1998, %v1996
    %v2000 = vxor.u32 %v1999, 2147483648
    %v2001 = vsel %vm1918, %v2000, %v1999
    %v2002 = vsub.s32 4, %v1978
    %v2003 = vsel %vm1918, %v2002, %v1978
    %v2004 = vsel %vm1917, %v464, %v2001
    %v2005 = vsel %vm1917, 0, %v2003
    %v2006 = vcosq.f32.pop %v2004
    %v2007 = vsinq.f32.pop %v2004
    %vm2008 = vweird.f32 %v464
    %v2009 = vand.u32 %v2005, 3
    %vm2010 = vcmp.lt.s32.totalorder %v2009, 2
    %vm2011 = vcmp.eq.s32.totalorder %v2009, 0
    %v2012 = vxor.u32 %v2007, 2147483648
    %v2013 = vsel %vm2011, %v2006, %v2012
    %vm2014 = vcmp.eq.s32.totalorder %v2009, 2
    %v2015 = vxor.u32 %v2006, 2147483648
    %v2016 = vsel %vm2014, %v2015, %v2007
    %v2017 = vsel %vm2010, %v2013, %v2016
    %v2018 = vsel %vm2008, nan, %v2017
    %v2019 = vand.u32 2147483647, %v465
    %vm2020 = vcmp.le.f32.partialorder %v2019, 0.7853982
    %vm2021 = vcmp.lt.s32.totalorder %v465, 0
    %v2022 = vand.u32 %v465, 2139095040
    %v2023 = vshrl.u32 %v2022, 23
    %v2024 = vsub.s32 %v2023, 127
    %v2025 = vand.u32 2147483647, %v465
    %v2026 = vand.u32 %v2025, 8388607
    %v2027 = vor.u32 %v2026, 8388608
    %v2028 = vsub.s32 0, %v2027
    %v2029 = vadd.s32 %v2024, 1
    %vm2030 = vcmp.gt.s32.totalorder %v2029, 0
    %v2031 = vsel %vm2030, %v2029, 0
    %v2032 = vshrl.u32 %v2031, 5
    %v2033 = vand.u32 %v2031, 31
    %v2034 = vsub.s32 32, %v2033
    %v2035 = vshrl.u32 683565275, %v2034
    %v2036 = vshll.u32 683565275, %v2033
    %v2037 = vshrl.u32 2475754826, %v2034
    %v2038 = vor.u32 %v2036, %v2037
    %v2039 = vshll.u32 2475754826, %v2033
    %v2040 = vshrl.u32 2131351028, %v2034
    %v2041 = vor.u32 %v2039, %v2040
    %v2042 = vshll.u32 2131351028, %v2033
    %v2043 = vshrl.u32 2102212464, %v2034
    %v2044 = vor.u32 %v2042, %v2043
    %v2045 = vshll.u32 2102212464, %v2033
    %v2046 = vshrl.u32 920167782, %v2034
    %v2047 = vor.u32 %v2045, %v2046
    %v2048 = vshll.u32 920167782, %v2033
    %v2049 = vshrl.u32 1326507024, %v2034
    %v2050 = vor.u32 %v2048, %v2049
    %vm2051 = vcmp.lt.s32.totalorder %v2032, 1
    %vm2052 = vcmp.lt.s32.totalorder %v2032, 2
    %vm2053 = vcmp.lt.s32.totalorder %v2032, 3
    %vm2054 = vcmp.lt.s32.totalorder %v2032, 4
    %v2055 = vsel %vm2051, %v2035, %v2038
    %v2056 = vsel %vm2054, %v2044, 2102212464
    %v2057 = vsel %vm2053, %v2041, %v2056
    %v2058 = vsel %vm2052, %v2055, %v2057
    %v2059 = vsel %vm2051, %v2038, %v2041
    %v2060 = vsel %vm2054, %v2047, 920167782
    %v2061 = vsel %vm2053, %v2044, %v2060
    %v2062 = vsel %vm2052, %v2059, %v2061
    %v2063 = vsel %vm2051, %v2041, %v2044
    %v2064 = vsel %vm2054, %v2050, 1326507024
    %v2065 = vsel %vm2053, %v2047, %v2064
    %v2066 = vsel %vm2052, %v2063, %v2065
    %v2067 = vshll.u32 %v2027, 8
    %v2068 = vmul.u32.u64.compose %v2067, %v2066
    %v2069 = vextract.low.u32 %v2068
    %v2070 = vextract.high.u32 %v2068
    %v2071 = vmul.u32.u64.compose %v2067, %v2062
    %v2072 = vextract.low.u32 %v2071
    %v2073 = vextract.high.u32 %v2071
    %v2074 = vmul.u32 %v2067, %v2058
    %v2075 = vadd.s32 %v2070, %v2072
    %vm2076 = vc.u32 %v2070, %v2072
    %v2077 = vadd.s32 %v2073, 1
    %v2078 = vsel %vm2076, %v2077, %v2073
    %v2079 = vadd.s32 %v2074, %v2078
    %v2080 = vadd.s32 %v2079, 536870912
    %v2081 = vshrl.u32 %v2080, 30
    %v2082 = vshll.u32 %v2081, 30
    %v2083 = vsub.s32 %v2079, %v2082
    %vm2084 = vcmp.lt.s32.totalorder %v2083, 0
    %v2085 = vsub.s32 0, %v2083
    %v2086 = vsel %vm2084, %v2085, %v2083
    %v2087 = vclz %v2086
    %v2088 = vsub.s32 %v2087, 2
    %vm2089 = vcmp.gt.s32.totalorder 0, %v2088
    %v2090 = vsel %vm2089, 0, %v2088
    %v2091 = vsub.s32 32, %v2090
    %v2092 = vshll.u32 %v2083, %v2090
    %v2093 = vshrl.u32 %v2075, %v2091
    %v2094 = vor.u32 %v2092, %v2093
    %v2095 = vsub.s32 4294967266, %v2090
    %v2096 = vadd.s32 %v2095, 127
    %v2097 = vshll.u32 %v2096, 23
    %v2098 = vor.u32 4788187, %v2097
    %v2099 = vand.u32 2147483647, %v2098
    %v2101 = vcvt.s32.f32 %v2094
    %v2102 = vmul.f32 %v2101, %v2099
    %v2103 = vxor.u32 %v2102, 2147483648
    %v2104 = vsel %vm2021, %v2103, %v2102
    %v2105 = vsub.s32 4, %v2081
    %v2106 = vsel %vm2021, %v2105, %v2081
    %v2107 = vsel %vm2020, %v465, %v2104
    %v2108 = vsel %vm2020, 0, %v2106
    %v2109 = vcosq.f32.pop %v2107
    %v2110 = vsinq.f32.pop %v2107
    %vm2111 = vweird.f32 %v465
    %v2112 = vand.u32 %v2108, 3
    %vm2113 = vcmp.lt.s32.totalorder %v2112, 2
    %vm2114 = vcmp.eq.s32.totalorder %v2112, 0
    %v2115 = vxor.u32 %v2110, 2147483648
    %v2116 = vsel %vm2114, %v2109, %v2115
    %vm2117 = vcmp.eq.s32.totalorder %v2112, 2
    %v2118 = vxor.u32 %v2109, 2147483648
    %v2119 = vsel %vm2117, %v2118, %v2110
    %v2120 = vsel %vm2113, %v2116, %v2119
    %v2121 = vsel %vm2111, nan, %v2120
    %2130 = vrot.lane.b32.xlu0 %v1400, 16
    %v2131 = vpop.permute.xlu0 %2130
    %2132 = vrot.lane.b32.xlu0 %v1503, 16
    %v2133 = vpop.permute.xlu0 %2132
    %2134 = vrot.lane.b32.xlu0 %v1606, 16
    %v2135 = vpop.permute.xlu0 %2134
    %2136 = vrot.lane.b32.xlu0 %v1709, 16
    %v2137 = vpop.permute.xlu0 %2136
    %2138 = vrot.lane.b32.xlu0 %v1812, 16
    %v2139 = vpop.permute.xlu0 %2138
    %2140 = vrot.lane.b32.xlu0 %v1915, 16
    %v2141 = vpop.permute.xlu0 %2140
    %2142 = vrot.lane.b32.xlu0 %v2018, 16
    %v2143 = vpop.permute.xlu0 %2142
    %2144 = vrot.lane.b32.xlu0 %v2121, 16
    %v2145 = vpop.permute.xlu0 %2144
    %vm2154 = vcmask 130048
    %v2155 = vsel %vm2154, %v569, %v2131
    %v2156 = vsel %vm2154, %v673, %v2133
    %v2157 = vsel %vm2154, %v777, %v2135
    %v2158 = vsel %vm2154, %v881, %v2137
    %v2159 = vsel %vm2154, %v985, %v2139
    %v2160 = vsel %vm2154, %v1089, %v2141
    %v2161 = vsel %vm2154, %v1193, %v2143
    %v2162 = vsel %vm2154, %v1297, %v2145
    %v2163 = vld [vmem:[#allocation2] sm:$0xff]
    %v2164 = vld [vmem:[#allocation2 + $0x8] sm:$0xff]
    %v2165 = vld [vmem:[%s17] sm:$0x1]
    %v2167 = vlaneseq
    %v2168 = vshrl.u32 %v2167, 7
    %v2169 = vsub.s32 0, %v2168
    %v2170 = vrot.slane %v2165, %v2169
    %v2173 = vsel %vm2154, %v307, 0
    %v2176 = vsel %vm2154, %v308, 0
    %v2179 = vsel %vm2154, %v309, 0
    %v2182 = vsel %vm2154, %v310, 0
    %v2185 = vsel %vm2154, %v311, 0
    %v2188 = vsel %vm2154, %v312, 0
    %v2191 = vsel %vm2154, %v313, 0
    %v2194 = vsel %vm2154, %v314, 0
    %2196 = vmatprep.subr.mxu0 0.0
    %2197 = vmatpush1.msra.mxu0 0.0
    %2198 = vmatprep.subr.mxu0 0.0
    %2199 = vmatpush1.msra.mxu0 0.0
    %2200 = vmatprep.subr.mxu0 0.0
    %2201 = vmatpush1.msra.mxu0 0.0
    %2202 = vmatprep.subr.mxu0 0.0
    %2203 = vmatpush1.msra.mxu0 0.0
    %2204 = vmatprep.subr.mxu0 0.0
    %2205 = vmatpush1.msra.mxu0 0.0
    %2206 = vmatprep.subr.mxu0 0.0
    %2207 = vmatpush1.msra.mxu0 0.0
    %2208 = vmatprep.subr.mxu0 0.0
    %2209 = vmatpush1.msra.mxu0 0.0
    %2210 = vmatprep.subr.mxu0 0.0
    %2211 = vmatpush1.msra.mxu0 0.0
    %2212 = vmatprep.subr.mxu0 0.0
    %2213 = vmatpush1.msra.mxu0 0.0
    %2214 = vmatprep.subr.mxu0 0.0
    %2215 = vmatpush1.msra.mxu0 0.0
    %2216 = vmatprep.subr.mxu0 0.0
    %2217 = vmatpush1.msra.mxu0 0.0
    %2218 = vmatprep.subr.mxu0 0.0
    %2219 = vmatpush1.msra.mxu0 0.0
    %2220 = vmatprep.subr.mxu0 0.0
    %2221 = vmatpush1.msra.mxu0 0.0
    %2222 = vmatprep.subr.mxu0 0.0
    %2223 = vmatpush1.msra.mxu0 0.0
    %2224 = vmatprep.subr.mxu0 0.0
    %2225 = vmatpush1.msra.mxu0 %v2164
    %2226 = vmatprep.subr.mxu0 0.0
    %2227 = vmatpush1.msra.mxu0 %v2163
    %2228 = vmatprep.subr.mxu0 0.0
    %2229 = vmatpush2.msra.mxu0 0.0
    %2230 = vmatprep.subr.mxu0 0.0
    %2231 = vmatpush2.msra.mxu0 0.0
    %2232 = vmatprep.subr.mxu0 0.0
    %2233 = vmatpush2.msra.mxu0 0.0
    %2234 = vmatprep.subr.mxu0 0.0
    %2235 = vmatpush2.msra.mxu0 0.0
    %2236 = vmatprep.subr.mxu0 0.0
    %2237 = vmatpush2.msra.mxu0 0.0
    %2238 = vmatprep.subr.mxu0 0.0
    %2239 = vmatpush2.msra.mxu0 0.0
    %2240 = vmatprep.subr.mxu0 0.0
    %2241 = vmatpush2.msra.mxu0 0.0
    %2242 = vmatprep.subr.mxu0 0.0
    %2243 = vmatpush2.msra.mxu0 0.0
    %2244 = vmatprep.subr.mxu0 0.0
    %2245 = vmatpush2.msra.mxu0 0.0
    %2246 = vmatprep.subr.mxu0 0.0
    %2247 = vmatpush2.msra.mxu0 0.0
    %2248 = vmatprep.subr.mxu0 0.0
    %2249 = vmatpush2.msra.mxu0 0.0
    %2250 = vmatprep.subr.mxu0 0.0
    %2251 = vmatpush2.msra.mxu0 0.0
    %2252 = vmatprep.subr.mxu0 0.0
    %2253 = vmatpush2.msra.mxu0 0.0
    %2254 = vmatprep.subr.mxu0 0.0
    %2255 = vmatpush2.msra.mxu0 0.0
    %2256 = vmatprep.subr.mxu0 0.0
    %2257 = vmatpush2.msra.mxu0 0.0
    %2258 = vmatprep.subr.mxu0 0.0
    %2259 = vmatpush2.msra.mxu0 0.0
    %2260 = vmatprep.mubr.f32.mxu0 0.0
    %2261 = vmatmul.mubr.f32.gmra.mxu0 %v2173
    %v2262 = vpop.f32.mrf.mxu0
    %v2263 = vadd.f32 %v2170, %v2262
    %v2264 = vpop.f32.mrf.mxu0
    %2265 = vmatprep.mubr.f32.mxu0 0.0
    %2266 = vmatmul.mubr.f32.gmra.mxu0 %v2176
    %v2267 = vpop.f32.mrf.mxu0
    %v2268 = vadd.f32 %v2170, %v2267
    %v2269 = vpop.f32.mrf.mxu0
    %2270 = vmatprep.mubr.f32.mxu0 0.0
    %2271 = vmatmul.mubr.f32.gmra.mxu0 %v2179
    %v2272 = vpop.f32.mrf.mxu0
    %v2273 = vadd.f32 %v2170, %v2272
    %v2274 = vpop.f32.mrf.mxu0
    %2275 = vmatprep.mubr.f32.mxu0 0.0
    %2276 = vmatmul.mubr.f32.gmra.mxu0 %v2182
    %v2277 = vpop.f32.mrf.mxu0
    %v2278 = vadd.f32 %v2170, %v2277
    %v2279 = vpop.f32.mrf.mxu0
    %2280 = vmatprep.mubr.f32.mxu0 0.0
    %2281 = vmatmul.mubr.f32.gmra.mxu0 %v2185
    %v2282 = vpop.f32.mrf.mxu0
    %v2283 = vadd.f32 %v2170, %v2282
    %v2284 = vpop.f32.mrf.mxu0
    %2285 = vmatprep.mubr.f32.mxu0 0.0
    %2286 = vmatmul.mubr.f32.gmra.mxu0 %v2188
    %v2287 = vpop.f32.mrf.mxu0
    %v2288 = vadd.f32 %v2170, %v2287
    %v2289 = vpop.f32.mrf.mxu0
    %2290 = vmatprep.mubr.f32.mxu0 0.0
    %2291 = vmatmul.mubr.f32.gmra.mxu0 %v2191
    %v2292 = vpop.f32.mrf.mxu0
    %v2293 = vadd.f32 %v2170, %v2292
    %v2294 = vpop.f32.mrf.mxu0
    %2295 = vmatprep.mubr.f32.mxu0 0.0
    %2296 = vmatmul.mubr.f32.gmra.mxu0 %v2194
    %v2297 = vpop.f32.mrf.mxu0
    %v2298 = vadd.f32 %v2170, %v2297
    %v2299 = vpop.f32.mrf.mxu0
    %2300 = vdwg.mxu0
    %v2301 = vadd.f32 %v2263, %v2155
    %v2302 = vadd.f32 %v2268, %v2156
    %v2303 = vadd.f32 %v2273, %v2157
    %v2304 = vadd.f32 %v2278, %v2158
    %v2305 = vadd.f32 %v2283, %v2159
    %v2306 = vadd.f32 %v2288, %v2160
    %v2307 = vadd.f32 %v2293, %v2161
    %v2308 = vadd.f32 %v2298, %v2162
    %v2309 = vld [vmem:[#allocation4] sm:$0xff]
    %v2310 = vld [vmem:[#allocation4 + $0x8] sm:$0xff]
    %v2311 = vld [vmem:[#allocation6] sm:$0x1]
    %v2313 = vlaneseq
    %v2314 = vshrl.u32 %v2313, 7
    %v2315 = vsub.s32 0, %v2314
    %v2316 = vrot.slane %v2311, %v2315
    %2318 = vmatprep.subr.mxu0 0.0
    %2319 = vmatpush1.msra.mxu0 0.0
    %2320 = vmatprep.subr.mxu0 0.0
    %2321 = vmatpush1.msra.mxu0 0.0
    %2322 = vmatprep.subr.mxu0 0.0
    %2323 = vmatpush1.msra.mxu0 0.0
    %2324 = vmatprep.subr.mxu0 0.0
    %2325 = vmatpush1.msra.mxu0 0.0
    %2326 = vmatprep.subr.mxu0 0.0
    %2327 = vmatpush1.msra.mxu0 0.0
    %2328 = vmatprep.subr.mxu0 0.0
    %2329 = vmatpush1.msra.mxu0 0.0
    %2330 = vmatprep.subr.mxu0 0.0
    %2331 = vmatpush1.msra.mxu0 0.0
    %2332 = vmatprep.subr.mxu0 0.0
    %2333 = vmatpush1.msra.mxu0 0.0
    %2334 = vmatprep.subr.mxu0 0.0
    %2335 = vmatpush1.msra.mxu0 0.0
    %2336 = vmatprep.subr.mxu0 0.0
    %2337 = vmatpush1.msra.mxu0 0.0
    %2338 = vmatprep.subr.mxu0 0.0
    %2339 = vmatpush1.msra.mxu0 0.0
    %2340 = vmatprep.subr.mxu0 0.0
    %2341 = vmatpush1.msra.mxu0 0.0
    %2342 = vmatprep.subr.mxu0 0.0
    %2343 = vmatpush1.msra.mxu0 0.0
    %2344 = vmatprep.subr.mxu0 0.0
    %2345 = vmatpush1.msra.mxu0 0.0
    %2346 = vmatprep.subr.mxu0 0.0
    %2347 = vmatpush1.msra.mxu0 %v2310
    %2348 = vmatprep.subr.mxu0 0.0
    %2349 = vmatpush1.msra.mxu0 %v2309
    %2350 = vmatprep.subr.mxu0 0.0
    %2351 = vmatpush2.msra.mxu0 0.0
    %2352 = vmatprep.subr.mxu0 0.0
    %2353 = vmatpush2.msra.mxu0 0.0
    %2354 = vmatprep.subr.mxu0 0.0
    %2355 = vmatpush2.msra.mxu0 0.0
    %2356 = vmatprep.subr.mxu0 0.0
    %2357 = vmatpush2.msra.mxu0 0.0
    %2358 = vmatprep.subr.mxu0 0.0
    %2359 = vmatpush2.msra.mxu0 0.0
    %2360 = vmatprep.subr.mxu0 0.0
    %2361 = vmatpush2.msra.mxu0 0.0
    %2362 = vmatprep.subr.mxu0 0.0
    %2363 = vmatpush2.msra.mxu0 0.0
    %2364 = vmatprep.subr.mxu0 0.0
    %2365 = vmatpush2.msra.mxu0 0.0
    %2366 = vmatprep.subr.mxu0 0.0
    %2367 = vmatpush2.msra.mxu0 0.0
    %2368 = vmatprep.subr.mxu0 0.0
    %2369 = vmatpush2.msra.mxu0 0.0
    %2370 = vmatprep.subr.mxu0 0.0
    %2371 = vmatpush2.msra.mxu0 0.0
    %2372 = vmatprep.subr.mxu0 0.0
    %2373 = vmatpush2.msra.mxu0 0.0
    %2374 = vmatprep.subr.mxu0 0.0
    %2375 = vmatpush2.msra.mxu0 0.0
    %2376 = vmatprep.subr.mxu0 0.0
    %2377 = vmatpush2.msra.mxu0 0.0
    %2378 = vmatprep.subr.mxu0 0.0
    %2379 = vmatpush2.msra.mxu0 0.0
    %2380 = vmatprep.subr.mxu0 0.0
    %2381 = vmatpush2.msra.mxu0 0.0
    %2382 = vmatprep.mubr.f32.mxu0 0.0
    %2383 = vmatmul.mubr.f32.gmra.mxu0 %v2173
    %v2384 = vpop.f32.mrf.mxu0
    %v2385 = vadd.f32 %v2316, %v2384
    %v2386 = vpop.f32.mrf.mxu0
    %2387 = vmatprep.mubr.f32.mxu0 0.0
    %2388 = vmatmul.mubr.f32.gmra.mxu0 %v2176
    %v2389 = vpop.f32.mrf.mxu0
    %v2390 = vadd.f32 %v2316, %v2389
    %v2391 = vpop.f32.mrf.mxu0
    %2392 = vmatprep.mubr.f32.mxu0 0.0
    %2393 = vmatmul.mubr.f32.gmra.mxu0 %v2179
    %v2394 = vpop.f32.mrf.mxu0
    %v2395 = vadd.f32 %v2316, %v2394
    %v2396 = vpop.f32.mrf.mxu0
    %2397 = vmatprep.mubr.f32.mxu0 0.0
    %2398 = vmatmul.mubr.f32.gmra.mxu0 %v2182
    %v2399 = vpop.f32.mrf.mxu0
    %v2400 = vadd.f32 %v2316, %v2399
    %v2401 = vpop.f32.mrf.mxu0
    %2402 = vmatprep.mubr.f32.mxu0 0.0
    %2403 = vmatmul.mubr.f32.gmra.mxu0 %v2185
    %v2404 = vpop.f32.mrf.mxu0
    %v2405 = vadd.f32 %v2316, %v2404
    %v2406 = vpop.f32.mrf.mxu0
    %2407 = vmatprep.mubr.f32.mxu0 0.0
    %2408 = vmatmul.mubr.f32.gmra.mxu0 %v2188
    %v2409 = vpop.f32.mrf.mxu0
    %v2410 = vadd.f32 %v2316, %v2409
    %v2411 = vpop.f32.mrf.mxu0
    %2412 = vmatprep.mubr.f32.mxu0 0.0
    %2413 = vmatmul.mubr.f32.gmra.mxu0 %v2191
    %v2414 = vpop.f32.mrf.mxu0
    %v2415 = vadd.f32 %v2316, %v2414
    %v2416 = vpop.f32.mrf.mxu0
    %2417 = vmatprep.mubr.f32.mxu0 0.0
    %2418 = vmatmul.mubr.f32.gmra.mxu0 %v2194
    %v2419 = vpop.f32.mrf.mxu0
    %v2420 = vadd.f32 %v2316, %v2419
    %v2421 = vpop.f32.mrf.mxu0
    %2422 = vdwg.mxu0
    %v2423 = vld [vmem:[%s9] sm:$0xff]
    %v2424 = vld [vmem:[%s9 + $0x8] sm:$0xf]
    %v2425 = vld [vmem:[%s11] sm:$0xff]
    %v2426 = vld [vmem:[%s11 + $0x8] sm:$0xf]
    %v2427 = vld [vmem:[%s7] sm:$0xff]
    %v2428 = vld [vmem:[%s7 + $0x8] sm:$0xf]
    %v2429 = vld [vmem:[%s5] sm:$0xff]
    %v2430 = vld [vmem:[%s5 + $0x8] sm:$0xf]
    %v2431 = vld [vmem:[#allocation7] sm:$0x3]
    %v2432 = vld [vmem:[%s25] sm:$0xff]
    %v2433 = vld [vmem:[%s25 + $0x8] sm:$0xff]
    %v2434 = vld [vmem:[%s25 + $0x10] sm:$0xff]
    %v2435 = vld [vmem:[%s25 + $0x18] sm:$0xff]
    %v2436 = vld [vmem:[#allocation9] sm:$0x1]
    %v2437 = vld [vmem:[%s29] sm:$0xff]
    %v2438 = vld [vmem:[%s29 + $0x8] sm:$0xff]
    %v2439 = vld [vmem:[%s29 + $0x10] sm:$0xff]
    %v2440 = vld [vmem:[%s29 + $0x18] sm:$0xff]
    %v2441 = vld [vmem:[%s29 + $0x20] sm:$0xff]
    %v2442 = vld [vmem:[%s29 + $0x28] sm:$0xff]
    %v2443 = vld [vmem:[%s29 + $0x30] sm:$0xff]
    %v2444 = vld [vmem:[%s29 + $0x38] sm:$0xff]
    %v2445 = vld [vmem:[%s29 + $0x40] sm:$0xff]
    %v2446 = vld [vmem:[%s29 + $0x48] sm:$0xff]
    %v2447 = vld [vmem:[%s29 + $0x50] sm:$0xff]
    %v2448 = vld [vmem:[%s29 + $0x58] sm:$0xff]
    %v2449 = vld [vmem:[#allocation10] sm:$0x7]
    %vm2450 = vcmask 261120
    %v2451 = vsel %vm2450, %v2429, 0.0
    %2452 = vadd.xlane.f32.xlu0 %v2451
    %v2453 = vpop.xlane.xlu0 %2452
    %vm2454 = vcmask 257024
    %v2455 = vsel %vm2454, %v2430, 0.0
    %2456 = vadd.xlane.f32.xlu0 %v2455
    %v2457 = vpop.xlane.xlu0 %2456
    %v2458 = vrcp.pop 32.0
    %v2459 = vmul.f32 %v2453, %v2458
    %v2460 = vmul.f32 %v2457, %v2458
    %v2461 = vsub.f32 %v2429, %v2459
    %v2462 = vsub.f32 %v2430, %v2460
    %v2463 = vmul.f32 %v2461, %v2461
    %v2464 = vmul.f32 %v2462, %v2462
    %v2465 = vsel %vm2450, %v2463, 0.0
    %2466 = vadd.xlane.f32.xlu0 %v2465
    %v2467 = vpop.xlane.xlu0 %2466
    %v2468 = vsel %vm2454, %v2464, 0.0
    %2469 = vadd.xlane.f32.xlu0 %v2468
    %v2470 = vpop.xlane.xlu0 %2469
    %v2471 = vmul.f32 %v2467, %v2458
    %v2472 = vmul.f32 %v2470, %v2458
    %v2473 = vadd.f32 %v2471, 1e-05
    %v2474 = vadd.f32 %v2472, 1e-05
    %v2475 = vrsqrt.pop %v2473
    %v2476 = vrsqrt.pop %v2474
    %v2477 = vmul.f32 %v2461, %v2475
    %v2478 = vmul.f32 %v2462, %v2476
    %v2479 = vlaneseq
    %v2480 = vshrl.u32 %v2479, 7
    %v2481 = vsub.s32 0, %v2480
    %v2482 = vrot.slane %v2431, %v2481
    %v2483 = vmul.f32 %v2477, %v2482
    %v2484 = vmul.f32 %v2478, %v2482
    %v2485 = vlaneseq
    %v2486 = vshrl.u32 %v2485, 7
    %v2487 = vsub.s32 1, %v2486
    %v2488 = vrot.slane %v2431, %v2487
    %v2489 = vadd.f32 %v2483, %v2488
    %v2490 = vadd.f32 %v2484, %v2488
    %v2492 = vlaneseq
    %v2493 = vshrl.u32 %v2492, 7
    %v2494 = vsub.s32 0, %v2493
    %v2495 = vrot.slane %v2436, %v2494
    %v2498 = vsel %vm2450, %v2489, 0
    %v2501 = vsel %vm2450, %v2490, 0
    %2503 = vmatprep.subr.mxu0 0.0
    %2504 = vmatpush1.msra.mxu0 0.0
    %2505 = vmatprep.subr.mxu0 0.0
    %2506 = vmatpush1.msra.mxu0 0.0
    %2507 = vmatprep.subr.mxu0 0.0
    %2508 = vmatpush1.msra.mxu0 0.0
    %2509 = vmatprep.subr.mxu0 0.0
    %2510 = vmatpush1.msra.mxu0 0.0
    %2511 = vmatprep.subr.mxu0 0.0
    %2512 = vmatpush1.msra.mxu0 0.0
    %2513 = vmatprep.subr.mxu0 0.0
    %2514 = vmatpush1.msra.mxu0 0.0
    %2515 = vmatprep.subr.mxu0 0.0
    %2516 = vmatpush1.msra.mxu0 0.0
    %2517 = vmatprep.subr.mxu0 0.0
    %2518 = vmatpush1.msra.mxu0 0.0
    %2519 = vmatprep.subr.mxu0 0.0
    %2520 = vmatpush1.msra.mxu0 0.0
    %2521 = vmatprep.subr.mxu0 0.0
    %2522 = vmatpush1.msra.mxu0 0.0
    %2523 = vmatprep.subr.mxu0 0.0
    %2524 = vmatpush1.msra.mxu0 0.0
    %2525 = vmatprep.subr.mxu0 0.0
    %2526 = vmatpush1.msra.mxu0 0.0
    %2527 = vmatprep.subr.mxu0 0.0
    %2528 = vmatpush1.msra.mxu0 %v2435
    %2529 = vmatprep.subr.mxu0 0.0
    %2530 = vmatpush1.msra.mxu0 %v2434
    %2531 = vmatprep.subr.mxu0 0.0
    %2532 = vmatpush1.msra.mxu0 %v2433
    %2533 = vmatprep.subr.mxu0 0.0
    %2534 = vmatpush1.msra.mxu0 %v2432
    %2535 = vmatprep.subr.mxu0 0.0
    %2536 = vmatpush2.msra.mxu0 0.0
    %2537 = vmatprep.subr.mxu0 0.0
    %2538 = vmatpush2.msra.mxu0 0.0
    %2539 = vmatprep.subr.mxu0 0.0
    %2540 = vmatpush2.msra.mxu0 0.0
    %2541 = vmatprep.subr.mxu0 0.0
    %2542 = vmatpush2.msra.mxu0 0.0
    %2543 = vmatprep.subr.mxu0 0.0
    %2544 = vmatpush2.msra.mxu0 0.0
    %2545 = vmatprep.subr.mxu0 0.0
    %2546 = vmatpush2.msra.mxu0 0.0
    %2547 = vmatprep.subr.mxu0 0.0
    %2548 = vmatpush2.msra.mxu0 0.0
    %2549 = vmatprep.subr.mxu0 0.0
    %2550 = vmatpush2.msra.mxu0 0.0
    %2551 = vmatprep.subr.mxu0 0.0
    %2552 = vmatpush2.msra.mxu0 0.0
    %2553 = vmatprep.subr.mxu0 0.0
    %2554 = vmatpush2.msra.mxu0 0.0
    %2555 = vmatprep.subr.mxu0 0.0
    %2556 = vmatpush2.msra.mxu0 0.0
    %2557 = vmatprep.subr.mxu0 0.0
    %2558 = vmatpush2.msra.mxu0 0.0
    %2559 = vmatprep.subr.mxu0 0.0
    %2560 = vmatpush2.msra.mxu0 0.0
    %2561 = vmatprep.subr.mxu0 0.0
    %2562 = vmatpush2.msra.mxu0 0.0
    %2563 = vmatprep.subr.mxu0 0.0
    %2564 = vmatpush2.msra.mxu0 0.0
    %2565 = vmatprep.subr.mxu0 0.0
    %2566 = vmatpush2.msra.mxu0 0.0
    %2567 = vmatprep.mubr.f32.mxu0 0.0
    %2568 = vmatmul.mubr.f32.gmra.mxu0 %v2498
    %v2569 = vpop.f32.mrf.mxu0
    %v2570 = vadd.f32 %v2495, %v2569
    %v2571 = vpop.f32.mrf.mxu0
    %2572 = vmatprep.mubr.f32.mxu0 0.0
    %2573 = vmatmul.mubr.f32.gmra.mxu0 %v2501
    %v2574 = vpop.f32.mrf.mxu0
    %v2575 = vadd.f32 %v2495, %v2574
    %v2576 = vpop.f32.mrf.mxu0
    %2577 = vdwg.mxu0
    %v2578 = vlaneseq
    %v2579 = vshrl.u32 %v2578, 7
    %v2580 = vsub.s32 0, %v2579
    %v2581 = vrot.slane %v2449, %v2580
    %2582 = vmatprep.subr.mxu0 0.0
    %2583 = vmatpush1.msra.mxu0 0.0
    %2584 = vmatprep.subr.mxu0 0.0
    %2585 = vmatpush1.msra.mxu0 0.0
    %2586 = vmatprep.subr.mxu0 0.0
    %2587 = vmatpush1.msra.mxu0 0.0
    %2588 = vmatprep.subr.mxu0 0.0
    %2589 = vmatpush1.msra.mxu0 0.0
    %2590 = vmatprep.subr.mxu0 0.0
    %2591 = vmatpush1.msra.mxu0 0.0
    %2592 = vmatprep.subr.mxu0 0.0
    %2593 = vmatpush1.msra.mxu0 0.0
    %2594 = vmatprep.subr.mxu0 0.0
    %2595 = vmatpush1.msra.mxu0 0.0
    %2596 = vmatprep.subr.mxu0 0.0
    %2597 = vmatpush1.msra.mxu0 0.0
    %2598 = vmatprep.subr.mxu0 0.0
    %2599 = vmatpush1.msra.mxu0 0.0
    %2600 = vmatprep.subr.mxu0 0.0
    %2601 = vmatpush1.msra.mxu0 0.0
    %2602 = vmatprep.subr.mxu0 0.0
    %2603 = vmatpush1.msra.mxu0 0.0
    %2604 = vmatprep.subr.mxu0 0.0
    %2605 = vmatpush1.msra.mxu0 0.0
    %2606 = vmatprep.subr.mxu0 0.0
    %2607 = vmatpush1.msra.mxu0 %v2440
    %2608 = vmatprep.subr.mxu0 0.0
    %2609 = vmatpush1.msra.mxu0 %v2439
    %2610 = vmatprep.subr.mxu0 0.0
    %2611 = vmatpush1.msra.mxu0 %v2438
    %2612 = vmatprep.subr.mxu0 0.0
    %2613 = vmatpush1.msra.mxu0 %v2437
    %2614 = vmatprep.subr.mxu0 0.0
    %2615 = vmatpush2.msra.mxu0 0.0
    %2616 = vmatprep.subr.mxu0 0.0
    %2617 = vmatpush2.msra.mxu0 0.0
    %2618 = vmatprep.subr.mxu0 0.0
    %2619 = vmatpush2.msra.mxu0 0.0
    %2620 = vmatprep.subr.mxu0 0.0
    %2621 = vmatpush2.msra.mxu0 0.0
    %2622 = vmatprep.subr.mxu0 0.0
    %2623 = vmatpush2.msra.mxu0 0.0
    %2624 = vmatprep.subr.mxu0 0.0
    %2625 = vmatpush2.msra.mxu0 0.0
    %2626 = vmatprep.subr.mxu0 0.0
    %2627 = vmatpush2.msra.mxu0 0.0
    %2628 = vmatprep.subr.mxu0 0.0
    %2629 = vmatpush2.msra.mxu0 0.0
    %2630 = vmatprep.subr.mxu0 0.0
    %2631 = vmatpush2.msra.mxu0 0.0
    %2632 = vmatprep.subr.mxu0 0.0
    %2633 = vmatpush2.msra.mxu0 0.0
    %2634 = vmatprep.subr.mxu0 0.0
    %2635 = vmatpush2.msra.mxu0 0.0
    %2636 = vmatprep.subr.mxu0 0.0
    %2637 = vmatpush2.msra.mxu0 0.0
    %2638 = vmatprep.subr.mxu0 0.0
    %2639 = vmatpush2.msra.mxu0 0.0
    %2640 = vmatprep.subr.mxu0 0.0
    %2641 = vmatpush2.msra.mxu0 0.0
    %2642 = vmatprep.subr.mxu0 0.0
    %2643 = vmatpush2.msra.mxu0 0.0
    %2644 = vmatprep.subr.mxu0 0.0
    %2645 = vmatpush2.msra.mxu0 0.0
    %2646 = vmatprep.mubr.f32.mxu0 0.0
    %2647 = vmatmul.mubr.f32.gmra.mxu0 %v2498
    %v2648 = vpop.f32.mrf.mxu0
    %v2649 = vadd.f32 %v2581, %v2648
    %v2650 = vpop.f32.mrf.mxu0
    %2651 = vmatprep.mubr.f32.mxu0 0.0
    %2652 = vmatmul.mubr.f32.gmra.mxu0 %v2501
    %v2653 = vpop.f32.mrf.mxu0
    %v2654 = vadd.f32 %v2581, %v2653
    %v2655 = vpop.f32.mrf.mxu0
    %2656 = vdwg.mxu0
    %v2657 = vmax.f32 %v2649, 0.0
    %v2658 = vmax.f32 %v2654, 0.0
    %v2659 = vlaneseq
    %v2660 = vshrl.u32 %v2659, 7
    %v2661 = vsub.s32 1, %v2660
    %v2662 = vrot.slane %v2449, %v2661
    %v2664 = vsel %vm2450, %v2657, 0
    %v2667 = vsel %vm2450, %v2658, 0
    %2669 = vmatprep.subr.mxu0 0.0
    %2670 = vmatpush1.msra.mxu0 0.0
    %2671 = vmatprep.subr.mxu0 0.0
    %2672 = vmatpush1.msra.mxu0 0.0
    %2673 = vmatprep.subr.mxu0 0.0
    %2674 = vmatpush1.msra.mxu0 0.0
    %2675 = vmatprep.subr.mxu0 0.0
    %2676 = vmatpush1.msra.mxu0 0.0
    %2677 = vmatprep.subr.mxu0 0.0
    %2678 = vmatpush1.msra.mxu0 0.0
    %2679 = vmatprep.subr.mxu0 0.0
    %2680 = vmatpush1.msra.mxu0 0.0
    %2681 = vmatprep.subr.mxu0 0.0
    %2682 = vmatpush1.msra.mxu0 0.0
    %2683 = vmatprep.subr.mxu0 0.0
    %2684 = vmatpush1.msra.mxu0 0.0
    %2685 = vmatprep.subr.mxu0 0.0
    %2686 = vmatpush1.msra.mxu0 0.0
    %2687 = vmatprep.subr.mxu0 0.0
    %2688 = vmatpush1.msra.mxu0 0.0
    %2689 = vmatprep.subr.mxu0 0.0
    %2690 = vmatpush1.msra.mxu0 0.0
    %2691 = vmatprep.subr.mxu0 0.0
    %2692 = vmatpush1.msra.mxu0 0.0
    %2693 = vmatprep.subr.mxu0 0.0
    %2694 = vmatpush1.msra.mxu0 %v2444
    %2695 = vmatprep.subr.mxu0 0.0
    %2696 = vmatpush1.msra.mxu0 %v2443
    %2697 = vmatprep.subr.mxu0 0.0
    %2698 = vmatpush1.msra.mxu0 %v2442
    %2699 = vmatprep.subr.mxu0 0.0
    %2700 = vmatpush1.msra.mxu0 %v2441
    %2701 = vmatprep.subr.mxu0 0.0
    %2702 = vmatpush2.msra.mxu0 0.0
    %2703 = vmatprep.subr.mxu0 0.0
    %2704 = vmatpush2.msra.mxu0 0.0
    %2705 = vmatprep.subr.mxu0 0.0
    %2706 = vmatpush2.msra.mxu0 0.0
    %2707 = vmatprep.subr.mxu0 0.0
    %2708 = vmatpush2.msra.mxu0 0.0
    %2709 = vmatprep.subr.mxu0 0.0
    %2710 = vmatpush2.msra.mxu0 0.0
    %2711 = vmatprep.subr.mxu0 0.0
    %2712 = vmatpush2.msra.mxu0 0.0
    %2713 = vmatprep.subr.mxu0 0.0
    %2714 = vmatpush2.msra.mxu0 0.0
    %2715 = vmatprep.subr.mxu0 0.0
    %2716 = vmatpush2.msra.mxu0 0.0
    %2717 = vmatprep.subr.mxu0 0.0
    %2718 = vmatpush2.msra.mxu0 0.0
    %2719 = vmatprep.subr.mxu0 0.0
    %2720 = vmatpush2.msra.mxu0 0.0
    %2721 = vmatprep.subr.mxu0 0.0
    %2722 = vmatpush2.msra.mxu0 0.0
    %2723 = vmatprep.subr.mxu0 0.0
    %2724 = vmatpush2.msra.mxu0 0.0
    %2725 = vmatprep.subr.mxu0 0.0
    %2726 = vmatpush2.msra.mxu0 0.0
    %2727 = vmatprep.subr.mxu0 0.0
    %2728 = vmatpush2.msra.mxu0 0.0
    %2729 = vmatprep.subr.mxu0 0.0
    %2730 = vmatpush2.msra.mxu0 0.0
    %2731 = vmatprep.subr.mxu0 0.0
    %2732 = vmatpush2.msra.mxu0 0.0
    %2733 = vmatprep.mubr.f32.mxu0 0.0
    %2734 = vmatmul.mubr.f32.gmra.mxu0 %v2664
    %v2735 = vpop.f32.mrf.mxu0
    %v2736 = vadd.f32 %v2662, %v2735
    %v2737 = vpop.f32.mrf.mxu0
    %2738 = vmatprep.mubr.f32.mxu0 0.0
    %2739 = vmatmul.mubr.f32.gmra.mxu0 %v2667
    %v2740 = vpop.f32.mrf.mxu0
    %v2741 = vadd.f32 %v2662, %v2740
    %v2742 = vpop.f32.mrf.mxu0
    %2743 = vdwg.mxu0
    %v2744 = vmax.f32 %v2736, 0.0
    %v2745 = vmax.f32 %v2741, 0.0
    %v2746 = vlaneseq
    %v2747 = vshrl.u32 %v2746, 7
    %v2748 = vsub.s32 2, %v2747
    %v2749 = vrot.slane %v2449, %v2748
    %v2751 = vsel %vm2450, %v2744, 0
    %v2754 = vsel %vm2450, %v2745, 0
    %2756 = vmatprep.subr.mxu0 0.0
    %2757 = vmatpush1.msra.mxu0 0.0
    %2758 = vmatprep.subr.mxu0 0.0
    %2759 = vmatpush1.msra.mxu0 0.0
    %2760 = vmatprep.subr.mxu0 0.0
    %2761 = vmatpush1.msra.mxu0 0.0
    %2762 = vmatprep.subr.mxu0 0.0
    %2763 = vmatpush1.msra.mxu0 0.0
    %2764 = vmatprep.subr.mxu0 0.0
    %2765 = vmatpush1.msra.mxu0 0.0
    %2766 = vmatprep.subr.mxu0 0.0
    %2767 = vmatpush1.msra.mxu0 0.0
    %2768 = vmatprep.subr.mxu0 0.0
    %2769 = vmatpush1.msra.mxu0 0.0
    %2770 = vmatprep.subr.mxu0 0.0
    %2771 = vmatpush1.msra.mxu0 0.0
    %2772 = vmatprep.subr.mxu0 0.0
    %2773 = vmatpush1.msra.mxu0 0.0
    %2774 = vmatprep.subr.mxu0 0.0
    %2775 = vmatpush1.msra.mxu0 0.0
    %2776 = vmatprep.subr.mxu0 0.0
    %2777 = vmatpush1.msra.mxu0 0.0
    %2778 = vmatprep.subr.mxu0 0.0
    %2779 = vmatpush1.msra.mxu0 0.0
    %2780 = vmatprep.subr.mxu0 0.0
    %2781 = vmatpush1.msra.mxu0 %v2448
    %2782 = vmatprep.subr.mxu0 0.0
    %2783 = vmatpush1.msra.mxu0 %v2447
    %2784 = vmatprep.subr.mxu0 0.0
    %2785 = vmatpush1.msra.mxu0 %v2446
    %2786 = vmatprep.subr.mxu0 0.0
    %2787 = vmatpush1.msra.mxu0 %v2445
    %2788 = vmatprep.subr.mxu0 0.0
    %2789 = vmatpush2.msra.mxu0 0.0
    %2790 = vmatprep.subr.mxu0 0.0
    %2791 = vmatpush2.msra.mxu0 0.0
    %2792 = vmatprep.subr.mxu0 0.0
    %2793 = vmatpush2.msra.mxu0 0.0
    %2794 = vmatprep.subr.mxu0 0.0
    %2795 = vmatpush2.msra.mxu0 0.0
    %2796 = vmatprep.subr.mxu0 0.0
    %2797 = vmatpush2.msra.mxu0 0.0
    %2798 = vmatprep.subr.mxu0 0.0
    %2799 = vmatpush2.msra.mxu0 0.0
    %2800 = vmatprep.subr.mxu0 0.0
    %2801 = vmatpush2.msra.mxu0 0.0
    %2802 = vmatprep.subr.mxu0 0.0
    %2803 = vmatpush2.msra.mxu0 0.0
    %2804 = vmatprep.subr.mxu0 0.0
    %2805 = vmatpush2.msra.mxu0 0.0
    %2806 = vmatprep.subr.mxu0 0.0
    %2807 = vmatpush2.msra.mxu0 0.0
    %2808 = vmatprep.subr.mxu0 0.0
    %2809 = vmatpush2.msra.mxu0 0.0
    %2810 = vmatprep.subr.mxu0 0.0
    %2811 = vmatpush2.msra.mxu0 0.0
    %2812 = vmatprep.subr.mxu0 0.0
    %2813 = vmatpush2.msra.mxu0 0.0
    %2814 = vmatprep.subr.mxu0 0.0
    %2815 = vmatpush2.msra.mxu0 0.0
    %2816 = vmatprep.subr.mxu0 0.0
    %2817 = vmatpush2.msra.mxu0 0.0
    %2818 = vmatprep.subr.mxu0 0.0
    %2819 = vmatpush2.msra.mxu0 0.0
    %2820 = vmatprep.mubr.f32.mxu0 0.0
    %2821 = vmatmul.mubr.f32.gmra.mxu0 %v2751
    %v2822 = vpop.f32.mrf.mxu0
    %v2823 = vadd.f32 %v2749, %v2822
    %v2824 = vpop.f32.mrf.mxu0
    %2825 = vmatprep.mubr.f32.mxu0 0.0
    %2826 = vmatmul.mubr.f32.gmra.mxu0 %v2754
    %v2827 = vpop.f32.mrf.mxu0
    %v2828 = vadd.f32 %v2749, %v2827
    %v2829 = vpop.f32.mrf.mxu0
    %2830 = vdwg.mxu0
    %v2832 = vsel %vm2450, %v2823, 0
    %v2835 = vsel %vm2450, %v2828, 0
    %v2838 = vsel %vm2450, %v2301, 0
    %v2841 = vsel %vm2450, %v2302, 0
    %v2844 = vsel %vm2450, %v2303, 0
    %v2847 = vsel %vm2450, %v2304, 0
    %v2850 = vsel %vm2450, %v2305, 0
    %v2853 = vsel %vm2450, %v2306, 0
    %v2856 = vsel %vm2450, %v2307, 0
    %v2859 = vsel %vm2450, %v2308, 0
    %2861 = vmatprep.subr.mxu0 0.0
    %2862 = vmatpush1.xpose.msra.mxu0 0.0
    %2863 = vmatprep.subr.mxu0 0.0
    %2864 = vmatpush1.xpose.msra.mxu0 0.0
    %2865 = vmatprep.subr.mxu0 0.0
    %2866 = vmatpush1.xpose.msra.mxu0 0.0
    %2867 = vmatprep.subr.mxu0 0.0
    %2868 = vmatpush1.xpose.msra.mxu0 0.0
    %2869 = vmatprep.subr.mxu0 0.0
    %2870 = vmatpush1.xpose.msra.mxu0 0.0
    %2871 = vmatprep.subr.mxu0 0.0
    %2872 = vmatpush1.xpose.msra.mxu0 0.0
    %2873 = vmatprep.subr.mxu0 0.0
    %2874 = vmatpush1.xpose.msra.mxu0 0.0
    %2875 = vmatprep.subr.mxu0 0.0
    %2876 = vmatpush1.xpose.msra.mxu0 0.0
    %2877 = vmatprep.subr.mxu0 0.0
    %2878 = vmatpush1.xpose.msra.mxu0 %v2859
    %2879 = vmatprep.subr.mxu0 0.0
    %2880 = vmatpush1.xpose.msra.mxu0 %v2856
    %2881 = vmatprep.subr.mxu0 0.0
    %2882 = vmatpush1.xpose.msra.mxu0 %v2853
    %2883 = vmatprep.subr.mxu0 0.0
    %2884 = vmatpush1.xpose.msra.mxu0 %v2850
    %2885 = vmatprep.subr.mxu0 0.0
    %2886 = vmatpush1.xpose.msra.mxu0 %v2847
    %2887 = vmatprep.subr.mxu0 0.0
    %2888 = vmatpush1.xpose.msra.mxu0 %v2844
    %2889 = vmatprep.subr.mxu0 0.0
    %2890 = vmatpush1.xpose.msra.mxu0 %v2841
    %2891 = vmatprep.subr.mxu0 0.0
    %2892 = vmatpush1.xpose.msra.mxu0 %v2838
    %2893 = vmatprep.subr.mxu0 0.0
    %2894 = vmatpush2.xpose.msra.mxu0 0.0
    %2895 = vmatprep.subr.mxu0 0.0
    %2896 = vmatpush2.xpose.msra.mxu0 0.0
    %2897 = vmatprep.subr.mxu0 0.0
    %2898 = vmatpush2.xpose.msra.mxu0 0.0
    %2899 = vmatprep.subr.mxu0 0.0
    %2900 = vmatpush2.xpose.msra.mxu0 0.0
    %2901 = vmatprep.subr.mxu0 0.0
    %2902 = vmatpush2.xpose.msra.mxu0 0.0
    %2903 = vmatprep.subr.mxu0 0.0
    %2904 = vmatpush2.xpose.msra.mxu0 0.0
    %2905 = vmatprep.subr.mxu0 0.0
    %2906 = vmatpush2.xpose.msra.mxu0 0.0
    %2907 = vmatprep.subr.mxu0 0.0
    %2908 = vmatpush2.xpose.msra.mxu0 0.0
    %2909 = vmatprep.subr.mxu0 0.0
    %2910 = vmatpush2.xpose.msra.mxu0 0.0
    %2911 = vmatprep.subr.mxu0 0.0
    %2912 = vmatpush2.xpose.msra.mxu0 0.0
    %2913 = vmatprep.subr.mxu0 0.0
    %2914 = vmatpush2.xpose.msra.mxu0 0.0
    %2915 = vmatprep.subr.mxu0 0.0
    %2916 = vmatpush2.xpose.msra.mxu0 0.0
    %2917 = vmatprep.subr.mxu0 0.0
    %2918 = vmatpush2.xpose.msra.mxu0 0.0
    %2919 = vmatprep.subr.mxu0 0.0
    %2920 = vmatpush2.xpose.msra.mxu0 0.0
    %2921 = vmatprep.subr.mxu0 0.0
    %2922 = vmatpush2.xpose.msra.mxu0 0.0
    %2923 = vmatprep.subr.mxu0 0.0
    %2924 = vmatpush2.xpose.msra.mxu0 0.0
    %2925 = vmatprep.mubr.f32.mxu0 0.0
    %2926 = vmatmul.mubr.f32.gmra.mxu0 %v2832
    %v2927 = vpop.f32.mrf.mxu0
    %v2928 = vadd.f32 0.0, %v2927
    %v2929 = vpop.f32.mrf.mxu0
    %2930 = vmatprep.mubr.f32.mxu0 0.0
    %2931 = vmatmul.mubr.f32.gmra.mxu0 %v2835
    %v2932 = vpop.f32.mrf.mxu0
    %v2933 = vadd.f32 0.0, %v2932
    %v2934 = vpop.f32.mrf.mxu0
    %2935 = vdwg.mxu0
    %v2936 = vsub.f32 0.0, %v2928
    %v2937 = vsub.f32 0.0, %v2933
    %v2938 = vmul.f32 %v2936, 1.442695
    %v2939 = vpow.pop %v2938
    %v2940 = vmul.f32 %v2937, 1.442695
    %v2941 = vpow.pop %v2940
    %v2942 = vadd.f32 %v2939, 1.0
    %v2943 = vadd.f32 %v2941, 1.0
    %v2944 = vrcp.pop %v2942
    %v2945 = vrcp.pop %v2943
    %v2946 = vadd.f32 %v2944, %v2425
    %v2947 = vadd.f32 %v2945, %v2426
    %vm2948 = vcmask 523264
    %v2949 = vsel %vm2948, %v2946, inf
    %2950 = vmin.xlane.f32.xlu0 %v2949
    %v2951 = vpop.xlane.xlu0 %2950
    %vm2952 = vcmask 519168
    %v2953 = vsel %vm2952, %v2947, inf
    %2954 = vmin.xlane.f32.xlu0 %v2953
    %v2955 = vpop.xlane.xlu0 %2954
    %vm2956 = vcmask 1043456
    %v2957 = vsel %vm2956, %v2955, inf
    %v2958 = vmin.f32 %v2951, %v2957
    %v2959 = vrot.slane %v2958, 4
    %v2960 = vmin.f32 %v2958, %v2959
    %v2961 = vrot.slane %v2960, 2
    %v2962 = vmin.f32 %v2960, %v2961
    %v2963 = vrot.slane %v2962, 1
    %v2964 = vmin.f32 %v2962, %v2963
    %v2965 = vsub.f32 %v2946, %v2964
    %v2966 = vsub.f32 %v2947, %v2964
    %v2967 = vsel %vm2948, %v2965, -inf
    %2968 = vmax.xlane.f32.xlu0 %v2967
    %v2969 = vpop.xlane.xlu0 %2968
    %v2970 = vsel %vm2952, %v2966, -inf
    %2971 = vmax.xlane.f32.xlu0 %v2970
    %v2972 = vpop.xlane.xlu0 %2971
    %v2973 = vsel %vm2956, %v2972, -inf
    %v2974 = vmax.f32 %v2969, %v2973
    %v2975 = vrot.slane %v2974, 4
    %v2976 = vmax.f32 %v2974, %v2975
    %v2977 = vrot.slane %v2976, 2
    %v2978 = vmax.f32 %v2976, %v2977
    %v2979 = vrot.slane %v2978, 1
    %v2980 = vmax.f32 %v2978, %v2979
    %v2981 = vrcp.pop %v2980
    %v2982 = vmul.f32 %v2965, %v2981
    %v2983 = vmul.f32 %v2966, %v2981
    %vm2984 = vcmp.lt.f32.partialorder %v2982, 0.5
    %vm2985 = vcmp.lt.f32.partialorder %v2983, 0.5
    %v2986 = vsel %vm2984, 1, 0
    %v2987 = vsel %vm2985, 1, 0
    %v2988 = vcvt.s32.f32 %v2986
    %v2989 = vcvt.s32.f32 %v2987
    %2990 = vst.msk [vmem:[%s59] sm:$0xff] %vm2948, %v2928
    %2991 = vst.msk [vmem:[%s59 + $0x8] sm:$0xf] %vm2952, %v2933
    %2994 = vrot.lane.b32.xlu0 %v2570, 32
    %v2995 = vpop.permute.xlu0 %2994
    %2996 = vrot.lane.b32.xlu0 %v2575, 32
    %v2997 = vpop.permute.xlu0 %2996
    %v3000 = vsel %vm2450, %v2429, %v2995
    %v3001 = vsel %vm2450, %v2430, %v2997
    %vm3002 = vcmask 310272
    %3003 = vst.msk [vmem:[%s61] sm:$0xff] %vm3002, %v3000
    %vm3004 = vcmask 306176
    %3005 = vst.msk [vmem:[%s61 + $0x8] sm:$0xf] %vm3004, %v3001
    %v3006 = vld [vmem:[%s33] sm:$0xff]
    %v3007 = vld [vmem:[%s33 + $0x8] sm:$0xff]
    %v3008 = vld [vmem:[%s33 + $0x10] sm:$0xff]
    %v3009 = vld [vmem:[%s33 + $0x18] sm:$0xff]
    %v3010 = vld [vmem:[%s33 + $0x20] sm:$0xff]
    %v3011 = vld [vmem:[%s33 + $0x28] sm:$0xff]
    %v3012 = vld [vmem:[%s33 + $0x30] sm:$0xff]
    %v3013 = vld [vmem:[%s33 + $0x38] sm:$0xff]
    %v3014 = vld [vmem:[%s33 + $0x40] sm:$0xff]
    %v3015 = vld [vmem:[%s33 + $0x48] sm:$0xff]
    %v3016 = vld [vmem:[%s33 + $0x50] sm:$0xff]
    %v3017 = vld [vmem:[%s33 + $0x58] sm:$0xff]
    %v3018 = vld [vmem:[%s33 + $0x60] sm:$0xff]
    %v3019 = vld [vmem:[%s33 + $0x68] sm:$0xff]
    %v3020 = vld [vmem:[%s33 + $0x70] sm:$0xff]
    %v3021 = vld [vmem:[%s33 + $0x78] sm:$0xff]
    %v3022 = vld [vmem:[#allocation12] sm:$0xf]
    %v3023 = vld [vmem:[%s57] sm:$0x3f]
    %v3024 = vsel %vm2948, %v2988, 0.0
    %3025 = vadd.xlane.f32.xlu0 %v3024
    %v3026 = vpop.xlane.xlu0 %3025
    %v3027 = vsel %vm2952, %v2989, 0.0
    %3028 = vadd.xlane.f32.xlu0 %v3027
    %v3029 = vpop.xlane.xlu0 %3028
    %vm3030 = vcmp.ge.f32.partialorder %v3026, 63.5
    %vm3031 = vcmp.ge.f32.partialorder %v3029, 63.5
    %v3032 = vsel %vm3030, 1, 0
    %v3033 = vsel %vm3031, 1, 0
    %vm3034 = vcmp.eq.s32.totalorder %v3032, 1
    %vm3035 = vcmp.eq.s32.totalorder %v3033, 1
    %v3036 = vsel %vm3034, 0.0, %v2988
    %v3037 = vsel %vm3035, 0.0, %v2989
    %v3038 = vmul.f32 %v3036, 1e+09
    %v3039 = vmul.f32 %v3037, 1e+09
    %v3040 = vsub.f32 %v2423, %v3038
    %v3041 = vsub.f32 %v2424, %v3039
    %v3042 = vadd.f32 %v2429, %v2427
    %v3043 = vadd.f32 %v2430, %v2428
    %v3044 = vlaneseq
    %v3045 = vshrl.u32 %v3044, 7
    %v3046 = vsub.s32 0, %v3045
    %v3047 = vrot.slane %v3022, %v3046
    %v3049 = vsel %vm2450, %v3042, 0
    %v3052 = vsel %vm2450, %v3043, 0
    %3054 = vmatprep.subr.mxu0 0.0
    %3055 = vmatpush1.msra.mxu0 0.0
    %3056 = vmatprep.subr.mxu0 0.0
    %3057 = vmatpush1.msra.mxu0 0.0
    %3058 = vmatprep.subr.mxu0 0.0
    %3059 = vmatpush1.msra.mxu0 0.0
    %3060 = vmatprep.subr.mxu0 0.0
    %3061 = vmatpush1.msra.mxu0 0.0
    %3062 = vmatprep.subr.mxu0 0.0
    %3063 = vmatpush1.msra.mxu0 0.0
    %3064 = vmatprep.subr.mxu0 0.0
    %3065 = vmatpush1.msra.mxu0 0.0
    %3066 = vmatprep.subr.mxu0 0.0
    %3067 = vmatpush1.msra.mxu0 0.0
    %3068 = vmatprep.subr.mxu0 0.0
    %3069 = vmatpush1.msra.mxu0 0.0
    %3070 = vmatprep.subr.mxu0 0.0
    %3071 = vmatpush1.msra.mxu0 0.0
    %3072 = vmatprep.subr.mxu0 0.0
    %3073 = vmatpush1.msra.mxu0 0.0
    %3074 = vmatprep.subr.mxu0 0.0
    %3075 = vmatpush1.msra.mxu0 0.0
    %3076 = vmatprep.subr.mxu0 0.0
    %3077 = vmatpush1.msra.mxu0 0.0
    %3078 = vmatprep.subr.mxu0 0.0
    %3079 = vmatpush1.msra.mxu0 %v3009
    %3080 = vmatprep.subr.mxu0 0.0
    %3081 = vmatpush1.msra.mxu0 %v3008
    %3082 = vmatprep.subr.mxu0 0.0
    %3083 = vmatpush1.msra.mxu0 %v3007
    %3084 = vmatprep.subr.mxu0 0.0
    %3085 = vmatpush1.msra.mxu0 %v3006
    %3086 = vmatprep.subr.mxu0 0.0
    %3087 = vmatpush2.msra.mxu0 0.0
    %3088 = vmatprep.subr.mxu0 0.0
    %3089 = vmatpush2.msra.mxu0 0.0
    %3090 = vmatprep.subr.mxu0 0.0
    %3091 = vmatpush2.msra.mxu0 0.0
    %3092 = vmatprep.subr.mxu0 0.0
    %3093 = vmatpush2.msra.mxu0 0.0
    %3094 = vmatprep.subr.mxu0 0.0
    %3095 = vmatpush2.msra.mxu0 0.0
    %3096 = vmatprep.subr.mxu0 0.0
    %3097 = vmatpush2.msra.mxu0 0.0
    %3098 = vmatprep.subr.mxu0 0.0
    %3099 = vmatpush2.msra.mxu0 0.0
    %3100 = vmatprep.subr.mxu0 0.0
    %3101 = vmatpush2.msra.mxu0 0.0
    %3102 = vmatprep.subr.mxu0 0.0
    %3103 = vmatpush2.msra.mxu0 0.0
    %3104 = vmatprep.subr.mxu0 0.0
    %3105 = vmatpush2.msra.mxu0 0.0
    %3106 = vmatprep.subr.mxu0 0.0
    %3107 = vmatpush2.msra.mxu0 0.0
    %3108 = vmatprep.subr.mxu0 0.0
    %3109 = vmatpush2.msra.mxu0 0.0
    %3110 = vmatprep.subr.mxu0 0.0
    %3111 = vmatpush2.msra.mxu0 0.0
    %3112 = vmatprep.subr.mxu0 0.0
    %3113 = vmatpush2.msra.mxu0 0.0
    %3114 = vmatprep.subr.mxu0 0.0
    %3115 = vmatpush2.msra.mxu0 0.0
    %3116 = vmatprep.subr.mxu0 0.0
    %3117 = vmatpush2.msra.mxu0 0.0
    %3118 = vmatprep.mubr.f32.mxu0 0.0
    %3119 = vmatmul.mubr.f32.gmra.mxu0 %v3049
    %v3120 = vpop.f32.mrf.mxu0
    %v3121 = vadd.f32 %v3047, %v3120
    %v3122 = vpop.f32.mrf.mxu0
    %3123 = vmatprep.mubr.f32.mxu0 0.0
    %3124 = vmatmul.mubr.f32.gmra.mxu0 %v3052
    %v3125 = vpop.f32.mrf.mxu0
    %v3126 = vadd.f32 %v3047, %v3125
    %v3127 = vpop.f32.mrf.mxu0
    %3128 = vdwg.mxu0
    %v3129 = vadd.f32 %v2385, %v2155
    %v3130 = vadd.f32 %v2390, %v2156
    %v3131 = vadd.f32 %v2395, %v2157
    %v3132 = vadd.f32 %v2400, %v2158
    %v3133 = vadd.f32 %v2405, %v2159
    %v3134 = vadd.f32 %v2410, %v2160
    %v3135 = vadd.f32 %v2415, %v2161
    %v3136 = vadd.f32 %v2420, %v2162
    %v3137 = vlaneseq
    %v3138 = vshrl.u32 %v3137, 7
    %v3139 = vsub.s32 1, %v3138
    %v3140 = vrot.slane %v3022, %v3139
    %v3142 = vsel %vm2450, %v3129, 0
    %v3145 = vsel %vm2450, %v3130, 0
    %v3148 = vsel %vm2450, %v3131, 0
    %v3151 = vsel %vm2450, %v3132, 0
    %v3154 = vsel %vm2450, %v3133, 0
    %v3157 = vsel %vm2450, %v3134, 0
    %v3160 = vsel %vm2450, %v3135, 0
    %v3163 = vsel %vm2450, %v3136, 0
    %3165 = vmatprep.subr.mxu0 0.0
    %3166 = vmatpush1.msra.mxu0 0.0
    %3167 = vmatprep.subr.mxu0 0.0
    %3168 = vmatpush1.msra.mxu0 0.0
    %3169 = vmatprep.subr.mxu0 0.0
    %3170 = vmatpush1.msra.mxu0 0.0
    %3171 = vmatprep.subr.mxu0 0.0
    %3172 = vmatpush1.msra.mxu0 0.0
    %3173 = vmatprep.subr.mxu0 0.0
    %3174 = vmatpush1.msra.mxu0 0.0
    %3175 = vmatprep.subr.mxu0 0.0
    %3176 = vmatpush1.msra.mxu0 0.0
    %3177 = vmatprep.subr.mxu0 0.0
    %3178 = vmatpush1.msra.mxu0 0.0
    %3179 = vmatprep.subr.mxu0 0.0
    %3180 = vmatpush1.msra.mxu0 0.0
    %3181 = vmatprep.subr.mxu0 0.0
    %3182 = vmatpush1.msra.mxu0 0.0
    %3183 = vmatprep.subr.mxu0 0.0
    %3184 = vmatpush1.msra.mxu0 0.0
    %3185 = vmatprep.subr.mxu0 0.0
    %3186 = vmatpush1.msra.mxu0 0.0
    %3187 = vmatprep.subr.mxu0 0.0
    %3188 = vmatpush1.msra.mxu0 0.0
    %3189 = vmatprep.subr.mxu0 0.0
    %3190 = vmatpush1.msra.mxu0 %v3013
    %3191 = vmatprep.subr.mxu0 0.0
    %3192 = vmatpush1.msra.mxu0 %v3012
    %3193 = vmatprep.subr.mxu0 0.0
    %3194 = vmatpush1.msra.mxu0 %v3011
    %3195 = vmatprep.subr.mxu0 0.0
    %3196 = vmatpush1.msra.mxu0 %v3010
    %3197 = vmatprep.subr.mxu0 0.0
    %3198 = vmatpush2.msra.mxu0 0.0
    %3199 = vmatprep.subr.mxu0 0.0
    %3200 = vmatpush2.msra.mxu0 0.0
    %3201 = vmatprep.subr.mxu0 0.0
    %3202 = vmatpush2.msra.mxu0 0.0
    %3203 = vmatprep.subr.mxu0 0.0
    %3204 = vmatpush2.msra.mxu0 0.0
    %3205 = vmatprep.subr.mxu0 0.0
    %3206 = vmatpush2.msra.mxu0 0.0
    %3207 = vmatprep.subr.mxu0 0.0
    %3208 = vmatpush2.msra.mxu0 0.0
    %3209 = vmatprep.subr.mxu0 0.0
    %3210 = vmatpush2.msra.mxu0 0.0
    %3211 = vmatprep.subr.mxu0 0.0
    %3212 = vmatpush2.msra.mxu0 0.0
    %3213 = vmatprep.subr.mxu0 0.0
    %3214 = vmatpush2.msra.mxu0 0.0
    %3215 = vmatprep.subr.mxu0 0.0
    %3216 = vmatpush2.msra.mxu0 0.0
    %3217 = vmatprep.subr.mxu0 0.0
    %3218 = vmatpush2.msra.mxu0 0.0
    %3219 = vmatprep.subr.mxu0 0.0
    %3220 = vmatpush2.msra.mxu0 0.0
    %3221 = vmatprep.subr.mxu0 0.0
    %3222 = vmatpush2.msra.mxu0 0.0
    %3223 = vmatprep.subr.mxu0 0.0
    %3224 = vmatpush2.msra.mxu0 0.0
    %3225 = vmatprep.subr.mxu0 0.0
    %3226 = vmatpush2.msra.mxu0 0.0
    %3227 = vmatprep.subr.mxu0 0.0
    %3228 = vmatpush2.msra.mxu0 0.0
    %3229 = vmatprep.mubr.f32.mxu0 0.0
    %3230 = vmatmul.mubr.f32.gmra.mxu0 %v3142
    %v3231 = vpop.f32.mrf.mxu0
    %v3232 = vadd.f32 %v3140, %v3231
    %v3233 = vpop.f32.mrf.mxu0
    %3234 = vmatprep.mubr.f32.mxu0 0.0
    %3235 = vmatmul.mubr.f32.gmra.mxu0 %v3145
    %v3236 = vpop.f32.mrf.mxu0
    %v3237 = vadd.f32 %v3140, %v3236
    %v3238 = vpop.f32.mrf.mxu0
    %3239 = vmatprep.mubr.f32.mxu0 0.0
    %3240 = vmatmul.mubr.f32.gmra.mxu0 %v3148
    %v3241 = vpop.f32.mrf.mxu0
    %v3242 = vadd.f32 %v3140, %v3241
    %v3243 = vpop.f32.mrf.mxu0
    %3244 = vmatprep.mubr.f32.mxu0 0.0
    %3245 = vmatmul.mubr.f32.gmra.mxu0 %v3151
    %v3246 = vpop.f32.mrf.mxu0
    %v3247 = vadd.f32 %v3140, %v3246
    %v3248 = vpop.f32.mrf.mxu0
    %3249 = vmatprep.mubr.f32.mxu0 0.0
    %3250 = vmatmul.mubr.f32.gmra.mxu0 %v3154
    %v3251 = vpop.f32.mrf.mxu0
    %v3252 = vadd.f32 %v3140, %v3251
    %v3253 = vpop.f32.mrf.mxu0
    %3254 = vmatprep.mubr.f32.mxu0 0.0
    %3255 = vmatmul.mubr.f32.gmra.mxu0 %v3157
    %v3256 = vpop.f32.mrf.mxu0
    %v3257 = vadd.f32 %v3140, %v3256
    %v3258 = vpop.f32.mrf.mxu0
    %3259 = vmatprep.mubr.f32.mxu0 0.0
    %3260 = vmatmul.mubr.f32.gmra.mxu0 %v3160
    %v3261 = vpop.f32.mrf.mxu0
    %v3262 = vadd.f32 %v3140, %v3261
    %v3263 = vpop.f32.mrf.mxu0
    %3264 = vmatprep.mubr.f32.mxu0 0.0
    %3265 = vmatmul.mubr.f32.gmra.mxu0 %v3163
    %v3266 = vpop.f32.mrf.mxu0
    %v3267 = vadd.f32 %v3140, %v3266
    %v3268 = vpop.f32.mrf.mxu0
    %3269 = vdwg.mxu0
    %v3270 = vlaneseq
    %v3271 = vshrl.u32 %v3270, 7
    %v3272 = vsub.s32 2, %v3271
    %v3273 = vrot.slane %v3022, %v3272
    %v3275 = vsel %vm2450, %v2385, 0
    %v3278 = vsel %vm2450, %v2390, 0
    %v3281 = vsel %vm2450, %v2395, 0
    %v3284 = vsel %vm2450, %v2400, 0
    %v3287 = vsel %vm2450, %v2405, 0
    %v3290 = vsel %vm2450, %v2410, 0
    %v3293 = vsel %vm2450, %v2415, 0
    %v3296 = vsel %vm2450, %v2420, 0
    %3298 = vmatprep.subr.mxu0 0.0
    %3299 = vmatpush1.msra.mxu0 0.0
    %3300 = vmatprep.subr.mxu0 0.0
    %3301 = vmatpush1.msra.mxu0 0.0
    %3302 = vmatprep.subr.mxu0 0.0
    %3303 = vmatpush1.msra.mxu0 0.0
    %3304 = vmatprep.subr.mxu0 0.0
    %3305 = vmatpush1.msra.mxu0 0.0
    %3306 = vmatprep.subr.mxu0 0.0
    %3307 = vmatpush1.msra.mxu0 0.0
    %3308 = vmatprep.subr.mxu0 0.0
    %3309 = vmatpush1.msra.mxu0 0.0
    %3310 = vmatprep.subr.mxu0 0.0
    %3311 = vmatpush1.msra.mxu0 0.0
    %3312 = vmatprep.subr.mxu0 0.0
    %3313 = vmatpush1.msra.mxu0 0.0
    %3314 = vmatprep.subr.mxu0 0.0
    %3315 = vmatpush1.msra.mxu0 0.0
    %3316 = vmatprep.subr.mxu0 0.0
    %3317 = vmatpush1.msra.mxu0 0.0
    %3318 = vmatprep.subr.mxu0 0.0
    %3319 = vmatpush1.msra.mxu0 0.0
    %3320 = vmatprep.subr.mxu0 0.0
    %3321 = vmatpush1.msra.mxu0 0.0
    %3322 = vmatprep.subr.mxu0 0.0
    %3323 = vmatpush1.msra.mxu0 %v3017
    %3324 = vmatprep.subr.mxu0 0.0
    %3325 = vmatpush1.msra.mxu0 %v3016
    %3326 = vmatprep.subr.mxu0 0.0
    %3327 = vmatpush1.msra.mxu0 %v3015
    %3328 = vmatprep.subr.mxu0 0.0
    %3329 = vmatpush1.msra.mxu0 %v3014
    %3330 = vmatprep.subr.mxu0 0.0
    %3331 = vmatpush2.msra.mxu0 0.0
    %3332 = vmatprep.subr.mxu0 0.0
    %3333 = vmatpush2.msra.mxu0 0.0
    %3334 = vmatprep.subr.mxu0 0.0
    %3335 = vmatpush2.msra.mxu0 0.0
    %3336 = vmatprep.subr.mxu0 0.0
    %3337 = vmatpush2.msra.mxu0 0.0
    %3338 = vmatprep.subr.mxu0 0.0
    %3339 = vmatpush2.msra.mxu0 0.0
    %3340 = vmatprep.subr.mxu0 0.0
    %3341 = vmatpush2.msra.mxu0 0.0
    %3342 = vmatprep.subr.mxu0 0.0
    %3343 = vmatpush2.msra.mxu0 0.0
    %3344 = vmatprep.subr.mxu0 0.0
    %3345 = vmatpush2.msra.mxu0 0.0
    %3346 = vmatprep.subr.mxu0 0.0
    %3347 = vmatpush2.msra.mxu0 0.0
    %3348 = vmatprep.subr.mxu0 0.0
    %3349 = vmatpush2.msra.mxu0 0.0
    %3350 = vmatprep.subr.mxu0 0.0
    %3351 = vmatpush2.msra.mxu0 0.0
    %3352 = vmatprep.subr.mxu0 0.0
    %3353 = vmatpush2.msra.mxu0 0.0
    %3354 = vmatprep.subr.mxu0 0.0
    %3355 = vmatpush2.msra.mxu0 0.0
    %3356 = vmatprep.subr.mxu0 0.0
    %3357 = vmatpush2.msra.mxu0 0.0
    %3358 = vmatprep.subr.mxu0 0.0
    %3359 = vmatpush2.msra.mxu0 0.0
    %3360 = vmatprep.subr.mxu0 0.0
    %3361 = vmatpush2.msra.mxu0 0.0
    %3362 = vmatprep.mubr.f32.mxu0 0.0
    %3363 = vmatmul.mubr.f32.gmra.mxu0 %v3275
    %v3364 = vpop.f32.mrf.mxu0
    %v3365 = vadd.f32 %v3273, %v3364
    %v3366 = vpop.f32.mrf.mxu0
    %3367 = vmatprep.mubr.f32.mxu0 0.0
    %3368 = vmatmul.mubr.f32.gmra.mxu0 %v3278
    %v3369 = vpop.f32.mrf.mxu0
    %v3370 = vadd.f32 %v3273, %v3369
    %v3371 = vpop.f32.mrf.mxu0
    %3372 = vmatprep.mubr.f32.mxu0 0.0
    %3373 = vmatmul.mubr.f32.gmra.mxu0 %v3281
    %v3374 = vpop.f32.mrf.mxu0
    %v3375 = vadd.f32 %v3273, %v3374
    %v3376 = vpop.f32.mrf.mxu0
    %3377 = vmatprep.mubr.f32.mxu0 0.0
    %3378 = vmatmul.mubr.f32.gmra.mxu0 %v3284
    %v3379 = vpop.f32.mrf.mxu0
    %v3380 = vadd.f32 %v3273, %v3379
    %v3381 = vpop.f32.mrf.mxu0
    %3382 = vmatprep.mubr.f32.mxu0 0.0
    %3383 = vmatmul.mubr.f32.gmra.mxu0 %v3287
    %v3384 = vpop.f32.mrf.mxu0
    %v3385 = vadd.f32 %v3273, %v3384
    %v3386 = vpop.f32.mrf.mxu0
    %3387 = vmatprep.mubr.f32.mxu0 0.0
    %3388 = vmatmul.mubr.f32.gmra.mxu0 %v3290
    %v3389 = vpop.f32.mrf.mxu0
    %v3390 = vadd.f32 %v3273, %v3389
    %v3391 = vpop.f32.mrf.mxu0
    %3392 = vmatprep.mubr.f32.mxu0 0.0
    %3393 = vmatmul.mubr.f32.gmra.mxu0 %v3293
    %v3394 = vpop.f32.mrf.mxu0
    %v3395 = vadd.f32 %v3273, %v3394
    %v3396 = vpop.f32.mrf.mxu0
    %3397 = vmatprep.mubr.f32.mxu0 0.0
    %3398 = vmatmul.mubr.f32.gmra.mxu0 %v3296
    %v3399 = vpop.f32.mrf.mxu0
    %v3400 = vadd.f32 %v3273, %v3399
    %v3401 = vpop.f32.mrf.mxu0
    %3402 = vdwg.mxu0
    %vm3403 = vcmask 64512
    %v3405 = vsel %vm3403, %v3121, 0
    %v3408 = vsel %vm3403, %v3126, 0
    %v3411 = vsel %vm3403, %v3232, 0
    %v3414 = vsel %vm3403, %v3237, 0
    %v3417 = vsel %vm3403, %v3242, 0
    %v3420 = vsel %vm3403, %v3247, 0
    %v3423 = vsel %vm3403, %v3252, 0
    %v3426 = vsel %vm3403, %v3257, 0
    %v3429 = vsel %vm3403, %v3262, 0
    %v3432 = vsel %vm3403, %v3267, 0
    %3434 = vmatprep.subr.mxu0 0.0
    %3435 = vmatpush1.xpose.msra.mxu0 0.0
    %3436 = vmatprep.subr.mxu0 0.0
    %3437 = vmatpush1.xpose.msra.mxu0 0.0
    %3438 = vmatprep.subr.mxu0 0.0
    %3439 = vmatpush1.xpose.msra.mxu0 0.0
    %3440 = vmatprep.subr.mxu0 0.0
    %3441 = vmatpush1.xpose.msra.mxu0 0.0
    %3442 = vmatprep.subr.mxu0 0.0
    %3443 = vmatpush1.xpose.msra.mxu0 0.0
    %3444 = vmatprep.subr.mxu0 0.0
    %3445 = vmatpush1.xpose.msra.mxu0 0.0
    %3446 = vmatprep.subr.mxu0 0.0
    %3447 = vmatpush1.xpose.msra.mxu0 0.0
    %3448 = vmatprep.subr.mxu0 0.0
    %3449 = vmatpush1.xpose.msra.mxu0 0.0
    %3450 = vmatprep.subr.mxu0 0.0
    %3451 = vmatpush1.xpose.msra.mxu0 %v3432
    %3452 = vmatprep.subr.mxu0 0.0
    %3453 = vmatpush1.xpose.msra.mxu0 %v3429
    %3454 = vmatprep.subr.mxu0 0.0
    %3455 = vmatpush1.xpose.msra.mxu0 %v3426
    %3456 = vmatprep.subr.mxu0 0.0
    %3457 = vmatpush1.xpose.msra.mxu0 %v3423
    %3458 = vmatprep.subr.mxu0 0.0
    %3459 = vmatpush1.xpose.msra.mxu0 %v3420
    %3460 = vmatprep.subr.mxu0 0.0
    %3461 = vmatpush1.xpose.msra.mxu0 %v3417
    %3462 = vmatprep.subr.mxu0 0.0
    %3463 = vmatpush1.xpose.msra.mxu0 %v3414
    %3464 = vmatprep.subr.mxu0 0.0
    %3465 = vmatpush1.xpose.msra.mxu0 %v3411
    %3466 = vmatprep.subr.mxu0 0.0
    %3467 = vmatpush2.xpose.msra.mxu0 0.0
    %3468 = vmatprep.subr.mxu0 0.0
    %3469 = vmatpush2.xpose.msra.mxu0 0.0
    %3470 = vmatprep.subr.mxu0 0.0
    %3471 = vmatpush2.xpose.msra.mxu0 0.0
    %3472 = vmatprep.subr.mxu0 0.0
    %3473 = vmatpush2.xpose.msra.mxu0 0.0
    %3474 = vmatprep.subr.mxu0 0.0
    %3475 = vmatpush2.xpose.msra.mxu0 0.0
    %3476 = vmatprep.subr.mxu0 0.0
    %3477 = vmatpush2.xpose.msra.mxu0 0.0
    %3478 = vmatprep.subr.mxu0 0.0
    %3479 = vmatpush2.xpose.msra.mxu0 0.0
    %3480 = vmatprep.subr.mxu0 0.0
    %3481 = vmatpush2.xpose.msra.mxu0 0.0
    %3482 = vmatprep.subr.mxu0 0.0
    %3483 = vmatpush2.xpose.msra.mxu0 0.0
    %3484 = vmatprep.subr.mxu0 0.0
    %3485 = vmatpush2.xpose.msra.mxu0 0.0
    %3486 = vmatprep.subr.mxu0 0.0
    %3487 = vmatpush2.xpose.msra.mxu0 0.0
    %3488 = vmatprep.subr.mxu0 0.0
    %3489 = vmatpush2.xpose.msra.mxu0 0.0
    %3490 = vmatprep.subr.mxu0 0.0
    %3491 = vmatpush2.xpose.msra.mxu0 0.0
    %3492 = vmatprep.subr.mxu0 0.0
    %3493 = vmatpush2.xpose.msra.mxu0 0.0
    %3494 = vmatprep.subr.mxu0 0.0
    %3495 = vmatpush2.xpose.msra.mxu0 0.0
    %3496 = vmatprep.subr.mxu0 0.0
    %3497 = vmatpush2.xpose.msra.mxu0 0.0
    %3498 = vmatprep.mubr.f32.mxu0 0.0
    %3499 = vmatmul.mubr.f32.gmra.mxu0 %v3405
    %v3500 = vpop.f32.mrf.mxu0
    %v3501 = vadd.f32 0.0, %v3500
    %v3502 = vpop.f32.mrf.mxu0
    %3503 = vmatprep.mubr.f32.mxu0 0.0
    %3504 = vmatmul.mubr.f32.gmra.mxu0 %v3408
    %v3505 = vpop.f32.mrf.mxu0
    %v3506 = vadd.f32 0.0, %v3505
    %v3507 = vpop.f32.mrf.mxu0
    %3508 = vdwg.mxu0
    %v3509 = vmul.f32 %v3501, 0.35355338
    %v3510 = vmul.f32 %v3506, 0.35355338
    %v3511 = vadd.f32 %v3509, %v3040
    %v3512 = vadd.f32 %v3510, %v3041
    %v3513 = vsel %vm2948, %v3511, -inf
    %3514 = vmax.xlane.f32.xlu0 %v3513
    %v3515 = vpop.xlane.xlu0 %3514
    %v3516 = vsel %vm2952, %v3512, -inf
    %3517 = vmax.xlane.f32.xlu0 %v3516
    %v3518 = vpop.xlane.xlu0 %3517
    %v3519 = vsub.f32 %v3511, %v3515
    %v3520 = vsub.f32 %v3512, %v3518
    %v3521 = vmul.f32 %v3519, 1.442695
    %v3522 = vpow.pop %v3521
    %v3523 = vmul.f32 %v3520, 1.442695
    %v3524 = vpow.pop %v3523
    %v3525 = vsel %vm2948, %v3522, 0.0
    %3526 = vadd.xlane.f32.xlu0 %v3525
    %v3527 = vpop.xlane.xlu0 %3526
    %v3528 = vsel %vm2952, %v3524, 0.0
    %3529 = vadd.xlane.f32.xlu0 %v3528
    %v3530 = vpop.xlane.xlu0 %3529
    %v3531 = vrcp.pop %v3527
    %v3532 = vrcp.pop %v3530
    %v3533 = vmul.f32 %v3522, %v3531
    %v3534 = vmul.f32 %v3524, %v3532
    %v3536 = vsel %vm2948, %v3533, 0
    %v3539 = vsel %vm2948, %v3534, 0
    %3541 = vmatprep.subr.mxu0 0.0
    %3542 = vmatpush1.msra.mxu0 0.0
    %3543 = vmatprep.subr.mxu0 0.0
    %3544 = vmatpush1.msra.mxu0 0.0
    %3545 = vmatprep.subr.mxu0 0.0
    %3546 = vmatpush1.msra.mxu0 0.0
    %3547 = vmatprep.subr.mxu0 0.0
    %3548 = vmatpush1.msra.mxu0 0.0
    %3549 = vmatprep.subr.mxu0 0.0
    %3550 = vmatpush1.msra.mxu0 0.0
    %3551 = vmatprep.subr.mxu0 0.0
    %3552 = vmatpush1.msra.mxu0 0.0
    %3553 = vmatprep.subr.mxu0 0.0
    %3554 = vmatpush1.msra.mxu0 0.0
    %3555 = vmatprep.subr.mxu0 0.0
    %3556 = vmatpush1.msra.mxu0 0.0
    %3557 = vmatprep.subr.mxu0 0.0
    %3558 = vmatpush1.msra.mxu0 %v3400
    %3559 = vmatprep.subr.mxu0 0.0
    %3560 = vmatpush1.msra.mxu0 %v3395
    %3561 = vmatprep.subr.mxu0 0.0
    %3562 = vmatpush1.msra.mxu0 %v3390
    %3563 = vmatprep.subr.mxu0 0.0
    %3564 = vmatpush1.msra.mxu0 %v3385
    %3565 = vmatprep.subr.mxu0 0.0
    %3566 = vmatpush1.msra.mxu0 %v3380
    %3567 = vmatprep.subr.mxu0 0.0
    %3568 = vmatpush1.msra.mxu0 %v3375
    %3569 = vmatprep.subr.mxu0 0.0
    %3570 = vmatpush1.msra.mxu0 %v3370
    %3571 = vmatprep.subr.mxu0 0.0
    %3572 = vmatpush1.msra.mxu0 %v3365
    %3573 = vmatprep.subr.mxu0 0.0
    %3574 = vmatpush2.msra.mxu0 0.0
    %3575 = vmatprep.subr.mxu0 0.0
    %3576 = vmatpush2.msra.mxu0 0.0
    %3577 = vmatprep.subr.mxu0 0.0
    %3578 = vmatpush2.msra.mxu0 0.0
    %3579 = vmatprep.subr.mxu0 0.0
    %3580 = vmatpush2.msra.mxu0 0.0
    %3581 = vmatprep.subr.mxu0 0.0
    %3582 = vmatpush2.msra.mxu0 0.0
    %3583 = vmatprep.subr.mxu0 0.0
    %3584 = vmatpush2.msra.mxu0 0.0
    %3585 = vmatprep.subr.mxu0 0.0
    %3586 = vmatpush2.msra.mxu0 0.0
    %3587 = vmatprep.subr.mxu0 0.0
    %3588 = vmatpush2.msra.mxu0 0.0
    %3589 = vmatprep.subr.mxu0 0.0
    %3590 = vmatpush2.msra.mxu0 0.0
    %3591 = vmatprep.subr.mxu0 0.0
    %3592 = vmatpush2.msra.mxu0 0.0
    %3593 = vmatprep.subr.mxu0 0.0
    %3594 = vmatpush2.msra.mxu0 0.0
    %3595 = vmatprep.subr.mxu0 0.0
    %3596 = vmatpush2.msra.mxu0 0.0
    %3597 = vmatprep.subr.mxu0 0.0
    %3598 = vmatpush2.msra.mxu0 0.0
    %3599 = vmatprep.subr.mxu0 0.0
    %3600 = vmatpush2.msra.mxu0 0.0
    %3601 = vmatprep.subr.mxu0 0.0
    %3602 = vmatpush2.msra.mxu0 0.0
    %3603 = vmatprep.subr.mxu0 0.0
    %3604 = vmatpush2.msra.mxu0 0.0
    %3605 = vmatprep.mubr.f32.mxu0 0.0
    %3606 = vmatmul.mubr.f32.gmra.mxu0 %v3536
    %v3607 = vpop.f32.mrf.mxu0
    %v3608 = vadd.f32 0.0, %v3607
    %v3609 = vpop.f32.mrf.mxu0
    %3610 = vmatprep.mubr.f32.mxu0 0.0
    %3611 = vmatmul.mubr.f32.gmra.mxu0 %v3539
    %v3612 = vpop.f32.mrf.mxu0
    %v3613 = vadd.f32 0.0, %v3612
    %v3614 = vpop.f32.mrf.mxu0
    %3615 = vdwg.mxu0
    %3616 = vrot.lane.b32.xlu0 %v3121, 120
    %v3617 = vpop.permute.xlu0 %3616
    %3618 = vrot.lane.b32.xlu0 %v3126, 120
    %v3619 = vpop.permute.xlu0 %3618
    %3620 = vrot.lane.b32.xlu0 %v3232, 120
    %v3621 = vpop.permute.xlu0 %3620
    %3622 = vrot.lane.b32.xlu0 %v3237, 120
    %v3623 = vpop.permute.xlu0 %3622
    %3624 = vrot.lane.b32.xlu0 %v3242, 120
    %v3625 = vpop.permute.xlu0 %3624
    %3626 = vrot.lane.b32.xlu0 %v3247, 120
    %v3627 = vpop.permute.xlu0 %3626
    %3628 = vrot.lane.b32.xlu0 %v3252, 120
    %v3629 = vpop.permute.xlu0 %3628
    %3630 = vrot.lane.b32.xlu0 %v3257, 120
    %v3631 = vpop.permute.xlu0 %3630
    %3632 = vrot.lane.b32.xlu0 %v3262, 120
    %v3633 = vpop.permute.xlu0 %3632
    %3634 = vrot.lane.b32.xlu0 %v3267, 120
    %v3635 = vpop.permute.xlu0 %3634
    %v3636 = vsel %vm3403, %v3617, 0
    %v3638 = vsel %vm3403, %v3619, 0
    %v3640 = vsel %vm3403, %v3621, 0
    %v3642 = vsel %vm3403, %v3623, 0
    %v3644 = vsel %vm3403, %v3625, 0
    %v3646 = vsel %vm3403, %v3627, 0
    %v3648 = vsel %vm3403, %v3629, 0
    %v3650 = vsel %vm3403, %v3631, 0
    %v3652 = vsel %vm3403, %v3633, 0
    %v3654 = vsel %vm3403, %v3635, 0
    %3656 = vmatprep.subr.mxu0 0.0
    %3657 = vmatpush1.xpose.msra.mxu0 0.0
    %3658 = vmatprep.subr.mxu0 0.0
    %3659 = vmatpush1.xpose.msra.mxu0 0.0
    %3660 = vmatprep.subr.mxu0 0.0
    %3661 = vmatpush1.xpose.msra.mxu0 0.0
    %3662 = vmatprep.subr.mxu0 0.0
    %3663 = vmatpush1.xpose.msra.mxu0 0.0
    %3664 = vmatprep.subr.mxu0 0.0
    %3665 = vmatpush1.xpose.msra.mxu0 0.0
    %3666 = vmatprep.subr.mxu0 0.0
    %3667 = vmatpush1.xpose.msra.mxu0 0.0
    %3668 = vmatprep.subr.mxu0 0.0
    %3669 = vmatpush1.xpose.msra.mxu0 0.0
    %3670 = vmatprep.subr.mxu0 0.0
    %3671 = vmatpush1.xpose.msra.mxu0 0.0
    %3672 = vmatprep.subr.mxu0 0.0
    %3673 = vmatpush1.xpose.msra.mxu0 %v3654
    %3674 = vmatprep.subr.mxu0 0.0
    %3675 = vmatpush1.xpose.msra.mxu0 %v3652
    %3676 = vmatprep.subr.mxu0 0.0
    %3677 = vmatpush1.xpose.msra.mxu0 %v3650
    %3678 = vmatprep.subr.mxu0 0.0
    %3679 = vmatpush1.xpose.msra.mxu0 %v3648
    %3680 = vmatprep.subr.mxu0 0.0
    %3681 = vmatpush1.xpose.msra.mxu0 %v3646
    %3682 = vmatprep.subr.mxu0 0.0
    %3683 = vmatpush1.xpose.msra.mxu0 %v3644
    %3684 = vmatprep.subr.mxu0 0.0
    %3685 = vmatpush1.xpose.msra.mxu0 %v3642
    %3686 = vmatprep.subr.mxu0 0.0
    %3687 = vmatpush1.xpose.msra.mxu0 %v3640
    %3688 = vmatprep.subr.mxu0 0.0
    %3689 = vmatpush2.xpose.msra.mxu0 0.0
    %3690 = vmatprep.subr.mxu0 0.0
    %3691 = vmatpush2.xpose.msra.mxu0 0.0
    %3692 = vmatprep.subr.mxu0 0.0
    %3693 = vmatpush2.xpose.msra.mxu0 0.0
    %3694 = vmatprep.subr.mxu0 0.0
    %3695 = vmatpush2.xpose.msra.mxu0 0.0
    %3696 = vmatprep.subr.mxu0 0.0
    %3697 = vmatpush2.xpose.msra.mxu0 0.0
    %3698 = vmatprep.subr.mxu0 0.0
    %3699 = vmatpush2.xpose.msra.mxu0 0.0
    %3700 = vmatprep.subr.mxu0 0.0
    %3701 = vmatpush2.xpose.msra.mxu0 0.0
    %3702 = vmatprep.subr.mxu0 0.0
    %3703 = vmatpush2.xpose.msra.mxu0 0.0
    %3704 = vmatprep.subr.mxu0 0.0
    %3705 = vmatpush2.xpose.msra.mxu0 0.0
    %3706 = vmatprep.subr.mxu0 0.0
    %3707 = vmatpush2.xpose.msra.mxu0 0.0
    %3708 = vmatprep.subr.mxu0 0.0
    %3709 = vmatpush2.xpose.msra.mxu0 0.0
    %3710 = vmatprep.subr.mxu0 0.0
    %3711 = vmatpush2.xpose.msra.mxu0 0.0
    %3712 = vmatprep.subr.mxu0 0.0
    %3713 = vmatpush2.xpose.msra.mxu0 0.0
    %3714 = vmatprep.subr.mxu0 0.0
    %3715 = vmatpush2.xpose.msra.mxu0 0.0
    %3716 = vmatprep.subr.mxu0 0.0
    %3717 = vmatpush2.xpose.msra.mxu0 0.0
    %3718 = vmatprep.subr.mxu0 0.0
    %3719 = vmatpush2.xpose.msra.mxu0 0.0
    %3720 = vmatprep.mubr.f32.mxu0 0.0
    %3721 = vmatmul.mubr.f32.gmra.mxu0 %v3636
    %v3722 = vpop.f32.mrf.mxu0
    %v3723 = vadd.f32 0.0, %v3722
    %v3724 = vpop.f32.mrf.mxu0
    %3725 = vmatprep.mubr.f32.mxu0 0.0
    %3726 = vmatmul.mubr.f32.gmra.mxu0 %v3638
    %v3727 = vpop.f32.mrf.mxu0
    %v3728 = vadd.f32 0.0, %v3727
    %v3729 = vpop.f32.mrf.mxu0
    %3730 = vdwg.mxu0
    %v3731 = vmul.f32 %v3723, 0.35355338
    %v3732 = vmul.f32 %v3728, 0.35355338
    %v3733 = vadd.f32 %v3731, %v3040
    %v3734 = vadd.f32 %v3732, %v3041
    %v3735 = vsel %vm2948, %v3733, -inf
    %3736 = vmax.xlane.f32.xlu0 %v3735
    %v3737 = vpop.xlane.xlu0 %3736
    %v3738 = vsel %vm2952, %v3734, -inf
    %3739 = vmax.xlane.f32.xlu0 %v3738
    %v3740 = vpop.xlane.xlu0 %3739
    %v3741 = vsub.f32 %v3733, %v3737
    %v3742 = vsub.f32 %v3734, %v3740
    %v3743 = vmul.f32 %v3741, 1.442695
    %v3744 = vpow.pop %v3743
    %v3745 = vmul.f32 %v3742, 1.442695
    %v3746 = vpow.pop %v3745
    %v3747 = vsel %vm2948, %v3744, 0.0
    %3748 = vadd.xlane.f32.xlu0 %v3747
    %v3749 = vpop.xlane.xlu0 %3748
    %v3750 = vsel %vm2952, %v3746, 0.0
    %3751 = vadd.xlane.f32.xlu0 %v3750
    %v3752 = vpop.xlane.xlu0 %3751
    %v3753 = vrcp.pop %v3749
    %v3754 = vrcp.pop %v3752
    %v3755 = vmul.f32 %v3744, %v3753
    %v3756 = vmul.f32 %v3746, %v3754
    %3765 = vrot.lane.b32.xlu0 %v3365, 120
    %v3766 = vpop.permute.xlu0 %3765
    %3767 = vrot.lane.b32.xlu0 %v3370, 120
    %v3768 = vpop.permute.xlu0 %3767
    %3769 = vrot.lane.b32.xlu0 %v3375, 120
    %v3770 = vpop.permute.xlu0 %3769
    %3771 = vrot.lane.b32.xlu0 %v3380, 120
    %v3772 = vpop.permute.xlu0 %3771
    %3773 = vrot.lane.b32.xlu0 %v3385, 120
    %v3774 = vpop.permute.xlu0 %3773
    %3775 = vrot.lane.b32.xlu0 %v3390, 120
    %v3776 = vpop.permute.xlu0 %3775
    %3777 = vrot.lane.b32.xlu0 %v3395, 120
    %v3778 = vpop.permute.xlu0 %3777
    %3779 = vrot.lane.b32.xlu0 %v3400, 120
    %v3780 = vpop.permute.xlu0 %3779
    %v3790 = vsel %vm2948, %v3755, 0
    %v3793 = vsel %vm2948, %v3756, 0
    %3795 = vmatprep.subr.mxu0 0.0
    %3796 = vmatpush1.msra.mxu0 0.0
    %3797 = vmatprep.subr.mxu0 0.0
    %3798 = vmatpush1.msra.mxu0 0.0
    %3799 = vmatprep.subr.mxu0 0.0
    %3800 = vmatpush1.msra.mxu0 0.0
    %3801 = vmatprep.subr.mxu0 0.0
    %3802 = vmatpush1.msra.mxu0 0.0
    %3803 = vmatprep.subr.mxu0 0.0
    %3804 = vmatpush1.msra.mxu0 0.0
    %3805 = vmatprep.subr.mxu0 0.0
    %3806 = vmatpush1.msra.mxu0 0.0
    %3807 = vmatprep.subr.mxu0 0.0
    %3808 = vmatpush1.msra.mxu0 0.0
    %3809 = vmatprep.subr.mxu0 0.0
    %3810 = vmatpush1.msra.mxu0 0.0
    %3811 = vmatprep.subr.mxu0 0.0
    %3812 = vmatpush1.msra.mxu0 %v3780
    %3813 = vmatprep.subr.mxu0 0.0
    %3814 = vmatpush1.msra.mxu0 %v3778
    %3815 = vmatprep.subr.mxu0 0.0
    %3816 = vmatpush1.msra.mxu0 %v3776
    %3817 = vmatprep.subr.mxu0 0.0
    %3818 = vmatpush1.msra.mxu0 %v3774
    %3819 = vmatprep.subr.mxu0 0.0
    %3820 = vmatpush1.msra.mxu0 %v3772
    %3821 = vmatprep.subr.mxu0 0.0
    %3822 = vmatpush1.msra.mxu0 %v3770
    %3823 = vmatprep.subr.mxu0 0.0
    %3824 = vmatpush1.msra.mxu0 %v3768
    %3825 = vmatprep.subr.mxu0 0.0
    %3826 = vmatpush1.msra.mxu0 %v3766
    %3827 = vmatprep.subr.mxu0 0.0
    %3828 = vmatpush2.msra.mxu0 0.0
    %3829 = vmatprep.subr.mxu0 0.0
    %3830 = vmatpush2.msra.mxu0 0.0
    %3831 = vmatprep.subr.mxu0 0.0
    %3832 = vmatpush2.msra.mxu0 0.0
    %3833 = vmatprep.subr.mxu0 0.0
    %3834 = vmatpush2.msra.mxu0 0.0
    %3835 = vmatprep.subr.mxu0 0.0
    %3836 = vmatpush2.msra.mxu0 0.0
    %3837 = vmatprep.subr.mxu0 0.0
    %3838 = vmatpush2.msra.mxu0 0.0
    %3839 = vmatprep.subr.mxu0 0.0
    %3840 = vmatpush2.msra.mxu0 0.0
    %3841 = vmatprep.subr.mxu0 0.0
    %3842 = vmatpush2.msra.mxu0 0.0
    %3843 = vmatprep.subr.mxu0 0.0
    %3844 = vmatpush2.msra.mxu0 0.0
    %3845 = vmatprep.subr.mxu0 0.0
    %3846 = vmatpush2.msra.mxu0 0.0
    %3847 = vmatprep.subr.mxu0 0.0
    %3848 = vmatpush2.msra.mxu0 0.0
    %3849 = vmatprep.subr.mxu0 0.0
    %3850 = vmatpush2.msra.mxu0 0.0
    %3851 = vmatprep.subr.mxu0 0.0
    %3852 = vmatpush2.msra.mxu0 0.0
    %3853 = vmatprep.subr.mxu0 0.0
    %3854 = vmatpush2.msra.mxu0 0.0
    %3855 = vmatprep.subr.mxu0 0.0
    %3856 = vmatpush2.msra.mxu0 0.0
    %3857 = vmatprep.subr.mxu0 0.0
    %3858 = vmatpush2.msra.mxu0 0.0
    %3859 = vmatprep.mubr.f32.mxu0 0.0
    %3860 = vmatmul.mubr.f32.gmra.mxu0 %v3790
    %v3861 = vpop.f32.mrf.mxu0
    %v3862 = vadd.f32 0.0, %v3861
    %v3863 = vpop.f32.mrf.mxu0
    %3864 = vmatprep.mubr.f32.mxu0 0.0
    %3865 = vmatmul.mubr.f32.gmra.mxu0 %v3793
    %v3866 = vpop.f32.mrf.mxu0
    %v3867 = vadd.f32 0.0, %v3866
    %v3868 = vpop.f32.mrf.mxu0
    %3869 = vdwg.mxu0
    %3870 = vrot.lane.b32.xlu0 %v3121, 112
    %v3871 = vpop.permute.xlu0 %3870
    %3872 = vrot.lane.b32.xlu0 %v3126, 112
    %v3873 = vpop.permute.xlu0 %3872
    %3874 = vrot.lane.b32.xlu0 %v3232, 112
    %v3875 = vpop.permute.xlu0 %3874
    %3876 = vrot.lane.b32.xlu0 %v3237, 112
    %v3877 = vpop.permute.xlu0 %3876
    %3878 = vrot.lane.b32.xlu0 %v3242, 112
    %v3879 = vpop.permute.xlu0 %3878
    %3880 = vrot.lane.b32.xlu0 %v3247, 112
    %v3881 = vpop.permute.xlu0 %3880
    %3882 = vrot.lane.b32.xlu0 %v3252, 112
    %v3883 = vpop.permute.xlu0 %3882
    %3884 = vrot.lane.b32.xlu0 %v3257, 112
    %v3885 = vpop.permute.xlu0 %3884
    %3886 = vrot.lane.b32.xlu0 %v3262, 112
    %v3887 = vpop.permute.xlu0 %3886
    %3888 = vrot.lane.b32.xlu0 %v3267, 112
    %v3889 = vpop.permute.xlu0 %3888
    %v3890 = vsel %vm3403, %v3871, 0
    %v3892 = vsel %vm3403, %v3873, 0
    %v3894 = vsel %vm3403, %v3875, 0
    %v3896 = vsel %vm3403, %v3877, 0
    %v3898 = vsel %vm3403, %v3879, 0
    %v3900 = vsel %vm3403, %v3881, 0
    %v3902 = vsel %vm3403, %v3883, 0
    %v3904 = vsel %vm3403, %v3885, 0
    %v3906 = vsel %vm3403, %v3887, 0
    %v3908 = vsel %vm3403, %v3889, 0
    %3910 = vmatprep.subr.mxu0 0.0
    %3911 = vmatpush1.xpose.msra.mxu0 0.0
    %3912 = vmatprep.subr.mxu0 0.0
    %3913 = vmatpush1.xpose.msra.mxu0 0.0
    %3914 = vmatprep.subr.mxu0 0.0
    %3915 = vmatpush1.xpose.msra.mxu0 0.0
    %3916 = vmatprep.subr.mxu0 0.0
    %3917 = vmatpush1.xpose.msra.mxu0 0.0
    %3918 = vmatprep.subr.mxu0 0.0
    %3919 = vmatpush1.xpose.msra.mxu0 0.0
    %3920 = vmatprep.subr.mxu0 0.0
    %3921 = vmatpush1.xpose.msra.mxu0 0.0
    %3922 = vmatprep.subr.mxu0 0.0
    %3923 = vmatpush1.xpose.msra.mxu0 0.0
    %3924 = vmatprep.subr.mxu0 0.0
    %3925 = vmatpush1.xpose.msra.mxu0 0.0
    %3926 = vmatprep.subr.mxu0 0.0
    %3927 = vmatpush1.xpose.msra.mxu0 %v3908
    %3928 = vmatprep.subr.mxu0 0.0
    %3929 = vmatpush1.xpose.msra.mxu0 %v3906
    %3930 = vmatprep.subr.mxu0 0.0
    %3931 = vmatpush1.xpose.msra.mxu0 %v3904
    %3932 = vmatprep.subr.mxu0 0.0
    %3933 = vmatpush1.xpose.msra.mxu0 %v3902
    %3934 = vmatprep.subr.mxu0 0.0
    %3935 = vmatpush1.xpose.msra.mxu0 %v3900
    %3936 = vmatprep.subr.mxu0 0.0
    %3937 = vmatpush1.xpose.msra.mxu0 %v3898
    %3938 = vmatprep.subr.mxu0 0.0
    %3939 = vmatpush1.xpose.msra.mxu0 %v3896
    %3940 = vmatprep.subr.mxu0 0.0
    %3941 = vmatpush1.xpose.msra.mxu0 %v3894
    %3942 = vmatprep.subr.mxu0 0.0
    %3943 = vmatpush2.xpose.msra.mxu0 0.0
    %3944 = vmatprep.subr.mxu0 0.0
    %3945 = vmatpush2.xpose.msra.mxu0 0.0
    %3946 = vmatprep.subr.mxu0 0.0
    %3947 = vmatpush2.xpose.msra.mxu0 0.0
    %3948 = vmatprep.subr.mxu0 0.0
    %3949 = vmatpush2.xpose.msra.mxu0 0.0
    %3950 = vmatprep.subr.mxu0 0.0
    %3951 = vmatpush2.xpose.msra.mxu0 0.0
    %3952 = vmatprep.subr.mxu0 0.0
    %3953 = vmatpush2.xpose.msra.mxu0 0.0
    %3954 = vmatprep.subr.mxu0 0.0
    %3955 = vmatpush2.xpose.msra.mxu0 0.0
    %3956 = vmatprep.subr.mxu0 0.0
    %3957 = vmatpush2.xpose.msra.mxu0 0.0
    %3958 = vmatprep.subr.mxu0 0.0
    %3959 = vmatpush2.xpose.msra.mxu0 0.0
    %3960 = vmatprep.subr.mxu0 0.0
    %3961 = vmatpush2.xpose.msra.mxu0 0.0
    %3962 = vmatprep.subr.mxu0 0.0
    %3963 = vmatpush2.xpose.msra.mxu0 0.0
    %3964 = vmatprep.subr.mxu0 0.0
    %3965 = vmatpush2.xpose.msra.mxu0 0.0
    %3966 = vmatprep.subr.mxu0 0.0
    %3967 = vmatpush2.xpose.msra.mxu0 0.0
    %3968 = vmatprep.subr.mxu0 0.0
    %3969 = vmatpush2.xpose.msra.mxu0 0.0
    %3970 = vmatprep.subr.mxu0 0.0
    %3971 = vmatpush2.xpose.msra.mxu0 0.0
    %3972 = vmatprep.subr.mxu0 0.0
    %3973 = vmatpush2.xpose.msra.mxu0 0.0
    %3974 = vmatprep.mubr.f32.mxu0 0.0
    %3975 = vmatmul.mubr.f32.gmra.mxu0 %v3890
    %v3976 = vpop.f32.mrf.mxu0
    %v3977 = vadd.f32 0.0, %v3976
    %v3978 = vpop.f32.mrf.mxu0
    %3979 = vmatprep.mubr.f32.mxu0 0.0
    %3980 = vmatmul.mubr.f32.gmra.mxu0 %v3892
    %v3981 = vpop.f32.mrf.mxu0
    %v3982 = vadd.f32 0.0, %v3981
    %v3983 = vpop.f32.mrf.mxu0
    %3984 = vdwg.mxu0
    %v3985 = vmul.f32 %v3977, 0.35355338
    %v3986 = vmul.f32 %v3982, 0.35355338
    %v3987 = vadd.f32 %v3985, %v3040
    %v3988 = vadd.f32 %v3986, %v3041
    %v3989 = vsel %vm2948, %v3987, -inf
    %3990 = vmax.xlane.f32.xlu0 %v3989
    %v3991 = vpop.xlane.xlu0 %3990
    %v3992 = vsel %vm2952, %v3988, -inf
    %3993 = vmax.xlane.f32.xlu0 %v3992
    %v3994 = vpop.xlane.xlu0 %3993
    %v3995 = vsub.f32 %v3987, %v3991
    %v3996 = vsub.f32 %v3988, %v3994
    %v3997 = vmul.f32 %v3995, 1.442695
    %v3998 = vpow.pop %v3997
    %v3999 = vmul.f32 %v3996, 1.442695
    %v4000 = vpow.pop %v3999
    %v4001 = vsel %vm2948, %v3998, 0.0
    %4002 = vadd.xlane.f32.xlu0 %v4001
    %v4003 = vpop.xlane.xlu0 %4002
    %v4004 = vsel %vm2952, %v4000, 0.0
    %4005 = vadd.xlane.f32.xlu0 %v4004
    %v4006 = vpop.xlane.xlu0 %4005
    %v4007 = vrcp.pop %v4003
    %v4008 = vrcp.pop %v4006
    %v4009 = vmul.f32 %v3998, %v4007
    %v4010 = vmul.f32 %v4000, %v4008
    %4011 = vrot.lane.b32.xlu0 %v3365, 112
    %v4012 = vpop.permute.xlu0 %4011
    %4013 = vrot.lane.b32.xlu0 %v3370, 112
    %v4014 = vpop.permute.xlu0 %4013
    %4015 = vrot.lane.b32.xlu0 %v3375, 112
    %v4016 = vpop.permute.xlu0 %4015
    %4017 = vrot.lane.b32.xlu0 %v3380, 112
    %v4018 = vpop.permute.xlu0 %4017
    %4019 = vrot.lane.b32.xlu0 %v3385, 112
    %v4020 = vpop.permute.xlu0 %4019
    %4021 = vrot.lane.b32.xlu0 %v3390, 112
    %v4022 = vpop.permute.xlu0 %4021
    %4023 = vrot.lane.b32.xlu0 %v3395, 112
    %v4024 = vpop.permute.xlu0 %4023
    %4025 = vrot.lane.b32.xlu0 %v3400, 112
    %v4026 = vpop.permute.xlu0 %4025
    %v4036 = vsel %vm2948, %v4009, 0
    %v4039 = vsel %vm2948, %v4010, 0
    %4041 = vmatprep.subr.mxu0 0.0
    %4042 = vmatpush1.msra.mxu0 0.0
    %4043 = vmatprep.subr.mxu0 0.0
    %4044 = vmatpush1.msra.mxu0 0.0
    %4045 = vmatprep.subr.mxu0 0.0
    %4046 = vmatpush1.msra.mxu0 0.0
    %4047 = vmatprep.subr.mxu0 0.0
    %4048 = vmatpush1.msra.mxu0 0.0
    %4049 = vmatprep.subr.mxu0 0.0
    %4050 = vmatpush1.msra.mxu0 0.0
    %4051 = vmatprep.subr.mxu0 0.0
    %4052 = vmatpush1.msra.mxu0 0.0
    %4053 = vmatprep.subr.mxu0 0.0
    %4054 = vmatpush1.msra.mxu0 0.0
    %4055 = vmatprep.subr.mxu0 0.0
    %4056 = vmatpush1.msra.mxu0 0.0
    %4057 = vmatprep.subr.mxu0 0.0
    %4058 = vmatpush1.msra.mxu0 %v4026
    %4059 = vmatprep.subr.mxu0 0.0
    %4060 = vmatpush1.msra.mxu0 %v4024
    %4061 = vmatprep.subr.mxu0 0.0
    %4062 = vmatpush1.msra.mxu0 %v4022
    %4063 = vmatprep.subr.mxu0 0.0
    %4064 = vmatpush1.msra.mxu0 %v4020
    %4065 = vmatprep.subr.mxu0 0.0
    %4066 = vmatpush1.msra.mxu0 %v4018
    %4067 = vmatprep.subr.mxu0 0.0
    %4068 = vmatpush1.msra.mxu0 %v4016
    %4069 = vmatprep.subr.mxu0 0.0
    %4070 = vmatpush1.msra.mxu0 %v4014
    %4071 = vmatprep.subr.mxu0 0.0
    %4072 = vmatpush1.msra.mxu0 %v4012
    %4073 = vmatprep.subr.mxu0 0.0
    %4074 = vmatpush2.msra.mxu0 0.0
    %4075 = vmatprep.subr.mxu0 0.0
    %4076 = vmatpush2.msra.mxu0 0.0
    %4077 = vmatprep.subr.mxu0 0.0
    %4078 = vmatpush2.msra.mxu0 0.0
    %4079 = vmatprep.subr.mxu0 0.0
    %4080 = vmatpush2.msra.mxu0 0.0
    %4081 = vmatprep.subr.mxu0 0.0
    %4082 = vmatpush2.msra.mxu0 0.0
    %4083 = vmatprep.subr.mxu0 0.0
    %4084 = vmatpush2.msra.mxu0 0.0
    %4085 = vmatprep.subr.mxu0 0.0
    %4086 = vmatpush2.msra.mxu0 0.0
    %4087 = vmatprep.subr.mxu0 0.0
    %4088 = vmatpush2.msra.mxu0 0.0
    %4089 = vmatprep.subr.mxu0 0.0
    %4090 = vmatpush2.msra.mxu0 0.0
    %4091 = vmatprep.subr.mxu0 0.0
    %4092 = vmatpush2.msra.mxu0 0.0
    %4093 = vmatprep.subr.mxu0 0.0
    %4094 = vmatpush2.msra.mxu0 0.0
    %4095 = vmatprep.subr.mxu0 0.0
    %4096 = vmatpush2.msra.mxu0 0.0
    %4097 = vmatprep.subr.mxu0 0.0
    %4098 = vmatpush2.msra.mxu0 0.0
    %4099 = vmatprep.subr.mxu0 0.0
    %4100 = vmatpush2.msra.mxu0 0.0
    %4101 = vmatprep.subr.mxu0 0.0
    %4102 = vmatpush2.msra.mxu0 0.0
    %4103 = vmatprep.subr.mxu0 0.0
    %4104 = vmatpush2.msra.mxu0 0.0
    %4105 = vmatprep.mubr.f32.mxu0 0.0
    %4106 = vmatmul.mubr.f32.gmra.mxu0 %v4036
    %v4107 = vpop.f32.mrf.mxu0
    %v4108 = vadd.f32 0.0, %v4107
    %v4109 = vpop.f32.mrf.mxu0
    %4110 = vmatprep.mubr.f32.mxu0 0.0
    %4111 = vmatmul.mubr.f32.gmra.mxu0 %v4039
    %v4112 = vpop.f32.mrf.mxu0
    %v4113 = vadd.f32 0.0, %v4112
    %v4114 = vpop.f32.mrf.mxu0
    %4115 = vdwg.mxu0
    %4116 = vrot.lane.b32.xlu0 %v3121, 104
    %v4117 = vpop.permute.xlu0 %4116
    %4118 = vrot.lane.b32.xlu0 %v3126, 104
    %v4119 = vpop.permute.xlu0 %4118
    %4120 = vrot.lane.b32.xlu0 %v3232, 104
    %v4121 = vpop.permute.xlu0 %4120
    %4122 = vrot.lane.b32.xlu0 %v3237, 104
    %v4123 = vpop.permute.xlu0 %4122
    %4124 = vrot.lane.b32.xlu0 %v3242, 104
    %v4125 = vpop.permute.xlu0 %4124
    %4126 = vrot.lane.b32.xlu0 %v3247, 104
    %v4127 = vpop.permute.xlu0 %4126
    %4128 = vrot.lane.b32.xlu0 %v3252, 104
    %v4129 = vpop.permute.xlu0 %4128
    %4130 = vrot.lane.b32.xlu0 %v3257, 104
    %v4131 = vpop.permute.xlu0 %4130
    %4132 = vrot.lane.b32.xlu0 %v3262, 104
    %v4133 = vpop.permute.xlu0 %4132
    %4134 = vrot.lane.b32.xlu0 %v3267, 104
    %v4135 = vpop.permute.xlu0 %4134
    %v4136 = vsel %vm3403, %v4117, 0
    %v4138 = vsel %vm3403, %v4119, 0
    %v4140 = vsel %vm3403, %v4121, 0
    %v4142 = vsel %vm3403, %v4123, 0
    %v4144 = vsel %vm3403, %v4125, 0
    %v4146 = vsel %vm3403, %v4127, 0
    %v4148 = vsel %vm3403, %v4129, 0
    %v4150 = vsel %vm3403, %v4131, 0
    %v4152 = vsel %vm3403, %v4133, 0
    %v4154 = vsel %vm3403, %v4135, 0
    %4156 = vmatprep.subr.mxu0 0.0
    %4157 = vmatpush1.xpose.msra.mxu0 0.0
    %4158 = vmatprep.subr.mxu0 0.0
    %4159 = vmatpush1.xpose.msra.mxu0 0.0
    %4160 = vmatprep.subr.mxu0 0.0
    %4161 = vmatpush1.xpose.msra.mxu0 0.0
    %4162 = vmatprep.subr.mxu0 0.0
    %4163 = vmatpush1.xpose.msra.mxu0 0.0
    %4164 = vmatprep.subr.mxu0 0.0
    %4165 = vmatpush1.xpose.msra.mxu0 0.0
    %4166 = vmatprep.subr.mxu0 0.0
    %4167 = vmatpush1.xpose.msra.mxu0 0.0
    %4168 = vmatprep.subr.mxu0 0.0
    %4169 = vmatpush1.xpose.msra.mxu0 0.0
    %4170 = vmatprep.subr.mxu0 0.0
    %4171 = vmatpush1.xpose.msra.mxu0 0.0
    %4172 = vmatprep.subr.mxu0 0.0
    %4173 = vmatpush1.xpose.msra.mxu0 %v4154
    %4174 = vmatprep.subr.mxu0 0.0
    %4175 = vmatpush1.xpose.msra.mxu0 %v4152
    %4176 = vmatprep.subr.mxu0 0.0
    %4177 = vmatpush1.xpose.msra.mxu0 %v4150
    %4178 = vmatprep.subr.mxu0 0.0
    %4179 = vmatpush1.xpose.msra.mxu0 %v4148
    %4180 = vmatprep.subr.mxu0 0.0
    %4181 = vmatpush1.xpose.msra.mxu0 %v4146
    %4182 = vmatprep.subr.mxu0 0.0
    %4183 = vmatpush1.xpose.msra.mxu0 %v4144
    %4184 = vmatprep.subr.mxu0 0.0
    %4185 = vmatpush1.xpose.msra.mxu0 %v4142
    %4186 = vmatprep.subr.mxu0 0.0
    %4187 = vmatpush1.xpose.msra.mxu0 %v4140
    %4188 = vmatprep.subr.mxu0 0.0
    %4189 = vmatpush2.xpose.msra.mxu0 0.0
    %4190 = vmatprep.subr.mxu0 0.0
    %4191 = vmatpush2.xpose.msra.mxu0 0.0
    %4192 = vmatprep.subr.mxu0 0.0
    %4193 = vmatpush2.xpose.msra.mxu0 0.0
    %4194 = vmatprep.subr.mxu0 0.0
    %4195 = vmatpush2.xpose.msra.mxu0 0.0
    %4196 = vmatprep.subr.mxu0 0.0
    %4197 = vmatpush2.xpose.msra.mxu0 0.0
    %4198 = vmatprep.subr.mxu0 0.0
    %4199 = vmatpush2.xpose.msra.mxu0 0.0
    %4200 = vmatprep.subr.mxu0 0.0
    %4201 = vmatpush2.xpose.msra.mxu0 0.0
    %4202 = vmatprep.subr.mxu0 0.0
    %4203 = vmatpush2.xpose.msra.mxu0 0.0
    %4204 = vmatprep.subr.mxu0 0.0
    %4205 = vmatpush2.xpose.msra.mxu0 0.0
    %4206 = vmatprep.subr.mxu0 0.0
    %4207 = vmatpush2.xpose.msra.mxu0 0.0
    %4208 = vmatprep.subr.mxu0 0.0
    %4209 = vmatpush2.xpose.msra.mxu0 0.0
    %4210 = vmatprep.subr.mxu0 0.0
    %4211 = vmatpush2.xpose.msra.mxu0 0.0
    %4212 = vmatprep.subr.mxu0 0.0
    %4213 = vmatpush2.xpose.msra.mxu0 0.0
    %4214 = vmatprep.subr.mxu0 0.0
    %4215 = vmatpush2.xpose.msra.mxu0 0.0
    %4216 = vmatprep.subr.mxu0 0.0
    %4217 = vmatpush2.xpose.msra.mxu0 0.0
    %4218 = vmatprep.subr.mxu0 0.0
    %4219 = vmatpush2.xpose.msra.mxu0 0.0
    %4220 = vmatprep.mubr.f32.mxu0 0.0
    %4221 = vmatmul.mubr.f32.gmra.mxu0 %v4136
    %v4222 = vpop.f32.mrf.mxu0
    %v4223 = vadd.f32 0.0, %v4222
    %v4224 = vpop.f32.mrf.mxu0
    %4225 = vmatprep.mubr.f32.mxu0 0.0
    %4226 = vmatmul.mubr.f32.gmra.mxu0 %v4138
    %v4227 = vpop.f32.mrf.mxu0
    %v4228 = vadd.f32 0.0, %v4227
    %v4229 = vpop.f32.mrf.mxu0
    %4230 = vdwg.mxu0
    %v4231 = vmul.f32 %v4223, 0.35355338
    %v4232 = vmul.f32 %v4228, 0.35355338
    %v4233 = vadd.f32 %v4231, %v3040
    %v4234 = vadd.f32 %v4232, %v3041
    %v4235 = vsel %vm2948, %v4233, -inf
    %4236 = vmax.xlane.f32.xlu0 %v4235
    %v4237 = vpop.xlane.xlu0 %4236
    %v4238 = vsel %vm2952, %v4234, -inf
    %4239 = vmax.xlane.f32.xlu0 %v4238
    %v4240 = vpop.xlane.xlu0 %4239
    %v4241 = vsub.f32 %v4233, %v4237
    %v4242 = vsub.f32 %v4234, %v4240
    %v4243 = vmul.f32 %v4241, 1.442695
    %v4244 = vpow.pop %v4243
    %v4245 = vmul.f32 %v4242, 1.442695
    %v4246 = vpow.pop %v4245
    %v4247 = vsel %vm2948, %v4244, 0.0
    %4248 = vadd.xlane.f32.xlu0 %v4247
    %v4249 = vpop.xlane.xlu0 %4248
    %v4250 = vsel %vm2952, %v4246, 0.0
    %4251 = vadd.xlane.f32.xlu0 %v4250
    %v4252 = vpop.xlane.xlu0 %4251
    %v4253 = vrcp.pop %v4249
    %v4254 = vrcp.pop %v4252
    %v4255 = vmul.f32 %v4244, %v4253
    %v4256 = vmul.f32 %v4246, %v4254
    %4257 = vrot.lane.b32.xlu0 %v3365, 104
    %v4258 = vpop.permute.xlu0 %4257
    %4259 = vrot.lane.b32.xlu0 %v3370, 104
    %v4260 = vpop.permute.xlu0 %4259
    %4261 = vrot.lane.b32.xlu0 %v3375, 104
    %v4262 = vpop.permute.xlu0 %4261
    %4263 = vrot.lane.b32.xlu0 %v3380, 104
    %v4264 = vpop.permute.xlu0 %4263
    %4265 = vrot.lane.b32.xlu0 %v3385, 104
    %v4266 = vpop.permute.xlu0 %4265
    %4267 = vrot.lane.b32.xlu0 %v3390, 104
    %v4268 = vpop.permute.xlu0 %4267
    %4269 = vrot.lane.b32.xlu0 %v3395, 104
    %v4270 = vpop.permute.xlu0 %4269
    %4271 = vrot.lane.b32.xlu0 %v3400, 104
    %v4272 = vpop.permute.xlu0 %4271
    %v4282 = vsel %vm2948, %v4255, 0
    %v4285 = vsel %vm2948, %v4256, 0
    %4287 = vmatprep.subr.mxu0 0.0
    %4288 = vmatpush1.msra.mxu0 0.0
    %4289 = vmatprep.subr.mxu0 0.0
    %4290 = vmatpush1.msra.mxu0 0.0
    %4291 = vmatprep.subr.mxu0 0.0
    %4292 = vmatpush1.msra.mxu0 0.0
    %4293 = vmatprep.subr.mxu0 0.0
    %4294 = vmatpush1.msra.mxu0 0.0
    %4295 = vmatprep.subr.mxu0 0.0
    %4296 = vmatpush1.msra.mxu0 0.0
    %4297 = vmatprep.subr.mxu0 0.0
    %4298 = vmatpush1.msra.mxu0 0.0
    %4299 = vmatprep.subr.mxu0 0.0
    %4300 = vmatpush1.msra.mxu0 0.0
    %4301 = vmatprep.subr.mxu0 0.0
    %4302 = vmatpush1.msra.mxu0 0.0
    %4303 = vmatprep.subr.mxu0 0.0
    %4304 = vmatpush1.msra.mxu0 %v4272
    %4305 = vmatprep.subr.mxu0 0.0
    %4306 = vmatpush1.msra.mxu0 %v4270
    %4307 = vmatprep.subr.mxu0 0.0
    %4308 = vmatpush1.msra.mxu0 %v4268
    %4309 = vmatprep.subr.mxu0 0.0
    %4310 = vmatpush1.msra.mxu0 %v4266
    %4311 = vmatprep.subr.mxu0 0.0
    %4312 = vmatpush1.msra.mxu0 %v4264
    %4313 = vmatprep.subr.mxu0 0.0
    %4314 = vmatpush1.msra.mxu0 %v4262
    %4315 = vmatprep.subr.mxu0 0.0
    %4316 = vmatpush1.msra.mxu0 %v4260
    %4317 = vmatprep.subr.mxu0 0.0
    %4318 = vmatpush1.msra.mxu0 %v4258
    %4319 = vmatprep.subr.mxu0 0.0
    %4320 = vmatpush2.msra.mxu0 0.0
    %4321 = vmatprep.subr.mxu0 0.0
    %4322 = vmatpush2.msra.mxu0 0.0
    %4323 = vmatprep.subr.mxu0 0.0
    %4324 = vmatpush2.msra.mxu0 0.0
    %4325 = vmatprep.subr.mxu0 0.0
    %4326 = vmatpush2.msra.mxu0 0.0
    %4327 = vmatprep.subr.mxu0 0.0
    %4328 = vmatpush2.msra.mxu0 0.0
    %4329 = vmatprep.subr.mxu0 0.0
    %4330 = vmatpush2.msra.mxu0 0.0
    %4331 = vmatprep.subr.mxu0 0.0
    %4332 = vmatpush2.msra.mxu0 0.0
    %4333 = vmatprep.subr.mxu0 0.0
    %4334 = vmatpush2.msra.mxu0 0.0
    %4335 = vmatprep.subr.mxu0 0.0
    %4336 = vmatpush2.msra.mxu0 0.0
    %4337 = vmatprep.subr.mxu0 0.0
    %4338 = vmatpush2.msra.mxu0 0.0
    %4339 = vmatprep.subr.mxu0 0.0
    %4340 = vmatpush2.msra.mxu0 0.0
    %4341 = vmatprep.subr.mxu0 0.0
    %4342 = vmatpush2.msra.mxu0 0.0
    %4343 = vmatprep.subr.mxu0 0.0
    %4344 = vmatpush2.msra.mxu0 0.0
    %4345 = vmatprep.subr.mxu0 0.0
    %4346 = vmatpush2.msra.mxu0 0.0
    %4347 = vmatprep.subr.mxu0 0.0
    %4348 = vmatpush2.msra.mxu0 0.0
    %4349 = vmatprep.subr.mxu0 0.0
    %4350 = vmatpush2.msra.mxu0 0.0
    %4351 = vmatprep.mubr.f32.mxu0 0.0
    %4352 = vmatmul.mubr.f32.gmra.mxu0 %v4282
    %v4353 = vpop.f32.mrf.mxu0
    %v4354 = vadd.f32 0.0, %v4353
    %v4355 = vpop.f32.mrf.mxu0
    %4356 = vmatprep.mubr.f32.mxu0 0.0
    %4357 = vmatmul.mubr.f32.gmra.mxu0 %v4285
    %v4358 = vpop.f32.mrf.mxu0
    %v4359 = vadd.f32 0.0, %v4358
    %v4360 = vpop.f32.mrf.mxu0
    %4361 = vdwg.mxu0
    %4364 = vrot.lane.b32.xlu0 %v3862, 8
    %v4365 = vpop.permute.xlu0 %4364
    %4366 = vrot.lane.b32.xlu0 %v3867, 8
    %v4367 = vpop.permute.xlu0 %4366
    %4372 = vrot.lane.b32.xlu0 %v4108, 16
    %v4373 = vpop.permute.xlu0 %4372
    %4374 = vrot.lane.b32.xlu0 %v4113, 16
    %v4375 = vpop.permute.xlu0 %4374
    %4380 = vrot.lane.b32.xlu0 %v4354, 24
    %v4381 = vpop.permute.xlu0 %4380
    %4382 = vrot.lane.b32.xlu0 %v4359, 24
    %v4383 = vpop.permute.xlu0 %4382
    %v4386 = vsel %vm3403, %v3608, %v4365
    %v4387 = vsel %vm3403, %v3613, %v4367
    %v4388 = vsel %vm2154, %v4386, %v4373
    %v4389 = vsel %vm2154, %v4387, %v4375
    %vm4390 = vcmask 195584
    %v4391 = vsel %vm4390, %v4388, %v4381
    %v4392 = vsel %vm4390, %v4389, %v4383
    %v4393 = vlaneseq
    %v4394 = vshrl.u32 %v4393, 7
    %v4395 = vsub.s32 3, %v4394
    %v4396 = vrot.slane %v3022, %v4395
    %v4398 = vsel %vm2450, %v4391, 0
    %v4401 = vsel %vm2450, %v4392, 0
    %4403 = vmatprep.subr.mxu0 0.0
    %4404 = vmatpush1.msra.mxu0 0.0
    %4405 = vmatprep.subr.mxu0 0.0
    %4406 = vmatpush1.msra.mxu0 0.0
    %4407 = vmatprep.subr.mxu0 0.0
    %4408 = vmatpush1.msra.mxu0 0.0
    %4409 = vmatprep.subr.mxu0 0.0
    %4410 = vmatpush1.msra.mxu0 0.0
    %4411 = vmatprep.subr.mxu0 0.0
    %4412 = vmatpush1.msra.mxu0 0.0
    %4413 = vmatprep.subr.mxu0 0.0
    %4414 = vmatpush1.msra.mxu0 0.0
    %4415 = vmatprep.subr.mxu0 0.0
    %4416 = vmatpush1.msra.mxu0 0.0
    %4417 = vmatprep.subr.mxu0 0.0
    %4418 = vmatpush1.msra.mxu0 0.0
    %4419 = vmatprep.subr.mxu0 0.0
    %4420 = vmatpush1.msra.mxu0 0.0
    %4421 = vmatprep.subr.mxu0 0.0
    %4422 = vmatpush1.msra.mxu0 0.0
    %4423 = vmatprep.subr.mxu0 0.0
    %4424 = vmatpush1.msra.mxu0 0.0
    %4425 = vmatprep.subr.mxu0 0.0
    %4426 = vmatpush1.msra.mxu0 0.0
    %4427 = vmatprep.subr.mxu0 0.0
    %4428 = vmatpush1.msra.mxu0 %v3021
    %4429 = vmatprep.subr.mxu0 0.0
    %4430 = vmatpush1.msra.mxu0 %v3020
    %4431 = vmatprep.subr.mxu0 0.0
    %4432 = vmatpush1.msra.mxu0 %v3019
    %4433 = vmatprep.subr.mxu0 0.0
    %4434 = vmatpush1.msra.mxu0 %v3018
    %4435 = vmatprep.subr.mxu0 0.0
    %4436 = vmatpush2.msra.mxu0 0.0
    %4437 = vmatprep.subr.mxu0 0.0
    %4438 = vmatpush2.msra.mxu0 0.0
    %4439 = vmatprep.subr.mxu0 0.0
    %4440 = vmatpush2.msra.mxu0 0.0
    %4441 = vmatprep.subr.mxu0 0.0
    %4442 = vmatpush2.msra.mxu0 0.0
    %4443 = vmatprep.subr.mxu0 0.0
    %4444 = vmatpush2.msra.mxu0 0.0
    %4445 = vmatprep.subr.mxu0 0.0
    %4446 = vmatpush2.msra.mxu0 0.0
    %4447 = vmatprep.subr.mxu0 0.0
    %4448 = vmatpush2.msra.mxu0 0.0
    %4449 = vmatprep.subr.mxu0 0.0
    %4450 = vmatpush2.msra.mxu0 0.0
    %4451 = vmatprep.subr.mxu0 0.0
    %4452 = vmatpush2.msra.mxu0 0.0
    %4453 = vmatprep.subr.mxu0 0.0
    %4454 = vmatpush2.msra.mxu0 0.0
    %4455 = vmatprep.subr.mxu0 0.0
    %4456 = vmatpush2.msra.mxu0 0.0
    %4457 = vmatprep.subr.mxu0 0.0
    %4458 = vmatpush2.msra.mxu0 0.0
    %4459 = vmatprep.subr.mxu0 0.0
    %4460 = vmatpush2.msra.mxu0 0.0
    %4461 = vmatprep.subr.mxu0 0.0
    %4462 = vmatpush2.msra.mxu0 0.0
    %4463 = vmatprep.subr.mxu0 0.0
    %4464 = vmatpush2.msra.mxu0 0.0
    %4465 = vmatprep.subr.mxu0 0.0
    %4466 = vmatpush2.msra.mxu0 0.0
    %4467 = vmatprep.mubr.f32.mxu0 0.0
    %4468 = vmatmul.mubr.f32.gmra.mxu0 %v4398
    %v4469 = vpop.f32.mrf.mxu0
    %v4470 = vadd.f32 %v4396, %v4469
    %v4471 = vpop.f32.mrf.mxu0
    %4472 = vmatprep.mubr.f32.mxu0 0.0
    %4473 = vmatmul.mubr.f32.gmra.mxu0 %v4401
    %v4474 = vpop.f32.mrf.mxu0
    %v4475 = vadd.f32 %v4396, %v4474
    %v4476 = vpop.f32.mrf.mxu0
    %4477 = vdwg.mxu0
    %v4478 = vadd.f32 %v2429, %v4470
    %v4479 = vadd.f32 %v2430, %v4475
    %v4480 = vsel %vm2450, %v4478, 0.0
    %4481 = vadd.xlane.f32.xlu0 %v4480
    %v4482 = vpop.xlane.xlu0 %4481
    %v4483 = vsel %vm2454, %v4479, 0.0
    %4484 = vadd.xlane.f32.xlu0 %v4483
    %v4485 = vpop.xlane.xlu0 %4484
    %v4486 = vmul.f32 %v4482, %v2458
    %v4487 = vmul.f32 %v4485, %v2458
    %v4488 = vsub.f32 %v4478, %v4486
    %v4489 = vsub.f32 %v4479, %v4487
    %v4490 = vmul.f32 %v4488, %v4488
    %v4491 = vmul.f32 %v4489, %v4489
    %v4492 = vsel %vm2450, %v4490, 0.0
    %4493 = vadd.xlane.f32.xlu0 %v4492
    %v4494 = vpop.xlane.xlu0 %4493
    %v4495 = vsel %vm2454, %v4491, 0.0
    %4496 = vadd.xlane.f32.xlu0 %v4495
    %v4497 = vpop.xlane.xlu0 %4496
    %v4498 = vmul.f32 %v4494, %v2458
    %v4499 = vmul.f32 %v4497, %v2458
    %v4500 = vadd.f32 %v4498, 1e-05
    %v4501 = vadd.f32 %v4499, 1e-05
    %v4502 = vrsqrt.pop %v4500
    %v4503 = vrsqrt.pop %v4501
    %v4504 = vmul.f32 %v4488, %v4502
    %v4505 = vmul.f32 %v4489, %v4503
    %v4506 = vlaneseq
    %v4507 = vshrl.u32 %v4506, 7
    %v4508 = vsub.s32 0, %v4507
    %v4509 = vrot.slane %v3023, %v4508
    %v4510 = vmul.f32 %v4504, %v4509
    %v4511 = vmul.f32 %v4505, %v4509
    %v4512 = vlaneseq
    %v4513 = vshrl.u32 %v4512, 7
    %v4514 = vsub.s32 1, %v4513
    %v4515 = vrot.slane %v3023, %v4514
    %v4516 = vadd.f32 %v4510, %v4515
    %v4517 = vadd.f32 %v4511, %v4515
    %v4518 = vadd.f32 %v4516, %v2427
    %v4519 = vadd.f32 %v4517, %v2428
    %v4520 = vld [vmem:[%s37] sm:$0xff]
    %v4521 = vld [vmem:[%s37 + $0x8] sm:$0xff]
    %v4522 = vld [vmem:[%s37 + $0x10] sm:$0xff]
    %v4523 = vld [vmem:[%s37 + $0x18] sm:$0xff]
    %v4524 = vld [vmem:[#allocation13] sm:$0x1]
    %v4526 = vlaneseq
    %v4527 = vshrl.u32 %v4526, 7
    %v4528 = vsub.s32 0, %v4527
    %v4529 = vrot.slane %v4524, %v4528
    %v4532 = vsel %vm2450, %v4518, 0
    %v4535 = vsel %vm2450, %v4519, 0
    %4537 = vmatprep.subr.mxu0 0.0
    %4538 = vmatpush1.msra.mxu0 0.0
    %4539 = vmatprep.subr.mxu0 0.0
    %4540 = vmatpush1.msra.mxu0 0.0
    %4541 = vmatprep.subr.mxu0 0.0
    %4542 = vmatpush1.msra.mxu0 0.0
    %4543 = vmatprep.subr.mxu0 0.0
    %4544 = vmatpush1.msra.mxu0 0.0
    %4545 = vmatprep.subr.mxu0 0.0
    %4546 = vmatpush1.msra.mxu0 0.0
    %4547 = vmatprep.subr.mxu0 0.0
    %4548 = vmatpush1.msra.mxu0 0.0
    %4549 = vmatprep.subr.mxu0 0.0
    %4550 = vmatpush1.msra.mxu0 0.0
    %4551 = vmatprep.subr.mxu0 0.0
    %4552 = vmatpush1.msra.mxu0 0.0
    %4553 = vmatprep.subr.mxu0 0.0
    %4554 = vmatpush1.msra.mxu0 0.0
    %4555 = vmatprep.subr.mxu0 0.0
    %4556 = vmatpush1.msra.mxu0 0.0
    %4557 = vmatprep.subr.mxu0 0.0
    %4558 = vmatpush1.msra.mxu0 0.0
    %4559 = vmatprep.subr.mxu0 0.0
    %4560 = vmatpush1.msra.mxu0 0.0
    %4561 = vmatprep.subr.mxu0 0.0
    %4562 = vmatpush1.msra.mxu0 %v4523
    %4563 = vmatprep.subr.mxu0 0.0
    %4564 = vmatpush1.msra.mxu0 %v4522
    %4565 = vmatprep.subr.mxu0 0.0
    %4566 = vmatpush1.msra.mxu0 %v4521
    %4567 = vmatprep.subr.mxu0 0.0
    %4568 = vmatpush1.msra.mxu0 %v4520
    %4569 = vmatprep.subr.mxu0 0.0
    %4570 = vmatpush2.msra.mxu0 0.0
    %4571 = vmatprep.subr.mxu0 0.0
    %4572 = vmatpush2.msra.mxu0 0.0
    %4573 = vmatprep.subr.mxu0 0.0
    %4574 = vmatpush2.msra.mxu0 0.0
    %4575 = vmatprep.subr.mxu0 0.0
    %4576 = vmatpush2.msra.mxu0 0.0
    %4577 = vmatprep.subr.mxu0 0.0
    %4578 = vmatpush2.msra.mxu0 0.0
    %4579 = vmatprep.subr.mxu0 0.0
    %4580 = vmatpush2.msra.mxu0 0.0
    %4581 = vmatprep.subr.mxu0 0.0
    %4582 = vmatpush2.msra.mxu0 0.0
    %4583 = vmatprep.subr.mxu0 0.0
    %4584 = vmatpush2.msra.mxu0 0.0
    %4585 = vmatprep.subr.mxu0 0.0
    %4586 = vmatpush2.msra.mxu0 0.0
    %4587 = vmatprep.subr.mxu0 0.0
    %4588 = vmatpush2.msra.mxu0 0.0
    %4589 = vmatprep.subr.mxu0 0.0
    %4590 = vmatpush2.msra.mxu0 0.0
    %4591 = vmatprep.subr.mxu0 0.0
    %4592 = vmatpush2.msra.mxu0 0.0
    %4593 = vmatprep.subr.mxu0 0.0
    %4594 = vmatpush2.msra.mxu0 0.0
    %4595 = vmatprep.subr.mxu0 0.0
    %4596 = vmatpush2.msra.mxu0 0.0
    %4597 = vmatprep.subr.mxu0 0.0
    %4598 = vmatpush2.msra.mxu0 0.0
    %4599 = vmatprep.subr.mxu0 0.0
    %4600 = vmatpush2.msra.mxu0 0.0
    %4601 = vmatprep.mubr.f32.mxu0 0.0
    %4602 = vmatmul.mubr.f32.gmra.mxu0 %v4532
    %v4603 = vpop.f32.mrf.mxu0
    %v4604 = vadd.f32 %v4529, %v4603
    %v4605 = vpop.f32.mrf.mxu0
    %4606 = vmatprep.mubr.f32.mxu0 0.0
    %4607 = vmatmul.mubr.f32.gmra.mxu0 %v4535
    %v4608 = vpop.f32.mrf.mxu0
    %v4609 = vadd.f32 %v4529, %v4608
    %v4610 = vpop.f32.mrf.mxu0
    %4611 = vdwg.mxu0
    %v4612 = vld [vmem:[%s41] sm:$0xff]
    %v4613 = vld [vmem:[%s41 + $0x8] sm:$0xff]
    %v4614 = vld [vmem:[%s41 + $0x10] sm:$0xff]
    %v4615 = vld [vmem:[%s41 + $0x18] sm:$0xff]
    %v4616 = vld [vmem:[#allocation15] sm:$0x1]
    %v4618 = vlaneseq
    %v4619 = vshrl.u32 %v4618, 7
    %v4620 = vsub.s32 0, %v4619
    %v4621 = vrot.slane %v4616, %v4620
    %v4624 = vsel %vm2450, %v4516, 0
    %v4627 = vsel %vm2450, %v4517, 0
    %4629 = vmatprep.subr.mxu0 0.0
    %4630 = vmatpush1.msra.mxu0 0.0
    %4631 = vmatprep.subr.mxu0 0.0
    %4632 = vmatpush1.msra.mxu0 0.0
    %4633 = vmatprep.subr.mxu0 0.0
    %4634 = vmatpush1.msra.mxu0 0.0
    %4635 = vmatprep.subr.mxu0 0.0
    %4636 = vmatpush1.msra.mxu0 0.0
    %4637 = vmatprep.subr.mxu0 0.0
    %4638 = vmatpush1.msra.mxu0 0.0
    %4639 = vmatprep.subr.mxu0 0.0
    %4640 = vmatpush1.msra.mxu0 0.0
    %4641 = vmatprep.subr.mxu0 0.0
    %4642 = vmatpush1.msra.mxu0 0.0
    %4643 = vmatprep.subr.mxu0 0.0
    %4644 = vmatpush1.msra.mxu0 0.0
    %4645 = vmatprep.subr.mxu0 0.0
    %4646 = vmatpush1.msra.mxu0 0.0
    %4647 = vmatprep.subr.mxu0 0.0
    %4648 = vmatpush1.msra.mxu0 0.0
    %4649 = vmatprep.subr.mxu0 0.0
    %4650 = vmatpush1.msra.mxu0 0.0
    %4651 = vmatprep.subr.mxu0 0.0
    %4652 = vmatpush1.msra.mxu0 0.0
    %4653 = vmatprep.subr.mxu0 0.0
    %4654 = vmatpush1.msra.mxu0 %v4615
    %4655 = vmatprep.subr.mxu0 0.0
    %4656 = vmatpush1.msra.mxu0 %v4614
    %4657 = vmatprep.subr.mxu0 0.0
    %4658 = vmatpush1.msra.mxu0 %v4613
    %4659 = vmatprep.subr.mxu0 0.0
    %4660 = vmatpush1.msra.mxu0 %v4612
    %4661 = vmatprep.subr.mxu0 0.0
    %4662 = vmatpush2.msra.mxu0 0.0
    %4663 = vmatprep.subr.mxu0 0.0
    %4664 = vmatpush2.msra.mxu0 0.0
    %4665 = vmatprep.subr.mxu0 0.0
    %4666 = vmatpush2.msra.mxu0 0.0
    %4667 = vmatprep.subr.mxu0 0.0
    %4668 = vmatpush2.msra.mxu0 0.0
    %4669 = vmatprep.subr.mxu0 0.0
    %4670 = vmatpush2.msra.mxu0 0.0
    %4671 = vmatprep.subr.mxu0 0.0
    %4672 = vmatpush2.msra.mxu0 0.0
    %4673 = vmatprep.subr.mxu0 0.0
    %4674 = vmatpush2.msra.mxu0 0.0
    %4675 = vmatprep.subr.mxu0 0.0
    %4676 = vmatpush2.msra.mxu0 0.0
    %4677 = vmatprep.subr.mxu0 0.0
    %4678 = vmatpush2.msra.mxu0 0.0
    %4679 = vmatprep.subr.mxu0 0.0
    %4680 = vmatpush2.msra.mxu0 0.0
    %4681 = vmatprep.subr.mxu0 0.0
    %4682 = vmatpush2.msra.mxu0 0.0
    %4683 = vmatprep.subr.mxu0 0.0
    %4684 = vmatpush2.msra.mxu0 0.0
    %4685 = vmatprep.subr.mxu0 0.0
    %4686 = vmatpush2.msra.mxu0 0.0
    %4687 = vmatprep.subr.mxu0 0.0
    %4688 = vmatpush2.msra.mxu0 0.0
    %4689 = vmatprep.subr.mxu0 0.0
    %4690 = vmatpush2.msra.mxu0 0.0
    %4691 = vmatprep.subr.mxu0 0.0
    %4692 = vmatpush2.msra.mxu0 0.0
    %4693 = vmatprep.mubr.f32.mxu0 0.0
    %4694 = vmatmul.mubr.f32.gmra.mxu0 %v4624
    %v4695 = vpop.f32.mrf.mxu0
    %v4696 = vadd.f32 %v4621, %v4695
    %v4697 = vpop.f32.mrf.mxu0
    %4698 = vmatprep.mubr.f32.mxu0 0.0
    %4699 = vmatmul.mubr.f32.gmra.mxu0 %v4627
    %v4700 = vpop.f32.mrf.mxu0
    %v4701 = vadd.f32 %v4621, %v4700
    %v4702 = vpop.f32.mrf.mxu0
    %4703 = vdwg.mxu0
    %v4704 = vld [vmem:[#allocation16] sm:$0xff]
    %v4705 = vld [vmem:[#allocation16 + $0x8] sm:$0xff]
    %v4706 = vld [vmem:[#allocation16 + $0x10] sm:$0xff]
    %v4707 = vld [vmem:[#allocation16 + $0x18] sm:$0xff]
    %v4708 = vld [vmem:[#allocation18] sm:$0x1]
    %4711 = vrot.lane.b32.xlu0 %v4604, 96
    %v4712 = vpop.permute.xlu0 %4711
    %4713 = vrot.lane.b32.xlu0 %v4609, 96
    %v4714 = vpop.permute.xlu0 %4713
    %v4715 = vsel %vm3403, %v4604, 0
    %v4717 = vsel %vm3403, %v4609, 0
    %v4719 = vsel %vm3403, %v4712, 0
    %v4721 = vsel %vm3403, %v4714, 0
    %4723 = vmatprep.subr.mxu0 0.0
    %4724 = vmatpush1.xpose.msra.mxu0 0.0
    %4725 = vmatprep.subr.mxu0 0.0
    %4726 = vmatpush1.xpose.msra.mxu0 0.0
    %4727 = vmatprep.subr.mxu0 0.0
    %4728 = vmatpush1.xpose.msra.mxu0 0.0
    %4729 = vmatprep.subr.mxu0 0.0
    %4730 = vmatpush1.xpose.msra.mxu0 0.0
    %4731 = vmatprep.subr.mxu0 0.0
    %4732 = vmatpush1.xpose.msra.mxu0 0.0
    %4733 = vmatprep.subr.mxu0 0.0
    %4734 = vmatpush1.xpose.msra.mxu0 0.0
    %4735 = vmatprep.subr.mxu0 0.0
    %4736 = vmatpush1.xpose.msra.mxu0 0.0
    %4737 = vmatprep.subr.mxu0 0.0
    %4738 = vmatpush1.xpose.msra.mxu0 0.0
    %4739 = vmatprep.subr.mxu0 0.0
    %4740 = vmatpush1.xpose.msra.mxu0 0.0
    %4741 = vmatprep.subr.mxu0 0.0
    %4742 = vmatpush1.xpose.msra.mxu0 0.0
    %4743 = vmatprep.subr.mxu0 0.0
    %4744 = vmatpush1.xpose.msra.mxu0 0.0
    %4745 = vmatprep.subr.mxu0 0.0
    %4746 = vmatpush1.xpose.msra.mxu0 0.0
    %4747 = vmatprep.subr.mxu0 0.0
    %4748 = vmatpush1.xpose.msra.mxu0 0.0
    %4749 = vmatprep.subr.mxu0 0.0
    %4750 = vmatpush1.xpose.msra.mxu0 0.0
    %4751 = vmatprep.subr.mxu0 0.0
    %4752 = vmatpush1.xpose.msra.mxu0 %v4721
    %4753 = vmatprep.subr.mxu0 0.0
    %4754 = vmatpush1.xpose.msra.mxu0 %v4719
    %4755 = vmatprep.subr.mxu0 0.0
    %4756 = vmatpush2.xpose.msra.mxu0 0.0
    %4757 = vmatprep.subr.mxu0 0.0
    %4758 = vmatpush2.xpose.msra.mxu0 0.0
    %4759 = vmatprep.subr.mxu0 0.0
    %4760 = vmatpush2.xpose.msra.mxu0 0.0
    %4761 = vmatprep.subr.mxu0 0.0
    %4762 = vmatpush2.xpose.msra.mxu0 0.0
    %4763 = vmatprep.subr.mxu0 0.0
    %4764 = vmatpush2.xpose.msra.mxu0 0.0
    %4765 = vmatprep.subr.mxu0 0.0
    %4766 = vmatpush2.xpose.msra.mxu0 0.0
    %4767 = vmatprep.subr.mxu0 0.0
    %4768 = vmatpush2.xpose.msra.mxu0 0.0
    %4769 = vmatprep.subr.mxu0 0.0
    %4770 = vmatpush2.xpose.msra.mxu0 0.0
    %4771 = vmatprep.subr.mxu0 0.0
    %4772 = vmatpush2.xpose.msra.mxu0 0.0
    %4773 = vmatprep.subr.mxu0 0.0
    %4774 = vmatpush2.xpose.msra.mxu0 0.0
    %4775 = vmatprep.subr.mxu0 0.0
    %4776 = vmatpush2.xpose.msra.mxu0 0.0
    %4777 = vmatprep.subr.mxu0 0.0
    %4778 = vmatpush2.xpose.msra.mxu0 0.0
    %4779 = vmatprep.subr.mxu0 0.0
    %4780 = vmatpush2.xpose.msra.mxu0 0.0
    %4781 = vmatprep.subr.mxu0 0.0
    %4782 = vmatpush2.xpose.msra.mxu0 0.0
    %4783 = vmatprep.subr.mxu0 0.0
    %4784 = vmatpush2.xpose.msra.mxu0 0.0
    %4785 = vmatprep.subr.mxu0 0.0
    %4786 = vmatpush2.xpose.msra.mxu0 0.0
    %4787 = vmatprep.mubr.f32.mxu0 0.0
    %4788 = vmatmul.mubr.f32.gmra.mxu0 %v4715
    %v4789 = vpop.f32.mrf.mxu0
    %v4790 = vadd.f32 0.0, %v4789
    %v4791 = vpop.f32.mrf.mxu0
    %4792 = vmatprep.mubr.f32.mxu0 0.0
    %4793 = vmatmul.mubr.f32.gmra.mxu0 %v4717
    %v4794 = vpop.f32.mrf.mxu0
    %v4795 = vadd.f32 0.0, %v4794
    %v4796 = vpop.f32.mrf.mxu0
    %4797 = vdwg.mxu0
    %v4798 = vmul.f32 %v4790, 0.35355338
    %v4799 = vmul.f32 %v4795, 0.35355338
    %vm4800 = vcmask 97280
    %v4801 = vsel %vm4800, %v4798, -inf
    %4802 = vmax.xlane.f32.xlu0 %v4801
    %v4803 = vpop.xlane.xlu0 %4802
    %vm4804 = vcmask 93184
    %v4805 = vsel %vm4804, %v4799, -inf
    %4806 = vmax.xlane.f32.xlu0 %v4805
    %v4807 = vpop.xlane.xlu0 %4806
    %v4808 = vsub.f32 %v4798, %v4803
    %v4809 = vsub.f32 %v4799, %v4807
    %v4810 = vmul.f32 %v4808, 1.442695
    %v4811 = vpow.pop %v4810
    %v4812 = vmul.f32 %v4809, 1.442695
    %v4813 = vpow.pop %v4812
    %v4814 = vsel %vm4800, %v4811, 0.0
    %4815 = vadd.xlane.f32.xlu0 %v4814
    %v4816 = vpop.xlane.xlu0 %4815
    %v4817 = vsel %vm4804, %v4813, 0.0
    %4818 = vadd.xlane.f32.xlu0 %v4817
    %v4819 = vpop.xlane.xlu0 %4818
    %v4820 = vrcp.pop %v4816
    %v4821 = vrcp.pop %v4819
    %v4822 = vmul.f32 %v4811, %v4820
    %v4823 = vmul.f32 %v4813, %v4821
    %v4825 = vsel %vm4800, %v4822, 0
    %v4828 = vsel %vm4800, %v4823, 0
    %v4831 = vsel %vm2956, %v4701, 0
    %4833 = vmatprep.subr.mxu0 0.0
    %4834 = vmatpush1.msra.mxu0 0.0
    %4835 = vmatprep.subr.mxu0 0.0
    %4836 = vmatpush1.msra.mxu0 0.0
    %4837 = vmatprep.subr.mxu0 0.0
    %4838 = vmatpush1.msra.mxu0 0.0
    %4839 = vmatprep.subr.mxu0 0.0
    %4840 = vmatpush1.msra.mxu0 0.0
    %4841 = vmatprep.subr.mxu0 0.0
    %4842 = vmatpush1.msra.mxu0 0.0
    %4843 = vmatprep.subr.mxu0 0.0
    %4844 = vmatpush1.msra.mxu0 0.0
    %4845 = vmatprep.subr.mxu0 0.0
    %4846 = vmatpush1.msra.mxu0 0.0
    %4847 = vmatprep.subr.mxu0 0.0
    %4848 = vmatpush1.msra.mxu0 0.0
    %4849 = vmatprep.subr.mxu0 0.0
    %4850 = vmatpush1.msra.mxu0 0.0
    %4851 = vmatprep.subr.mxu0 0.0
    %4852 = vmatpush1.msra.mxu0 0.0
    %4853 = vmatprep.subr.mxu0 0.0
    %4854 = vmatpush1.msra.mxu0 0.0
    %4855 = vmatprep.subr.mxu0 0.0
    %4856 = vmatpush1.msra.mxu0 0.0
    %4857 = vmatprep.subr.mxu0 0.0
    %4858 = vmatpush1.msra.mxu0 0.0
    %4859 = vmatprep.subr.mxu0 0.0
    %4860 = vmatpush1.msra.mxu0 0.0
    %4861 = vmatprep.subr.mxu0 0.0
    %4862 = vmatpush1.msra.mxu0 %v4831
    %4863 = vmatprep.subr.mxu0 0.0
    %4864 = vmatpush1.msra.mxu0 %v4696
    %4865 = vmatprep.subr.mxu0 0.0
    %4866 = vmatpush2.msra.mxu0 0.0
    %4867 = vmatprep.subr.mxu0 0.0
    %4868 = vmatpush2.msra.mxu0 0.0
    %4869 = vmatprep.subr.mxu0 0.0
    %4870 = vmatpush2.msra.mxu0 0.0
    %4871 = vmatprep.subr.mxu0 0.0
    %4872 = vmatpush2.msra.mxu0 0.0
    %4873 = vmatprep.subr.mxu0 0.0
    %4874 = vmatpush2.msra.mxu0 0.0
    %4875 = vmatprep.subr.mxu0 0.0
    %4876 = vmatpush2.msra.mxu0 0.0
    %4877 = vmatprep.subr.mxu0 0.0
    %4878 = vmatpush2.msra.mxu0 0.0
    %4879 = vmatprep.subr.mxu0 0.0
    %4880 = vmatpush2.msra.mxu0 0.0
    %4881 = vmatprep.subr.mxu0 0.0
    %4882 = vmatpush2.msra.mxu0 0.0
    %4883 = vmatprep.subr.mxu0 0.0
    %4884 = vmatpush2.msra.mxu0 0.0
    %4885 = vmatprep.subr.mxu0 0.0
    %4886 = vmatpush2.msra.mxu0 0.0
    %4887 = vmatprep.subr.mxu0 0.0
    %4888 = vmatpush2.msra.mxu0 0.0
    %4889 = vmatprep.subr.mxu0 0.0
    %4890 = vmatpush2.msra.mxu0 0.0
    %4891 = vmatprep.subr.mxu0 0.0
    %4892 = vmatpush2.msra.mxu0 0.0
    %4893 = vmatprep.subr.mxu0 0.0
    %4894 = vmatpush2.msra.mxu0 0.0
    %4895 = vmatprep.subr.mxu0 0.0
    %4896 = vmatpush2.msra.mxu0 0.0
    %4897 = vmatprep.mubr.f32.mxu0 0.0
    %4898 = vmatmul.mubr.f32.gmra.mxu0 %v4825
    %v4899 = vpop.f32.mrf.mxu0
    %v4900 = vadd.f32 0.0, %v4899
    %v4901 = vpop.f32.mrf.mxu0
    %4902 = vmatprep.mubr.f32.mxu0 0.0
    %4903 = vmatmul.mubr.f32.gmra.mxu0 %v4828
    %v4904 = vpop.f32.mrf.mxu0
    %v4905 = vadd.f32 0.0, %v4904
    %v4906 = vpop.f32.mrf.mxu0
    %4907 = vdwg.mxu0
    %4908 = vrot.lane.b32.xlu0 %v4604, 120
    %v4909 = vpop.permute.xlu0 %4908
    %4910 = vrot.lane.b32.xlu0 %v4609, 120
    %v4911 = vpop.permute.xlu0 %4910
    %4912 = vrot.lane.b32.xlu0 %v4604, 88
    %v4913 = vpop.permute.xlu0 %4912
    %4914 = vrot.lane.b32.xlu0 %v4609, 88
    %v4915 = vpop.permute.xlu0 %4914
    %v4916 = vsel %vm3403, %v4909, 0
    %v4918 = vsel %vm3403, %v4911, 0
    %v4920 = vsel %vm3403, %v4913, 0
    %v4922 = vsel %vm3403, %v4915, 0
    %4924 = vmatprep.subr.mxu0 0.0
    %4925 = vmatpush1.xpose.msra.mxu0 0.0
    %4926 = vmatprep.subr.mxu0 0.0
    %4927 = vmatpush1.xpose.msra.mxu0 0.0
    %4928 = vmatprep.subr.mxu0 0.0
    %4929 = vmatpush1.xpose.msra.mxu0 0.0
    %4930 = vmatprep.subr.mxu0 0.0
    %4931 = vmatpush1.xpose.msra.mxu0 0.0
    %4932 = vmatprep.subr.mxu0 0.0
    %4933 = vmatpush1.xpose.msra.mxu0 0.0
    %4934 = vmatprep.subr.mxu0 0.0
    %4935 = vmatpush1.xpose.msra.mxu0 0.0
    %4936 = vmatprep.subr.mxu0 0.0
    %4937 = vmatpush1.xpose.msra.mxu0 0.0
    %4938 = vmatprep.subr.mxu0 0.0
    %4939 = vmatpush1.xpose.msra.mxu0 0.0
    %4940 = vmatprep.subr.mxu0 0.0
    %4941 = vmatpush1.xpose.msra.mxu0 0.0
    %4942 = vmatprep.subr.mxu0 0.0
    %4943 = vmatpush1.xpose.msra.mxu0 0.0
    %4944 = vmatprep.subr.mxu0 0.0
    %4945 = vmatpush1.xpose.msra.mxu0 0.0
    %4946 = vmatprep.subr.mxu0 0.0
    %4947 = vmatpush1.xpose.msra.mxu0 0.0
    %4948 = vmatprep.subr.mxu0 0.0
    %4949 = vmatpush1.xpose.msra.mxu0 0.0
    %4950 = vmatprep.subr.mxu0 0.0
    %4951 = vmatpush1.xpose.msra.mxu0 0.0
    %4952 = vmatprep.subr.mxu0 0.0
    %4953 = vmatpush1.xpose.msra.mxu0 %v4922
    %4954 = vmatprep.subr.mxu0 0.0
    %4955 = vmatpush1.xpose.msra.mxu0 %v4920
    %4956 = vmatprep.subr.mxu0 0.0
    %4957 = vmatpush2.xpose.msra.mxu0 0.0
    %4958 = vmatprep.subr.mxu0 0.0
    %4959 = vmatpush2.xpose.msra.mxu0 0.0
    %4960 = vmatprep.subr.mxu0 0.0
    %4961 = vmatpush2.xpose.msra.mxu0 0.0
    %4962 = vmatprep.subr.mxu0 0.0
    %4963 = vmatpush2.xpose.msra.mxu0 0.0
    %4964 = vmatprep.subr.mxu0 0.0
    %4965 = vmatpush2.xpose.msra.mxu0 0.0
    %4966 = vmatprep.subr.mxu0 0.0
    %4967 = vmatpush2.xpose.msra.mxu0 0.0
    %4968 = vmatprep.subr.mxu0 0.0
    %4969 = vmatpush2.xpose.msra.mxu0 0.0
    %4970 = vmatprep.subr.mxu0 0.0
    %4971 = vmatpush2.xpose.msra.mxu0 0.0
    %4972 = vmatprep.subr.mxu0 0.0
    %4973 = vmatpush2.xpose.msra.mxu0 0.0
    %4974 = vmatprep.subr.mxu0 0.0
    %4975 = vmatpush2.xpose.msra.mxu0 0.0
    %4976 = vmatprep.subr.mxu0 0.0
    %4977 = vmatpush2.xpose.msra.mxu0 0.0
    %4978 = vmatprep.subr.mxu0 0.0
    %4979 = vmatpush2.xpose.msra.mxu0 0.0
    %4980 = vmatprep.subr.mxu0 0.0
    %4981 = vmatpush2.xpose.msra.mxu0 0.0
    %4982 = vmatprep.subr.mxu0 0.0
    %4983 = vmatpush2.xpose.msra.mxu0 0.0
    %4984 = vmatprep.subr.mxu0 0.0
    %4985 = vmatpush2.xpose.msra.mxu0 0.0
    %4986 = vmatprep.subr.mxu0 0.0
    %4987 = vmatpush2.xpose.msra.mxu0 0.0
    %4988 = vmatprep.mubr.f32.mxu0 0.0
    %4989 = vmatmul.mubr.f32.gmra.mxu0 %v4916
    %v4990 = vpop.f32.mrf.mxu0
    %v4991 = vadd.f32 0.0, %v4990
    %v4992 = vpop.f32.mrf.mxu0
    %4993 = vmatprep.mubr.f32.mxu0 0.0
    %4994 = vmatmul.mubr.f32.gmra.mxu0 %v4918
    %v4995 = vpop.f32.mrf.mxu0
    %v4996 = vadd.f32 0.0, %v4995
    %v4997 = vpop.f32.mrf.mxu0
    %4998 = vdwg.mxu0
    %v4999 = vmul.f32 %v4991, 0.35355338
    %v5000 = vmul.f32 %v4996, 0.35355338
    %v5001 = vsel %vm4800, %v4999, -inf
    %5002 = vmax.xlane.f32.xlu0 %v5001
    %v5003 = vpop.xlane.xlu0 %5002
    %v5004 = vsel %vm4804, %v5000, -inf
    %5005 = vmax.xlane.f32.xlu0 %v5004
    %v5006 = vpop.xlane.xlu0 %5005
    %v5007 = vsub.f32 %v4999, %v5003
    %v5008 = vsub.f32 %v5000, %v5006
    %v5009 = vmul.f32 %v5007, 1.442695
    %v5010 = vpow.pop %v5009
    %v5011 = vmul.f32 %v5008, 1.442695
    %v5012 = vpow.pop %v5011
    %v5013 = vsel %vm4800, %v5010, 0.0
    %5014 = vadd.xlane.f32.xlu0 %v5013
    %v5015 = vpop.xlane.xlu0 %5014
    %v5016 = vsel %vm4804, %v5012, 0.0
    %5017 = vadd.xlane.f32.xlu0 %v5016
    %v5018 = vpop.xlane.xlu0 %5017
    %v5019 = vrcp.pop %v5015
    %v5020 = vrcp.pop %v5018
    %v5021 = vmul.f32 %v5010, %v5019
    %v5022 = vmul.f32 %v5012, %v5020
    %5024 = vrot.lane.b32.xlu0 %v4696, 120
    %v5025 = vpop.permute.xlu0 %5024
    %5026 = vrot.lane.b32.xlu0 %v4701, 120
    %v5027 = vpop.permute.xlu0 %5026
    %v5030 = vsel %vm4800, %v5021, 0
    %v5033 = vsel %vm4800, %v5022, 0
    %v5035 = vsel %vm2956, %v5027, 0
    %5037 = vmatprep.subr.mxu0 0.0
    %5038 = vmatpush1.msra.mxu0 0.0
    %5039 = vmatprep.subr.mxu0 0.0
    %5040 = vmatpush1.msra.mxu0 0.0
    %5041 = vmatprep.subr.mxu0 0.0
    %5042 = vmatpush1.msra.mxu0 0.0
    %5043 = vmatprep.subr.mxu0 0.0
    %5044 = vmatpush1.msra.mxu0 0.0
    %5045 = vmatprep.subr.mxu0 0.0
    %5046 = vmatpush1.msra.mxu0 0.0
    %5047 = vmatprep.subr.mxu0 0.0
    %5048 = vmatpush1.msra.mxu0 0.0
    %5049 = vmatprep.subr.mxu0 0.0
    %5050 = vmatpush1.msra.mxu0 0.0
    %5051 = vmatprep.subr.mxu0 0.0
    %5052 = vmatpush1.msra.mxu0 0.0
    %5053 = vmatprep.subr.mxu0 0.0
    %5054 = vmatpush1.msra.mxu0 0.0
    %5055 = vmatprep.subr.mxu0 0.0
    %5056 = vmatpush1.msra.mxu0 0.0
    %5057 = vmatprep.subr.mxu0 0.0
    %5058 = vmatpush1.msra.mxu0 0.0
    %5059 = vmatprep.subr.mxu0 0.0
    %5060 = vmatpush1.msra.mxu0 0.0
    %5061 = vmatprep.subr.mxu0 0.0
    %5062 = vmatpush1.msra.mxu0 0.0
    %5063 = vmatprep.subr.mxu0 0.0
    %5064 = vmatpush1.msra.mxu0 0.0
    %5065 = vmatprep.subr.mxu0 0.0
    %5066 = vmatpush1.msra.mxu0 %v5035
    %5067 = vmatprep.subr.mxu0 0.0
    %5068 = vmatpush1.msra.mxu0 %v5025
    %5069 = vmatprep.subr.mxu0 0.0
    %5070 = vmatpush2.msra.mxu0 0.0
    %5071 = vmatprep.subr.mxu0 0.0
    %5072 = vmatpush2.msra.mxu0 0.0
    %5073 = vmatprep.subr.mxu0 0.0
    %5074 = vmatpush2.msra.mxu0 0.0
    %5075 = vmatprep.subr.mxu0 0.0
    %5076 = vmatpush2.msra.mxu0 0.0
    %5077 = vmatprep.subr.mxu0 0.0
    %5078 = vmatpush2.msra.mxu0 0.0
    %5079 = vmatprep.subr.mxu0 0.0
    %5080 = vmatpush2.msra.mxu0 0.0
    %5081 = vmatprep.subr.mxu0 0.0
    %5082 = vmatpush2.msra.mxu0 0.0
    %5083 = vmatprep.subr.mxu0 0.0
    %5084 = vmatpush2.msra.mxu0 0.0
    %5085 = vmatprep.subr.mxu0 0.0
    %5086 = vmatpush2.msra.mxu0 0.0
    %5087 = vmatprep.subr.mxu0 0.0
    %5088 = vmatpush2.msra.mxu0 0.0
    %5089 = vmatprep.subr.mxu0 0.0
    %5090 = vmatpush2.msra.mxu0 0.0
    %5091 = vmatprep.subr.mxu0 0.0
    %5092 = vmatpush2.msra.mxu0 0.0
    %5093 = vmatprep.subr.mxu0 0.0
    %5094 = vmatpush2.msra.mxu0 0.0
    %5095 = vmatprep.subr.mxu0 0.0
    %5096 = vmatpush2.msra.mxu0 0.0
    %5097 = vmatprep.subr.mxu0 0.0
    %5098 = vmatpush2.msra.mxu0 0.0
    %5099 = vmatprep.subr.mxu0 0.0
    %5100 = vmatpush2.msra.mxu0 0.0
    %5101 = vmatprep.mubr.f32.mxu0 0.0
    %5102 = vmatmul.mubr.f32.gmra.mxu0 %v5030
    %v5103 = vpop.f32.mrf.mxu0
    %v5104 = vadd.f32 0.0, %v5103
    %v5105 = vpop.f32.mrf.mxu0
    %5106 = vmatprep.mubr.f32.mxu0 0.0
    %5107 = vmatmul.mubr.f32.gmra.mxu0 %v5033
    %v5108 = vpop.f32.mrf.mxu0
    %v5109 = vadd.f32 0.0, %v5108
    %v5110 = vpop.f32.mrf.mxu0
    %5111 = vdwg.mxu0
    %5112 = vrot.lane.b32.xlu0 %v4604, 112
    %v5113 = vpop.permute.xlu0 %5112
    %5114 = vrot.lane.b32.xlu0 %v4609, 112
    %v5115 = vpop.permute.xlu0 %5114
    %5116 = vrot.lane.b32.xlu0 %v4604, 80
    %v5117 = vpop.permute.xlu0 %5116
    %5118 = vrot.lane.b32.xlu0 %v4609, 80
    %v5119 = vpop.permute.xlu0 %5118
    %v5120 = vsel %vm3403, %v5113, 0
    %v5122 = vsel %vm3403, %v5115, 0
    %v5124 = vsel %vm3403, %v5117, 0
    %v5126 = vsel %vm3403, %v5119, 0
    %5128 = vmatprep.subr.mxu0 0.0
    %5129 = vmatpush1.xpose.msra.mxu0 0.0
    %5130 = vmatprep.subr.mxu0 0.0
    %5131 = vmatpush1.xpose.msra.mxu0 0.0
    %5132 = vmatprep.subr.mxu0 0.0
    %5133 = vmatpush1.xpose.msra.mxu0 0.0
    %5134 = vmatprep.subr.mxu0 0.0
    %5135 = vmatpush1.xpose.msra.mxu0 0.0
    %5136 = vmatprep.subr.mxu0 0.0
    %5137 = vmatpush1.xpose.msra.mxu0 0.0
    %5138 = vmatprep.subr.mxu0 0.0
    %5139 = vmatpush1.xpose.msra.mxu0 0.0
    %5140 = vmatprep.subr.mxu0 0.0
    %5141 = vmatpush1.xpose.msra.mxu0 0.0
    %5142 = vmatprep.subr.mxu0 0.0
    %5143 = vmatpush1.xpose.msra.mxu0 0.0
    %5144 = vmatprep.subr.mxu0 0.0
    %5145 = vmatpush1.xpose.msra.mxu0 0.0
    %5146 = vmatprep.subr.mxu0 0.0
    %5147 = vmatpush1.xpose.msra.mxu0 0.0
    %5148 = vmatprep.subr.mxu0 0.0
    %5149 = vmatpush1.xpose.msra.mxu0 0.0
    %5150 = vmatprep.subr.mxu0 0.0
    %5151 = vmatpush1.xpose.msra.mxu0 0.0
    %5152 = vmatprep.subr.mxu0 0.0
    %5153 = vmatpush1.xpose.msra.mxu0 0.0
    %5154 = vmatprep.subr.mxu0 0.0
    %5155 = vmatpush1.xpose.msra.mxu0 0.0
    %5156 = vmatprep.subr.mxu0 0.0
    %5157 = vmatpush1.xpose.msra.mxu0 %v5126
    %5158 = vmatprep.subr.mxu0 0.0
    %5159 = vmatpush1.xpose.msra.mxu0 %v5124
    %5160 = vmatprep.subr.mxu0 0.0
    %5161 = vmatpush2.xpose.msra.mxu0 0.0
    %5162 = vmatprep.subr.mxu0 0.0
    %5163 = vmatpush2.xpose.msra.mxu0 0.0
    %5164 = vmatprep.subr.mxu0 0.0
    %5165 = vmatpush2.xpose.msra.mxu0 0.0
    %5166 = vmatprep.subr.mxu0 0.0
    %5167 = vmatpush2.xpose.msra.mxu0 0.0
    %5168 = vmatprep.subr.mxu0 0.0
    %5169 = vmatpush2.xpose.msra.mxu0 0.0
    %5170 = vmatprep.subr.mxu0 0.0
    %5171 = vmatpush2.xpose.msra.mxu0 0.0
    %5172 = vmatprep.subr.mxu0 0.0
    %5173 = vmatpush2.xpose.msra.mxu0 0.0
    %5174 = vmatprep.subr.mxu0 0.0
    %5175 = vmatpush2.xpose.msra.mxu0 0.0
    %5176 = vmatprep.subr.mxu0 0.0
    %5177 = vmatpush2.xpose.msra.mxu0 0.0
    %5178 = vmatprep.subr.mxu0 0.0
    %5179 = vmatpush2.xpose.msra.mxu0 0.0
    %5180 = vmatprep.subr.mxu0 0.0
    %5181 = vmatpush2.xpose.msra.mxu0 0.0
    %5182 = vmatprep.subr.mxu0 0.0
    %5183 = vmatpush2.xpose.msra.mxu0 0.0
    %5184 = vmatprep.subr.mxu0 0.0
    %5185 = vmatpush2.xpose.msra.mxu0 0.0
    %5186 = vmatprep.subr.mxu0 0.0
    %5187 = vmatpush2.xpose.msra.mxu0 0.0
    %5188 = vmatprep.subr.mxu0 0.0
    %5189 = vmatpush2.xpose.msra.mxu0 0.0
    %5190 = vmatprep.subr.mxu0 0.0
    %5191 = vmatpush2.xpose.msra.mxu0 0.0
    %5192 = vmatprep.mubr.f32.mxu0 0.0
    %5193 = vmatmul.mubr.f32.gmra.mxu0 %v5120
    %v5194 = vpop.f32.mrf.mxu0
    %v5195 = vadd.f32 0.0, %v5194
    %v5196 = vpop.f32.mrf.mxu0
    %5197 = vmatprep.mubr.f32.mxu0 0.0
    %5198 = vmatmul.mubr.f32.gmra.mxu0 %v5122
    %v5199 = vpop.f32.mrf.mxu0
    %v5200 = vadd.f32 0.0, %v5199
    %v5201 = vpop.f32.mrf.mxu0
    %5202 = vdwg.mxu0
    %v5203 = vmul.f32 %v5195, 0.35355338
    %v5204 = vmul.f32 %v5200, 0.35355338
    %v5205 = vsel %vm4800, %v5203, -inf
    %5206 = vmax.xlane.f32.xlu0 %v5205
    %v5207 = vpop.xlane.xlu0 %5206
    %v5208 = vsel %vm4804, %v5204, -inf
    %5209 = vmax.xlane.f32.xlu0 %v5208
    %v5210 = vpop.xlane.xlu0 %5209
    %v5211 = vsub.f32 %v5203, %v5207
    %v5212 = vsub.f32 %v5204, %v5210
    %v5213 = vmul.f32 %v5211, 1.442695
    %v5214 = vpow.pop %v5213
    %v5215 = vmul.f32 %v5212, 1.442695
    %v5216 = vpow.pop %v5215
    %v5217 = vsel %vm4800, %v5214, 0.0
    %5218 = vadd.xlane.f32.xlu0 %v5217
    %v5219 = vpop.xlane.xlu0 %5218
    %v5220 = vsel %vm4804, %v5216, 0.0
    %5221 = vadd.xlane.f32.xlu0 %v5220
    %v5222 = vpop.xlane.xlu0 %5221
    %v5223 = vrcp.pop %v5219
    %v5224 = vrcp.pop %v5222
    %v5225 = vmul.f32 %v5214, %v5223
    %v5226 = vmul.f32 %v5216, %v5224
    %5227 = vrot.lane.b32.xlu0 %v4696, 112
    %v5228 = vpop.permute.xlu0 %5227
    %5229 = vrot.lane.b32.xlu0 %v4701, 112
    %v5230 = vpop.permute.xlu0 %5229
    %v5233 = vsel %vm4800, %v5225, 0
    %v5236 = vsel %vm4800, %v5226, 0
    %v5238 = vsel %vm2956, %v5230, 0
    %5240 = vmatprep.subr.mxu0 0.0
    %5241 = vmatpush1.msra.mxu0 0.0
    %5242 = vmatprep.subr.mxu0 0.0
    %5243 = vmatpush1.msra.mxu0 0.0
    %5244 = vmatprep.subr.mxu0 0.0
    %5245 = vmatpush1.msra.mxu0 0.0
    %5246 = vmatprep.subr.mxu0 0.0
    %5247 = vmatpush1.msra.mxu0 0.0
    %5248 = vmatprep.subr.mxu0 0.0
    %5249 = vmatpush1.msra.mxu0 0.0
    %5250 = vmatprep.subr.mxu0 0.0
    %5251 = vmatpush1.msra.mxu0 0.0
    %5252 = vmatprep.subr.mxu0 0.0
    %5253 = vmatpush1.msra.mxu0 0.0
    %5254 = vmatprep.subr.mxu0 0.0
    %5255 = vmatpush1.msra.mxu0 0.0
    %5256 = vmatprep.subr.mxu0 0.0
    %5257 = vmatpush1.msra.mxu0 0.0
    %5258 = vmatprep.subr.mxu0 0.0
    %5259 = vmatpush1.msra.mxu0 0.0
    %5260 = vmatprep.subr.mxu0 0.0
    %5261 = vmatpush1.msra.mxu0 0.0
    %5262 = vmatprep.subr.mxu0 0.0
    %5263 = vmatpush1.msra.mxu0 0.0
    %5264 = vmatprep.subr.mxu0 0.0
    %5265 = vmatpush1.msra.mxu0 0.0
    %5266 = vmatprep.subr.mxu0 0.0
    %5267 = vmatpush1.msra.mxu0 0.0
    %5268 = vmatprep.subr.mxu0 0.0
    %5269 = vmatpush1.msra.mxu0 %v5238
    %5270 = vmatprep.subr.mxu0 0.0
    %5271 = vmatpush1.msra.mxu0 %v5228
    %5272 = vmatprep.subr.mxu0 0.0
    %5273 = vmatpush2.msra.mxu0 0.0
    %5274 = vmatprep.subr.mxu0 0.0
    %5275 = vmatpush2.msra.mxu0 0.0
    %5276 = vmatprep.subr.mxu0 0.0
    %5277 = vmatpush2.msra.mxu0 0.0
    %5278 = vmatprep.subr.mxu0 0.0
    %5279 = vmatpush2.msra.mxu0 0.0
    %5280 = vmatprep.subr.mxu0 0.0
    %5281 = vmatpush2.msra.mxu0 0.0
    %5282 = vmatprep.subr.mxu0 0.0
    %5283 = vmatpush2.msra.mxu0 0.0
    %5284 = vmatprep.subr.mxu0 0.0
    %5285 = vmatpush2.msra.mxu0 0.0
    %5286 = vmatprep.subr.mxu0 0.0
    %5287 = vmatpush2.msra.mxu0 0.0
    %5288 = vmatprep.subr.mxu0 0.0
    %5289 = vmatpush2.msra.mxu0 0.0
    %5290 = vmatprep.subr.mxu0 0.0
    %5291 = vmatpush2.msra.mxu0 0.0
    %5292 = vmatprep.subr.mxu0 0.0
    %5293 = vmatpush2.msra.mxu0 0.0
    %5294 = vmatprep.subr.mxu0 0.0
    %5295 = vmatpush2.msra.mxu0 0.0
    %5296 = vmatprep.subr.mxu0 0.0
    %5297 = vmatpush2.msra.mxu0 0.0
    %5298 = vmatprep.subr.mxu0 0.0
    %5299 = vmatpush2.msra.mxu0 0.0
    %5300 = vmatprep.subr.mxu0 0.0
    %5301 = vmatpush2.msra.mxu0 0.0
    %5302 = vmatprep.subr.mxu0 0.0
    %5303 = vmatpush2.msra.mxu0 0.0
    %5304 = vmatprep.mubr.f32.mxu0 0.0
    %5305 = vmatmul.mubr.f32.gmra.mxu0 %v5233
    %v5306 = vpop.f32.mrf.mxu0
    %v5307 = vadd.f32 0.0, %v5306
    %v5308 = vpop.f32.mrf.mxu0
    %5309 = vmatprep.mubr.f32.mxu0 0.0
    %5310 = vmatmul.mubr.f32.gmra.mxu0 %v5236
    %v5311 = vpop.f32.mrf.mxu0
    %v5312 = vadd.f32 0.0, %v5311
    %v5313 = vpop.f32.mrf.mxu0
    %5314 = vdwg.mxu0
    %5315 = vrot.lane.b32.xlu0 %v4604, 104
    %v5316 = vpop.permute.xlu0 %5315
    %5317 = vrot.lane.b32.xlu0 %v4609, 104
    %v5318 = vpop.permute.xlu0 %5317
    %5319 = vrot.lane.b32.xlu0 %v4604, 72
    %v5320 = vpop.permute.xlu0 %5319
    %5321 = vrot.lane.b32.xlu0 %v4609, 72
    %v5322 = vpop.permute.xlu0 %5321
    %v5323 = vsel %vm3403, %v5316, 0
    %v5325 = vsel %vm3403, %v5318, 0
    %v5327 = vsel %vm3403, %v5320, 0
    %v5329 = vsel %vm3403, %v5322, 0
    %5331 = vmatprep.subr.mxu0 0.0
    %5332 = vmatpush1.xpose.msra.mxu0 0.0
    %5333 = vmatprep.subr.mxu0 0.0
    %5334 = vmatpush1.xpose.msra.mxu0 0.0
    %5335 = vmatprep.subr.mxu0 0.0
    %5336 = vmatpush1.xpose.msra.mxu0 0.0
    %5337 = vmatprep.subr.mxu0 0.0
    %5338 = vmatpush1.xpose.msra.mxu0 0.0
    %5339 = vmatprep.subr.mxu0 0.0
    %5340 = vmatpush1.xpose.msra.mxu0 0.0
    %5341 = vmatprep.subr.mxu0 0.0
    %5342 = vmatpush1.xpose.msra.mxu0 0.0
    %5343 = vmatprep.subr.mxu0 0.0
    %5344 = vmatpush1.xpose.msra.mxu0 0.0
    %5345 = vmatprep.subr.mxu0 0.0
    %5346 = vmatpush1.xpose.msra.mxu0 0.0
    %5347 = vmatprep.subr.mxu0 0.0
    %5348 = vmatpush1.xpose.msra.mxu0 0.0
    %5349 = vmatprep.subr.mxu0 0.0
    %5350 = vmatpush1.xpose.msra.mxu0 0.0
    %5351 = vmatprep.subr.mxu0 0.0
    %5352 = vmatpush1.xpose.msra.mxu0 0.0
    %5353 = vmatprep.subr.mxu0 0.0
    %5354 = vmatpush1.xpose.msra.mxu0 0.0
    %5355 = vmatprep.subr.mxu0 0.0
    %5356 = vmatpush1.xpose.msra.mxu0 0.0
    %5357 = vmatprep.subr.mxu0 0.0
    %5358 = vmatpush1.xpose.msra.mxu0 0.0
    %5359 = vmatprep.subr.mxu0 0.0
    %5360 = vmatpush1.xpose.msra.mxu0 %v5329
    %5361 = vmatprep.subr.mxu0 0.0
    %5362 = vmatpush1.xpose.msra.mxu0 %v5327
    %5363 = vmatprep.subr.mxu0 0.0
    %5364 = vmatpush2.xpose.msra.mxu0 0.0
    %5365 = vmatprep.subr.mxu0 0.0
    %5366 = vmatpush2.xpose.msra.mxu0 0.0
    %5367 = vmatprep.subr.mxu0 0.0
    %5368 = vmatpush2.xpose.msra.mxu0 0.0
    %5369 = vmatprep.subr.mxu0 0.0
    %5370 = vmatpush2.xpose.msra.mxu0 0.0
    %5371 = vmatprep.subr.mxu0 0.0
    %5372 = vmatpush2.xpose.msra.mxu0 0.0
    %5373 = vmatprep.subr.mxu0 0.0
    %5374 = vmatpush2.xpose.msra.mxu0 0.0
    %5375 = vmatprep.subr.mxu0 0.0
    %5376 = vmatpush2.xpose.msra.mxu0 0.0
    %5377 = vmatprep.subr.mxu0 0.0
    %5378 = vmatpush2.xpose.msra.mxu0 0.0
    %5379 = vmatprep.subr.mxu0 0.0
    %5380 = vmatpush2.xpose.msra.mxu0 0.0
    %5381 = vmatprep.subr.mxu0 0.0
    %5382 = vmatpush2.xpose.msra.mxu0 0.0
    %5383 = vmatprep.subr.mxu0 0.0
    %5384 = vmatpush2.xpose.msra.mxu0 0.0
    %5385 = vmatprep.subr.mxu0 0.0
    %5386 = vmatpush2.xpose.msra.mxu0 0.0
    %5387 = vmatprep.subr.mxu0 0.0
    %5388 = vmatpush2.xpose.msra.mxu0 0.0
    %5389 = vmatprep.subr.mxu0 0.0
    %5390 = vmatpush2.xpose.msra.mxu0 0.0
    %5391 = vmatprep.subr.mxu0 0.0
    %5392 = vmatpush2.xpose.msra.mxu0 0.0
    %5393 = vmatprep.subr.mxu0 0.0
    %5394 = vmatpush2.xpose.msra.mxu0 0.0
    %5395 = vmatprep.mubr.f32.mxu0 0.0
    %5396 = vmatmul.mubr.f32.gmra.mxu0 %v5323
    %v5397 = vpop.f32.mrf.mxu0
    %v5398 = vadd.f32 0.0, %v5397
    %v5399 = vpop.f32.mrf.mxu0
    %5400 = vmatprep.mubr.f32.mxu0 0.0
    %5401 = vmatmul.mubr.f32.gmra.mxu0 %v5325
    %v5402 = vpop.f32.mrf.mxu0
    %v5403 = vadd.f32 0.0, %v5402
    %v5404 = vpop.f32.mrf.mxu0
    %5405 = vdwg.mxu0
    %v5406 = vmul.f32 %v5398, 0.35355338
    %v5407 = vmul.f32 %v5403, 0.35355338
    %v5408 = vsel %vm4800, %v5406, -inf
    %5409 = vmax.xlane.f32.xlu0 %v5408
    %v5410 = vpop.xlane.xlu0 %5409
    %v5411 = vsel %vm4804, %v5407, -inf
    %5412 = vmax.xlane.f32.xlu0 %v5411
    %v5413 = vpop.xlane.xlu0 %5412
    %v5414 = vsub.f32 %v5406, %v5410
    %v5415 = vsub.f32 %v5407, %v5413
    %v5416 = vmul.f32 %v5414, 1.442695
    %v5417 = vpow.pop %v5416
    %v5418 = vmul.f32 %v5415, 1.442695
    %v5419 = vpow.pop %v5418
    %v5420 = vsel %vm4800, %v5417, 0.0
    %5421 = vadd.xlane.f32.xlu0 %v5420
    %v5422 = vpop.xlane.xlu0 %5421
    %v5423 = vsel %vm4804, %v5419, 0.0
    %5424 = vadd.xlane.f32.xlu0 %v5423
    %v5425 = vpop.xlane.xlu0 %5424
    %v5426 = vrcp.pop %v5422
    %v5427 = vrcp.pop %v5425
    %v5428 = vmul.f32 %v5417, %v5426
    %v5429 = vmul.f32 %v5419, %v5427
    %5430 = vrot.lane.b32.xlu0 %v4696, 104
    %v5431 = vpop.permute.xlu0 %5430
    %5432 = vrot.lane.b32.xlu0 %v4701, 104
    %v5433 = vpop.permute.xlu0 %5432
    %v5436 = vsel %vm4800, %v5428, 0
    %v5439 = vsel %vm4800, %v5429, 0
    %v5441 = vsel %vm2956, %v5433, 0
    %5443 = vmatprep.subr.mxu0 0.0
    %5444 = vmatpush1.msra.mxu0 0.0
    %5445 = vmatprep.subr.mxu0 0.0
    %5446 = vmatpush1.msra.mxu0 0.0
    %5447 = vmatprep.subr.mxu0 0.0
    %5448 = vmatpush1.msra.mxu0 0.0
    %5449 = vmatprep.subr.mxu0 0.0
    %5450 = vmatpush1.msra.mxu0 0.0
    %5451 = vmatprep.subr.mxu0 0.0
    %5452 = vmatpush1.msra.mxu0 0.0
    %5453 = vmatprep.subr.mxu0 0.0
    %5454 = vmatpush1.msra.mxu0 0.0
    %5455 = vmatprep.subr.mxu0 0.0
    %5456 = vmatpush1.msra.mxu0 0.0
    %5457 = vmatprep.subr.mxu0 0.0
    %5458 = vmatpush1.msra.mxu0 0.0
    %5459 = vmatprep.subr.mxu0 0.0
    %5460 = vmatpush1.msra.mxu0 0.0
    %5461 = vmatprep.subr.mxu0 0.0
    %5462 = vmatpush1.msra.mxu0 0.0
    %5463 = vmatprep.subr.mxu0 0.0
    %5464 = vmatpush1.msra.mxu0 0.0
    %5465 = vmatprep.subr.mxu0 0.0
    %5466 = vmatpush1.msra.mxu0 0.0
    %5467 = vmatprep.subr.mxu0 0.0
    %5468 = vmatpush1.msra.mxu0 0.0
    %5469 = vmatprep.subr.mxu0 0.0
    %5470 = vmatpush1.msra.mxu0 0.0
    %5471 = vmatprep.subr.mxu0 0.0
    %5472 = vmatpush1.msra.mxu0 %v5441
    %5473 = vmatprep.subr.mxu0 0.0
    %5474 = vmatpush1.msra.mxu0 %v5431
    %5475 = vmatprep.subr.mxu0 0.0
    %5476 = vmatpush2.msra.mxu0 0.0
    %5477 = vmatprep.subr.mxu0 0.0
    %5478 = vmatpush2.msra.mxu0 0.0
    %5479 = vmatprep.subr.mxu0 0.0
    %5480 = vmatpush2.msra.mxu0 0.0
    %5481 = vmatprep.subr.mxu0 0.0
    %5482 = vmatpush2.msra.mxu0 0.0
    %5483 = vmatprep.subr.mxu0 0.0
    %5484 = vmatpush2.msra.mxu0 0.0
    %5485 = vmatprep.subr.mxu0 0.0
    %5486 = vmatpush2.msra.mxu0 0.0
    %5487 = vmatprep.subr.mxu0 0.0
    %5488 = vmatpush2.msra.mxu0 0.0
    %5489 = vmatprep.subr.mxu0 0.0
    %5490 = vmatpush2.msra.mxu0 0.0
    %5491 = vmatprep.subr.mxu0 0.0
    %5492 = vmatpush2.msra.mxu0 0.0
    %5493 = vmatprep.subr.mxu0 0.0
    %5494 = vmatpush2.msra.mxu0 0.0
    %5495 = vmatprep.subr.mxu0 0.0
    %5496 = vmatpush2.msra.mxu0 0.0
    %5497 = vmatprep.subr.mxu0 0.0
    %5498 = vmatpush2.msra.mxu0 0.0
    %5499 = vmatprep.subr.mxu0 0.0
    %5500 = vmatpush2.msra.mxu0 0.0
    %5501 = vmatprep.subr.mxu0 0.0
    %5502 = vmatpush2.msra.mxu0 0.0
    %5503 = vmatprep.subr.mxu0 0.0
    %5504 = vmatpush2.msra.mxu0 0.0
    %5505 = vmatprep.subr.mxu0 0.0
    %5506 = vmatpush2.msra.mxu0 0.0
    %5507 = vmatprep.mubr.f32.mxu0 0.0
    %5508 = vmatmul.mubr.f32.gmra.mxu0 %v5436
    %v5509 = vpop.f32.mrf.mxu0
    %v5510 = vadd.f32 0.0, %v5509
    %v5511 = vpop.f32.mrf.mxu0
    %5512 = vmatprep.mubr.f32.mxu0 0.0
    %5513 = vmatmul.mubr.f32.gmra.mxu0 %v5439
    %v5514 = vpop.f32.mrf.mxu0
    %v5515 = vadd.f32 0.0, %v5514
    %v5516 = vpop.f32.mrf.mxu0
    %5517 = vdwg.mxu0
    %5520 = vrot.lane.b32.xlu0 %v5104, 8
    %v5521 = vpop.permute.xlu0 %5520
    %5522 = vrot.lane.b32.xlu0 %v5109, 8
    %v5523 = vpop.permute.xlu0 %5522
    %5528 = vrot.lane.b32.xlu0 %v5307, 16
    %v5529 = vpop.permute.xlu0 %5528
    %5530 = vrot.lane.b32.xlu0 %v5312, 16
    %v5531 = vpop.permute.xlu0 %5530
    %5536 = vrot.lane.b32.xlu0 %v5510, 24
    %v5537 = vpop.permute.xlu0 %5536
    %5538 = vrot.lane.b32.xlu0 %v5515, 24
    %v5539 = vpop.permute.xlu0 %5538
    %v5542 = vsel %vm3403, %v4900, %v5521
    %v5543 = vsel %vm3403, %v4905, %v5523
    %v5544 = vsel %vm2154, %v5542, %v5529
    %v5545 = vsel %vm2154, %v5543, %v5531
    %v5546 = vsel %vm4390, %v5544, %v5537
    %v5547 = vsel %vm4390, %v5545, %v5539
    %v5549 = vlaneseq
    %v5550 = vshrl.u32 %v5549, 7
    %v5551 = vsub.s32 0, %v5550
    %v5552 = vrot.slane %v4708, %v5551
    %v5555 = vsel %vm2450, %v5546, 0
    %v5558 = vsel %vm2450, %v5547, 0
    %5560 = vmatprep.subr.mxu0 0.0
    %5561 = vmatpush1.msra.mxu0 0.0
    %5562 = vmatprep.subr.mxu0 0.0
    %5563 = vmatpush1.msra.mxu0 0.0
    %5564 = vmatprep.subr.mxu0 0.0
    %5565 = vmatpush1.msra.mxu0 0.0
    %5566 = vmatprep.subr.mxu0 0.0
    %5567 = vmatpush1.msra.mxu0 0.0
    %5568 = vmatprep.subr.mxu0 0.0
    %5569 = vmatpush1.msra.mxu0 0.0
    %5570 = vmatprep.subr.mxu0 0.0
    %5571 = vmatpush1.msra.mxu0 0.0
    %5572 = vmatprep.subr.mxu0 0.0
    %5573 = vmatpush1.msra.mxu0 0.0
    %5574 = vmatprep.subr.mxu0 0.0
    %5575 = vmatpush1.msra.mxu0 0.0
    %5576 = vmatprep.subr.mxu0 0.0
    %5577 = vmatpush1.msra.mxu0 0.0
    %5578 = vmatprep.subr.mxu0 0.0
    %5579 = vmatpush1.msra.mxu0 0.0
    %5580 = vmatprep.subr.mxu0 0.0
    %5581 = vmatpush1.msra.mxu0 0.0
    %5582 = vmatprep.subr.mxu0 0.0
    %5583 = vmatpush1.msra.mxu0 0.0
    %5584 = vmatprep.subr.mxu0 0.0
    %5585 = vmatpush1.msra.mxu0 %v4707
    %5586 = vmatprep.subr.mxu0 0.0
    %5587 = vmatpush1.msra.mxu0 %v4706
    %5588 = vmatprep.subr.mxu0 0.0
    %5589 = vmatpush1.msra.mxu0 %v4705
    %5590 = vmatprep.subr.mxu0 0.0
    %5591 = vmatpush1.msra.mxu0 %v4704
    %5592 = vmatprep.subr.mxu0 0.0
    %5593 = vmatpush2.msra.mxu0 0.0
    %5594 = vmatprep.subr.mxu0 0.0
    %5595 = vmatpush2.msra.mxu0 0.0
    %5596 = vmatprep.subr.mxu0 0.0
    %5597 = vmatpush2.msra.mxu0 0.0
    %5598 = vmatprep.subr.mxu0 0.0
    %5599 = vmatpush2.msra.mxu0 0.0
    %5600 = vmatprep.subr.mxu0 0.0
    %5601 = vmatpush2.msra.mxu0 0.0
    %5602 = vmatprep.subr.mxu0 0.0
    %5603 = vmatpush2.msra.mxu0 0.0
    %5604 = vmatprep.subr.mxu0 0.0
    %5605 = vmatpush2.msra.mxu0 0.0
    %5606 = vmatprep.subr.mxu0 0.0
    %5607 = vmatpush2.msra.mxu0 0.0
    %5608 = vmatprep.subr.mxu0 0.0
    %5609 = vmatpush2.msra.mxu0 0.0
    %5610 = vmatprep.subr.mxu0 0.0
    %5611 = vmatpush2.msra.mxu0 0.0
    %5612 = vmatprep.subr.mxu0 0.0
    %5613 = vmatpush2.msra.mxu0 0.0
    %5614 = vmatprep.subr.mxu0 0.0
    %5615 = vmatpush2.msra.mxu0 0.0
    %5616 = vmatprep.subr.mxu0 0.0
    %5617 = vmatpush2.msra.mxu0 0.0
    %5618 = vmatprep.subr.mxu0 0.0
    %5619 = vmatpush2.msra.mxu0 0.0
    %5620 = vmatprep.subr.mxu0 0.0
    %5621 = vmatpush2.msra.mxu0 0.0
    %5622 = vmatprep.subr.mxu0 0.0
    %5623 = vmatpush2.msra.mxu0 0.0
    %5624 = vmatprep.mubr.f32.mxu0 0.0
    %5625 = vmatmul.mubr.f32.gmra.mxu0 %v5555
    %v5626 = vpop.f32.mrf.mxu0
    %v5627 = vadd.f32 %v5552, %v5626
    %v5628 = vpop.f32.mrf.mxu0
    %5629 = vmatprep.mubr.f32.mxu0 0.0
    %5630 = vmatmul.mubr.f32.gmra.mxu0 %v5558
    %v5631 = vpop.f32.mrf.mxu0
    %v5632 = vadd.f32 %v5552, %v5631
    %v5633 = vpop.f32.mrf.mxu0
    %5634 = vdwg.mxu0
    %v5635 = vadd.f32 %v4516, %v5627
    %v5636 = vadd.f32 %v4517, %v5632
    %v5637 = vsel %vm2450, %v5635, 0.0
    %5638 = vadd.xlane.f32.xlu0 %v5637
    %v5639 = vpop.xlane.xlu0 %5638
    %v5640 = vsel %vm2454, %v5636, 0.0
    %5641 = vadd.xlane.f32.xlu0 %v5640
    %v5642 = vpop.xlane.xlu0 %5641
    %v5643 = vmul.f32 %v5639, %v2458
    %v5644 = vmul.f32 %v5642, %v2458
    %v5645 = vsub.f32 %v5635, %v5643
    %v5646 = vsub.f32 %v5636, %v5644
    %v5647 = vmul.f32 %v5645, %v5645
    %v5648 = vmul.f32 %v5646, %v5646
    %v5649 = vsel %vm2450, %v5647, 0.0
    %5650 = vadd.xlane.f32.xlu0 %v5649
    %v5651 = vpop.xlane.xlu0 %5650
    %v5652 = vsel %vm2454, %v5648, 0.0
    %5653 = vadd.xlane.f32.xlu0 %v5652
    %v5654 = vpop.xlane.xlu0 %5653
    %v5655 = vmul.f32 %v5651, %v2458
    %v5656 = vmul.f32 %v5654, %v2458
    %v5657 = vadd.f32 %v5655, 1e-05
    %v5658 = vadd.f32 %v5656, 1e-05
    %v5659 = vrsqrt.pop %v5657
    %v5660 = vrsqrt.pop %v5658
    %v5661 = vmul.f32 %v5645, %v5659
    %v5662 = vmul.f32 %v5646, %v5660
    %v5663 = vlaneseq
    %v5664 = vshrl.u32 %v5663, 7
    %v5665 = vsub.s32 2, %v5664
    %v5666 = vrot.slane %v3023, %v5665
    %v5667 = vmul.f32 %v5661, %v5666
    %v5668 = vmul.f32 %v5662, %v5666
    %v5669 = vlaneseq
    %v5670 = vshrl.u32 %v5669, 7
    %v5671 = vsub.s32 3, %v5670
    %v5672 = vrot.slane %v3023, %v5671
    %v5673 = vadd.f32 %v5667, %v5672
    %v5674 = vadd.f32 %v5668, %v5672
    %v5675 = vld [vmem:[#allocation19] sm:$0xff]
    %v5676 = vld [vmem:[#allocation19 + $0x8] sm:$0xff]
    %v5677 = vld [vmem:[#allocation19 + $0x10] sm:$0xff]
    %v5678 = vld [vmem:[#allocation19 + $0x18] sm:$0xff]
    %v5679 = vld [vmem:[#allocation21] sm:$0x1]
    %v5681 = vlaneseq
    %v5682 = vshrl.u32 %v5681, 7
    %v5683 = vsub.s32 0, %v5682
    %v5684 = vrot.slane %v5679, %v5683
    %v5687 = vsel %vm2450, %v5673, 0
    %v5690 = vsel %vm2450, %v5674, 0
    %5692 = vmatprep.subr.mxu0 0.0
    %5693 = vmatpush1.msra.mxu0 0.0
    %5694 = vmatprep.subr.mxu0 0.0
    %5695 = vmatpush1.msra.mxu0 0.0
    %5696 = vmatprep.subr.mxu0 0.0
    %5697 = vmatpush1.msra.mxu0 0.0
    %5698 = vmatprep.subr.mxu0 0.0
    %5699 = vmatpush1.msra.mxu0 0.0
    %5700 = vmatprep.subr.mxu0 0.0
    %5701 = vmatpush1.msra.mxu0 0.0
    %5702 = vmatprep.subr.mxu0 0.0
    %5703 = vmatpush1.msra.mxu0 0.0
    %5704 = vmatprep.subr.mxu0 0.0
    %5705 = vmatpush1.msra.mxu0 0.0
    %5706 = vmatprep.subr.mxu0 0.0
    %5707 = vmatpush1.msra.mxu0 0.0
    %5708 = vmatprep.subr.mxu0 0.0
    %5709 = vmatpush1.msra.mxu0 0.0
    %5710 = vmatprep.subr.mxu0 0.0
    %5711 = vmatpush1.msra.mxu0 0.0
    %5712 = vmatprep.subr.mxu0 0.0
    %5713 = vmatpush1.msra.mxu0 0.0
    %5714 = vmatprep.subr.mxu0 0.0
    %5715 = vmatpush1.msra.mxu0 0.0
    %5716 = vmatprep.subr.mxu0 0.0
    %5717 = vmatpush1.msra.mxu0 %v5678
    %5718 = vmatprep.subr.mxu0 0.0
    %5719 = vmatpush1.msra.mxu0 %v5677
    %5720 = vmatprep.subr.mxu0 0.0
    %5721 = vmatpush1.msra.mxu0 %v5676
    %5722 = vmatprep.subr.mxu0 0.0
    %5723 = vmatpush1.msra.mxu0 %v5675
    %5724 = vmatprep.subr.mxu0 0.0
    %5725 = vmatpush2.msra.mxu0 0.0
    %5726 = vmatprep.subr.mxu0 0.0
    %5727 = vmatpush2.msra.mxu0 0.0
    %5728 = vmatprep.subr.mxu0 0.0
    %5729 = vmatpush2.msra.mxu0 0.0
    %5730 = vmatprep.subr.mxu0 0.0
    %5731 = vmatpush2.msra.mxu0 0.0
    %5732 = vmatprep.subr.mxu0 0.0
    %5733 = vmatpush2.msra.mxu0 0.0
    %5734 = vmatprep.subr.mxu0 0.0
    %5735 = vmatpush2.msra.mxu0 0.0
    %5736 = vmatprep.subr.mxu0 0.0
    %5737 = vmatpush2.msra.mxu0 0.0
    %5738 = vmatprep.subr.mxu0 0.0
    %5739 = vmatpush2.msra.mxu0 0.0
    %5740 = vmatprep.subr.mxu0 0.0
    %5741 = vmatpush2.msra.mxu0 0.0
    %5742 = vmatprep.subr.mxu0 0.0
    %5743 = vmatpush2.msra.mxu0 0.0
    %5744 = vmatprep.subr.mxu0 0.0
    %5745 = vmatpush2.msra.mxu0 0.0
    %5746 = vmatprep.subr.mxu0 0.0
    %5747 = vmatpush2.msra.mxu0 0.0
    %5748 = vmatprep.subr.mxu0 0.0
    %5749 = vmatpush2.msra.mxu0 0.0
    %5750 = vmatprep.subr.mxu0 0.0
    %5751 = vmatpush2.msra.mxu0 0.0
    %5752 = vmatprep.subr.mxu0 0.0
    %5753 = vmatpush2.msra.mxu0 0.0
    %5754 = vmatprep.subr.mxu0 0.0
    %5755 = vmatpush2.msra.mxu0 0.0
    %5756 = vmatprep.mubr.f32.mxu0 0.0
    %5757 = vmatmul.mubr.f32.gmra.mxu0 %v5687
    %v5758 = vpop.f32.mrf.mxu0
    %v5759 = vadd.f32 %v5684, %v5758
    %v5760 = vpop.f32.mrf.mxu0
    %5761 = vmatprep.mubr.f32.mxu0 0.0
    %5762 = vmatmul.mubr.f32.gmra.mxu0 %v5690
    %v5763 = vpop.f32.mrf.mxu0
    %v5764 = vadd.f32 %v5684, %v5763
    %v5765 = vpop.f32.mrf.mxu0
    %5766 = vdwg.mxu0
    %v5767 = vmax.f32 %v5759, 0.0
    %v5768 = vmax.f32 %v5764, 0.0
    %v5769 = vld [vmem:[%s53] sm:$0xff]
    %v5770 = vld [vmem:[%s53 + $0x8] sm:$0xff]
    %v5771 = vld [vmem:[%s53 + $0x10] sm:$0xff]
    %v5772 = vld [vmem:[%s53 + $0x18] sm:$0xff]
    %v5773 = vld [vmem:[%s53 + $0x20] sm:$0xff]
    %v5774 = vld [vmem:[%s53 + $0x28] sm:$0xff]
    %v5775 = vld [vmem:[%s53 + $0x30] sm:$0xff]
    %v5776 = vld [vmem:[%s53 + $0x38] sm:$0xff]
    %v5777 = vld [vmem:[#allocation22] sm:$0x1]
    %v5779 = vlaneseq
    %v5780 = vshrl.u32 %v5779, 7
    %v5781 = vsub.s32 0, %v5780
    %v5782 = vrot.slane %v5777, %v5781
    %v5785 = vsel %vm2948, %v5767, 0
    %v5788 = vsel %vm2948, %v5768, 0
    %5790 = vmatprep.subr.mxu0 0.0
    %5791 = vmatpush1.msra.mxu0 0.0
    %5792 = vmatprep.subr.mxu0 0.0
    %5793 = vmatpush1.msra.mxu0 0.0
    %5794 = vmatprep.subr.mxu0 0.0
    %5795 = vmatpush1.msra.mxu0 0.0
    %5796 = vmatprep.subr.mxu0 0.0
    %5797 = vmatpush1.msra.mxu0 0.0
    %5798 = vmatprep.subr.mxu0 0.0
    %5799 = vmatpush1.msra.mxu0 0.0
    %5800 = vmatprep.subr.mxu0 0.0
    %5801 = vmatpush1.msra.mxu0 0.0
    %5802 = vmatprep.subr.mxu0 0.0
    %5803 = vmatpush1.msra.mxu0 0.0
    %5804 = vmatprep.subr.mxu0 0.0
    %5805 = vmatpush1.msra.mxu0 0.0
    %5806 = vmatprep.subr.mxu0 0.0
    %5807 = vmatpush1.msra.mxu0 %v5776
    %5808 = vmatprep.subr.mxu0 0.0
    %5809 = vmatpush1.msra.mxu0 %v5775
    %5810 = vmatprep.subr.mxu0 0.0
    %5811 = vmatpush1.msra.mxu0 %v5774
    %5812 = vmatprep.subr.mxu0 0.0
    %5813 = vmatpush1.msra.mxu0 %v5773
    %5814 = vmatprep.subr.mxu0 0.0
    %5815 = vmatpush1.msra.mxu0 %v5772
    %5816 = vmatprep.subr.mxu0 0.0
    %5817 = vmatpush1.msra.mxu0 %v5771
    %5818 = vmatprep.subr.mxu0 0.0
    %5819 = vmatpush1.msra.mxu0 %v5770
    %5820 = vmatprep.subr.mxu0 0.0
    %5821 = vmatpush1.msra.mxu0 %v5769
    %5822 = vmatprep.subr.mxu0 0.0
    %5823 = vmatpush2.msra.mxu0 0.0
    %5824 = vmatprep.subr.mxu0 0.0
    %5825 = vmatpush2.msra.mxu0 0.0
    %5826 = vmatprep.subr.mxu0 0.0
    %5827 = vmatpush2.msra.mxu0 0.0
    %5828 = vmatprep.subr.mxu0 0.0
    %5829 = vmatpush2.msra.mxu0 0.0
    %5830 = vmatprep.subr.mxu0 0.0
    %5831 = vmatpush2.msra.mxu0 0.0
    %5832 = vmatprep.subr.mxu0 0.0
    %5833 = vmatpush2.msra.mxu0 0.0
    %5834 = vmatprep.subr.mxu0 0.0
    %5835 = vmatpush2.msra.mxu0 0.0
    %5836 = vmatprep.subr.mxu0 0.0
    %5837 = vmatpush2.msra.mxu0 0.0
    %5838 = vmatprep.subr.mxu0 0.0
    %5839 = vmatpush2.msra.mxu0 0.0
    %5840 = vmatprep.subr.mxu0 0.0
    %5841 = vmatpush2.msra.mxu0 0.0
    %5842 = vmatprep.subr.mxu0 0.0
    %5843 = vmatpush2.msra.mxu0 0.0
    %5844 = vmatprep.subr.mxu0 0.0
    %5845 = vmatpush2.msra.mxu0 0.0
    %5846 = vmatprep.subr.mxu0 0.0
    %5847 = vmatpush2.msra.mxu0 0.0
    %5848 = vmatprep.subr.mxu0 0.0
    %5849 = vmatpush2.msra.mxu0 0.0
    %5850 = vmatprep.subr.mxu0 0.0
    %5851 = vmatpush2.msra.mxu0 0.0
    %5852 = vmatprep.subr.mxu0 0.0
    %5853 = vmatpush2.msra.mxu0 0.0
    %5854 = vmatprep.mubr.f32.mxu0 0.0
    %5855 = vmatmul.mubr.f32.gmra.mxu0 %v5785
    %v5856 = vpop.f32.mrf.mxu0
    %v5857 = vadd.f32 %v5782, %v5856
    %v5858 = vpop.f32.mrf.mxu0
    %5859 = vmatprep.mubr.f32.mxu0 0.0
    %5860 = vmatmul.mubr.f32.gmra.mxu0 %v5788
    %v5861 = vpop.f32.mrf.mxu0
    %v5862 = vadd.f32 %v5782, %v5861
    %v5863 = vpop.f32.mrf.mxu0
    %5864 = vdwg.mxu0
    %v5865 = vadd.f32 %v5673, %v5857
    %v5866 = vadd.f32 %v5674, %v5862
    %v5867 = vsel %vm2450, %v5865, 0.0
    %5868 = vadd.xlane.f32.xlu0 %v5867
    %v5869 = vpop.xlane.xlu0 %5868
    %v5870 = vsel %vm2454, %v5866, 0.0
    %5871 = vadd.xlane.f32.xlu0 %v5870
    %v5872 = vpop.xlane.xlu0 %5871
    %v5873 = vmul.f32 %v5869, %v2458
    %v5874 = vmul.f32 %v5872, %v2458
    %v5875 = vsub.f32 %v5865, %v5873
    %v5876 = vsub.f32 %v5866, %v5874
    %v5877 = vmul.f32 %v5875, %v5875
    %v5878 = vmul.f32 %v5876, %v5876
    %v5879 = vsel %vm2450, %v5877, 0.0
    %5880 = vadd.xlane.f32.xlu0 %v5879
    %v5881 = vpop.xlane.xlu0 %5880
    %v5882 = vsel %vm2454, %v5878, 0.0
    %5883 = vadd.xlane.f32.xlu0 %v5882
    %v5884 = vpop.xlane.xlu0 %5883
    %v5885 = vmul.f32 %v5881, %v2458
    %v5886 = vmul.f32 %v5884, %v2458
    %v5887 = vadd.f32 %v5885, 1e-05
    %v5888 = vadd.f32 %v5886, 1e-05
    %v5889 = vrsqrt.pop %v5887
    %v5890 = vrsqrt.pop %v5888
    %v5891 = vmul.f32 %v5875, %v5889
    %v5892 = vmul.f32 %v5876, %v5890
    %v5893 = vlaneseq
    %v5894 = vshrl.u32 %v5893, 7
    %v5895 = vsub.s32 4, %v5894
    %v5896 = vrot.slane %v3023, %v5895
    %v5897 = vmul.f32 %v5891, %v5896
    %v5898 = vmul.f32 %v5892, %v5896
    %v5899 = vlaneseq
    %v5900 = vshrl.u32 %v5899, 7
    %v5901 = vsub.s32 5, %v5900
    %v5902 = vrot.slane %v3023, %v5901
    %v5903 = vadd.f32 %v5897, %v5902
    %v5904 = vadd.f32 %v5898, %v5902
    %v5905 = vsel %vm2450, %v5903, 0.0
    %5906 = vadd.xlane.f32.xlu0 %v5905
    %v5907 = vpop.xlane.xlu0 %5906
    %v5908 = vsel %vm2454, %v5904, 0.0
    %5909 = vadd.xlane.f32.xlu0 %v5908
    %v5910 = vpop.xlane.xlu0 %5909
    %v5911 = vmul.f32 %v5907, %v2458
    %v5912 = vmul.f32 %v5910, %v2458
    %v5913 = vsub.f32 %v5903, %v5911
    %v5914 = vsub.f32 %v5904, %v5912
    %v5915 = vmul.f32 %v5913, %v5913
    %v5916 = vmul.f32 %v5914, %v5914
    %v5917 = vsel %vm2450, %v5915, 0.0
    %5918 = vadd.xlane.f32.xlu0 %v5917
    %v5919 = vpop.xlane.xlu0 %5918
    %v5920 = vsel %vm2454, %v5916, 0.0
    %5921 = vadd.xlane.f32.xlu0 %v5920
    %v5922 = vpop.xlane.xlu0 %5921
    %v5923 = vmul.f32 %v5919, %v2458
    %v5924 = vmul.f32 %v5922, %v2458
    %v5925 = vadd.f32 %v5923, 1e-05
    %v5926 = vadd.f32 %v5924, 1e-05
    %v5927 = vrsqrt.pop %v5925
    %v5928 = vrsqrt.pop %v5926
    %v5929 = vmul.f32 %v5913, %v5927
    %v5930 = vmul.f32 %v5914, %v5928
    %v5931 = vmul.f32 %v5929, %v2482
    %v5932 = vmul.f32 %v5930, %v2482
    %v5933 = vadd.f32 %v5931, %v2488
    %v5934 = vadd.f32 %v5932, %v2488
    %v5936 = vsel %vm2450, %v5933, 0
    %v5939 = vsel %vm2450, %v5934, 0
    %5941 = vmatprep.subr.mxu0 0.0
    %5942 = vmatpush1.msra.mxu0 0.0
    %5943 = vmatprep.subr.mxu0 0.0
    %5944 = vmatpush1.msra.mxu0 0.0
    %5945 = vmatprep.subr.mxu0 0.0
    %5946 = vmatpush1.msra.mxu0 0.0
    %5947 = vmatprep.subr.mxu0 0.0
    %5948 = vmatpush1.msra.mxu0 0.0
    %5949 = vmatprep.subr.mxu0 0.0
    %5950 = vmatpush1.msra.mxu0 0.0
    %5951 = vmatprep.subr.mxu0 0.0
    %5952 = vmatpush1.msra.mxu0 0.0
    %5953 = vmatprep.subr.mxu0 0.0
    %5954 = vmatpush1.msra.mxu0 0.0
    %5955 = vmatprep.subr.mxu0 0.0
    %5956 = vmatpush1.msra.mxu0 0.0
    %5957 = vmatprep.subr.mxu0 0.0
    %5958 = vmatpush1.msra.mxu0 0.0
    %5959 = vmatprep.subr.mxu0 0.0
    %5960 = vmatpush1.msra.mxu0 0.0
    %5961 = vmatprep.subr.mxu0 0.0
    %5962 = vmatpush1.msra.mxu0 0.0
    %5963 = vmatprep.subr.mxu0 0.0
    %5964 = vmatpush1.msra.mxu0 0.0
    %5965 = vmatprep.subr.mxu0 0.0
    %5966 = vmatpush1.msra.mxu0 %v2435
    %5967 = vmatprep.subr.mxu0 0.0
    %5968 = vmatpush1.msra.mxu0 %v2434
    %5969 = vmatprep.subr.mxu0 0.0
    %5970 = vmatpush1.msra.mxu0 %v2433
    %5971 = vmatprep.subr.mxu0 0.0
    %5972 = vmatpush1.msra.mxu0 %v2432
    %5973 = vmatprep.subr.mxu0 0.0
    %5974 = vmatpush2.msra.mxu0 0.0
    %5975 = vmatprep.subr.mxu0 0.0
    %5976 = vmatpush2.msra.mxu0 0.0
    %5977 = vmatprep.subr.mxu0 0.0
    %5978 = vmatpush2.msra.mxu0 0.0
    %5979 = vmatprep.subr.mxu0 0.0
    %5980 = vmatpush2.msra.mxu0 0.0
    %5981 = vmatprep.subr.mxu0 0.0
    %5982 = vmatpush2.msra.mxu0 0.0
    %5983 = vmatprep.subr.mxu0 0.0
    %5984 = vmatpush2.msra.mxu0 0.0
    %5985 = vmatprep.subr.mxu0 0.0
    %5986 = vmatpush2.msra.mxu0 0.0
    %5987 = vmatprep.subr.mxu0 0.0
    %5988 = vmatpush2.msra.mxu0 0.0
    %5989 = vmatprep.subr.mxu0 0.0
    %5990 = vmatpush2.msra.mxu0 0.0
    %5991 = vmatprep.subr.mxu0 0.0
    %5992 = vmatpush2.msra.mxu0 0.0
    %5993 = vmatprep.subr.mxu0 0.0
    %5994 = vmatpush2.msra.mxu0 0.0
    %5995 = vmatprep.subr.mxu0 0.0
    %5996 = vmatpush2.msra.mxu0 0.0
    %5997 = vmatprep.subr.mxu0 0.0
    %5998 = vmatpush2.msra.mxu0 0.0
    %5999 = vmatprep.subr.mxu0 0.0
    %6000 = vmatpush2.msra.mxu0 0.0
    %6001 = vmatprep.subr.mxu0 0.0
    %6002 = vmatpush2.msra.mxu0 0.0
    %6003 = vmatprep.subr.mxu0 0.0
    %6004 = vmatpush2.msra.mxu0 0.0
    %6005 = vmatprep.mubr.f32.mxu0 0.0
    %6006 = vmatmul.mubr.f32.gmra.mxu0 %v5936
    %v6007 = vpop.f32.mrf.mxu0
    %v6008 = vadd.f32 %v2495, %v6007
    %v6009 = vpop.f32.mrf.mxu0
    %6010 = vmatprep.mubr.f32.mxu0 0.0
    %6011 = vmatmul.mubr.f32.gmra.mxu0 %v5939
    %v6012 = vpop.f32.mrf.mxu0
    %v6013 = vadd.f32 %v2495, %v6012
    %v6014 = vpop.f32.mrf.mxu0
    %6015 = vdwg.mxu0
    %6016 = vmatprep.subr.mxu0 0.0
    %6017 = vmatpush1.msra.mxu0 0.0
    %6018 = vmatprep.subr.mxu0 0.0
    %6019 = vmatpush1.msra.mxu0 0.0
    %6020 = vmatprep.subr.mxu0 0.0
    %6021 = vmatpush1.msra.mxu0 0.0
    %6022 = vmatprep.subr.mxu0 0.0
    %6023 = vmatpush1.msra.mxu0 0.0
    %6024 = vmatprep.subr.mxu0 0.0
    %6025 = vmatpush1.msra.mxu0 0.0
    %6026 = vmatprep.subr.mxu0 0.0
    %6027 = vmatpush1.msra.mxu0 0.0
    %6028 = vmatprep.subr.mxu0 0.0
    %6029 = vmatpush1.msra.mxu0 0.0
    %6030 = vmatprep.subr.mxu0 0.0
    %6031 = vmatpush1.msra.mxu0 0.0
    %6032 = vmatprep.subr.mxu0 0.0
    %6033 = vmatpush1.msra.mxu0 0.0
    %6034 = vmatprep.subr.mxu0 0.0
    %6035 = vmatpush1.msra.mxu0 0.0
    %6036 = vmatprep.subr.mxu0 0.0
    %6037 = vmatpush1.msra.mxu0 0.0
    %6038 = vmatprep.subr.mxu0 0.0
    %6039 = vmatpush1.msra.mxu0 0.0
    %6040 = vmatprep.subr.mxu0 0.0
    %6041 = vmatpush1.msra.mxu0 %v2440
    %6042 = vmatprep.subr.mxu0 0.0
    %6043 = vmatpush1.msra.mxu0 %v2439
    %6044 = vmatprep.subr.mxu0 0.0
    %6045 = vmatpush1.msra.mxu0 %v2438
    %6046 = vmatprep.subr.mxu0 0.0
    %6047 = vmatpush1.msra.mxu0 %v2437
    %6048 = vmatprep.subr.mxu0 0.0
    %6049 = vmatpush2.msra.mxu0 0.0
    %6050 = vmatprep.subr.mxu0 0.0
    %6051 = vmatpush2.msra.mxu0 0.0
    %6052 = vmatprep.subr.mxu0 0.0
    %6053 = vmatpush2.msra.mxu0 0.0
    %6054 = vmatprep.subr.mxu0 0.0
    %6055 = vmatpush2.msra.mxu0 0.0
    %6056 = vmatprep.subr.mxu0 0.0
    %6057 = vmatpush2.msra.mxu0 0.0
    %6058 = vmatprep.subr.mxu0 0.0
    %6059 = vmatpush2.msra.mxu0 0.0
    %6060 = vmatprep.subr.mxu0 0.0
    %6061 = vmatpush2.msra.mxu0 0.0
    %6062 = vmatprep.subr.mxu0 0.0
    %6063 = vmatpush2.msra.mxu0 0.0
    %6064 = vmatprep.subr.mxu0 0.0
    %6065 = vmatpush2.msra.mxu0 0.0
    %6066 = vmatprep.subr.mxu0 0.0
    %6067 = vmatpush2.msra.mxu0 0.0
    %6068 = vmatprep.subr.mxu0 0.0
    %6069 = vmatpush2.msra.mxu0 0.0
    %6070 = vmatprep.subr.mxu0 0.0
    %6071 = vmatpush2.msra.mxu0 0.0
    %6072 = vmatprep.subr.mxu0 0.0
    %6073 = vmatpush2.msra.mxu0 0.0
    %6074 = vmatprep.subr.mxu0 0.0
    %6075 = vmatpush2.msra.mxu0 0.0
    %6076 = vmatprep.subr.mxu0 0.0
    %6077 = vmatpush2.msra.mxu0 0.0
    %6078 = vmatprep.subr.mxu0 0.0
    %6079 = vmatpush2.msra.mxu0 0.0
    %6080 = vmatprep.mubr.f32.mxu0 0.0
    %6081 = vmatmul.mubr.f32.gmra.mxu0 %v5936
    %v6082 = vpop.f32.mrf.mxu0
    %v6083 = vadd.f32 %v2581, %v6082
    %v6084 = vpop.f32.mrf.mxu0
    %6085 = vmatprep.mubr.f32.mxu0 0.0
    %6086 = vmatmul.mubr.f32.gmra.mxu0 %v5939
    %v6087 = vpop.f32.mrf.mxu0
    %v6088 = vadd.f32 %v2581, %v6087
    %v6089 = vpop.f32.mrf.mxu0
    %6090 = vdwg.mxu0
    %v6091 = vmax.f32 %v6083, 0.0
    %v6092 = vmax.f32 %v6088, 0.0
    %v6094 = vsel %vm2450, %v6091, 0
    %v6097 = vsel %vm2450, %v6092, 0
    %6099 = vmatprep.subr.mxu0 0.0
    %6100 = vmatpush1.msra.mxu0 0.0
    %6101 = vmatprep.subr.mxu0 0.0
    %6102 = vmatpush1.msra.mxu0 0.0
    %6103 = vmatprep.subr.mxu0 0.0
    %6104 = vmatpush1.msra.mxu0 0.0
    %6105 = vmatprep.subr.mxu0 0.0
    %6106 = vmatpush1.msra.mxu0 0.0
    %6107 = vmatprep.subr.mxu0 0.0
    %6108 = vmatpush1.msra.mxu0 0.0
    %6109 = vmatprep.subr.mxu0 0.0
    %6110 = vmatpush1.msra.mxu0 0.0
    %6111 = vmatprep.subr.mxu0 0.0
    %6112 = vmatpush1.msra.mxu0 0.0
    %6113 = vmatprep.subr.mxu0 0.0
    %6114 = vmatpush1.msra.mxu0 0.0
    %6115 = vmatprep.subr.mxu0 0.0
    %6116 = vmatpush1.msra.mxu0 0.0
    %6117 = vmatprep.subr.mxu0 0.0
    %6118 = vmatpush1.msra.mxu0 0.0
    %6119 = vmatprep.subr.mxu0 0.0
    %6120 = vmatpush1.msra.mxu0 0.0
    %6121 = vmatprep.subr.mxu0 0.0
    %6122 = vmatpush1.msra.mxu0 0.0
    %6123 = vmatprep.subr.mxu0 0.0
    %6124 = vmatpush1.msra.mxu0 %v2444
    %6125 = vmatprep.subr.mxu0 0.0
    %6126 = vmatpush1.msra.mxu0 %v2443
    %6127 = vmatprep.subr.mxu0 0.0
    %6128 = vmatpush1.msra.mxu0 %v2442
    %6129 = vmatprep.subr.mxu0 0.0
    %6130 = vmatpush1.msra.mxu0 %v2441
    %6131 = vmatprep.subr.mxu0 0.0
    %6132 = vmatpush2.msra.mxu0 0.0
    %6133 = vmatprep.subr.mxu0 0.0
    %6134 = vmatpush2.msra.mxu0 0.0
    %6135 = vmatprep.subr.mxu0 0.0
    %6136 = vmatpush2.msra.mxu0 0.0
    %6137 = vmatprep.subr.mxu0 0.0
    %6138 = vmatpush2.msra.mxu0 0.0
    %6139 = vmatprep.subr.mxu0 0.0
    %6140 = vmatpush2.msra.mxu0 0.0
    %6141 = vmatprep.subr.mxu0 0.0
    %6142 = vmatpush2.msra.mxu0 0.0
    %6143 = vmatprep.subr.mxu0 0.0
    %6144 = vmatpush2.msra.mxu0 0.0
    %6145 = vmatprep.subr.mxu0 0.0
    %6146 = vmatpush2.msra.mxu0 0.0
    %6147 = vmatprep.subr.mxu0 0.0
    %6148 = vmatpush2.msra.mxu0 0.0
    %6149 = vmatprep.subr.mxu0 0.0
    %6150 = vmatpush2.msra.mxu0 0.0
    %6151 = vmatprep.subr.mxu0 0.0
    %6152 = vmatpush2.msra.mxu0 0.0
    %6153 = vmatprep.subr.mxu0 0.0
    %6154 = vmatpush2.msra.mxu0 0.0
    %6155 = vmatprep.subr.mxu0 0.0
    %6156 = vmatpush2.msra.mxu0 0.0
    %6157 = vmatprep.subr.mxu0 0.0
    %6158 = vmatpush2.msra.mxu0 0.0
    %6159 = vmatprep.subr.mxu0 0.0
    %6160 = vmatpush2.msra.mxu0 0.0
    %6161 = vmatprep.subr.mxu0 0.0
    %6162 = vmatpush2.msra.mxu0 0.0
    %6163 = vmatprep.mubr.f32.mxu0 0.0
    %6164 = vmatmul.mubr.f32.gmra.mxu0 %v6094
    %v6165 = vpop.f32.mrf.mxu0
    %v6166 = vadd.f32 %v2662, %v6165
    %v6167 = vpop.f32.mrf.mxu0
    %6168 = vmatprep.mubr.f32.mxu0 0.0
    %6169 = vmatmul.mubr.f32.gmra.mxu0 %v6097
    %v6170 = vpop.f32.mrf.mxu0
    %v6171 = vadd.f32 %v2662, %v6170
    %v6172 = vpop.f32.mrf.mxu0
    %6173 = vdwg.mxu0
    %v6174 = vmax.f32 %v6166, 0.0
    %v6175 = vmax.f32 %v6171, 0.0
    %v6177 = vsel %vm2450, %v6174, 0
    %v6180 = vsel %vm2450, %v6175, 0
    %6182 = vmatprep.subr.mxu0 0.0
    %6183 = vmatpush1.msra.mxu0 0.0
    %6184 = vmatprep.subr.mxu0 0.0
    %6185 = vmatpush1.msra.mxu0 0.0
    %6186 = vmatprep.subr.mxu0 0.0
    %6187 = vmatpush1.msra.mxu0 0.0
    %6188 = vmatprep.subr.mxu0 0.0
    %6189 = vmatpush1.msra.mxu0 0.0
    %6190 = vmatprep.subr.mxu0 0.0
    %6191 = vmatpush1.msra.mxu0 0.0
    %6192 = vmatprep.subr.mxu0 0.0
    %6193 = vmatpush1.msra.mxu0 0.0
    %6194 = vmatprep.subr.mxu0 0.0
    %6195 = vmatpush1.msra.mxu0 0.0
    %6196 = vmatprep.subr.mxu0 0.0
    %6197 = vmatpush1.msra.mxu0 0.0
    %6198 = vmatprep.subr.mxu0 0.0
    %6199 = vmatpush1.msra.mxu0 0.0
    %6200 = vmatprep.subr.mxu0 0.0
    %6201 = vmatpush1.msra.mxu0 0.0
    %6202 = vmatprep.subr.mxu0 0.0
    %6203 = vmatpush1.msra.mxu0 0.0
    %6204 = vmatprep.subr.mxu0 0.0
    %6205 = vmatpush1.msra.mxu0 0.0
    %6206 = vmatprep.subr.mxu0 0.0
    %6207 = vmatpush1.msra.mxu0 %v2448
    %6208 = vmatprep.subr.mxu0 0.0
    %6209 = vmatpush1.msra.mxu0 %v2447
    %6210 = vmatprep.subr.mxu0 0.0
    %6211 = vmatpush1.msra.mxu0 %v2446
    %6212 = vmatprep.subr.mxu0 0.0
    %6213 = vmatpush1.msra.mxu0 %v2445
    %6214 = vmatprep.subr.mxu0 0.0
    %6215 = vmatpush2.msra.mxu0 0.0
    %6216 = vmatprep.subr.mxu0 0.0
    %6217 = vmatpush2.msra.mxu0 0.0
    %6218 = vmatprep.subr.mxu0 0.0
    %6219 = vmatpush2.msra.mxu0 0.0
    %6220 = vmatprep.subr.mxu0 0.0
    %6221 = vmatpush2.msra.mxu0 0.0
    %6222 = vmatprep.subr.mxu0 0.0
    %6223 = vmatpush2.msra.mxu0 0.0
    %6224 = vmatprep.subr.mxu0 0.0
    %6225 = vmatpush2.msra.mxu0 0.0
    %6226 = vmatprep.subr.mxu0 0.0
    %6227 = vmatpush2.msra.mxu0 0.0
    %6228 = vmatprep.subr.mxu0 0.0
    %6229 = vmatpush2.msra.mxu0 0.0
    %6230 = vmatprep.subr.mxu0 0.0
    %6231 = vmatpush2.msra.mxu0 0.0
    %6232 = vmatprep.subr.mxu0 0.0
    %6233 = vmatpush2.msra.mxu0 0.0
    %6234 = vmatprep.subr.mxu0 0.0
    %6235 = vmatpush2.msra.mxu0 0.0
    %6236 = vmatprep.subr.mxu0 0.0
    %6237 = vmatpush2.msra.mxu0 0.0
    %6238 = vmatprep.subr.mxu0 0.0
    %6239 = vmatpush2.msra.mxu0 0.0
    %6240 = vmatprep.subr.mxu0 0.0
    %6241 = vmatpush2.msra.mxu0 0.0
    %6242 = vmatprep.subr.mxu0 0.0
    %6243 = vmatpush2.msra.mxu0 0.0
    %6244 = vmatprep.subr.mxu0 0.0
    %6245 = vmatpush2.msra.mxu0 0.0
    %6246 = vmatprep.mubr.f32.mxu0 0.0
    %6247 = vmatmul.mubr.f32.gmra.mxu0 %v6177
    %v6248 = vpop.f32.mrf.mxu0
    %v6249 = vadd.f32 %v2749, %v6248
    %v6250 = vpop.f32.mrf.mxu0
    %6251 = vmatprep.mubr.f32.mxu0 0.0
    %6252 = vmatmul.mubr.f32.gmra.mxu0 %v6180
    %v6253 = vpop.f32.mrf.mxu0
    %v6254 = vadd.f32 %v2749, %v6253
    %v6255 = vpop.f32.mrf.mxu0
    %6256 = vdwg.mxu0
    %v6258 = vsel %vm2450, %v6249, 0
    %v6261 = vsel %vm2450, %v6254, 0
    %6263 = vmatprep.subr.mxu0 0.0
    %6264 = vmatpush1.xpose.msra.mxu0 0.0
    %6265 = vmatprep.subr.mxu0 0.0
    %6266 = vmatpush1.xpose.msra.mxu0 0.0
    %6267 = vmatprep.subr.mxu0 0.0
    %6268 = vmatpush1.xpose.msra.mxu0 0.0
    %6269 = vmatprep.subr.mxu0 0.0
    %6270 = vmatpush1.xpose.msra.mxu0 0.0
    %6271 = vmatprep.subr.mxu0 0.0
    %6272 = vmatpush1.xpose.msra.mxu0 0.0
    %6273 = vmatprep.subr.mxu0 0.0
    %6274 = vmatpush1.xpose.msra.mxu0 0.0
    %6275 = vmatprep.subr.mxu0 0.0
    %6276 = vmatpush1.xpose.msra.mxu0 0.0
    %6277 = vmatprep.subr.mxu0 0.0
    %6278 = vmatpush1.xpose.msra.mxu0 0.0
    %6279 = vmatprep.subr.mxu0 0.0
    %6280 = vmatpush1.xpose.msra.mxu0 %v2859
    %6281 = vmatprep.subr.mxu0 0.0
    %6282 = vmatpush1.xpose.msra.mxu0 %v2856
    %6283 = vmatprep.subr.mxu0 0.0
    %6284 = vmatpush1.xpose.msra.mxu0 %v2853
    %6285 = vmatprep.subr.mxu0 0.0
    %6286 = vmatpush1.xpose.msra.mxu0 %v2850
    %6287 = vmatprep.subr.mxu0 0.0
    %6288 = vmatpush1.xpose.msra.mxu0 %v2847
    %6289 = vmatprep.subr.mxu0 0.0
    %6290 = vmatpush1.xpose.msra.mxu0 %v2844
    %6291 = vmatprep.subr.mxu0 0.0
    %6292 = vmatpush1.xpose.msra.mxu0 %v2841
    %6293 = vmatprep.subr.mxu0 0.0
    %6294 = vmatpush1.xpose.msra.mxu0 %v2838
    %6295 = vmatprep.subr.mxu0 0.0
    %6296 = vmatpush2.xpose.msra.mxu0 0.0
    %6297 = vmatprep.subr.mxu0 0.0
    %6298 = vmatpush2.xpose.msra.mxu0 0.0
    %6299 = vmatprep.subr.mxu0 0.0
    %6300 = vmatpush2.xpose.msra.mxu0 0.0
    %6301 = vmatprep.subr.mxu0 0.0
    %6302 = vmatpush2.xpose.msra.mxu0 0.0
    %6303 = vmatprep.subr.mxu0 0.0
    %6304 = vmatpush2.xpose.msra.mxu0 0.0
    %6305 = vmatprep.subr.mxu0 0.0
    %6306 = vmatpush2.xpose.msra.mxu0 0.0
    %6307 = vmatprep.subr.mxu0 0.0
    %6308 = vmatpush2.xpose.msra.mxu0 0.0
    %6309 = vmatprep.subr.mxu0 0.0
    %6310 = vmatpush2.xpose.msra.mxu0 0.0
    %6311 = vmatprep.subr.mxu0 0.0
    %6312 = vmatpush2.xpose.msra.mxu0 0.0
    %6313 = vmatprep.subr.mxu0 0.0
    %6314 = vmatpush2.xpose.msra.mxu0 0.0
    %6315 = vmatprep.subr.mxu0 0.0
    %6316 = vmatpush2.xpose.msra.mxu0 0.0
    %6317 = vmatprep.subr.mxu0 0.0
    %6318 = vmatpush2.xpose.msra.mxu0 0.0
    %6319 = vmatprep.subr.mxu0 0.0
    %6320 = vmatpush2.xpose.msra.mxu0 0.0
    %6321 = vmatprep.subr.mxu0 0.0
    %6322 = vmatpush2.xpose.msra.mxu0 0.0
    %6323 = vmatprep.subr.mxu0 0.0
    %6324 = vmatpush2.xpose.msra.mxu0 0.0
    %6325 = vmatprep.subr.mxu0 0.0
    %6326 = vmatpush2.xpose.msra.mxu0 0.0
    %6327 = vmatprep.mubr.f32.mxu0 0.0
    %6328 = vmatmul.mubr.f32.gmra.mxu0 %v6258
    %v6329 = vpop.f32.mrf.mxu0
    %v6330 = vadd.f32 0.0, %v6329
    %v6331 = vpop.f32.mrf.mxu0
    %6332 = vmatprep.mubr.f32.mxu0 0.0
    %6333 = vmatmul.mubr.f32.gmra.mxu0 %v6261
    %v6334 = vpop.f32.mrf.mxu0
    %v6335 = vadd.f32 0.0, %v6334
    %v6336 = vpop.f32.mrf.mxu0
    %6337 = vdwg.mxu0
    %v6338 = vsub.f32 0.0, %v6330
    %v6339 = vsub.f32 0.0, %v6335
    %v6340 = vmul.f32 %v6338, 1.442695
    %v6341 = vpow.pop %v6340
    %v6342 = vmul.f32 %v6339, 1.442695
    %v6343 = vpow.pop %v6342
    %v6344 = vadd.f32 %v6341, 1.0
    %v6345 = vadd.f32 %v6343, 1.0
    %v6346 = vrcp.pop %v6344
    %v6347 = vrcp.pop %v6345
    %v6348 = vadd.f32 %v6346, %v2425
    %v6349 = vadd.f32 %v6347, %v2426
    %v6350 = vsel %vm2948, %v6348, inf
    %6351 = vmin.xlane.f32.xlu0 %v6350
    %v6352 = vpop.xlane.xlu0 %6351
    %v6353 = vsel %vm2952, %v6349, inf
    %6354 = vmin.xlane.f32.xlu0 %v6353
    %v6355 = vpop.xlane.xlu0 %6354
    %v6356 = vsel %vm2956, %v6355, inf
    %v6357 = vmin.f32 %v6352, %v6356
    %v6358 = vrot.slane %v6357, 4
    %v6359 = vmin.f32 %v6357, %v6358
    %v6360 = vrot.slane %v6359, 2
    %v6361 = vmin.f32 %v6359, %v6360
    %v6362 = vrot.slane %v6361, 1
    %v6363 = vmin.f32 %v6361, %v6362
    %v6364 = vsub.f32 %v6348, %v6363
    %v6365 = vsub.f32 %v6349, %v6363
    %v6366 = vsel %vm2948, %v6364, -inf
    %6367 = vmax.xlane.f32.xlu0 %v6366
    %v6368 = vpop.xlane.xlu0 %6367
    %v6369 = vsel %vm2952, %v6365, -inf
    %6370 = vmax.xlane.f32.xlu0 %v6369
    %v6371 = vpop.xlane.xlu0 %6370
    %v6372 = vsel %vm2956, %v6371, -inf
    %v6373 = vmax.f32 %v6368, %v6372
    %v6374 = vrot.slane %v6373, 4
    %v6375 = vmax.f32 %v6373, %v6374
    %v6376 = vrot.slane %v6375, 2
    %v6377 = vmax.f32 %v6375, %v6376
    %v6378 = vrot.slane %v6377, 1
    %v6379 = vmax.f32 %v6377, %v6378
    %v6380 = vrcp.pop %v6379
    %v6381 = vmul.f32 %v6364, %v6380
    %v6382 = vmul.f32 %v6365, %v6380
    %vm6383 = vcmp.lt.f32.partialorder %v6381, 0.5
    %vm6384 = vcmp.lt.f32.partialorder %v6382, 0.5
    %v6385 = vsel %vm6383, 1, 0
    %v6386 = vsel %vm6384, 1, 0
    %v6387 = vcvt.s32.f32 %v6385
    %v6388 = vcvt.s32.f32 %v6386
    %s6389 = scalar_lea.vmem %s59, 16
    %6390 = vst.msk [vmem:[%s6389] sm:$0xff] %vm2948, %v6330
    %6391 = vst.msk [vmem:[%s6389 + $0x8] sm:$0xf] %vm2952, %v6335
    %6394 = vrot.lane.b32.xlu0 %v6008, 32
    %v6395 = vpop.permute.xlu0 %6394
    %6396 = vrot.lane.b32.xlu0 %v6013, 32
    %v6397 = vpop.permute.xlu0 %6396
    %v6400 = vsel %vm2450, %v5903, %v6395
    %v6401 = vsel %vm2450, %v5904, %v6397
    %s6402 = scalar_lea.vmem %s61, 16
    %6403 = vst.msk [vmem:[%s6402] sm:$0xff] %vm3002, %v6400
    %6404 = vst.msk [vmem:[%s6402 + $0x8] sm:$0xf] %vm3004, %v6401
    %s6405 = scalar_lea.vmem %s33, 128
    %v6406 = vld [vmem:[%s6405] sm:$0xff]
    %v6407 = vld [vmem:[%s6405 + $0x8] sm:$0xff]
    %v6408 = vld [vmem:[%s6405 + $0x10] sm:$0xff]
    %v6409 = vld [vmem:[%s6405 + $0x18] sm:$0xff]
    %v6410 = vld [vmem:[%s6405 + $0x20] sm:$0xff]
    %v6411 = vld [vmem:[%s6405 + $0x28] sm:$0xff]
    %v6412 = vld [vmem:[%s6405 + $0x30] sm:$0xff]
    %v6413 = vld [vmem:[%s6405 + $0x38] sm:$0xff]
    %v6414 = vld [vmem:[%s6405 + $0x40] sm:$0xff]
    %v6415 = vld [vmem:[%s6405 + $0x48] sm:$0xff]
    %v6416 = vld [vmem:[%s6405 + $0x50] sm:$0xff]
    %v6417 = vld [vmem:[%s6405 + $0x58] sm:$0xff]
    %v6418 = vld [vmem:[%s6405 + $0x60] sm:$0xff]
    %v6419 = vld [vmem:[%s6405 + $0x68] sm:$0xff]
    %v6420 = vld [vmem:[%s6405 + $0x70] sm:$0xff]
    %v6421 = vld [vmem:[%s6405 + $0x78] sm:$0xff]
    %s6422 = scalar_lea.vmem [#allocation12], 4
    %v6423 = vld [vmem:[%s6422] sm:$0xf]
    %s6424 = scalar_lea.vmem %s57, 8
    %v6425 = vld [vmem:[%s6424] sm:$0x3f]
    %v6426 = vsel %vm2948, %v6387, 0.0
    %6427 = vadd.xlane.f32.xlu0 %v6426
    %v6428 = vpop.xlane.xlu0 %6427
    %v6429 = vsel %vm2952, %v6388, 0.0
    %6430 = vadd.xlane.f32.xlu0 %v6429
    %v6431 = vpop.xlane.xlu0 %6430
    %vm6432 = vcmp.ge.f32.partialorder %v6428, 63.5
    %vm6433 = vcmp.ge.f32.partialorder %v6431, 63.5
    %v6434 = vsel %vm6432, 1, 0
    %v6435 = vsel %vm6433, 1, 0
    %vm6436 = vcmp.eq.s32.totalorder %v6434, 1
    %vm6437 = vcmp.eq.s32.totalorder %v6435, 1
    %v6438 = vsel %vm6436, 0.0, %v6387
    %v6439 = vsel %vm6437, 0.0, %v6388
    %v6440 = vmul.f32 %v6438, 1e+09
    %v6441 = vmul.f32 %v6439, 1e+09
    %v6442 = vsub.f32 %v2423, %v6440
    %v6443 = vsub.f32 %v2424, %v6441
    %v6444 = vadd.f32 %v5903, %v2427
    %v6445 = vadd.f32 %v5904, %v2428
    %v6446 = vlaneseq
    %v6447 = vshrl.u32 %v6446, 7
    %v6448 = vsub.s32 0, %v6447
    %v6449 = vrot.slane %v6423, %v6448
    %v6451 = vsel %vm2450, %v6444, 0
    %v6454 = vsel %vm2450, %v6445, 0
    %6456 = vmatprep.subr.mxu0 0.0
    %6457 = vmatpush1.msra.mxu0 0.0
    %6458 = vmatprep.subr.mxu0 0.0
    %6459 = vmatpush1.msra.mxu0 0.0
    %6460 = vmatprep.subr.mxu0 0.0
    %6461 = vmatpush1.msra.mxu0 0.0
    %6462 = vmatprep.subr.mxu0 0.0
    %6463 = vmatpush1.msra.mxu0 0.0
    %6464 = vmatprep.subr.mxu0 0.0
    %6465 = vmatpush1.msra.mxu0 0.0
    %6466 = vmatprep.subr.mxu0 0.0
    %6467 = vmatpush1.msra.mxu0 0.0
    %6468 = vmatprep.subr.mxu0 0.0
    %6469 = vmatpush1.msra.mxu0 0.0
    %6470 = vmatprep.subr.mxu0 0.0
    %6471 = vmatpush1.msra.mxu0 0.0
    %6472 = vmatprep.subr.mxu0 0.0
    %6473 = vmatpush1.msra.mxu0 0.0
    %6474 = vmatprep.subr.mxu0 0.0
    %6475 = vmatpush1.msra.mxu0 0.0
    %6476 = vmatprep.subr.mxu0 0.0
    %6477 = vmatpush1.msra.mxu0 0.0
    %6478 = vmatprep.subr.mxu0 0.0
    %6479 = vmatpush1.msra.mxu0 0.0
    %6480 = vmatprep.subr.mxu0 0.0
    %6481 = vmatpush1.msra.mxu0 %v6409
    %6482 = vmatprep.subr.mxu0 0.0
    %6483 = vmatpush1.msra.mxu0 %v6408
    %6484 = vmatprep.subr.mxu0 0.0
    %6485 = vmatpush1.msra.mxu0 %v6407
    %6486 = vmatprep.subr.mxu0 0.0
    %6487 = vmatpush1.msra.mxu0 %v6406
    %6488 = vmatprep.subr.mxu0 0.0
    %6489 = vmatpush2.msra.mxu0 0.0
    %6490 = vmatprep.subr.mxu0 0.0
    %6491 = vmatpush2.msra.mxu0 0.0
    %6492 = vmatprep.subr.mxu0 0.0
    %6493 = vmatpush2.msra.mxu0 0.0
    %6494 = vmatprep.subr.mxu0 0.0
    %6495 = vmatpush2.msra.mxu0 0.0
    %6496 = vmatprep.subr.mxu0 0.0
    %6497 = vmatpush2.msra.mxu0 0.0
    %6498 = vmatprep.subr.mxu0 0.0
    %6499 = vmatpush2.msra.mxu0 0.0
    %6500 = vmatprep.subr.mxu0 0.0
    %6501 = vmatpush2.msra.mxu0 0.0
    %6502 = vmatprep.subr.mxu0 0.0
    %6503 = vmatpush2.msra.mxu0 0.0
    %6504 = vmatprep.subr.mxu0 0.0
    %6505 = vmatpush2.msra.mxu0 0.0
    %6506 = vmatprep.subr.mxu0 0.0
    %6507 = vmatpush2.msra.mxu0 0.0
    %6508 = vmatprep.subr.mxu0 0.0
    %6509 = vmatpush2.msra.mxu0 0.0
    %6510 = vmatprep.subr.mxu0 0.0
    %6511 = vmatpush2.msra.mxu0 0.0
    %6512 = vmatprep.subr.mxu0 0.0
    %6513 = vmatpush2.msra.mxu0 0.0
    %6514 = vmatprep.subr.mxu0 0.0
    %6515 = vmatpush2.msra.mxu0 0.0
    %6516 = vmatprep.subr.mxu0 0.0
    %6517 = vmatpush2.msra.mxu0 0.0
    %6518 = vmatprep.subr.mxu0 0.0
    %6519 = vmatpush2.msra.mxu0 0.0
    %6520 = vmatprep.mubr.f32.mxu0 0.0
    %6521 = vmatmul.mubr.f32.gmra.mxu0 %v6451
    %v6522 = vpop.f32.mrf.mxu0
    %v6523 = vadd.f32 %v6449, %v6522
    %v6524 = vpop.f32.mrf.mxu0
    %6525 = vmatprep.mubr.f32.mxu0 0.0
    %6526 = vmatmul.mubr.f32.gmra.mxu0 %v6454
    %v6527 = vpop.f32.mrf.mxu0
    %v6528 = vadd.f32 %v6449, %v6527
    %v6529 = vpop.f32.mrf.mxu0
    %6530 = vdwg.mxu0
    %v6531 = vlaneseq
    %v6532 = vshrl.u32 %v6531, 7
    %v6533 = vsub.s32 1, %v6532
    %v6534 = vrot.slane %v6423, %v6533
    %6535 = vmatprep.subr.mxu0 0.0
    %6536 = vmatpush1.msra.mxu0 0.0
    %6537 = vmatprep.subr.mxu0 0.0
    %6538 = vmatpush1.msra.mxu0 0.0
    %6539 = vmatprep.subr.mxu0 0.0
    %6540 = vmatpush1.msra.mxu0 0.0
    %6541 = vmatprep.subr.mxu0 0.0
    %6542 = vmatpush1.msra.mxu0 0.0
    %6543 = vmatprep.subr.mxu0 0.0
    %6544 = vmatpush1.msra.mxu0 0.0
    %6545 = vmatprep.subr.mxu0 0.0
    %6546 = vmatpush1.msra.mxu0 0.0
    %6547 = vmatprep.subr.mxu0 0.0
    %6548 = vmatpush1.msra.mxu0 0.0
    %6549 = vmatprep.subr.mxu0 0.0
    %6550 = vmatpush1.msra.mxu0 0.0
    %6551 = vmatprep.subr.mxu0 0.0
    %6552 = vmatpush1.msra.mxu0 0.0
    %6553 = vmatprep.subr.mxu0 0.0
    %6554 = vmatpush1.msra.mxu0 0.0
    %6555 = vmatprep.subr.mxu0 0.0
    %6556 = vmatpush1.msra.mxu0 0.0
    %6557 = vmatprep.subr.mxu0 0.0
    %6558 = vmatpush1.msra.mxu0 0.0
    %6559 = vmatprep.subr.mxu0 0.0
    %6560 = vmatpush1.msra.mxu0 %v6413
    %6561 = vmatprep.subr.mxu0 0.0
    %6562 = vmatpush1.msra.mxu0 %v6412
    %6563 = vmatprep.subr.mxu0 0.0
    %6564 = vmatpush1.msra.mxu0 %v6411
    %6565 = vmatprep.subr.mxu0 0.0
    %6566 = vmatpush1.msra.mxu0 %v6410
    %6567 = vmatprep.subr.mxu0 0.0
    %6568 = vmatpush2.msra.mxu0 0.0
    %6569 = vmatprep.subr.mxu0 0.0
    %6570 = vmatpush2.msra.mxu0 0.0
    %6571 = vmatprep.subr.mxu0 0.0
    %6572 = vmatpush2.msra.mxu0 0.0
    %6573 = vmatprep.subr.mxu0 0.0
    %6574 = vmatpush2.msra.mxu0 0.0
    %6575 = vmatprep.subr.mxu0 0.0
    %6576 = vmatpush2.msra.mxu0 0.0
    %6577 = vmatprep.subr.mxu0 0.0
    %6578 = vmatpush2.msra.mxu0 0.0
    %6579 = vmatprep.subr.mxu0 0.0
    %6580 = vmatpush2.msra.mxu0 0.0
    %6581 = vmatprep.subr.mxu0 0.0
    %6582 = vmatpush2.msra.mxu0 0.0
    %6583 = vmatprep.subr.mxu0 0.0
    %6584 = vmatpush2.msra.mxu0 0.0
    %6585 = vmatprep.subr.mxu0 0.0
    %6586 = vmatpush2.msra.mxu0 0.0
    %6587 = vmatprep.subr.mxu0 0.0
    %6588 = vmatpush2.msra.mxu0 0.0
    %6589 = vmatprep.subr.mxu0 0.0
    %6590 = vmatpush2.msra.mxu0 0.0
    %6591 = vmatprep.subr.mxu0 0.0
    %6592 = vmatpush2.msra.mxu0 0.0
    %6593 = vmatprep.subr.mxu0 0.0
    %6594 = vmatpush2.msra.mxu0 0.0
    %6595 = vmatprep.subr.mxu0 0.0
    %6596 = vmatpush2.msra.mxu0 0.0
    %6597 = vmatprep.subr.mxu0 0.0
    %6598 = vmatpush2.msra.mxu0 0.0
    %6599 = vmatprep.mubr.f32.mxu0 0.0
    %6600 = vmatmul.mubr.f32.gmra.mxu0 %v3142
    %v6601 = vpop.f32.mrf.mxu0
    %v6602 = vadd.f32 %v6534, %v6601
    %v6603 = vpop.f32.mrf.mxu0
    %6604 = vmatprep.mubr.f32.mxu0 0.0
    %6605 = vmatmul.mubr.f32.gmra.mxu0 %v3145
    %v6606 = vpop.f32.mrf.mxu0
    %v6607 = vadd.f32 %v6534, %v6606
    %v6608 = vpop.f32.mrf.mxu0
    %6609 = vmatprep.mubr.f32.mxu0 0.0
    %6610 = vmatmul.mubr.f32.gmra.mxu0 %v3148
    %v6611 = vpop.f32.mrf.mxu0
    %v6612 = vadd.f32 %v6534, %v6611
    %v6613 = vpop.f32.mrf.mxu0
    %6614 = vmatprep.mubr.f32.mxu0 0.0
    %6615 = vmatmul.mubr.f32.gmra.mxu0 %v3151
    %v6616 = vpop.f32.mrf.mxu0
    %v6617 = vadd.f32 %v6534, %v6616
    %v6618 = vpop.f32.mrf.mxu0
    %6619 = vmatprep.mubr.f32.mxu0 0.0
    %6620 = vmatmul.mubr.f32.gmra.mxu0 %v3154
    %v6621 = vpop.f32.mrf.mxu0
    %v6622 = vadd.f32 %v6534, %v6621
    %v6623 = vpop.f32.mrf.mxu0
    %6624 = vmatprep.mubr.f32.mxu0 0.0
    %6625 = vmatmul.mubr.f32.gmra.mxu0 %v3157
    %v6626 = vpop.f32.mrf.mxu0
    %v6627 = vadd.f32 %v6534, %v6626
    %v6628 = vpop.f32.mrf.mxu0
    %6629 = vmatprep.mubr.f32.mxu0 0.0
    %6630 = vmatmul.mubr.f32.gmra.mxu0 %v3160
    %v6631 = vpop.f32.mrf.mxu0
    %v6632 = vadd.f32 %v6534, %v6631
    %v6633 = vpop.f32.mrf.mxu0
    %6634 = vmatprep.mubr.f32.mxu0 0.0
    %6635 = vmatmul.mubr.f32.gmra.mxu0 %v3163
    %v6636 = vpop.f32.mrf.mxu0
    %v6637 = vadd.f32 %v6534, %v6636
    %v6638 = vpop.f32.mrf.mxu0
    %6639 = vdwg.mxu0
    %v6640 = vlaneseq
    %v6641 = vshrl.u32 %v6640, 7
    %v6642 = vsub.s32 2, %v6641
    %v6643 = vrot.slane %v6423, %v6642
    %6644 = vmatprep.subr.mxu0 0.0
    %6645 = vmatpush1.msra.mxu0 0.0
    %6646 = vmatprep.subr.mxu0 0.0
    %6647 = vmatpush1.msra.mxu0 0.0
    %6648 = vmatprep.subr.mxu0 0.0
    %6649 = vmatpush1.msra.mxu0 0.0
    %6650 = vmatprep.subr.mxu0 0.0
    %6651 = vmatpush1.msra.mxu0 0.0
    %6652 = vmatprep.subr.mxu0 0.0
    %6653 = vmatpush1.msra.mxu0 0.0
    %6654 = vmatprep.subr.mxu0 0.0
    %6655 = vmatpush1.msra.mxu0 0.0
    %6656 = vmatprep.subr.mxu0 0.0
    %6657 = vmatpush1.msra.mxu0 0.0
    %6658 = vmatprep.subr.mxu0 0.0
    %6659 = vmatpush1.msra.mxu0 0.0
    %6660 = vmatprep.subr.mxu0 0.0
    %6661 = vmatpush1.msra.mxu0 0.0
    %6662 = vmatprep.subr.mxu0 0.0
    %6663 = vmatpush1.msra.mxu0 0.0
    %6664 = vmatprep.subr.mxu0 0.0
    %6665 = vmatpush1.msra.mxu0 0.0
    %6666 = vmatprep.subr.mxu0 0.0
    %6667 = vmatpush1.msra.mxu0 0.0
    %6668 = vmatprep.subr.mxu0 0.0
    %6669 = vmatpush1.msra.mxu0 %v6417
    %6670 = vmatprep.subr.mxu0 0.0
    %6671 = vmatpush1.msra.mxu0 %v6416
    %6672 = vmatprep.subr.mxu0 0.0
    %6673 = vmatpush1.msra.mxu0 %v6415
    %6674 = vmatprep.subr.mxu0 0.0
    %6675 = vmatpush1.msra.mxu0 %v6414
    %6676 = vmatprep.subr.mxu0 0.0
    %6677 = vmatpush2.msra.mxu0 0.0
    %6678 = vmatprep.subr.mxu0 0.0
    %6679 = vmatpush2.msra.mxu0 0.0
    %6680 = vmatprep.subr.mxu0 0.0
    %6681 = vmatpush2.msra.mxu0 0.0
    %6682 = vmatprep.subr.mxu0 0.0
    %6683 = vmatpush2.msra.mxu0 0.0
    %6684 = vmatprep.subr.mxu0 0.0
    %6685 = vmatpush2.msra.mxu0 0.0
    %6686 = vmatprep.subr.mxu0 0.0
    %6687 = vmatpush2.msra.mxu0 0.0
    %6688 = vmatprep.subr.mxu0 0.0
    %6689 = vmatpush2.msra.mxu0 0.0
    %6690 = vmatprep.subr.mxu0 0.0
    %6691 = vmatpush2.msra.mxu0 0.0
    %6692 = vmatprep.subr.mxu0 0.0
    %6693 = vmatpush2.msra.mxu0 0.0
    %6694 = vmatprep.subr.mxu0 0.0
    %6695 = vmatpush2.msra.mxu0 0.0
    %6696 = vmatprep.subr.mxu0 0.0
    %6697 = vmatpush2.msra.mxu0 0.0
    %6698 = vmatprep.subr.mxu0 0.0
    %6699 = vmatpush2.msra.mxu0 0.0
    %6700 = vmatprep.subr.mxu0 0.0
    %6701 = vmatpush2.msra.mxu0 0.0
    %6702 = vmatprep.subr.mxu0 0.0
    %6703 = vmatpush2.msra.mxu0 0.0
    %6704 = vmatprep.subr.mxu0 0.0
    %6705 = vmatpush2.msra.mxu0 0.0
    %6706 = vmatprep.subr.mxu0 0.0
    %6707 = vmatpush2.msra.mxu0 0.0
    %6708 = vmatprep.mubr.f32.mxu0 0.0
    %6709 = vmatmul.mubr.f32.gmra.mxu0 %v3275
    %v6710 = vpop.f32.mrf.mxu0
    %v6711 = vadd.f32 %v6643, %v6710
    %v6712 = vpop.f32.mrf.mxu0
    %6713 = vmatprep.mubr.f32.mxu0 0.0
    %6714 = vmatmul.mubr.f32.gmra.mxu0 %v3278
    %v6715 = vpop.f32.mrf.mxu0
    %v6716 = vadd.f32 %v6643, %v6715
    %v6717 = vpop.f32.mrf.mxu0
    %6718 = vmatprep.mubr.f32.mxu0 0.0
    %6719 = vmatmul.mubr.f32.gmra.mxu0 %v3281
    %v6720 = vpop.f32.mrf.mxu0
    %v6721 = vadd.f32 %v6643, %v6720
    %v6722 = vpop.f32.mrf.mxu0
    %6723 = vmatprep.mubr.f32.mxu0 0.0
    %6724 = vmatmul.mubr.f32.gmra.mxu0 %v3284
    %v6725 = vpop.f32.mrf.mxu0
    %v6726 = vadd.f32 %v6643, %v6725
    %v6727 = vpop.f32.mrf.mxu0
    %6728 = vmatprep.mubr.f32.mxu0 0.0
    %6729 = vmatmul.mubr.f32.gmra.mxu0 %v3287
    %v6730 = vpop.f32.mrf.mxu0
    %v6731 = vadd.f32 %v6643, %v6730
    %v6732 = vpop.f32.mrf.mxu0
    %6733 = vmatprep.mubr.f32.mxu0 0.0
    %6734 = vmatmul.mubr.f32.gmra.mxu0 %v3290
    %v6735 = vpop.f32.mrf.mxu0
    %v6736 = vadd.f32 %v6643, %v6735
    %v6737 = vpop.f32.mrf.mxu0
    %6738 = vmatprep.mubr.f32.mxu0 0.0
    %6739 = vmatmul.mubr.f32.gmra.mxu0 %v3293
    %v6740 = vpop.f32.mrf.mxu0
    %v6741 = vadd.f32 %v6643, %v6740
    %v6742 = vpop.f32.mrf.mxu0
    %6743 = vmatprep.mubr.f32.mxu0 0.0
    %6744 = vmatmul.mubr.f32.gmra.mxu0 %v3296
    %v6745 = vpop.f32.mrf.mxu0
    %v6746 = vadd.f32 %v6643, %v6745
    %v6747 = vpop.f32.mrf.mxu0
    %6748 = vdwg.mxu0
    %v6750 = vsel %vm3403, %v6523, 0
    %v6753 = vsel %vm3403, %v6528, 0
    %v6756 = vsel %vm3403, %v6602, 0
    %v6759 = vsel %vm3403, %v6607, 0
    %v6762 = vsel %vm3403, %v6612, 0
    %v6765 = vsel %vm3403, %v6617, 0
    %v6768 = vsel %vm3403, %v6622, 0
    %v6771 = vsel %vm3403, %v6627, 0
    %v6774 = vsel %vm3403, %v6632, 0
    %v6777 = vsel %vm3403, %v6637, 0
    %6779 = vmatprep.subr.mxu0 0.0
    %6780 = vmatpush1.xpose.msra.mxu0 0.0
    %6781 = vmatprep.subr.mxu0 0.0
    %6782 = vmatpush1.xpose.msra.mxu0 0.0
    %6783 = vmatprep.subr.mxu0 0.0
    %6784 = vmatpush1.xpose.msra.mxu0 0.0
    %6785 = vmatprep.subr.mxu0 0.0
    %6786 = vmatpush1.xpose.msra.mxu0 0.0
    %6787 = vmatprep.subr.mxu0 0.0
    %6788 = vmatpush1.xpose.msra.mxu0 0.0
    %6789 = vmatprep.subr.mxu0 0.0
    %6790 = vmatpush1.xpose.msra.mxu0 0.0
    %6791 = vmatprep.subr.mxu0 0.0
    %6792 = vmatpush1.xpose.msra.mxu0 0.0
    %6793 = vmatprep.subr.mxu0 0.0
    %6794 = vmatpush1.xpose.msra.mxu0 0.0
    %6795 = vmatprep.subr.mxu0 0.0
    %6796 = vmatpush1.xpose.msra.mxu0 %v6777
    %6797 = vmatprep.subr.mxu0 0.0
    %6798 = vmatpush1.xpose.msra.mxu0 %v6774
    %6799 = vmatprep.subr.mxu0 0.0
    %6800 = vmatpush1.xpose.msra.mxu0 %v6771
    %6801 = vmatprep.subr.mxu0 0.0
    %6802 = vmatpush1.xpose.msra.mxu0 %v6768
    %6803 = vmatprep.subr.mxu0 0.0
    %6804 = vmatpush1.xpose.msra.mxu0 %v6765
    %6805 = vmatprep.subr.mxu0 0.0
    %6806 = vmatpush1.xpose.msra.mxu0 %v6762
    %6807 = vmatprep.subr.mxu0 0.0
    %6808 = vmatpush1.xpose.msra.mxu0 %v6759
    %6809 = vmatprep.subr.mxu0 0.0
    %6810 = vmatpush1.xpose.msra.mxu0 %v6756
    %6811 = vmatprep.subr.mxu0 0.0
    %6812 = vmatpush2.xpose.msra.mxu0 0.0
    %6813 = vmatprep.subr.mxu0 0.0
    %6814 = vmatpush2.xpose.msra.mxu0 0.0
    %6815 = vmatprep.subr.mxu0 0.0
    %6816 = vmatpush2.xpose.msra.mxu0 0.0
    %6817 = vmatprep.subr.mxu0 0.0
    %6818 = vmatpush2.xpose.msra.mxu0 0.0
    %6819 = vmatprep.subr.mxu0 0.0
    %6820 = vmatpush2.xpose.msra.mxu0 0.0
    %6821 = vmatprep.subr.mxu0 0.0
    %6822 = vmatpush2.xpose.msra.mxu0 0.0
    %6823 = vmatprep.subr.mxu0 0.0
    %6824 = vmatpush2.xpose.msra.mxu0 0.0
    %6825 = vmatprep.subr.mxu0 0.0
    %6826 = vmatpush2.xpose.msra.mxu0 0.0
    %6827 = vmatprep.subr.mxu0 0.0
    %6828 = vmatpush2.xpose.msra.mxu0 0.0
    %6829 = vmatprep.subr.mxu0 0.0
    %6830 = vmatpush2.xpose.msra.mxu0 0.0
    %6831 = vmatprep.subr.mxu0 0.0
    %6832 = vmatpush2.xpose.msra.mxu0 0.0
    %6833 = vmatprep.subr.mxu0 0.0
    %6834 = vmatpush2.xpose.msra.mxu0 0.0
    %6835 = vmatprep.subr.mxu0 0.0
    %6836 = vmatpush2.xpose.msra.mxu0 0.0
    %6837 = vmatprep.subr.mxu0 0.0
    %6838 = vmatpush2.xpose.msra.mxu0 0.0
    %6839 = vmatprep.subr.mxu0 0.0
    %6840 = vmatpush2.xpose.msra.mxu0 0.0
    %6841 = vmatprep.subr.mxu0 0.0
    %6842 = vmatpush2.xpose.msra.mxu0 0.0
    %6843 = vmatprep.mubr.f32.mxu0 0.0
    %6844 = vmatmul.mubr.f32.gmra.mxu0 %v6750
    %v6845 = vpop.f32.mrf.mxu0
    %v6846 = vadd.f32 0.0, %v6845
    %v6847 = vpop.f32.mrf.mxu0
    %6848 = vmatprep.mubr.f32.mxu0 0.0
    %6849 = vmatmul.mubr.f32.gmra.mxu0 %v6753
    %v6850 = vpop.f32.mrf.mxu0
    %v6851 = vadd.f32 0.0, %v6850
    %v6852 = vpop.f32.mrf.mxu0
    %6853 = vdwg.mxu0
    %v6854 = vmul.f32 %v6846, 0.35355338
    %v6855 = vmul.f32 %v6851, 0.35355338
    %v6856 = vadd.f32 %v6854, %v6442
    %v6857 = vadd.f32 %v6855, %v6443
    %v6858 = vsel %vm2948, %v6856, -inf
    %6859 = vmax.xlane.f32.xlu0 %v6858
    %v6860 = vpop.xlane.xlu0 %6859
    %v6861 = vsel %vm2952, %v6857, -inf
    %6862 = vmax.xlane.f32.xlu0 %v6861
    %v6863 = vpop.xlane.xlu0 %6862
    %v6864 = vsub.f32 %v6856, %v6860
    %v6865 = vsub.f32 %v6857, %v6863
    %v6866 = vmul.f32 %v6864, 1.442695
    %v6867 = vpow.pop %v6866
    %v6868 = vmul.f32 %v6865, 1.442695
    %v6869 = vpow.pop %v6868
    %v6870 = vsel %vm2948, %v6867, 0.0
    %6871 = vadd.xlane.f32.xlu0 %v6870
    %v6872 = vpop.xlane.xlu0 %6871
    %v6873 = vsel %vm2952, %v6869, 0.0
    %6874 = vadd.xlane.f32.xlu0 %v6873
    %v6875 = vpop.xlane.xlu0 %6874
    %v6876 = vrcp.pop %v6872
    %v6877 = vrcp.pop %v6875
    %v6878 = vmul.f32 %v6867, %v6876
    %v6879 = vmul.f32 %v6869, %v6877
    %v6881 = vsel %vm2948, %v6878, 0
    %v6884 = vsel %vm2948, %v6879, 0
    %6886 = vmatprep.subr.mxu0 0.0
    %6887 = vmatpush1.msra.mxu0 0.0
    %6888 = vmatprep.subr.mxu0 0.0
    %6889 = vmatpush1.msra.mxu0 0.0
    %6890 = vmatprep.subr.mxu0 0.0
    %6891 = vmatpush1.msra.mxu0 0.0
    %6892 = vmatprep.subr.mxu0 0.0
    %6893 = vmatpush1.msra.mxu0 0.0
    %6894 = vmatprep.subr.mxu0 0.0
    %6895 = vmatpush1.msra.mxu0 0.0
    %6896 = vmatprep.subr.mxu0 0.0
    %6897 = vmatpush1.msra.mxu0 0.0
    %6898 = vmatprep.subr.mxu0 0.0
    %6899 = vmatpush1.msra.mxu0 0.0
    %6900 = vmatprep.subr.mxu0 0.0
    %6901 = vmatpush1.msra.mxu0 0.0
    %6902 = vmatprep.subr.mxu0 0.0
    %6903 = vmatpush1.msra.mxu0 %v6746
    %6904 = vmatprep.subr.mxu0 0.0
    %6905 = vmatpush1.msra.mxu0 %v6741
    %6906 = vmatprep.subr.mxu0 0.0
    %6907 = vmatpush1.msra.mxu0 %v6736
    %6908 = vmatprep.subr.mxu0 0.0
    %6909 = vmatpush1.msra.mxu0 %v6731
    %6910 = vmatprep.subr.mxu0 0.0
    %6911 = vmatpush1.msra.mxu0 %v6726
    %6912 = vmatprep.subr.mxu0 0.0
    %6913 = vmatpush1.msra.mxu0 %v6721
    %6914 = vmatprep.subr.mxu0 0.0
    %6915 = vmatpush1.msra.mxu0 %v6716
    %6916 = vmatprep.subr.mxu0 0.0
    %6917 = vmatpush1.msra.mxu0 %v6711
    %6918 = vmatprep.subr.mxu0 0.0
    %6919 = vmatpush2.msra.mxu0 0.0
    %6920 = vmatprep.subr.mxu0 0.0
    %6921 = vmatpush2.msra.mxu0 0.0
    %6922 = vmatprep.subr.mxu0 0.0
    %6923 = vmatpush2.msra.mxu0 0.0
    %6924 = vmatprep.subr.mxu0 0.0
    %6925 = vmatpush2.msra.mxu0 0.0
    %6926 = vmatprep.subr.mxu0 0.0
    %6927 = vmatpush2.msra.mxu0 0.0
    %6928 = vmatprep.subr.mxu0 0.0
    %6929 = vmatpush2.msra.mxu0 0.0
    %6930 = vmatprep.subr.mxu0 0.0
    %6931 = vmatpush2.msra.mxu0 0.0
    %6932 = vmatprep.subr.mxu0 0.0
    %6933 = vmatpush2.msra.mxu0 0.0
    %6934 = vmatprep.subr.mxu0 0.0
    %6935 = vmatpush2.msra.mxu0 0.0
    %6936 = vmatprep.subr.mxu0 0.0
    %6937 = vmatpush2.msra.mxu0 0.0
    %6938 = vmatprep.subr.mxu0 0.0
    %6939 = vmatpush2.msra.mxu0 0.0
    %6940 = vmatprep.subr.mxu0 0.0
    %6941 = vmatpush2.msra.mxu0 0.0
    %6942 = vmatprep.subr.mxu0 0.0
    %6943 = vmatpush2.msra.mxu0 0.0
    %6944 = vmatprep.subr.mxu0 0.0
    %6945 = vmatpush2.msra.mxu0 0.0
    %6946 = vmatprep.subr.mxu0 0.0
    %6947 = vmatpush2.msra.mxu0 0.0
    %6948 = vmatprep.subr.mxu0 0.0
    %6949 = vmatpush2.msra.mxu0 0.0
    %6950 = vmatprep.mubr.f32.mxu0 0.0
    %6951 = vmatmul.mubr.f32.gmra.mxu0 %v6881
    %v6952 = vpop.f32.mrf.mxu0
    %v6953 = vadd.f32 0.0, %v6952
    %v6954 = vpop.f32.mrf.mxu0
    %6955 = vmatprep.mubr.f32.mxu0 0.0
    %6956 = vmatmul.mubr.f32.gmra.mxu0 %v6884
    %v6957 = vpop.f32.mrf.mxu0
    %v6958 = vadd.f32 0.0, %v6957
    %v6959 = vpop.f32.mrf.mxu0
    %6960 = vdwg.mxu0
    %6961 = vrot.lane.b32.xlu0 %v6523, 120
    %v6962 = vpop.permute.xlu0 %6961
    %6963 = vrot.lane.b32.xlu0 %v6528, 120
    %v6964 = vpop.permute.xlu0 %6963
    %6965 = vrot.lane.b32.xlu0 %v6602, 120
    %v6966 = vpop.permute.xlu0 %6965
    %6967 = vrot.lane.b32.xlu0 %v6607, 120
    %v6968 = vpop.permute.xlu0 %6967
    %6969 = vrot.lane.b32.xlu0 %v6612, 120
    %v6970 = vpop.permute.xlu0 %6969
    %6971 = vrot.lane.b32.xlu0 %v6617, 120
    %v6972 = vpop.permute.xlu0 %6971
    %6973 = vrot.lane.b32.xlu0 %v6622, 120
    %v6974 = vpop.permute.xlu0 %6973
    %6975 = vrot.lane.b32.xlu0 %v6627, 120
    %v6976 = vpop.permute.xlu0 %6975
    %6977 = vrot.lane.b32.xlu0 %v6632, 120
    %v6978 = vpop.permute.xlu0 %6977
    %6979 = vrot.lane.b32.xlu0 %v6637, 120
    %v6980 = vpop.permute.xlu0 %6979
    %v6981 = vsel %vm3403, %v6962, 0
    %v6983 = vsel %vm3403, %v6964, 0
    %v6985 = vsel %vm3403, %v6966, 0
    %v6987 = vsel %vm3403, %v6968, 0
    %v6989 = vsel %vm3403, %v6970, 0
    %v6991 = vsel %vm3403, %v6972, 0
    %v6993 = vsel %vm3403, %v6974, 0
    %v6995 = vsel %vm3403, %v6976, 0
    %v6997 = vsel %vm3403, %v6978, 0
    %v6999 = vsel %vm3403, %v6980, 0
    %7001 = vmatprep.subr.mxu0 0.0
    %7002 = vmatpush1.xpose.msra.mxu0 0.0
    %7003 = vmatprep.subr.mxu0 0.0
    %7004 = vmatpush1.xpose.msra.mxu0 0.0
    %7005 = vmatprep.subr.mxu0 0.0
    %7006 = vmatpush1.xpose.msra.mxu0 0.0
    %7007 = vmatprep.subr.mxu0 0.0
    %7008 = vmatpush1.xpose.msra.mxu0 0.0
    %7009 = vmatprep.subr.mxu0 0.0
    %7010 = vmatpush1.xpose.msra.mxu0 0.0
    %7011 = vmatprep.subr.mxu0 0.0
    %7012 = vmatpush1.xpose.msra.mxu0 0.0
    %7013 = vmatprep.subr.mxu0 0.0
    %7014 = vmatpush1.xpose.msra.mxu0 0.0
    %7015 = vmatprep.subr.mxu0 0.0
    %7016 = vmatpush1.xpose.msra.mxu0 0.0
    %7017 = vmatprep.subr.mxu0 0.0
    %7018 = vmatpush1.xpose.msra.mxu0 %v6999
    %7019 = vmatprep.subr.mxu0 0.0
    %7020 = vmatpush1.xpose.msra.mxu0 %v6997
    %7021 = vmatprep.subr.mxu0 0.0
    %7022 = vmatpush1.xpose.msra.mxu0 %v6995
    %7023 = vmatprep.subr.mxu0 0.0
    %7024 = vmatpush1.xpose.msra.mxu0 %v6993
    %7025 = vmatprep.subr.mxu0 0.0
    %7026 = vmatpush1.xpose.msra.mxu0 %v6991
    %7027 = vmatprep.subr.mxu0 0.0
    %7028 = vmatpush1.xpose.msra.mxu0 %v6989
    %7029 = vmatprep.subr.mxu0 0.0
    %7030 = vmatpush1.xpose.msra.mxu0 %v6987
    %7031 = vmatprep.subr.mxu0 0.0
    %7032 = vmatpush1.xpose.msra.mxu0 %v6985
    %7033 = vmatprep.subr.mxu0 0.0
    %7034 = vmatpush2.xpose.msra.mxu0 0.0
    %7035 = vmatprep.subr.mxu0 0.0
    %7036 = vmatpush2.xpose.msra.mxu0 0.0
    %7037 = vmatprep.subr.mxu0 0.0
    %7038 = vmatpush2.xpose.msra.mxu0 0.0
    %7039 = vmatprep.subr.mxu0 0.0
    %7040 = vmatpush2.xpose.msra.mxu0 0.0
    %7041 = vmatprep.subr.mxu0 0.0
    %7042 = vmatpush2.xpose.msra.mxu0 0.0
    %7043 = vmatprep.subr.mxu0 0.0
    %7044 = vmatpush2.xpose.msra.mxu0 0.0
    %7045 = vmatprep.subr.mxu0 0.0
    %7046 = vmatpush2.xpose.msra.mxu0 0.0
    %7047 = vmatprep.subr.mxu0 0.0
    %7048 = vmatpush2.xpose.msra.mxu0 0.0
    %7049 = vmatprep.subr.mxu0 0.0
    %7050 = vmatpush2.xpose.msra.mxu0 0.0
    %7051 = vmatprep.subr.mxu0 0.0
    %7052 = vmatpush2.xpose.msra.mxu0 0.0
    %7053 = vmatprep.subr.mxu0 0.0
    %7054 = vmatpush2.xpose.msra.mxu0 0.0
    %7055 = vmatprep.subr.mxu0 0.0
    %7056 = vmatpush2.xpose.msra.mxu0 0.0
    %7057 = vmatprep.subr.mxu0 0.0
    %7058 = vmatpush2.xpose.msra.mxu0 0.0
    %7059 = vmatprep.subr.mxu0 0.0
    %7060 = vmatpush2.xpose.msra.mxu0 0.0
    %7061 = vmatprep.subr.mxu0 0.0
    %7062 = vmatpush2.xpose.msra.mxu0 0.0
    %7063 = vmatprep.subr.mxu0 0.0
    %7064 = vmatpush2.xpose.msra.mxu0 0.0
    %7065 = vmatprep.mubr.f32.mxu0 0.0
    %7066 = vmatmul.mubr.f32.gmra.mxu0 %v6981
    %v7067 = vpop.f32.mrf.mxu0
    %v7068 = vadd.f32 0.0, %v7067
    %v7069 = vpop.f32.mrf.mxu0
    %7070 = vmatprep.mubr.f32.mxu0 0.0
    %7071 = vmatmul.mubr.f32.gmra.mxu0 %v6983
    %v7072 = vpop.f32.mrf.mxu0
    %v7073 = vadd.f32 0.0, %v7072
    %v7074 = vpop.f32.mrf.mxu0
    %7075 = vdwg.mxu0
    %v7076 = vmul.f32 %v7068, 0.35355338
    %v7077 = vmul.f32 %v7073, 0.35355338
    %v7078 = vadd.f32 %v7076, %v6442
    %v7079 = vadd.f32 %v7077, %v6443
    %v7080 = vsel %vm2948, %v7078, -inf
    %7081 = vmax.xlane.f32.xlu0 %v7080
    %v7082 = vpop.xlane.xlu0 %7081
    %v7083 = vsel %vm2952, %v7079, -inf
    %7084 = vmax.xlane.f32.xlu0 %v7083
    %v7085 = vpop.xlane.xlu0 %7084
    %v7086 = vsub.f32 %v7078, %v7082
    %v7087 = vsub.f32 %v7079, %v7085
    %v7088 = vmul.f32 %v7086, 1.442695
    %v7089 = vpow.pop %v7088
    %v7090 = vmul.f32 %v7087, 1.442695
    %v7091 = vpow.pop %v7090
    %v7092 = vsel %vm2948, %v7089, 0.0
    %7093 = vadd.xlane.f32.xlu0 %v7092
    %v7094 = vpop.xlane.xlu0 %7093
    %v7095 = vsel %vm2952, %v7091, 0.0
    %7096 = vadd.xlane.f32.xlu0 %v7095
    %v7097 = vpop.xlane.xlu0 %7096
    %v7098 = vrcp.pop %v7094
    %v7099 = vrcp.pop %v7097
    %v7100 = vmul.f32 %v7089, %v7098
    %v7101 = vmul.f32 %v7091, %v7099
    %7110 = vrot.lane.b32.xlu0 %v6711, 120
    %v7111 = vpop.permute.xlu0 %7110
    %7112 = vrot.lane.b32.xlu0 %v6716, 120
    %v7113 = vpop.permute.xlu0 %7112
    %7114 = vrot.lane.b32.xlu0 %v6721, 120
    %v7115 = vpop.permute.xlu0 %7114
    %7116 = vrot.lane.b32.xlu0 %v6726, 120
    %v7117 = vpop.permute.xlu0 %7116
    %7118 = vrot.lane.b32.xlu0 %v6731, 120
    %v7119 = vpop.permute.xlu0 %7118
    %7120 = vrot.lane.b32.xlu0 %v6736, 120
    %v7121 = vpop.permute.xlu0 %7120
    %7122 = vrot.lane.b32.xlu0 %v6741, 120
    %v7123 = vpop.permute.xlu0 %7122
    %7124 = vrot.lane.b32.xlu0 %v6746, 120
    %v7125 = vpop.permute.xlu0 %7124
    %v7135 = vsel %vm2948, %v7100, 0
    %v7138 = vsel %vm2948, %v7101, 0
    %7140 = vmatprep.subr.mxu0 0.0
    %7141 = vmatpush1.msra.mxu0 0.0
    %7142 = vmatprep.subr.mxu0 0.0
    %7143 = vmatpush1.msra.mxu0 0.0
    %7144 = vmatprep.subr.mxu0 0.0
    %7145 = vmatpush1.msra.mxu0 0.0
    %7146 = vmatprep.subr.mxu0 0.0
    %7147 = vmatpush1.msra.mxu0 0.0
    %7148 = vmatprep.subr.mxu0 0.0
    %7149 = vmatpush1.msra.mxu0 0.0
    %7150 = vmatprep.subr.mxu0 0.0
    %7151 = vmatpush1.msra.mxu0 0.0
    %7152 = vmatprep.subr.mxu0 0.0
    %7153 = vmatpush1.msra.mxu0 0.0
    %7154 = vmatprep.subr.mxu0 0.0
    %7155 = vmatpush1.msra.mxu0 0.0
    %7156 = vmatprep.subr.mxu0 0.0
    %7157 = vmatpush1.msra.mxu0 %v7125
    %7158 = vmatprep.subr.mxu0 0.0
    %7159 = vmatpush1.msra.mxu0 %v7123
    %7160 = vmatprep.subr.mxu0 0.0
    %7161 = vmatpush1.msra.mxu0 %v7121
    %7162 = vmatprep.subr.mxu0 0.0
    %7163 = vmatpush1.msra.mxu0 %v7119
    %7164 = vmatprep.subr.mxu0 0.0
    %7165 = vmatpush1.msra.mxu0 %v7117
    %7166 = vmatprep.subr.mxu0 0.0
    %7167 = vmatpush1.msra.mxu0 %v7115
    %7168 = vmatprep.subr.mxu0 0.0
    %7169 = vmatpush1.msra.mxu0 %v7113
    %7170 = vmatprep.subr.mxu0 0.0
    %7171 = vmatpush1.msra.mxu0 %v7111
    %7172 = vmatprep.subr.mxu0 0.0
    %7173 = vmatpush2.msra.mxu0 0.0
    %7174 = vmatprep.subr.mxu0 0.0
    %7175 = vmatpush2.msra.mxu0 0.0
    %7176 = vmatprep.subr.mxu0 0.0
    %7177 = vmatpush2.msra.mxu0 0.0
    %7178 = vmatprep.subr.mxu0 0.0
    %7179 = vmatpush2.msra.mxu0 0.0
    %7180 = vmatprep.subr.mxu0 0.0
    %7181 = vmatpush2.msra.mxu0 0.0
    %7182 = vmatprep.subr.mxu0 0.0
    %7183 = vmatpush2.msra.mxu0 0.0
    %7184 = vmatprep.subr.mxu0 0.0
    %7185 = vmatpush2.msra.mxu0 0.0
    %7186 = vmatprep.subr.mxu0 0.0
    %7187 = vmatpush2.msra.mxu0 0.0
    %7188 = vmatprep.subr.mxu0 0.0
    %7189 = vmatpush2.msra.mxu0 0.0
    %7190 = vmatprep.subr.mxu0 0.0
    %7191 = vmatpush2.msra.mxu0 0.0
    %7192 = vmatprep.subr.mxu0 0.0
    %7193 = vmatpush2.msra.mxu0 0.0
    %7194 = vmatprep.subr.mxu0 0.0
    %7195 = vmatpush2.msra.mxu0 0.0
    %7196 = vmatprep.subr.mxu0 0.0
    %7197 = vmatpush2.msra.mxu0 0.0
    %7198 = vmatprep.subr.mxu0 0.0
    %7199 = vmatpush2.msra.mxu0 0.0
    %7200 = vmatprep.subr.mxu0 0.0
    %7201 = vmatpush2.msra.mxu0 0.0
    %7202 = vmatprep.subr.mxu0 0.0
    %7203 = vmatpush2.msra.mxu0 0.0
    %7204 = vmatprep.mubr.f32.mxu0 0.0
    %7205 = vmatmul.mubr.f32.gmra.mxu0 %v7135
    %v7206 = vpop.f32.mrf.mxu0
    %v7207 = vadd.f32 0.0, %v7206
    %v7208 = vpop.f32.mrf.mxu0
    %7209 = vmatprep.mubr.f32.mxu0 0.0
    %7210 = vmatmul.mubr.f32.gmra.mxu0 %v7138
    %v7211 = vpop.f32.mrf.mxu0
    %v7212 = vadd.f32 0.0, %v7211
    %v7213 = vpop.f32.mrf.mxu0
    %7214 = vdwg.mxu0
    %7215 = vrot.lane.b32.xlu0 %v6523, 112
    %v7216 = vpop.permute.xlu0 %7215
    %7217 = vrot.lane.b32.xlu0 %v6528, 112
    %v7218 = vpop.permute.xlu0 %7217
    %7219 = vrot.lane.b32.xlu0 %v6602, 112
    %v7220 = vpop.permute.xlu0 %7219
    %7221 = vrot.lane.b32.xlu0 %v6607, 112
    %v7222 = vpop.permute.xlu0 %7221
    %7223 = vrot.lane.b32.xlu0 %v6612, 112
    %v7224 = vpop.permute.xlu0 %7223
    %7225 = vrot.lane.b32.xlu0 %v6617, 112
    %v7226 = vpop.permute.xlu0 %7225
    %7227 = vrot.lane.b32.xlu0 %v6622, 112
    %v7228 = vpop.permute.xlu0 %7227
    %7229 = vrot.lane.b32.xlu0 %v6627, 112
    %v7230 = vpop.permute.xlu0 %7229
    %7231 = vrot.lane.b32.xlu0 %v6632, 112
    %v7232 = vpop.permute.xlu0 %7231
    %7233 = vrot.lane.b32.xlu0 %v6637, 112
    %v7234 = vpop.permute.xlu0 %7233
    %v7235 = vsel %vm3403, %v7216, 0
    %v7237 = vsel %vm3403, %v7218, 0
    %v7239 = vsel %vm3403, %v7220, 0
    %v7241 = vsel %vm3403, %v7222, 0
    %v7243 = vsel %vm3403, %v7224, 0
    %v7245 = vsel %vm3403, %v7226, 0
    %v7247 = vsel %vm3403, %v7228, 0
    %v7249 = vsel %vm3403, %v7230, 0
    %v7251 = vsel %vm3403, %v7232, 0
    %v7253 = vsel %vm3403, %v7234, 0
    %7255 = vmatprep.subr.mxu0 0.0
    %7256 = vmatpush1.xpose.msra.mxu0 0.0
    %7257 = vmatprep.subr.mxu0 0.0
    %7258 = vmatpush1.xpose.msra.mxu0 0.0
    %7259 = vmatprep.subr.mxu0 0.0
    %7260 = vmatpush1.xpose.msra.mxu0 0.0
    %7261 = vmatprep.subr.mxu0 0.0
    %7262 = vmatpush1.xpose.msra.mxu0 0.0
    %7263 = vmatprep.subr.mxu0 0.0
    %7264 = vmatpush1.xpose.msra.mxu0 0.0
    %7265 = vmatprep.subr.mxu0 0.0
    %7266 = vmatpush1.xpose.msra.mxu0 0.0
    %7267 = vmatprep.subr.mxu0 0.0
    %7268 = vmatpush1.xpose.msra.mxu0 0.0
    %7269 = vmatprep.subr.mxu0 0.0
    %7270 = vmatpush1.xpose.msra.mxu0 0.0
    %7271 = vmatprep.subr.mxu0 0.0
    %7272 = vmatpush1.xpose.msra.mxu0 %v7253
    %7273 = vmatprep.subr.mxu0 0.0
    %7274 = vmatpush1.xpose.msra.mxu0 %v7251
    %7275 = vmatprep.subr.mxu0 0.0
    %7276 = vmatpush1.xpose.msra.mxu0 %v7249
    %7277 = vmatprep.subr.mxu0 0.0
    %7278 = vmatpush1.xpose.msra.mxu0 %v7247
    %7279 = vmatprep.subr.mxu0 0.0
    %7280 = vmatpush1.xpose.msra.mxu0 %v7245
    %7281 = vmatprep.subr.mxu0 0.0
    %7282 = vmatpush1.xpose.msra.mxu0 %v7243
    %7283 = vmatprep.subr.mxu0 0.0
    %7284 = vmatpush1.xpose.msra.mxu0 %v7241
    %7285 = vmatprep.subr.mxu0 0.0
    %7286 = vmatpush1.xpose.msra.mxu0 %v7239
    %7287 = vmatprep.subr.mxu0 0.0
    %7288 = vmatpush2.xpose.msra.mxu0 0.0
    %7289 = vmatprep.subr.mxu0 0.0
    %7290 = vmatpush2.xpose.msra.mxu0 0.0
    %7291 = vmatprep.subr.mxu0 0.0
    %7292 = vmatpush2.xpose.msra.mxu0 0.0
    %7293 = vmatprep.subr.mxu0 0.0
    %7294 = vmatpush2.xpose.msra.mxu0 0.0
    %7295 = vmatprep.subr.mxu0 0.0
    %7296 = vmatpush2.xpose.msra.mxu0 0.0
    %7297 = vmatprep.subr.mxu0 0.0
    %7298 = vmatpush2.xpose.msra.mxu0 0.0
    %7299 = vmatprep.subr.mxu0 0.0
    %7300 = vmatpush2.xpose.msra.mxu0 0.0
    %7301 = vmatprep.subr.mxu0 0.0
    %7302 = vmatpush2.xpose.msra.mxu0 0.0
    %7303 = vmatprep.subr.mxu0 0.0
    %7304 = vmatpush2.xpose.msra.mxu0 0.0
    %7305 = vmatprep.subr.mxu0 0.0
    %7306 = vmatpush2.xpose.msra.mxu0 0.0
    %7307 = vmatprep.subr.mxu0 0.0
    %7308 = vmatpush2.xpose.msra.mxu0 0.0
    %7309 = vmatprep.subr.mxu0 0.0
    %7310 = vmatpush2.xpose.msra.mxu0 0.0
    %7311 = vmatprep.subr.mxu0 0.0
    %7312 = vmatpush2.xpose.msra.mxu0 0.0
    %7313 = vmatprep.subr.mxu0 0.0
    %7314 = vmatpush2.xpose.msra.mxu0 0.0
    %7315 = vmatprep.subr.mxu0 0.0
    %7316 = vmatpush2.xpose.msra.mxu0 0.0
    %7317 = vmatprep.subr.mxu0 0.0
    %7318 = vmatpush2.xpose.msra.mxu0 0.0
    %7319 = vmatprep.mubr.f32.mxu0 0.0
    %7320 = vmatmul.mubr.f32.gmra.mxu0 %v7235
    %v7321 = vpop.f32.mrf.mxu0
    %v7322 = vadd.f32 0.0, %v7321
    %v7323 = vpop.f32.mrf.mxu0
    %7324 = vmatprep.mubr.f32.mxu0 0.0
    %7325 = vmatmul.mubr.f32.gmra.mxu0 %v7237
    %v7326 = vpop.f32.mrf.mxu0
    %v7327 = vadd.f32 0.0, %v7326
    %v7328 = vpop.f32.mrf.mxu0
    %7329 = vdwg.mxu0
    %v7330 = vmul.f32 %v7322, 0.35355338
    %v7331 = vmul.f32 %v7327, 0.35355338
    %v7332 = vadd.f32 %v7330, %v6442
    %v7333 = vadd.f32 %v7331, %v6443
    %v7334 = vsel %vm2948, %v7332, -inf
    %7335 = vmax.xlane.f32.xlu0 %v7334
    %v7336 = vpop.xlane.xlu0 %7335
    %v7337 = vsel %vm2952, %v7333, -inf
    %7338 = vmax.xlane.f32.xlu0 %v7337
    %v7339 = vpop.xlane.xlu0 %7338
    %v7340 = vsub.f32 %v7332, %v7336
    %v7341 = vsub.f32 %v7333, %v7339
    %v7342 = vmul.f32 %v7340, 1.442695
    %v7343 = vpow.pop %v7342
    %v7344 = vmul.f32 %v7341, 1.442695
    %v7345 = vpow.pop %v7344
    %v7346 = vsel %vm2948, %v7343, 0.0
    %7347 = vadd.xlane.f32.xlu0 %v7346
    %v7348 = vpop.xlane.xlu0 %7347
    %v7349 = vsel %vm2952, %v7345, 0.0
    %7350 = vadd.xlane.f32.xlu0 %v7349
    %v7351 = vpop.xlane.xlu0 %7350
    %v7352 = vrcp.pop %v7348
    %v7353 = vrcp.pop %v7351
    %v7354 = vmul.f32 %v7343, %v7352
    %v7355 = vmul.f32 %v7345, %v7353
    %7356 = vrot.lane.b32.xlu0 %v6711, 112
    %v7357 = vpop.permute.xlu0 %7356
    %7358 = vrot.lane.b32.xlu0 %v6716, 112
    %v7359 = vpop.permute.xlu0 %7358
    %7360 = vrot.lane.b32.xlu0 %v6721, 112
    %v7361 = vpop.permute.xlu0 %7360
    %7362 = vrot.lane.b32.xlu0 %v6726, 112
    %v7363 = vpop.permute.xlu0 %7362
    %7364 = vrot.lane.b32.xlu0 %v6731, 112
    %v7365 = vpop.permute.xlu0 %7364
    %7366 = vrot.lane.b32.xlu0 %v6736, 112
    %v7367 = vpop.permute.xlu0 %7366
    %7368 = vrot.lane.b32.xlu0 %v6741, 112
    %v7369 = vpop.permute.xlu0 %7368
    %7370 = vrot.lane.b32.xlu0 %v6746, 112
    %v7371 = vpop.permute.xlu0 %7370
    %v7381 = vsel %vm2948, %v7354, 0
    %v7384 = vsel %vm2948, %v7355, 0
    %7386 = vmatprep.subr.mxu0 0.0
    %7387 = vmatpush1.msra.mxu0 0.0
    %7388 = vmatprep.subr.mxu0 0.0
    %7389 = vmatpush1.msra.mxu0 0.0
    %7390 = vmatprep.subr.mxu0 0.0
    %7391 = vmatpush1.msra.mxu0 0.0
    %7392 = vmatprep.subr.mxu0 0.0
    %7393 = vmatpush1.msra.mxu0 0.0
    %7394 = vmatprep.subr.mxu0 0.0
    %7395 = vmatpush1.msra.mxu0 0.0
    %7396 = vmatprep.subr.mxu0 0.0
    %7397 = vmatpush1.msra.mxu0 0.0
    %7398 = vmatprep.subr.mxu0 0.0
    %7399 = vmatpush1.msra.mxu0 0.0
    %7400 = vmatprep.subr.mxu0 0.0
    %7401 = vmatpush1.msra.mxu0 0.0
    %7402 = vmatprep.subr.mxu0 0.0
    %7403 = vmatpush1.msra.mxu0 %v7371
    %7404 = vmatprep.subr.mxu0 0.0
    %7405 = vmatpush1.msra.mxu0 %v7369
    %7406 = vmatprep.subr.mxu0 0.0
    %7407 = vmatpush1.msra.mxu0 %v7367
    %7408 = vmatprep.subr.mxu0 0.0
    %7409 = vmatpush1.msra.mxu0 %v7365
    %7410 = vmatprep.subr.mxu0 0.0
    %7411 = vmatpush1.msra.mxu0 %v7363
    %7412 = vmatprep.subr.mxu0 0.0
    %7413 = vmatpush1.msra.mxu0 %v7361
    %7414 = vmatprep.subr.mxu0 0.0
    %7415 = vmatpush1.msra.mxu0 %v7359
    %7416 = vmatprep.subr.mxu0 0.0
    %7417 = vmatpush1.msra.mxu0 %v7357
    %7418 = vmatprep.subr.mxu0 0.0
    %7419 = vmatpush2.msra.mxu0 0.0
    %7420 = vmatprep.subr.mxu0 0.0
    %7421 = vmatpush2.msra.mxu0 0.0
    %7422 = vmatprep.subr.mxu0 0.0
    %7423 = vmatpush2.msra.mxu0 0.0
    %7424 = vmatprep.subr.mxu0 0.0
    %7425 = vmatpush2.msra.mxu0 0.0
    %7426 = vmatprep.subr.mxu0 0.0
    %7427 = vmatpush2.msra.mxu0 0.0
    %7428 = vmatprep.subr.mxu0 0.0
    %7429 = vmatpush2.msra.mxu0 0.0
    %7430 = vmatprep.subr.mxu0 0.0
    %7431 = vmatpush2.msra.mxu0 0.0
    %7432 = vmatprep.subr.mxu0 0.0
    %7433 = vmatpush2.msra.mxu0 0.0
    %7434 = vmatprep.subr.mxu0 0.0
    %7435 = vmatpush2.msra.mxu0 0.0
    %7436 = vmatprep.subr.mxu0 0.0
    %7437 = vmatpush2.msra.mxu0 0.0
    %7438 = vmatprep.subr.mxu0 0.0
    %7439 = vmatpush2.msra.mxu0 0.0
    %7440 = vmatprep.subr.mxu0 0.0
    %7441 = vmatpush2.msra.mxu0 0.0
    %7442 = vmatprep.subr.mxu0 0.0
    %7443 = vmatpush2.msra.mxu0 0.0
    %7444 = vmatprep.subr.mxu0 0.0
    %7445 = vmatpush2.msra.mxu0 0.0
    %7446 = vmatprep.subr.mxu0 0.0
    %7447 = vmatpush2.msra.mxu0 0.0
    %7448 = vmatprep.subr.mxu0 0.0
    %7449 = vmatpush2.msra.mxu0 0.0
    %7450 = vmatprep.mubr.f32.mxu0 0.0
    %7451 = vmatmul.mubr.f32.gmra.mxu0 %v7381
    %v7452 = vpop.f32.mrf.mxu0
    %v7453 = vadd.f32 0.0, %v7452
    %v7454 = vpop.f32.mrf.mxu0
    %7455 = vmatprep.mubr.f32.mxu0 0.0
    %7456 = vmatmul.mubr.f32.gmra.mxu0 %v7384
    %v7457 = vpop.f32.mrf.mxu0
    %v7458 = vadd.f32 0.0, %v7457
    %v7459 = vpop.f32.mrf.mxu0
    %7460 = vdwg.mxu0
    %7461 = vrot.lane.b32.xlu0 %v6523, 104
    %v7462 = vpop.permute.xlu0 %7461
    %7463 = vrot.lane.b32.xlu0 %v6528, 104
    %v7464 = vpop.permute.xlu0 %7463
    %7465 = vrot.lane.b32.xlu0 %v6602, 104
    %v7466 = vpop.permute.xlu0 %7465
    %7467 = vrot.lane.b32.xlu0 %v6607, 104
    %v7468 = vpop.permute.xlu0 %7467
    %7469 = vrot.lane.b32.xlu0 %v6612, 104
    %v7470 = vpop.permute.xlu0 %7469
    %7471 = vrot.lane.b32.xlu0 %v6617, 104
    %v7472 = vpop.permute.xlu0 %7471
    %7473 = vrot.lane.b32.xlu0 %v6622, 104
    %v7474 = vpop.permute.xlu0 %7473
    %7475 = vrot.lane.b32.xlu0 %v6627, 104
    %v7476 = vpop.permute.xlu0 %7475
    %7477 = vrot.lane.b32.xlu0 %v6632, 104
    %v7478 = vpop.permute.xlu0 %7477
    %7479 = vrot.lane.b32.xlu0 %v6637, 104
    %v7480 = vpop.permute.xlu0 %7479
    %v7481 = vsel %vm3403, %v7462, 0
    %v7483 = vsel %vm3403, %v7464, 0
    %v7485 = vsel %vm3403, %v7466, 0
    %v7487 = vsel %vm3403, %v7468, 0
    %v7489 = vsel %vm3403, %v7470, 0
    %v7491 = vsel %vm3403, %v7472, 0
    %v7493 = vsel %vm3403, %v7474, 0
    %v7495 = vsel %vm3403, %v7476, 0
    %v7497 = vsel %vm3403, %v7478, 0
    %v7499 = vsel %vm3403, %v7480, 0
    %7501 = vmatprep.subr.mxu0 0.0
    %7502 = vmatpush1.xpose.msra.mxu0 0.0
    %7503 = vmatprep.subr.mxu0 0.0
    %7504 = vmatpush1.xpose.msra.mxu0 0.0
    %7505 = vmatprep.subr.mxu0 0.0
    %7506 = vmatpush1.xpose.msra.mxu0 0.0
    %7507 = vmatprep.subr.mxu0 0.0
    %7508 = vmatpush1.xpose.msra.mxu0 0.0
    %7509 = vmatprep.subr.mxu0 0.0
    %7510 = vmatpush1.xpose.msra.mxu0 0.0
    %7511 = vmatprep.subr.mxu0 0.0
    %7512 = vmatpush1.xpose.msra.mxu0 0.0
    %7513 = vmatprep.subr.mxu0 0.0
    %7514 = vmatpush1.xpose.msra.mxu0 0.0
    %7515 = vmatprep.subr.mxu0 0.0
    %7516 = vmatpush1.xpose.msra.mxu0 0.0
    %7517 = vmatprep.subr.mxu0 0.0
    %7518 = vmatpush1.xpose.msra.mxu0 %v7499
    %7519 = vmatprep.subr.mxu0 0.0
    %7520 = vmatpush1.xpose.msra.mxu0 %v7497
    %7521 = vmatprep.subr.mxu0 0.0
    %7522 = vmatpush1.xpose.msra.mxu0 %v7495
    %7523 = vmatprep.subr.mxu0 0.0
    %7524 = vmatpush1.xpose.msra.mxu0 %v7493
    %7525 = vmatprep.subr.mxu0 0.0
    %7526 = vmatpush1.xpose.msra.mxu0 %v7491
    %7527 = vmatprep.subr.mxu0 0.0
    %7528 = vmatpush1.xpose.msra.mxu0 %v7489
    %7529 = vmatprep.subr.mxu0 0.0
    %7530 = vmatpush1.xpose.msra.mxu0 %v7487
    %7531 = vmatprep.subr.mxu0 0.0
    %7532 = vmatpush1.xpose.msra.mxu0 %v7485
    %7533 = vmatprep.subr.mxu0 0.0
    %7534 = vmatpush2.xpose.msra.mxu0 0.0
    %7535 = vmatprep.subr.mxu0 0.0
    %7536 = vmatpush2.xpose.msra.mxu0 0.0
    %7537 = vmatprep.subr.mxu0 0.0
    %7538 = vmatpush2.xpose.msra.mxu0 0.0
    %7539 = vmatprep.subr.mxu0 0.0
    %7540 = vmatpush2.xpose.msra.mxu0 0.0
    %7541 = vmatprep.subr.mxu0 0.0
    %7542 = vmatpush2.xpose.msra.mxu0 0.0
    %7543 = vmatprep.subr.mxu0 0.0
    %7544 = vmatpush2.xpose.msra.mxu0 0.0
    %7545 = vmatprep.subr.mxu0 0.0
    %7546 = vmatpush2.xpose.msra.mxu0 0.0
    %7547 = vmatprep.subr.mxu0 0.0
    %7548 = vmatpush2.xpose.msra.mxu0 0.0
    %7549 = vmatprep.subr.mxu0 0.0
    %7550 = vmatpush2.xpose.msra.mxu0 0.0
    %7551 = vmatprep.subr.mxu0 0.0
    %7552 = vmatpush2.xpose.msra.mxu0 0.0
    %7553 = vmatprep.subr.mxu0 0.0
    %7554 = vmatpush2.xpose.msra.mxu0 0.0
    %7555 = vmatprep.subr.mxu0 0.0
    %7556 = vmatpush2.xpose.msra.mxu0 0.0
    %7557 = vmatprep.subr.mxu0 0.0
    %7558 = vmatpush2.xpose.msra.mxu0 0.0
    %7559 = vmatprep.subr.mxu0 0.0
    %7560 = vmatpush2.xpose.msra.mxu0 0.0
    %7561 = vmatprep.subr.mxu0 0.0
    %7562 = vmatpush2.xpose.msra.mxu0 0.0
    %7563 = vmatprep.subr.mxu0 0.0
    %7564 = vmatpush2.xpose.msra.mxu0 0.0
    %7565 = vmatprep.mubr.f32.mxu0 0.0
    %7566 = vmatmul.mubr.f32.gmra.mxu0 %v7481
    %v7567 = vpop.f32.mrf.mxu0
    %v7568 = vadd.f32 0.0, %v7567
    %v7569 = vpop.f32.mrf.mxu0
    %7570 = vmatprep.mubr.f32.mxu0 0.0
    %7571 = vmatmul.mubr.f32.gmra.mxu0 %v7483
    %v7572 = vpop.f32.mrf.mxu0
    %v7573 = vadd.f32 0.0, %v7572
    %v7574 = vpop.f32.mrf.mxu0
    %7575 = vdwg.mxu0
    %v7576 = vmul.f32 %v7568, 0.35355338
    %v7577 = vmul.f32 %v7573, 0.35355338
    %v7578 = vadd.f32 %v7576, %v6442
    %v7579 = vadd.f32 %v7577, %v6443
    %v7580 = vsel %vm2948, %v7578, -inf
    %7581 = vmax.xlane.f32.xlu0 %v7580
    %v7582 = vpop.xlane.xlu0 %7581
    %v7583 = vsel %vm2952, %v7579, -inf
    %7584 = vmax.xlane.f32.xlu0 %v7583
    %v7585 = vpop.xlane.xlu0 %7584
    %v7586 = vsub.f32 %v7578, %v7582
    %v7587 = vsub.f32 %v7579, %v7585
    %v7588 = vmul.f32 %v7586, 1.442695
    %v7589 = vpow.pop %v7588
    %v7590 = vmul.f32 %v7587, 1.442695
    %v7591 = vpow.pop %v7590
    %v7592 = vsel %vm2948, %v7589, 0.0
    %7593 = vadd.xlane.f32.xlu0 %v7592
    %v7594 = vpop.xlane.xlu0 %7593
    %v7595 = vsel %vm2952, %v7591, 0.0
    %7596 = vadd.xlane.f32.xlu0 %v7595
    %v7597 = vpop.xlane.xlu0 %7596
    %v7598 = vrcp.pop %v7594
    %v7599 = vrcp.pop %v7597
    %v7600 = vmul.f32 %v7589, %v7598
    %v7601 = vmul.f32 %v7591, %v7599
    %7602 = vrot.lane.b32.xlu0 %v6711, 104
    %v7603 = vpop.permute.xlu0 %7602
    %7604 = vrot.lane.b32.xlu0 %v6716, 104
    %v7605 = vpop.permute.xlu0 %7604
    %7606 = vrot.lane.b32.xlu0 %v6721, 104
    %v7607 = vpop.permute.xlu0 %7606
    %7608 = vrot.lane.b32.xlu0 %v6726, 104
    %v7609 = vpop.permute.xlu0 %7608
    %7610 = vrot.lane.b32.xlu0 %v6731, 104
    %v7611 = vpop.permute.xlu0 %7610
    %7612 = vrot.lane.b32.xlu0 %v6736, 104
    %v7613 = vpop.permute.xlu0 %7612
    %7614 = vrot.lane.b32.xlu0 %v6741, 104
    %v7615 = vpop.permute.xlu0 %7614
    %7616 = vrot.lane.b32.xlu0 %v6746, 104
    %v7617 = vpop.permute.xlu0 %7616
    %v7627 = vsel %vm2948, %v7600, 0
    %v7630 = vsel %vm2948, %v7601, 0
    %7632 = vmatprep.subr.mxu0 0.0
    %7633 = vmatpush1.msra.mxu0 0.0
    %7634 = vmatprep.subr.mxu0 0.0
    %7635 = vmatpush1.msra.mxu0 0.0
    %7636 = vmatprep.subr.mxu0 0.0
    %7637 = vmatpush1.msra.mxu0 0.0
    %7638 = vmatprep.subr.mxu0 0.0
    %7639 = vmatpush1.msra.mxu0 0.0
    %7640 = vmatprep.subr.mxu0 0.0
    %7641 = vmatpush1.msra.mxu0 0.0
    %7642 = vmatprep.subr.mxu0 0.0
    %7643 = vmatpush1.msra.mxu0 0.0
    %7644 = vmatprep.subr.mxu0 0.0
    %7645 = vmatpush1.msra.mxu0 0.0
    %7646 = vmatprep.subr.mxu0 0.0
    %7647 = vmatpush1.msra.mxu0 0.0
    %7648 = vmatprep.subr.mxu0 0.0
    %7649 = vmatpush1.msra.mxu0 %v7617
    %7650 = vmatprep.subr.mxu0 0.0
    %7651 = vmatpush1.msra.mxu0 %v7615
    %7652 = vmatprep.subr.mxu0 0.0
    %7653 = vmatpush1.msra.mxu0 %v7613
    %7654 = vmatprep.subr.mxu0 0.0
    %7655 = vmatpush1.msra.mxu0 %v7611
    %7656 = vmatprep.subr.mxu0 0.0
    %7657 = vmatpush1.msra.mxu0 %v7609
    %7658 = vmatprep.subr.mxu0 0.0
    %7659 = vmatpush1.msra.mxu0 %v7607
    %7660 = vmatprep.subr.mxu0 0.0
    %7661 = vmatpush1.msra.mxu0 %v7605
    %7662 = vmatprep.subr.mxu0 0.0
    %7663 = vmatpush1.msra.mxu0 %v7603
    %7664 = vmatprep.subr.mxu0 0.0
    %7665 = vmatpush2.msra.mxu0 0.0
    %7666 = vmatprep.subr.mxu0 0.0
    %7667 = vmatpush2.msra.mxu0 0.0
    %7668 = vmatprep.subr.mxu0 0.0
    %7669 = vmatpush2.msra.mxu0 0.0
    %7670 = vmatprep.subr.mxu0 0.0
    %7671 = vmatpush2.msra.mxu0 0.0
    %7672 = vmatprep.subr.mxu0 0.0
    %7673 = vmatpush2.msra.mxu0 0.0
    %7674 = vmatprep.subr.mxu0 0.0
    %7675 = vmatpush2.msra.mxu0 0.0
    %7676 = vmatprep.subr.mxu0 0.0
    %7677 = vmatpush2.msra.mxu0 0.0
    %7678 = vmatprep.subr.mxu0 0.0
    %7679 = vmatpush2.msra.mxu0 0.0
    %7680 = vmatprep.subr.mxu0 0.0
    %7681 = vmatpush2.msra.mxu0 0.0
    %7682 = vmatprep.subr.mxu0 0.0
    %7683 = vmatpush2.msra.mxu0 0.0
    %7684 = vmatprep.subr.mxu0 0.0
    %7685 = vmatpush2.msra.mxu0 0.0
    %7686 = vmatprep.subr.mxu0 0.0
    %7687 = vmatpush2.msra.mxu0 0.0
    %7688 = vmatprep.subr.mxu0 0.0
    %7689 = vmatpush2.msra.mxu0 0.0
    %7690 = vmatprep.subr.mxu0 0.0
    %7691 = vmatpush2.msra.mxu0 0.0
    %7692 = vmatprep.subr.mxu0 0.0
    %7693 = vmatpush2.msra.mxu0 0.0
    %7694 = vmatprep.subr.mxu0 0.0
    %7695 = vmatpush2.msra.mxu0 0.0
    %7696 = vmatprep.mubr.f32.mxu0 0.0
    %7697 = vmatmul.mubr.f32.gmra.mxu0 %v7627
    %v7698 = vpop.f32.mrf.mxu0
    %v7699 = vadd.f32 0.0, %v7698
    %v7700 = vpop.f32.mrf.mxu0
    %7701 = vmatprep.mubr.f32.mxu0 0.0
    %7702 = vmatmul.mubr.f32.gmra.mxu0 %v7630
    %v7703 = vpop.f32.mrf.mxu0
    %v7704 = vadd.f32 0.0, %v7703
    %v7705 = vpop.f32.mrf.mxu0
    %7706 = vdwg.mxu0
    %7709 = vrot.lane.b32.xlu0 %v7207, 8
    %v7710 = vpop.permute.xlu0 %7709
    %7711 = vrot.lane.b32.xlu0 %v7212, 8
    %v7712 = vpop.permute.xlu0 %7711
    %7717 = vrot.lane.b32.xlu0 %v7453, 16
    %v7718 = vpop.permute.xlu0 %7717
    %7719 = vrot.lane.b32.xlu0 %v7458, 16
    %v7720 = vpop.permute.xlu0 %7719
    %7725 = vrot.lane.b32.xlu0 %v7699, 24
    %v7726 = vpop.permute.xlu0 %7725
    %7727 = vrot.lane.b32.xlu0 %v7704, 24
    %v7728 = vpop.permute.xlu0 %7727
    %v7731 = vsel %vm3403, %v6953, %v7710
    %v7732 = vsel %vm3403, %v6958, %v7712
    %v7733 = vsel %vm2154, %v7731, %v7718
    %v7734 = vsel %vm2154, %v7732, %v7720
    %v7735 = vsel %vm4390, %v7733, %v7726
    %v7736 = vsel %vm4390, %v7734, %v7728
    %v7737 = vlaneseq
    %v7738 = vshrl.u32 %v7737, 7
    %v7739 = vsub.s32 3, %v7738
    %v7740 = vrot.slane %v6423, %v7739
    %v7742 = vsel %vm2450, %v7735, 0
    %v7745 = vsel %vm2450, %v7736, 0
    %7747 = vmatprep.subr.mxu0 0.0
    %7748 = vmatpush1.msra.mxu0 0.0
    %7749 = vmatprep.subr.mxu0 0.0
    %7750 = vmatpush1.msra.mxu0 0.0
    %7751 = vmatprep.subr.mxu0 0.0
    %7752 = vmatpush1.msra.mxu0 0.0
    %7753 = vmatprep.subr.mxu0 0.0
    %7754 = vmatpush1.msra.mxu0 0.0
    %7755 = vmatprep.subr.mxu0 0.0
    %7756 = vmatpush1.msra.mxu0 0.0
    %7757 = vmatprep.subr.mxu0 0.0
    %7758 = vmatpush1.msra.mxu0 0.0
    %7759 = vmatprep.subr.mxu0 0.0
    %7760 = vmatpush1.msra.mxu0 0.0
    %7761 = vmatprep.subr.mxu0 0.0
    %7762 = vmatpush1.msra.mxu0 0.0
    %7763 = vmatprep.subr.mxu0 0.0
    %7764 = vmatpush1.msra.mxu0 0.0
    %7765 = vmatprep.subr.mxu0 0.0
    %7766 = vmatpush1.msra.mxu0 0.0
    %7767 = vmatprep.subr.mxu0 0.0
    %7768 = vmatpush1.msra.mxu0 0.0
    %7769 = vmatprep.subr.mxu0 0.0
    %7770 = vmatpush1.msra.mxu0 0.0
    %7771 = vmatprep.subr.mxu0 0.0
    %7772 = vmatpush1.msra.mxu0 %v6421
    %7773 = vmatprep.subr.mxu0 0.0
    %7774 = vmatpush1.msra.mxu0 %v6420
    %7775 = vmatprep.subr.mxu0 0.0
    %7776 = vmatpush1.msra.mxu0 %v6419
    %7777 = vmatprep.subr.mxu0 0.0
    %7778 = vmatpush1.msra.mxu0 %v6418
    %7779 = vmatprep.subr.mxu0 0.0
    %7780 = vmatpush2.msra.mxu0 0.0
    %7781 = vmatprep.subr.mxu0 0.0
    %7782 = vmatpush2.msra.mxu0 0.0
    %7783 = vmatprep.subr.mxu0 0.0
    %7784 = vmatpush2.msra.mxu0 0.0
    %7785 = vmatprep.subr.mxu0 0.0
    %7786 = vmatpush2.msra.mxu0 0.0
    %7787 = vmatprep.subr.mxu0 0.0
    %7788 = vmatpush2.msra.mxu0 0.0
    %7789 = vmatprep.subr.mxu0 0.0
    %7790 = vmatpush2.msra.mxu0 0.0
    %7791 = vmatprep.subr.mxu0 0.0
    %7792 = vmatpush2.msra.mxu0 0.0
    %7793 = vmatprep.subr.mxu0 0.0
    %7794 = vmatpush2.msra.mxu0 0.0
    %7795 = vmatprep.subr.mxu0 0.0
    %7796 = vmatpush2.msra.mxu0 0.0
    %7797 = vmatprep.subr.mxu0 0.0
    %7798 = vmatpush2.msra.mxu0 0.0
    %7799 = vmatprep.subr.mxu0 0.0
    %7800 = vmatpush2.msra.mxu0 0.0
    %7801 = vmatprep.subr.mxu0 0.0
    %7802 = vmatpush2.msra.mxu0 0.0
    %7803 = vmatprep.subr.mxu0 0.0
    %7804 = vmatpush2.msra.mxu0 0.0
    %7805 = vmatprep.subr.mxu0 0.0
    %7806 = vmatpush2.msra.mxu0 0.0
    %7807 = vmatprep.subr.mxu0 0.0
    %7808 = vmatpush2.msra.mxu0 0.0
    %7809 = vmatprep.subr.mxu0 0.0
    %7810 = vmatpush2.msra.mxu0 0.0
    %7811 = vmatprep.mubr.f32.mxu0 0.0
    %7812 = vmatmul.mubr.f32.gmra.mxu0 %v7742
    %v7813 = vpop.f32.mrf.mxu0
    %v7814 = vadd.f32 %v7740, %v7813
    %v7815 = vpop.f32.mrf.mxu0
    %7816 = vmatprep.mubr.f32.mxu0 0.0
    %7817 = vmatmul.mubr.f32.gmra.mxu0 %v7745
    %v7818 = vpop.f32.mrf.mxu0
    %v7819 = vadd.f32 %v7740, %v7818
    %v7820 = vpop.f32.mrf.mxu0
    %7821 = vdwg.mxu0
    %v7822 = vadd.f32 %v5903, %v7814
    %v7823 = vadd.f32 %v5904, %v7819
    %v7824 = vsel %vm2450, %v7822, 0.0
    %7825 = vadd.xlane.f32.xlu0 %v7824
    %v7826 = vpop.xlane.xlu0 %7825
    %v7827 = vsel %vm2454, %v7823, 0.0
    %7828 = vadd.xlane.f32.xlu0 %v7827
    %v7829 = vpop.xlane.xlu0 %7828
    %v7830 = vmul.f32 %v7826, %v2458
    %v7831 = vmul.f32 %v7829, %v2458
    %v7832 = vsub.f32 %v7822, %v7830
    %v7833 = vsub.f32 %v7823, %v7831
    %v7834 = vmul.f32 %v7832, %v7832
    %v7835 = vmul.f32 %v7833, %v7833
    %v7836 = vsel %vm2450, %v7834, 0.0
    %7837 = vadd.xlane.f32.xlu0 %v7836
    %v7838 = vpop.xlane.xlu0 %7837
    %v7839 = vsel %vm2454, %v7835, 0.0
    %7840 = vadd.xlane.f32.xlu0 %v7839
    %v7841 = vpop.xlane.xlu0 %7840
    %v7842 = vmul.f32 %v7838, %v2458
    %v7843 = vmul.f32 %v7841, %v2458
    %v7844 = vadd.f32 %v7842, 1e-05
    %v7845 = vadd.f32 %v7843, 1e-05
    %v7846 = vrsqrt.pop %v7844
    %v7847 = vrsqrt.pop %v7845
    %v7848 = vmul.f32 %v7832, %v7846
    %v7849 = vmul.f32 %v7833, %v7847
    %v7850 = vlaneseq
    %v7851 = vshrl.u32 %v7850, 7
    %v7852 = vsub.s32 0, %v7851
    %v7853 = vrot.slane %v6425, %v7852
    %v7854 = vmul.f32 %v7848, %v7853
    %v7855 = vmul.f32 %v7849, %v7853
    %v7856 = vlaneseq
    %v7857 = vshrl.u32 %v7856, 7
    %v7858 = vsub.s32 1, %v7857
    %v7859 = vrot.slane %v6425, %v7858
    %v7860 = vadd.f32 %v7854, %v7859
    %v7861 = vadd.f32 %v7855, %v7859
    %v7862 = vadd.f32 %v7860, %v2427
    %v7863 = vadd.f32 %v7861, %v2428
    %s7864 = scalar_lea.vmem %s37, 32
    %v7865 = vld [vmem:[%s7864] sm:$0xff]
    %v7866 = vld [vmem:[%s7864 + $0x8] sm:$0xff]
    %v7867 = vld [vmem:[%s7864 + $0x10] sm:$0xff]
    %v7868 = vld [vmem:[%s7864 + $0x18] sm:$0xff]
    %s7869 = scalar_lea.vmem [#allocation13], 1
    %v7870 = vld [vmem:[%s7869] sm:$0x1]
    %v7872 = vlaneseq
    %v7873 = vshrl.u32 %v7872, 7
    %v7874 = vsub.s32 0, %v7873
    %v7875 = vrot.slane %v7870, %v7874
    %v7878 = vsel %vm2450, %v7862, 0
    %v7881 = vsel %vm2450, %v7863, 0
    %7883 = vmatprep.subr.mxu0 0.0
    %7884 = vmatpush1.msra.mxu0 0.0
    %7885 = vmatprep.subr.mxu0 0.0
    %7886 = vmatpush1.msra.mxu0 0.0
    %7887 = vmatprep.subr.mxu0 0.0
    %7888 = vmatpush1.msra.mxu0 0.0
    %7889 = vmatprep.subr.mxu0 0.0
    %7890 = vmatpush1.msra.mxu0 0.0
    %7891 = vmatprep.subr.mxu0 0.0
    %7892 = vmatpush1.msra.mxu0 0.0
    %7893 = vmatprep.subr.mxu0 0.0
    %7894 = vmatpush1.msra.mxu0 0.0
    %7895 = vmatprep.subr.mxu0 0.0
    %7896 = vmatpush1.msra.mxu0 0.0
    %7897 = vmatprep.subr.mxu0 0.0
    %7898 = vmatpush1.msra.mxu0 0.0
    %7899 = vmatprep.subr.mxu0 0.0
    %7900 = vmatpush1.msra.mxu0 0.0
    %7901 = vmatprep.subr.mxu0 0.0
    %7902 = vmatpush1.msra.mxu0 0.0
    %7903 = vmatprep.subr.mxu0 0.0
    %7904 = vmatpush1.msra.mxu0 0.0
    %7905 = vmatprep.subr.mxu0 0.0
    %7906 = vmatpush1.msra.mxu0 0.0
    %7907 = vmatprep.subr.mxu0 0.0
    %7908 = vmatpush1.msra.mxu0 %v7868
    %7909 = vmatprep.subr.mxu0 0.0
    %7910 = vmatpush1.msra.mxu0 %v7867
    %7911 = vmatprep.subr.mxu0 0.0
    %7912 = vmatpush1.msra.mxu0 %v7866
    %7913 = vmatprep.subr.mxu0 0.0
    %7914 = vmatpush1.msra.mxu0 %v7865
    %7915 = vmatprep.subr.mxu0 0.0
    %7916 = vmatpush2.msra.mxu0 0.0
    %7917 = vmatprep.subr.mxu0 0.0
    %7918 = vmatpush2.msra.mxu0 0.0
    %7919 = vmatprep.subr.mxu0 0.0
    %7920 = vmatpush2.msra.mxu0 0.0
    %7921 = vmatprep.subr.mxu0 0.0
    %7922 = vmatpush2.msra.mxu0 0.0
    %7923 = vmatprep.subr.mxu0 0.0
    %7924 = vmatpush2.msra.mxu0 0.0
    %7925 = vmatprep.subr.mxu0 0.0
    %7926 = vmatpush2.msra.mxu0 0.0
    %7927 = vmatprep.subr.mxu0 0.0
    %7928 = vmatpush2.msra.mxu0 0.0
    %7929 = vmatprep.subr.mxu0 0.0
    %7930 = vmatpush2.msra.mxu0 0.0
    %7931 = vmatprep.subr.mxu0 0.0
    %7932 = vmatpush2.msra.mxu0 0.0
    %7933 = vmatprep.subr.mxu0 0.0
    %7934 = vmatpush2.msra.mxu0 0.0
    %7935 = vmatprep.subr.mxu0 0.0
    %7936 = vmatpush2.msra.mxu0 0.0
    %7937 = vmatprep.subr.mxu0 0.0
    %7938 = vmatpush2.msra.mxu0 0.0
    %7939 = vmatprep.subr.mxu0 0.0
    %7940 = vmatpush2.msra.mxu0 0.0
    %7941 = vmatprep.subr.mxu0 0.0
    %7942 = vmatpush2.msra.mxu0 0.0
    %7943 = vmatprep.subr.mxu0 0.0
    %7944 = vmatpush2.msra.mxu0 0.0
    %7945 = vmatprep.subr.mxu0 0.0
    %7946 = vmatpush2.msra.mxu0 0.0
    %7947 = vmatprep.mubr.f32.mxu0 0.0
    %7948 = vmatmul.mubr.f32.gmra.mxu0 %v7878
    %v7949 = vpop.f32.mrf.mxu0
    %v7950 = vadd.f32 %v7875, %v7949
    %v7951 = vpop.f32.mrf.mxu0
    %7952 = vmatprep.mubr.f32.mxu0 0.0
    %7953 = vmatmul.mubr.f32.gmra.mxu0 %v7881
    %v7954 = vpop.f32.mrf.mxu0
    %v7955 = vadd.f32 %v7875, %v7954
    %v7956 = vpop.f32.mrf.mxu0
    %7957 = vdwg.mxu0
    %s7958 = scalar_lea.vmem %s41, 32
    %v7959 = vld [vmem:[%s7958] sm:$0xff]
    %v7960 = vld [vmem:[%s7958 + $0x8] sm:$0xff]
    %v7961 = vld [vmem:[%s7958 + $0x10] sm:$0xff]
    %v7962 = vld [vmem:[%s7958 + $0x18] sm:$0xff]
    %s7963 = scalar_lea.vmem [#allocation15], 1
    %v7964 = vld [vmem:[%s7963] sm:$0x1]
    %v7966 = vlaneseq
    %v7967 = vshrl.u32 %v7966, 7
    %v7968 = vsub.s32 0, %v7967
    %v7969 = vrot.slane %v7964, %v7968
    %v7972 = vsel %vm2450, %v7860, 0
    %v7975 = vsel %vm2450, %v7861, 0
    %7977 = vmatprep.subr.mxu0 0.0
    %7978 = vmatpush1.msra.mxu0 0.0
    %7979 = vmatprep.subr.mxu0 0.0
    %7980 = vmatpush1.msra.mxu0 0.0
    %7981 = vmatprep.subr.mxu0 0.0
    %7982 = vmatpush1.msra.mxu0 0.0
    %7983 = vmatprep.subr.mxu0 0.0
    %7984 = vmatpush1.msra.mxu0 0.0
    %7985 = vmatprep.subr.mxu0 0.0
    %7986 = vmatpush1.msra.mxu0 0.0
    %7987 = vmatprep.subr.mxu0 0.0
    %7988 = vmatpush1.msra.mxu0 0.0
    %7989 = vmatprep.subr.mxu0 0.0
    %7990 = vmatpush1.msra.mxu0 0.0
    %7991 = vmatprep.subr.mxu0 0.0
    %7992 = vmatpush1.msra.mxu0 0.0
    %7993 = vmatprep.subr.mxu0 0.0
    %7994 = vmatpush1.msra.mxu0 0.0
    %7995 = vmatprep.subr.mxu0 0.0
    %7996 = vmatpush1.msra.mxu0 0.0
    %7997 = vmatprep.subr.mxu0 0.0
    %7998 = vmatpush1.msra.mxu0 0.0
    %7999 = vmatprep.subr.mxu0 0.0
    %8000 = vmatpush1.msra.mxu0 0.0
    %8001 = vmatprep.subr.mxu0 0.0
    %8002 = vmatpush1.msra.mxu0 %v7962
    %8003 = vmatprep.subr.mxu0 0.0
    %8004 = vmatpush1.msra.mxu0 %v7961
    %8005 = vmatprep.subr.mxu0 0.0
    %8006 = vmatpush1.msra.mxu0 %v7960
    %8007 = vmatprep.subr.mxu0 0.0
    %8008 = vmatpush1.msra.mxu0 %v7959
    %8009 = vmatprep.subr.mxu0 0.0
    %8010 = vmatpush2.msra.mxu0 0.0
    %8011 = vmatprep.subr.mxu0 0.0
    %8012 = vmatpush2.msra.mxu0 0.0
    %8013 = vmatprep.subr.mxu0 0.0
    %8014 = vmatpush2.msra.mxu0 0.0
    %8015 = vmatprep.subr.mxu0 0.0
    %8016 = vmatpush2.msra.mxu0 0.0
    %8017 = vmatprep.subr.mxu0 0.0
    %8018 = vmatpush2.msra.mxu0 0.0
    %8019 = vmatprep.subr.mxu0 0.0
    %8020 = vmatpush2.msra.mxu0 0.0
    %8021 = vmatprep.subr.mxu0 0.0
    %8022 = vmatpush2.msra.mxu0 0.0
    %8023 = vmatprep.subr.mxu0 0.0
    %8024 = vmatpush2.msra.mxu0 0.0
    %8025 = vmatprep.subr.mxu0 0.0
    %8026 = vmatpush2.msra.mxu0 0.0
    %8027 = vmatprep.subr.mxu0 0.0
    %8028 = vmatpush2.msra.mxu0 0.0
    %8029 = vmatprep.subr.mxu0 0.0
    %8030 = vmatpush2.msra.mxu0 0.0
    %8031 = vmatprep.subr.mxu0 0.0
    %8032 = vmatpush2.msra.mxu0 0.0
    %8033 = vmatprep.subr.mxu0 0.0
    %8034 = vmatpush2.msra.mxu0 0.0
    %8035 = vmatprep.subr.mxu0 0.0
    %8036 = vmatpush2.msra.mxu0 0.0
    %8037 = vmatprep.subr.mxu0 0.0
    %8038 = vmatpush2.msra.mxu0 0.0
    %8039 = vmatprep.subr.mxu0 0.0
    %8040 = vmatpush2.msra.mxu0 0.0
    %8041 = vmatprep.mubr.f32.mxu0 0.0
    %8042 = vmatmul.mubr.f32.gmra.mxu0 %v7972
    %v8043 = vpop.f32.mrf.mxu0
    %v8044 = vadd.f32 %v7969, %v8043
    %v8045 = vpop.f32.mrf.mxu0
    %8046 = vmatprep.mubr.f32.mxu0 0.0
    %8047 = vmatmul.mubr.f32.gmra.mxu0 %v7975
    %v8048 = vpop.f32.mrf.mxu0
    %v8049 = vadd.f32 %v7969, %v8048
    %v8050 = vpop.f32.mrf.mxu0
    %8051 = vdwg.mxu0
    %s8052 = scalar_lea.vmem [#allocation16], 32
    %v8053 = vld [vmem:[%s8052] sm:$0xff]
    %v8054 = vld [vmem:[%s8052 + $0x8] sm:$0xff]
    %v8055 = vld [vmem:[%s8052 + $0x10] sm:$0xff]
    %v8056 = vld [vmem:[%s8052 + $0x18] sm:$0xff]
    %s8057 = scalar_lea.vmem [#allocation18], 1
    %v8058 = vld [vmem:[%s8057] sm:$0x1]
    %8061 = vrot.lane.b32.xlu0 %v7950, 96
    %v8062 = vpop.permute.xlu0 %8061
    %8063 = vrot.lane.b32.xlu0 %v7955, 96
    %v8064 = vpop.permute.xlu0 %8063
    %v8065 = vsel %vm3403, %v7950, 0
    %v8067 = vsel %vm3403, %v7955, 0
    %v8069 = vsel %vm3403, %v8062, 0
    %v8071 = vsel %vm3403, %v8064, 0
    %8073 = vmatprep.subr.mxu0 0.0
    %8074 = vmatpush1.xpose.msra.mxu0 0.0
    %8075 = vmatprep.subr.mxu0 0.0
    %8076 = vmatpush1.xpose.msra.mxu0 0.0
    %8077 = vmatprep.subr.mxu0 0.0
    %8078 = vmatpush1.xpose.msra.mxu0 0.0
    %8079 = vmatprep.subr.mxu0 0.0
    %8080 = vmatpush1.xpose.msra.mxu0 0.0
    %8081 = vmatprep.subr.mxu0 0.0
    %8082 = vmatpush1.xpose.msra.mxu0 0.0
    %8083 = vmatprep.subr.mxu0 0.0
    %8084 = vmatpush1.xpose.msra.mxu0 0.0
    %8085 = vmatprep.subr.mxu0 0.0
    %8086 = vmatpush1.xpose.msra.mxu0 0.0
    %8087 = vmatprep.subr.mxu0 0.0
    %8088 = vmatpush1.xpose.msra.mxu0 0.0
    %8089 = vmatprep.subr.mxu0 0.0
    %8090 = vmatpush1.xpose.msra.mxu0 0.0
    %8091 = vmatprep.subr.mxu0 0.0
    %8092 = vmatpush1.xpose.msra.mxu0 0.0
    %8093 = vmatprep.subr.mxu0 0.0
    %8094 = vmatpush1.xpose.msra.mxu0 0.0
    %8095 = vmatprep.subr.mxu0 0.0
    %8096 = vmatpush1.xpose.msra.mxu0 0.0
    %8097 = vmatprep.subr.mxu0 0.0
    %8098 = vmatpush1.xpose.msra.mxu0 0.0
    %8099 = vmatprep.subr.mxu0 0.0
    %8100 = vmatpush1.xpose.msra.mxu0 0.0
    %8101 = vmatprep.subr.mxu0 0.0
    %8102 = vmatpush1.xpose.msra.mxu0 %v8071
    %8103 = vmatprep.subr.mxu0 0.0
    %8104 = vmatpush1.xpose.msra.mxu0 %v8069
    %8105 = vmatprep.subr.mxu0 0.0
    %8106 = vmatpush2.xpose.msra.mxu0 0.0
    %8107 = vmatprep.subr.mxu0 0.0
    %8108 = vmatpush2.xpose.msra.mxu0 0.0
    %8109 = vmatprep.subr.mxu0 0.0
    %8110 = vmatpush2.xpose.msra.mxu0 0.0
    %8111 = vmatprep.subr.mxu0 0.0
    %8112 = vmatpush2.xpose.msra.mxu0 0.0
    %8113 = vmatprep.subr.mxu0 0.0
    %8114 = vmatpush2.xpose.msra.mxu0 0.0
    %8115 = vmatprep.subr.mxu0 0.0
    %8116 = vmatpush2.xpose.msra.mxu0 0.0
    %8117 = vmatprep.subr.mxu0 0.0
    %8118 = vmatpush2.xpose.msra.mxu0 0.0
    %8119 = vmatprep.subr.mxu0 0.0
    %8120 = vmatpush2.xpose.msra.mxu0 0.0
    %8121 = vmatprep.subr.mxu0 0.0
    %8122 = vmatpush2.xpose.msra.mxu0 0.0
    %8123 = vmatprep.subr.mxu0 0.0
    %8124 = vmatpush2.xpose.msra.mxu0 0.0
    %8125 = vmatprep.subr.mxu0 0.0
    %8126 = vmatpush2.xpose.msra.mxu0 0.0
    %8127 = vmatprep.subr.mxu0 0.0
    %8128 = vmatpush2.xpose.msra.mxu0 0.0
    %8129 = vmatprep.subr.mxu0 0.0
    %8130 = vmatpush2.xpose.msra.mxu0 0.0
    %8131 = vmatprep.subr.mxu0 0.0
    %8132 = vmatpush2.xpose.msra.mxu0 0.0
    %8133 = vmatprep.subr.mxu0 0.0
    %8134 = vmatpush2.xpose.msra.mxu0 0.0
    %8135 = vmatprep.subr.mxu0 0.0
    %8136 = vmatpush2.xpose.msra.mxu0 0.0
    %8137 = vmatprep.mubr.f32.mxu0 0.0
    %8138 = vmatmul.mubr.f32.gmra.mxu0 %v8065
    %v8139 = vpop.f32.mrf.mxu0
    %v8140 = vadd.f32 0.0, %v8139
    %v8141 = vpop.f32.mrf.mxu0
    %8142 = vmatprep.mubr.f32.mxu0 0.0
    %8143 = vmatmul.mubr.f32.gmra.mxu0 %v8067
    %v8144 = vpop.f32.mrf.mxu0
    %v8145 = vadd.f32 0.0, %v8144
    %v8146 = vpop.f32.mrf.mxu0
    %8147 = vdwg.mxu0
    %v8148 = vmul.f32 %v8140, 0.35355338
    %v8149 = vmul.f32 %v8145, 0.35355338
    %v8150 = vsel %vm4800, %v8148, -inf
    %8151 = vmax.xlane.f32.xlu0 %v8150
    %v8152 = vpop.xlane.xlu0 %8151
    %v8153 = vsel %vm4804, %v8149, -inf
    %8154 = vmax.xlane.f32.xlu0 %v8153
    %v8155 = vpop.xlane.xlu0 %8154
    %v8156 = vsub.f32 %v8148, %v8152
    %v8157 = vsub.f32 %v8149, %v8155
    %v8158 = vmul.f32 %v8156, 1.442695
    %v8159 = vpow.pop %v8158
    %v8160 = vmul.f32 %v8157, 1.442695
    %v8161 = vpow.pop %v8160
    %v8162 = vsel %vm4800, %v8159, 0.0
    %8163 = vadd.xlane.f32.xlu0 %v8162
    %v8164 = vpop.xlane.xlu0 %8163
    %v8165 = vsel %vm4804, %v8161, 0.0
    %8166 = vadd.xlane.f32.xlu0 %v8165
    %v8167 = vpop.xlane.xlu0 %8166
    %v8168 = vrcp.pop %v8164
    %v8169 = vrcp.pop %v8167
    %v8170 = vmul.f32 %v8159, %v8168
    %v8171 = vmul.f32 %v8161, %v8169
    %v8173 = vsel %vm4800, %v8170, 0
    %v8176 = vsel %vm4800, %v8171, 0
    %v8179 = vsel %vm2956, %v8049, 0
    %8181 = vmatprep.subr.mxu0 0.0
    %8182 = vmatpush1.msra.mxu0 0.0
    %8183 = vmatprep.subr.mxu0 0.0
    %8184 = vmatpush1.msra.mxu0 0.0
    %8185 = vmatprep.subr.mxu0 0.0
    %8186 = vmatpush1.msra.mxu0 0.0
    %8187 = vmatprep.subr.mxu0 0.0
    %8188 = vmatpush1.msra.mxu0 0.0
    %8189 = vmatprep.subr.mxu0 0.0
    %8190 = vmatpush1.msra.mxu0 0.0
    %8191 = vmatprep.subr.mxu0 0.0
    %8192 = vmatpush1.msra.mxu0 0.0
    %8193 = vmatprep.subr.mxu0 0.0
    %8194 = vmatpush1.msra.mxu0 0.0
    %8195 = vmatprep.subr.mxu0 0.0
    %8196 = vmatpush1.msra.mxu0 0.0
    %8197 = vmatprep.subr.mxu0 0.0
    %8198 = vmatpush1.msra.mxu0 0.0
    %8199 = vmatprep.subr.mxu0 0.0
    %8200 = vmatpush1.msra.mxu0 0.0
    %8201 = vmatprep.subr.mxu0 0.0
    %8202 = vmatpush1.msra.mxu0 0.0
    %8203 = vmatprep.subr.mxu0 0.0
    %8204 = vmatpush1.msra.mxu0 0.0
    %8205 = vmatprep.subr.mxu0 0.0
    %8206 = vmatpush1.msra.mxu0 0.0
    %8207 = vmatprep.subr.mxu0 0.0
    %8208 = vmatpush1.msra.mxu0 0.0
    %8209 = vmatprep.subr.mxu0 0.0
    %8210 = vmatpush1.msra.mxu0 %v8179
    %8211 = vmatprep.subr.mxu0 0.0
    %8212 = vmatpush1.msra.mxu0 %v8044
    %8213 = vmatprep.subr.mxu0 0.0
    %8214 = vmatpush2.msra.mxu0 0.0
    %8215 = vmatprep.subr.mxu0 0.0
    %8216 = vmatpush2.msra.mxu0 0.0
    %8217 = vmatprep.subr.mxu0 0.0
    %8218 = vmatpush2.msra.mxu0 0.0
    %8219 = vmatprep.subr.mxu0 0.0
    %8220 = vmatpush2.msra.mxu0 0.0
    %8221 = vmatprep.subr.mxu0 0.0
    %8222 = vmatpush2.msra.mxu0 0.0
    %8223 = vmatprep.subr.mxu0 0.0
    %8224 = vmatpush2.msra.mxu0 0.0
    %8225 = vmatprep.subr.mxu0 0.0
    %8226 = vmatpush2.msra.mxu0 0.0
    %8227 = vmatprep.subr.mxu0 0.0
    %8228 = vmatpush2.msra.mxu0 0.0
    %8229 = vmatprep.subr.mxu0 0.0
    %8230 = vmatpush2.msra.mxu0 0.0
    %8231 = vmatprep.subr.mxu0 0.0
    %8232 = vmatpush2.msra.mxu0 0.0
    %8233 = vmatprep.subr.mxu0 0.0
    %8234 = vmatpush2.msra.mxu0 0.0
    %8235 = vmatprep.subr.mxu0 0.0
    %8236 = vmatpush2.msra.mxu0 0.0
    %8237 = vmatprep.subr.mxu0 0.0
    %8238 = vmatpush2.msra.mxu0 0.0
    %8239 = vmatprep.subr.mxu0 0.0
    %8240 = vmatpush2.msra.mxu0 0.0
    %8241 = vmatprep.subr.mxu0 0.0
    %8242 = vmatpush2.msra.mxu0 0.0
    %8243 = vmatprep.subr.mxu0 0.0
    %8244 = vmatpush2.msra.mxu0 0.0
    %8245 = vmatprep.mubr.f32.mxu0 0.0
    %8246 = vmatmul.mubr.f32.gmra.mxu0 %v8173
    %v8247 = vpop.f32.mrf.mxu0
    %v8248 = vadd.f32 0.0, %v8247
    %v8249 = vpop.f32.mrf.mxu0
    %8250 = vmatprep.mubr.f32.mxu0 0.0
    %8251 = vmatmul.mubr.f32.gmra.mxu0 %v8176
    %v8252 = vpop.f32.mrf.mxu0
    %v8253 = vadd.f32 0.0, %v8252
    %v8254 = vpop.f32.mrf.mxu0
    %8255 = vdwg.mxu0
    %8256 = vrot.lane.b32.xlu0 %v7950, 120
    %v8257 = vpop.permute.xlu0 %8256
    %8258 = vrot.lane.b32.xlu0 %v7955, 120
    %v8259 = vpop.permute.xlu0 %8258
    %8260 = vrot.lane.b32.xlu0 %v7950, 88
    %v8261 = vpop.permute.xlu0 %8260
    %8262 = vrot.lane.b32.xlu0 %v7955, 88
    %v8263 = vpop.permute.xlu0 %8262
    %v8264 = vsel %vm3403, %v8257, 0
    %v8266 = vsel %vm3403, %v8259, 0
    %v8268 = vsel %vm3403, %v8261, 0
    %v8270 = vsel %vm3403, %v8263, 0
    %8272 = vmatprep.subr.mxu0 0.0
    %8273 = vmatpush1.xpose.msra.mxu0 0.0
    %8274 = vmatprep.subr.mxu0 0.0
    %8275 = vmatpush1.xpose.msra.mxu0 0.0
    %8276 = vmatprep.subr.mxu0 0.0
    %8277 = vmatpush1.xpose.msra.mxu0 0.0
    %8278 = vmatprep.subr.mxu0 0.0
    %8279 = vmatpush1.xpose.msra.mxu0 0.0
    %8280 = vmatprep.subr.mxu0 0.0
    %8281 = vmatpush1.xpose.msra.mxu0 0.0
    %8282 = vmatprep.subr.mxu0 0.0
    %8283 = vmatpush1.xpose.msra.mxu0 0.0
    %8284 = vmatprep.subr.mxu0 0.0
    %8285 = vmatpush1.xpose.msra.mxu0 0.0
    %8286 = vmatprep.subr.mxu0 0.0
    %8287 = vmatpush1.xpose.msra.mxu0 0.0
    %8288 = vmatprep.subr.mxu0 0.0
    %8289 = vmatpush1.xpose.msra.mxu0 0.0
    %8290 = vmatprep.subr.mxu0 0.0
    %8291 = vmatpush1.xpose.msra.mxu0 0.0
    %8292 = vmatprep.subr.mxu0 0.0
    %8293 = vmatpush1.xpose.msra.mxu0 0.0
    %8294 = vmatprep.subr.mxu0 0.0
    %8295 = vmatpush1.xpose.msra.mxu0 0.0
    %8296 = vmatprep.subr.mxu0 0.0
    %8297 = vmatpush1.xpose.msra.mxu0 0.0
    %8298 = vmatprep.subr.mxu0 0.0
    %8299 = vmatpush1.xpose.msra.mxu0 0.0
    %8300 = vmatprep.subr.mxu0 0.0
    %8301 = vmatpush1.xpose.msra.mxu0 %v8270
    %8302 = vmatprep.subr.mxu0 0.0
    %8303 = vmatpush1.xpose.msra.mxu0 %v8268
    %8304 = vmatprep.subr.mxu0 0.0
    %8305 = vmatpush2.xpose.msra.mxu0 0.0
    %8306 = vmatprep.subr.mxu0 0.0
    %8307 = vmatpush2.xpose.msra.mxu0 0.0
    %8308 = vmatprep.subr.mxu0 0.0
    %8309 = vmatpush2.xpose.msra.mxu0 0.0
    %8310 = vmatprep.subr.mxu0 0.0
    %8311 = vmatpush2.xpose.msra.mxu0 0.0
    %8312 = vmatprep.subr.mxu0 0.0
    %8313 = vmatpush2.xpose.msra.mxu0 0.0
    %8314 = vmatprep.subr.mxu0 0.0
    %8315 = vmatpush2.xpose.msra.mxu0 0.0
    %8316 = vmatprep.subr.mxu0 0.0
    %8317 = vmatpush2.xpose.msra.mxu0 0.0
    %8318 = vmatprep.subr.mxu0 0.0
    %8319 = vmatpush2.xpose.msra.mxu0 0.0
    %8320 = vmatprep.subr.mxu0 0.0
    %8321 = vmatpush2.xpose.msra.mxu0 0.0
    %8322 = vmatprep.subr.mxu0 0.0
    %8323 = vmatpush2.xpose.msra.mxu0 0.0
    %8324 = vmatprep.subr.mxu0 0.0
    %8325 = vmatpush2.xpose.msra.mxu0 0.0
    %8326 = vmatprep.subr.mxu0 0.0
    %8327 = vmatpush2.xpose.msra.mxu0 0.0
    %8328 = vmatprep.subr.mxu0 0.0
    %8329 = vmatpush2.xpose.msra.mxu0 0.0
    %8330 = vmatprep.subr.mxu0 0.0
    %8331 = vmatpush2.xpose.msra.mxu0 0.0
    %8332 = vmatprep.subr.mxu0 0.0
    %8333 = vmatpush2.xpose.msra.mxu0 0.0
    %8334 = vmatprep.subr.mxu0 0.0
    %8335 = vmatpush2.xpose.msra.mxu0 0.0
    %8336 = vmatprep.mubr.f32.mxu0 0.0
    %8337 = vmatmul.mubr.f32.gmra.mxu0 %v8264
    %v8338 = vpop.f32.mrf.mxu0
    %v8339 = vadd.f32 0.0, %v8338
    %v8340 = vpop.f32.mrf.mxu0
    %8341 = vmatprep.mubr.f32.mxu0 0.0
    %8342 = vmatmul.mubr.f32.gmra.mxu0 %v8266
    %v8343 = vpop.f32.mrf.mxu0
    %v8344 = vadd.f32 0.0, %v8343
    %v8345 = vpop.f32.mrf.mxu0
    %8346 = vdwg.mxu0
    %v8347 = vmul.f32 %v8339, 0.35355338
    %v8348 = vmul.f32 %v8344, 0.35355338
    %v8349 = vsel %vm4800, %v8347, -inf
    %8350 = vmax.xlane.f32.xlu0 %v8349
    %v8351 = vpop.xlane.xlu0 %8350
    %v8352 = vsel %vm4804, %v8348, -inf
    %8353 = vmax.xlane.f32.xlu0 %v8352
    %v8354 = vpop.xlane.xlu0 %8353
    %v8355 = vsub.f32 %v8347, %v8351
    %v8356 = vsub.f32 %v8348, %v8354
    %v8357 = vmul.f32 %v8355, 1.442695
    %v8358 = vpow.pop %v8357
    %v8359 = vmul.f32 %v8356, 1.442695
    %v8360 = vpow.pop %v8359
    %v8361 = vsel %vm4800, %v8358, 0.0
    %8362 = vadd.xlane.f32.xlu0 %v8361
    %v8363 = vpop.xlane.xlu0 %8362
    %v8364 = vsel %vm4804, %v8360, 0.0
    %8365 = vadd.xlane.f32.xlu0 %v8364
    %v8366 = vpop.xlane.xlu0 %8365
    %v8367 = vrcp.pop %v8363
    %v8368 = vrcp.pop %v8366
    %v8369 = vmul.f32 %v8358, %v8367
    %v8370 = vmul.f32 %v8360, %v8368
    %8372 = vrot.lane.b32.xlu0 %v8044, 120
    %v8373 = vpop.permute.xlu0 %8372
    %8374 = vrot.lane.b32.xlu0 %v8049, 120
    %v8375 = vpop.permute.xlu0 %8374
    %v8378 = vsel %vm4800, %v8369, 0
    %v8381 = vsel %vm4800, %v8370, 0
    %v8383 = vsel %vm2956, %v8375, 0
    %8385 = vmatprep.subr.mxu0 0.0
    %8386 = vmatpush1.msra.mxu0 0.0
    %8387 = vmatprep.subr.mxu0 0.0
    %8388 = vmatpush1.msra.mxu0 0.0
    %8389 = vmatprep.subr.mxu0 0.0
    %8390 = vmatpush1.msra.mxu0 0.0
    %8391 = vmatprep.subr.mxu0 0.0
    %8392 = vmatpush1.msra.mxu0 0.0
    %8393 = vmatprep.subr.mxu0 0.0
    %8394 = vmatpush1.msra.mxu0 0.0
    %8395 = vmatprep.subr.mxu0 0.0
    %8396 = vmatpush1.msra.mxu0 0.0
    %8397 = vmatprep.subr.mxu0 0.0
    %8398 = vmatpush1.msra.mxu0 0.0
    %8399 = vmatprep.subr.mxu0 0.0
    %8400 = vmatpush1.msra.mxu0 0.0
    %8401 = vmatprep.subr.mxu0 0.0
    %8402 = vmatpush1.msra.mxu0 0.0
    %8403 = vmatprep.subr.mxu0 0.0
    %8404 = vmatpush1.msra.mxu0 0.0
    %8405 = vmatprep.subr.mxu0 0.0
    %8406 = vmatpush1.msra.mxu0 0.0
    %8407 = vmatprep.subr.mxu0 0.0
    %8408 = vmatpush1.msra.mxu0 0.0
    %8409 = vmatprep.subr.mxu0 0.0
    %8410 = vmatpush1.msra.mxu0 0.0
    %8411 = vmatprep.subr.mxu0 0.0
    %8412 = vmatpush1.msra.mxu0 0.0
    %8413 = vmatprep.subr.mxu0 0.0
    %8414 = vmatpush1.msra.mxu0 %v8383
    %8415 = vmatprep.subr.mxu0 0.0
    %8416 = vmatpush1.msra.mxu0 %v8373
    %8417 = vmatprep.subr.mxu0 0.0
    %8418 = vmatpush2.msra.mxu0 0.0
    %8419 = vmatprep.subr.mxu0 0.0
    %8420 = vmatpush2.msra.mxu0 0.0
    %8421 = vmatprep.subr.mxu0 0.0
    %8422 = vmatpush2.msra.mxu0 0.0
    %8423 = vmatprep.subr.mxu0 0.0
    %8424 = vmatpush2.msra.mxu0 0.0
    %8425 = vmatprep.subr.mxu0 0.0
    %8426 = vmatpush2.msra.mxu0 0.0
    %8427 = vmatprep.subr.mxu0 0.0
    %8428 = vmatpush2.msra.mxu0 0.0
    %8429 = vmatprep.subr.mxu0 0.0
    %8430 = vmatpush2.msra.mxu0 0.0
    %8431 = vmatprep.subr.mxu0 0.0
    %8432 = vmatpush2.msra.mxu0 0.0
    %8433 = vmatprep.subr.mxu0 0.0
    %8434 = vmatpush2.msra.mxu0 0.0
    %8435 = vmatprep.subr.mxu0 0.0
    %8436 = vmatpush2.msra.mxu0 0.0
    %8437 = vmatprep.subr.mxu0 0.0
    %8438 = vmatpush2.msra.mxu0 0.0
    %8439 = vmatprep.subr.mxu0 0.0
    %8440 = vmatpush2.msra.mxu0 0.0
    %8441 = vmatprep.subr.mxu0 0.0
    %8442 = vmatpush2.msra.mxu0 0.0
    %8443 = vmatprep.subr.mxu0 0.0
    %8444 = vmatpush2.msra.mxu0 0.0
    %8445 = vmatprep.subr.mxu0 0.0
    %8446 = vmatpush2.msra.mxu0 0.0
    %8447 = vmatprep.subr.mxu0 0.0
    %8448 = vmatpush2.msra.mxu0 0.0
    %8449 = vmatprep.mubr.f32.mxu0 0.0
    %8450 = vmatmul.mubr.f32.gmra.mxu0 %v8378
    %v8451 = vpop.f32.mrf.mxu0
    %v8452 = vadd.f32 0.0, %v8451
    %v8453 = vpop.f32.mrf.mxu0
    %8454 = vmatprep.mubr.f32.mxu0 0.0
    %8455 = vmatmul.mubr.f32.gmra.mxu0 %v8381
    %v8456 = vpop.f32.mrf.mxu0
    %v8457 = vadd.f32 0.0, %v8456
    %v8458 = vpop.f32.mrf.mxu0
    %8459 = vdwg.mxu0
    %8460 = vrot.lane.b32.xlu0 %v7950, 112
    %v8461 = vpop.permute.xlu0 %8460
    %8462 = vrot.lane.b32.xlu0 %v7955, 112
    %v8463 = vpop.permute.xlu0 %8462
    %8464 = vrot.lane.b32.xlu0 %v7950, 80
    %v8465 = vpop.permute.xlu0 %8464
    %8466 = vrot.lane.b32.xlu0 %v7955, 80
    %v8467 = vpop.permute.xlu0 %8466
    %v8468 = vsel %vm3403, %v8461, 0
    %v8470 = vsel %vm3403, %v8463, 0
    %v8472 = vsel %vm3403, %v8465, 0
    %v8474 = vsel %vm3403, %v8467, 0
    %8476 = vmatprep.subr.mxu0 0.0
    %8477 = vmatpush1.xpose.msra.mxu0 0.0
    %8478 = vmatprep.subr.mxu0 0.0
    %8479 = vmatpush1.xpose.msra.mxu0 0.0
    %8480 = vmatprep.subr.mxu0 0.0
    %8481 = vmatpush1.xpose.msra.mxu0 0.0
    %8482 = vmatprep.subr.mxu0 0.0
    %8483 = vmatpush1.xpose.msra.mxu0 0.0
    %8484 = vmatprep.subr.mxu0 0.0
    %8485 = vmatpush1.xpose.msra.mxu0 0.0
    %8486 = vmatprep.subr.mxu0 0.0
    %8487 = vmatpush1.xpose.msra.mxu0 0.0
    %8488 = vmatprep.subr.mxu0 0.0
    %8489 = vmatpush1.xpose.msra.mxu0 0.0
    %8490 = vmatprep.subr.mxu0 0.0
    %8491 = vmatpush1.xpose.msra.mxu0 0.0
    %8492 = vmatprep.subr.mxu0 0.0
    %8493 = vmatpush1.xpose.msra.mxu0 0.0
    %8494 = vmatprep.subr.mxu0 0.0
    %8495 = vmatpush1.xpose.msra.mxu0 0.0
    %8496 = vmatprep.subr.mxu0 0.0
    %8497 = vmatpush1.xpose.msra.mxu0 0.0
    %8498 = vmatprep.subr.mxu0 0.0
    %8499 = vmatpush1.xpose.msra.mxu0 0.0
    %8500 = vmatprep.subr.mxu0 0.0
    %8501 = vmatpush1.xpose.msra.mxu0 0.0
    %8502 = vmatprep.subr.mxu0 0.0
    %8503 = vmatpush1.xpose.msra.mxu0 0.0
    %8504 = vmatprep.subr.mxu0 0.0
    %8505 = vmatpush1.xpose.msra.mxu0 %v8474
    %8506 = vmatprep.subr.mxu0 0.0
    %8507 = vmatpush1.xpose.msra.mxu0 %v8472
    %8508 = vmatprep.subr.mxu0 0.0
    %8509 = vmatpush2.xpose.msra.mxu0 0.0
    %8510 = vmatprep.subr.mxu0 0.0
    %8511 = vmatpush2.xpose.msra.mxu0 0.0
    %8512 = vmatprep.subr.mxu0 0.0
    %8513 = vmatpush2.xpose.msra.mxu0 0.0
    %8514 = vmatprep.subr.mxu0 0.0
    %8515 = vmatpush2.xpose.msra.mxu0 0.0
    %8516 = vmatprep.subr.mxu0 0.0
    %8517 = vmatpush2.xpose.msra.mxu0 0.0
    %8518 = vmatprep.subr.mxu0 0.0
    %8519 = vmatpush2.xpose.msra.mxu0 0.0
    %8520 = vmatprep.subr.mxu0 0.0
    %8521 = vmatpush2.xpose.msra.mxu0 0.0
    %8522 = vmatprep.subr.mxu0 0.0
    %8523 = vmatpush2.xpose.msra.mxu0 0.0
    %8524 = vmatprep.subr.mxu0 0.0
    %8525 = vmatpush2.xpose.msra.mxu0 0.0
    %8526 = vmatprep.subr.mxu0 0.0
    %8527 = vmatpush2.xpose.msra.mxu0 0.0
    %8528 = vmatprep.subr.mxu0 0.0
    %8529 = vmatpush2.xpose.msra.mxu0 0.0
    %8530 = vmatprep.subr.mxu0 0.0
    %8531 = vmatpush2.xpose.msra.mxu0 0.0
    %8532 = vmatprep.subr.mxu0 0.0
    %8533 = vmatpush2.xpose.msra.mxu0 0.0
    %8534 = vmatprep.subr.mxu0 0.0
    %8535 = vmatpush2.xpose.msra.mxu0 0.0
    %8536 = vmatprep.subr.mxu0 0.0
    %8537 = vmatpush2.xpose.msra.mxu0 0.0
    %8538 = vmatprep.subr.mxu0 0.0
    %8539 = vmatpush2.xpose.msra.mxu0 0.0
    %8540 = vmatprep.mubr.f32.mxu0 0.0
    %8541 = vmatmul.mubr.f32.gmra.mxu0 %v8468
    %v8542 = vpop.f32.mrf.mxu0
    %v8543 = vadd.f32 0.0, %v8542
    %v8544 = vpop.f32.mrf.mxu0
    %8545 = vmatprep.mubr.f32.mxu0 0.0
    %8546 = vmatmul.mubr.f32.gmra.mxu0 %v8470
    %v8547 = vpop.f32.mrf.mxu0
    %v8548 = vadd.f32 0.0, %v8547
    %v8549 = vpop.f32.mrf.mxu0
    %8550 = vdwg.mxu0
    %v8551 = vmul.f32 %v8543, 0.35355338
    %v8552 = vmul.f32 %v8548, 0.35355338
    %v8553 = vsel %vm4800, %v8551, -inf
    %8554 = vmax.xlane.f32.xlu0 %v8553
    %v8555 = vpop.xlane.xlu0 %8554
    %v8556 = vsel %vm4804, %v8552, -inf
    %8557 = vmax.xlane.f32.xlu0 %v8556
    %v8558 = vpop.xlane.xlu0 %8557
    %v8559 = vsub.f32 %v8551, %v8555
    %v8560 = vsub.f32 %v8552, %v8558
    %v8561 = vmul.f32 %v8559, 1.442695
    %v8562 = vpow.pop %v8561
    %v8563 = vmul.f32 %v8560, 1.442695
    %v8564 = vpow.pop %v8563
    %v8565 = vsel %vm4800, %v8562, 0.0
    %8566 = vadd.xlane.f32.xlu0 %v8565
    %v8567 = vpop.xlane.xlu0 %8566
    %v8568 = vsel %vm4804, %v8564, 0.0
    %8569 = vadd.xlane.f32.xlu0 %v8568
    %v8570 = vpop.xlane.xlu0 %8569
    %v8571 = vrcp.pop %v8567
    %v8572 = vrcp.pop %v8570
    %v8573 = vmul.f32 %v8562, %v8571
    %v8574 = vmul.f32 %v8564, %v8572
    %8575 = vrot.lane.b32.xlu0 %v8044, 112
    %v8576 = vpop.permute.xlu0 %8575
    %8577 = vrot.lane.b32.xlu0 %v8049, 112
    %v8578 = vpop.permute.xlu0 %8577
    %v8581 = vsel %vm4800, %v8573, 0
    %v8584 = vsel %vm4800, %v8574, 0
    %v8586 = vsel %vm2956, %v8578, 0
    %8588 = vmatprep.subr.mxu0 0.0
    %8589 = vmatpush1.msra.mxu0 0.0
    %8590 = vmatprep.subr.mxu0 0.0
    %8591 = vmatpush1.msra.mxu0 0.0
    %8592 = vmatprep.subr.mxu0 0.0
    %8593 = vmatpush1.msra.mxu0 0.0
    %8594 = vmatprep.subr.mxu0 0.0
    %8595 = vmatpush1.msra.mxu0 0.0
    %8596 = vmatprep.subr.mxu0 0.0
    %8597 = vmatpush1.msra.mxu0 0.0
    %8598 = vmatprep.subr.mxu0 0.0
    %8599 = vmatpush1.msra.mxu0 0.0
    %8600 = vmatprep.subr.mxu0 0.0
    %8601 = vmatpush1.msra.mxu0 0.0
    %8602 = vmatprep.subr.mxu0 0.0
    %8603 = vmatpush1.msra.mxu0 0.0
    %8604 = vmatprep.subr.mxu0 0.0
    %8605 = vmatpush1.msra.mxu0 0.0
    %8606 = vmatprep.subr.mxu0 0.0
    %8607 = vmatpush1.msra.mxu0 0.0
    %8608 = vmatprep.subr.mxu0 0.0
    %8609 = vmatpush1.msra.mxu0 0.0
    %8610 = vmatprep.subr.mxu0 0.0
    %8611 = vmatpush1.msra.mxu0 0.0
    %8612 = vmatprep.subr.mxu0 0.0
    %8613 = vmatpush1.msra.mxu0 0.0
    %8614 = vmatprep.subr.mxu0 0.0
    %8615 = vmatpush1.msra.mxu0 0.0
    %8616 = vmatprep.subr.mxu0 0.0
    %8617 = vmatpush1.msra.mxu0 %v8586
    %8618 = vmatprep.subr.mxu0 0.0
    %8619 = vmatpush1.msra.mxu0 %v8576
    %8620 = vmatprep.subr.mxu0 0.0
    %8621 = vmatpush2.msra.mxu0 0.0
    %8622 = vmatprep.subr.mxu0 0.0
    %8623 = vmatpush2.msra.mxu0 0.0
    %8624 = vmatprep.subr.mxu0 0.0
    %8625 = vmatpush2.msra.mxu0 0.0
    %8626 = vmatprep.subr.mxu0 0.0
    %8627 = vmatpush2.msra.mxu0 0.0
    %8628 = vmatprep.subr.mxu0 0.0
    %8629 = vmatpush2.msra.mxu0 0.0
    %8630 = vmatprep.subr.mxu0 0.0
    %8631 = vmatpush2.msra.mxu0 0.0
    %8632 = vmatprep.subr.mxu0 0.0
    %8633 = vmatpush2.msra.mxu0 0.0
    %8634 = vmatprep.subr.mxu0 0.0
    %8635 = vmatpush2.msra.mxu0 0.0
    %8636 = vmatprep.subr.mxu0 0.0
    %8637 = vmatpush2.msra.mxu0 0.0
    %8638 = vmatprep.subr.mxu0 0.0
    %8639 = vmatpush2.msra.mxu0 0.0
    %8640 = vmatprep.subr.mxu0 0.0
    %8641 = vmatpush2.msra.mxu0 0.0
    %8642 = vmatprep.subr.mxu0 0.0
    %8643 = vmatpush2.msra.mxu0 0.0
    %8644 = vmatprep.subr.mxu0 0.0
    %8645 = vmatpush2.msra.mxu0 0.0
    %8646 = vmatprep.subr.mxu0 0.0
    %8647 = vmatpush2.msra.mxu0 0.0
    %8648 = vmatprep.subr.mxu0 0.0
    %8649 = vmatpush2.msra.mxu0 0.0
    %8650 = vmatprep.subr.mxu0 0.0
    %8651 = vmatpush2.msra.mxu0 0.0
    %8652 = vmatprep.mubr.f32.mxu0 0.0
    %8653 = vmatmul.mubr.f32.gmra.mxu0 %v8581
    %v8654 = vpop.f32.mrf.mxu0
    %v8655 = vadd.f32 0.0, %v8654
    %v8656 = vpop.f32.mrf.mxu0
    %8657 = vmatprep.mubr.f32.mxu0 0.0
    %8658 = vmatmul.mubr.f32.gmra.mxu0 %v8584
    %v8659 = vpop.f32.mrf.mxu0
    %v8660 = vadd.f32 0.0, %v8659
    %v8661 = vpop.f32.mrf.mxu0
    %8662 = vdwg.mxu0
    %8663 = vrot.lane.b32.xlu0 %v7950, 104
    %v8664 = vpop.permute.xlu0 %8663
    %8665 = vrot.lane.b32.xlu0 %v7955, 104
    %v8666 = vpop.permute.xlu0 %8665
    %8667 = vrot.lane.b32.xlu0 %v7950, 72
    %v8668 = vpop.permute.xlu0 %8667
    %8669 = vrot.lane.b32.xlu0 %v7955, 72
    %v8670 = vpop.permute.xlu0 %8669
    %v8671 = vsel %vm3403, %v8664, 0
    %v8673 = vsel %vm3403, %v8666, 0
    %v8675 = vsel %vm3403, %v8668, 0
    %v8677 = vsel %vm3403, %v8670, 0
    %8679 = vmatprep.subr.mxu0 0.0
    %8680 = vmatpush1.xpose.msra.mxu0 0.0
    %8681 = vmatprep.subr.mxu0 0.0
    %8682 = vmatpush1.xpose.msra.mxu0 0.0
    %8683 = vmatprep.subr.mxu0 0.0
    %8684 = vmatpush1.xpose.msra.mxu0 0.0
    %8685 = vmatprep.subr.mxu0 0.0
    %8686 = vmatpush1.xpose.msra.mxu0 0.0
    %8687 = vmatprep.subr.mxu0 0.0
    %8688 = vmatpush1.xpose.msra.mxu0 0.0
    %8689 = vmatprep.subr.mxu0 0.0
    %8690 = vmatpush1.xpose.msra.mxu0 0.0
    %8691 = vmatprep.subr.mxu0 0.0
    %8692 = vmatpush1.xpose.msra.mxu0 0.0
    %8693 = vmatprep.subr.mxu0 0.0
    %8694 = vmatpush1.xpose.msra.mxu0 0.0
    %8695 = vmatprep.subr.mxu0 0.0
    %8696 = vmatpush1.xpose.msra.mxu0 0.0
    %8697 = vmatprep.subr.mxu0 0.0
    %8698 = vmatpush1.xpose.msra.mxu0 0.0
    %8699 = vmatprep.subr.mxu0 0.0
    %8700 = vmatpush1.xpose.msra.mxu0 0.0
    %8701 = vmatprep.subr.mxu0 0.0
    %8702 = vmatpush1.xpose.msra.mxu0 0.0
    %8703 = vmatprep.subr.mxu0 0.0
    %8704 = vmatpush1.xpose.msra.mxu0 0.0
    %8705 = vmatprep.subr.mxu0 0.0
    %8706 = vmatpush1.xpose.msra.mxu0 0.0
    %8707 = vmatprep.subr.mxu0 0.0
    %8708 = vmatpush1.xpose.msra.mxu0 %v8677
    %8709 = vmatprep.subr.mxu0 0.0
    %8710 = vmatpush1.xpose.msra.mxu0 %v8675
    %8711 = vmatprep.subr.mxu0 0.0
    %8712 = vmatpush2.xpose.msra.mxu0 0.0
    %8713 = vmatprep.subr.mxu0 0.0
    %8714 = vmatpush2.xpose.msra.mxu0 0.0
    %8715 = vmatprep.subr.mxu0 0.0
    %8716 = vmatpush2.xpose.msra.mxu0 0.0
    %8717 = vmatprep.subr.mxu0 0.0
    %8718 = vmatpush2.xpose.msra.mxu0 0.0
    %8719 = vmatprep.subr.mxu0 0.0
    %8720 = vmatpush2.xpose.msra.mxu0 0.0
    %8721 = vmatprep.subr.mxu0 0.0
    %8722 = vmatpush2.xpose.msra.mxu0 0.0
    %8723 = vmatprep.subr.mxu0 0.0
    %8724 = vmatpush2.xpose.msra.mxu0 0.0
    %8725 = vmatprep.subr.mxu0 0.0
    %8726 = vmatpush2.xpose.msra.mxu0 0.0
    %8727 = vmatprep.subr.mxu0 0.0
    %8728 = vmatpush2.xpose.msra.mxu0 0.0
    %8729 = vmatprep.subr.mxu0 0.0
    %8730 = vmatpush2.xpose.msra.mxu0 0.0
    %8731 = vmatprep.subr.mxu0 0.0
    %8732 = vmatpush2.xpose.msra.mxu0 0.0
    %8733 = vmatprep.subr.mxu0 0.0
    %8734 = vmatpush2.xpose.msra.mxu0 0.0
    %8735 = vmatprep.subr.mxu0 0.0
    %8736 = vmatpush2.xpose.msra.mxu0 0.0
    %8737 = vmatprep.subr.mxu0 0.0
    %8738 = vmatpush2.xpose.msra.mxu0 0.0
    %8739 = vmatprep.subr.mxu0 0.0
    %8740 = vmatpush2.xpose.msra.mxu0 0.0
    %8741 = vmatprep.subr.mxu0 0.0
    %8742 = vmatpush2.xpose.msra.mxu0 0.0
    %8743 = vmatprep.mubr.f32.mxu0 0.0
    %8744 = vmatmul.mubr.f32.gmra.mxu0 %v8671
    %v8745 = vpop.f32.mrf.mxu0
    %v8746 = vadd.f32 0.0, %v8745
    %v8747 = vpop.f32.mrf.mxu0
    %8748 = vmatprep.mubr.f32.mxu0 0.0
    %8749 = vmatmul.mubr.f32.gmra.mxu0 %v8673
    %v8750 = vpop.f32.mrf.mxu0
    %v8751 = vadd.f32 0.0, %v8750
    %v8752 = vpop.f32.mrf.mxu0
    %8753 = vdwg.mxu0
    %v8754 = vmul.f32 %v8746, 0.35355338
    %v8755 = vmul.f32 %v8751, 0.35355338
    %v8756 = vsel %vm4800, %v8754, -inf
    %8757 = vmax.xlane.f32.xlu0 %v8756
    %v8758 = vpop.xlane.xlu0 %8757
    %v8759 = vsel %vm4804, %v8755, -inf
    %8760 = vmax.xlane.f32.xlu0 %v8759
    %v8761 = vpop.xlane.xlu0 %8760
    %v8762 = vsub.f32 %v8754, %v8758
    %v8763 = vsub.f32 %v8755, %v8761
    %v8764 = vmul.f32 %v8762, 1.442695
    %v8765 = vpow.pop %v8764
    %v8766 = vmul.f32 %v8763, 1.442695
    %v8767 = vpow.pop %v8766
    %v8768 = vsel %vm4800, %v8765, 0.0
    %8769 = vadd.xlane.f32.xlu0 %v8768
    %v8770 = vpop.xlane.xlu0 %8769
    %v8771 = vsel %vm4804, %v8767, 0.0
    %8772 = vadd.xlane.f32.xlu0 %v8771
    %v8773 = vpop.xlane.xlu0 %8772
    %v8774 = vrcp.pop %v8770
    %v8775 = vrcp.pop %v8773
    %v8776 = vmul.f32 %v8765, %v8774
    %v8777 = vmul.f32 %v8767, %v8775
    %8778 = vrot.lane.b32.xlu0 %v8044, 104
    %v8779 = vpop.permute.xlu0 %8778
    %8780 = vrot.lane.b32.xlu0 %v8049, 104
    %v8781 = vpop.permute.xlu0 %8780
    %v8784 = vsel %vm4800, %v8776, 0
    %v8787 = vsel %vm4800, %v8777, 0
    %v8789 = vsel %vm2956, %v8781, 0
    %8791 = vmatprep.subr.mxu0 0.0
    %8792 = vmatpush1.msra.mxu0 0.0
    %8793 = vmatprep.subr.mxu0 0.0
    %8794 = vmatpush1.msra.mxu0 0.0
    %8795 = vmatprep.subr.mxu0 0.0
    %8796 = vmatpush1.msra.mxu0 0.0
    %8797 = vmatprep.subr.mxu0 0.0
    %8798 = vmatpush1.msra.mxu0 0.0
    %8799 = vmatprep.subr.mxu0 0.0
    %8800 = vmatpush1.msra.mxu0 0.0
    %8801 = vmatprep.subr.mxu0 0.0
    %8802 = vmatpush1.msra.mxu0 0.0
    %8803 = vmatprep.subr.mxu0 0.0
    %8804 = vmatpush1.msra.mxu0 0.0
    %8805 = vmatprep.subr.mxu0 0.0
    %8806 = vmatpush1.msra.mxu0 0.0
    %8807 = vmatprep.subr.mxu0 0.0
    %8808 = vmatpush1.msra.mxu0 0.0
    %8809 = vmatprep.subr.mxu0 0.0
    %8810 = vmatpush1.msra.mxu0 0.0
    %8811 = vmatprep.subr.mxu0 0.0
    %8812 = vmatpush1.msra.mxu0 0.0
    %8813 = vmatprep.subr.mxu0 0.0
    %8814 = vmatpush1.msra.mxu0 0.0
    %8815 = vmatprep.subr.mxu0 0.0
    %8816 = vmatpush1.msra.mxu0 0.0
    %8817 = vmatprep.subr.mxu0 0.0
    %8818 = vmatpush1.msra.mxu0 0.0
    %8819 = vmatprep.subr.mxu0 0.0
    %8820 = vmatpush1.msra.mxu0 %v8789
    %8821 = vmatprep.subr.mxu0 0.0
    %8822 = vmatpush1.msra.mxu0 %v8779
    %8823 = vmatprep.subr.mxu0 0.0
    %8824 = vmatpush2.msra.mxu0 0.0
    %8825 = vmatprep.subr.mxu0 0.0
    %8826 = vmatpush2.msra.mxu0 0.0
    %8827 = vmatprep.subr.mxu0 0.0
    %8828 = vmatpush2.msra.mxu0 0.0
    %8829 = vmatprep.subr.mxu0 0.0
    %8830 = vmatpush2.msra.mxu0 0.0
    %8831 = vmatprep.subr.mxu0 0.0
    %8832 = vmatpush2.msra.mxu0 0.0
    %8833 = vmatprep.subr.mxu0 0.0
    %8834 = vmatpush2.msra.mxu0 0.0
    %8835 = vmatprep.subr.mxu0 0.0
    %8836 = vmatpush2.msra.mxu0 0.0
    %8837 = vmatprep.subr.mxu0 0.0
    %8838 = vmatpush2.msra.mxu0 0.0
    %8839 = vmatprep.subr.mxu0 0.0
    %8840 = vmatpush2.msra.mxu0 0.0
    %8841 = vmatprep.subr.mxu0 0.0
    %8842 = vmatpush2.msra.mxu0 0.0
    %8843 = vmatprep.subr.mxu0 0.0
    %8844 = vmatpush2.msra.mxu0 0.0
    %8845 = vmatprep.subr.mxu0 0.0
    %8846 = vmatpush2.msra.mxu0 0.0
    %8847 = vmatprep.subr.mxu0 0.0
    %8848 = vmatpush2.msra.mxu0 0.0
    %8849 = vmatprep.subr.mxu0 0.0
    %8850 = vmatpush2.msra.mxu0 0.0
    %8851 = vmatprep.subr.mxu0 0.0
    %8852 = vmatpush2.msra.mxu0 0.0
    %8853 = vmatprep.subr.mxu0 0.0
    %8854 = vmatpush2.msra.mxu0 0.0
    %8855 = vmatprep.mubr.f32.mxu0 0.0
    %8856 = vmatmul.mubr.f32.gmra.mxu0 %v8784
    %v8857 = vpop.f32.mrf.mxu0
    %v8858 = vadd.f32 0.0, %v8857
    %v8859 = vpop.f32.mrf.mxu0
    %8860 = vmatprep.mubr.f32.mxu0 0.0
    %8861 = vmatmul.mubr.f32.gmra.mxu0 %v8787
    %v8862 = vpop.f32.mrf.mxu0
    %v8863 = vadd.f32 0.0, %v8862
    %v8864 = vpop.f32.mrf.mxu0
    %8865 = vdwg.mxu0
    %8868 = vrot.lane.b32.xlu0 %v8452, 8
    %v8869 = vpop.permute.xlu0 %8868
    %8870 = vrot.lane.b32.xlu0 %v8457, 8
    %v8871 = vpop.permute.xlu0 %8870
    %8876 = vrot.lane.b32.xlu0 %v8655, 16
    %v8877 = vpop.permute.xlu0 %8876
    %8878 = vrot.lane.b32.xlu0 %v8660, 16
    %v8879 = vpop.permute.xlu0 %8878
    %8884 = vrot.lane.b32.xlu0 %v8858, 24
    %v8885 = vpop.permute.xlu0 %8884
    %8886 = vrot.lane.b32.xlu0 %v8863, 24
    %v8887 = vpop.permute.xlu0 %8886
    %v8890 = vsel %vm3403, %v8248, %v8869
    %v8891 = vsel %vm3403, %v8253, %v8871
    %v8892 = vsel %vm2154, %v8890, %v8877
    %v8893 = vsel %vm2154, %v8891, %v8879
    %v8894 = vsel %vm4390, %v8892, %v8885
    %v8895 = vsel %vm4390, %v8893, %v8887
    %v8897 = vlaneseq
    %v8898 = vshrl.u32 %v8897, 7
    %v8899 = vsub.s32 0, %v8898
    %v8900 = vrot.slane %v8058, %v8899
    %v8903 = vsel %vm2450, %v8894, 0
    %v8906 = vsel %vm2450, %v8895, 0
    %8908 = vmatprep.subr.mxu0 0.0
    %8909 = vmatpush1.msra.mxu0 0.0
    %8910 = vmatprep.subr.mxu0 0.0
    %8911 = vmatpush1.msra.mxu0 0.0
    %8912 = vmatprep.subr.mxu0 0.0
    %8913 = vmatpush1.msra.mxu0 0.0
    %8914 = vmatprep.subr.mxu0 0.0
    %8915 = vmatpush1.msra.mxu0 0.0
    %8916 = vmatprep.subr.mxu0 0.0
    %8917 = vmatpush1.msra.mxu0 0.0
    %8918 = vmatprep.subr.mxu0 0.0
    %8919 = vmatpush1.msra.mxu0 0.0
    %8920 = vmatprep.subr.mxu0 0.0
    %8921 = vmatpush1.msra.mxu0 0.0
    %8922 = vmatprep.subr.mxu0 0.0
    %8923 = vmatpush1.msra.mxu0 0.0
    %8924 = vmatprep.subr.mxu0 0.0
    %8925 = vmatpush1.msra.mxu0 0.0
    %8926 = vmatprep.subr.mxu0 0.0
    %8927 = vmatpush1.msra.mxu0 0.0
    %8928 = vmatprep.subr.mxu0 0.0
    %8929 = vmatpush1.msra.mxu0 0.0
    %8930 = vmatprep.subr.mxu0 0.0
    %8931 = vmatpush1.msra.mxu0 0.0
    %8932 = vmatprep.subr.mxu0 0.0
    %8933 = vmatpush1.msra.mxu0 %v8056
    %8934 = vmatprep.subr.mxu0 0.0
    %8935 = vmatpush1.msra.mxu0 %v8055
    %8936 = vmatprep.subr.mxu0 0.0
    %8937 = vmatpush1.msra.mxu0 %v8054
    %8938 = vmatprep.subr.mxu0 0.0
    %8939 = vmatpush1.msra.mxu0 %v8053
    %8940 = vmatprep.subr.mxu0 0.0
    %8941 = vmatpush2.msra.mxu0 0.0
    %8942 = vmatprep.subr.mxu0 0.0
    %8943 = vmatpush2.msra.mxu0 0.0
    %8944 = vmatprep.subr.mxu0 0.0
    %8945 = vmatpush2.msra.mxu0 0.0
    %8946 = vmatprep.subr.mxu0 0.0
    %8947 = vmatpush2.msra.mxu0 0.0
    %8948 = vmatprep.subr.mxu0 0.0
    %8949 = vmatpush2.msra.mxu0 0.0
    %8950 = vmatprep.subr.mxu0 0.0
    %8951 = vmatpush2.msra.mxu0 0.0
    %8952 = vmatprep.subr.mxu0 0.0
    %8953 = vmatpush2.msra.mxu0 0.0
    %8954 = vmatprep.subr.mxu0 0.0
    %8955 = vmatpush2.msra.mxu0 0.0
    %8956 = vmatprep.subr.mxu0 0.0
    %8957 = vmatpush2.msra.mxu0 0.0
    %8958 = vmatprep.subr.mxu0 0.0
    %8959 = vmatpush2.msra.mxu0 0.0
    %8960 = vmatprep.subr.mxu0 0.0
    %8961 = vmatpush2.msra.mxu0 0.0
    %8962 = vmatprep.subr.mxu0 0.0
    %8963 = vmatpush2.msra.mxu0 0.0
    %8964 = vmatprep.subr.mxu0 0.0
    %8965 = vmatpush2.msra.mxu0 0.0
    %8966 = vmatprep.subr.mxu0 0.0
    %8967 = vmatpush2.msra.mxu0 0.0
    %8968 = vmatprep.subr.mxu0 0.0
    %8969 = vmatpush2.msra.mxu0 0.0
    %8970 = vmatprep.subr.mxu0 0.0
    %8971 = vmatpush2.msra.mxu0 0.0
    %8972 = vmatprep.mubr.f32.mxu0 0.0
    %8973 = vmatmul.mubr.f32.gmra.mxu0 %v8903
    %v8974 = vpop.f32.mrf.mxu0
    %v8975 = vadd.f32 %v8900, %v8974
    %v8976 = vpop.f32.mrf.mxu0
    %8977 = vmatprep.mubr.f32.mxu0 0.0
    %8978 = vmatmul.mubr.f32.gmra.mxu0 %v8906
    %v8979 = vpop.f32.mrf.mxu0
    %v8980 = vadd.f32 %v8900, %v8979
    %v8981 = vpop.f32.mrf.mxu0
    %8982 = vdwg.mxu0
    %v8983 = vadd.f32 %v7860, %v8975
    %v8984 = vadd.f32 %v7861, %v8980
    %v8985 = vsel %vm2450, %v8983, 0.0
    %8986 = vadd.xlane.f32.xlu0 %v8985
    %v8987 = vpop.xlane.xlu0 %8986
    %v8988 = vsel %vm2454, %v8984, 0.0
    %8989 = vadd.xlane.f32.xlu0 %v8988
    %v8990 = vpop.xlane.xlu0 %8989
    %v8991 = vmul.f32 %v8987, %v2458
    %v8992 = vmul.f32 %v8990, %v2458
    %v8993 = vsub.f32 %v8983, %v8991
    %v8994 = vsub.f32 %v8984, %v8992
    %v8995 = vmul.f32 %v8993, %v8993
    %v8996 = vmul.f32 %v8994, %v8994
    %v8997 = vsel %vm2450, %v8995, 0.0
    %8998 = vadd.xlane.f32.xlu0 %v8997
    %v8999 = vpop.xlane.xlu0 %8998
    %v9000 = vsel %vm2454, %v8996, 0.0
    %9001 = vadd.xlane.f32.xlu0 %v9000
    %v9002 = vpop.xlane.xlu0 %9001
    %v9003 = vmul.f32 %v8999, %v2458
    %v9004 = vmul.f32 %v9002, %v2458
    %v9005 = vadd.f32 %v9003, 1e-05
    %v9006 = vadd.f32 %v9004, 1e-05
    %v9007 = vrsqrt.pop %v9005
    %v9008 = vrsqrt.pop %v9006
    %v9009 = vmul.f32 %v8993, %v9007
    %v9010 = vmul.f32 %v8994, %v9008
    %v9011 = vlaneseq
    %v9012 = vshrl.u32 %v9011, 7
    %v9013 = vsub.s32 2, %v9012
    %v9014 = vrot.slane %v6425, %v9013
    %v9015 = vmul.f32 %v9009, %v9014
    %v9016 = vmul.f32 %v9010, %v9014
    %v9017 = vlaneseq
    %v9018 = vshrl.u32 %v9017, 7
    %v9019 = vsub.s32 3, %v9018
    %v9020 = vrot.slane %v6425, %v9019
    %v9021 = vadd.f32 %v9015, %v9020
    %v9022 = vadd.f32 %v9016, %v9020
    %s9023 = scalar_lea.vmem [#allocation19], 32
    %v9024 = vld [vmem:[%s9023] sm:$0xff]
    %v9025 = vld [vmem:[%s9023 + $0x8] sm:$0xff]
    %v9026 = vld [vmem:[%s9023 + $0x10] sm:$0xff]
    %v9027 = vld [vmem:[%s9023 + $0x18] sm:$0xff]
    %s9028 = scalar_lea.vmem [#allocation21], 1
    %v9029 = vld [vmem:[%s9028] sm:$0x1]
    %v9031 = vlaneseq
    %v9032 = vshrl.u32 %v9031, 7
    %v9033 = vsub.s32 0, %v9032
    %v9034 = vrot.slane %v9029, %v9033
    %v9037 = vsel %vm2450, %v9021, 0
    %v9040 = vsel %vm2450, %v9022, 0
    %9042 = vmatprep.subr.mxu0 0.0
    %9043 = vmatpush1.msra.mxu0 0.0
    %9044 = vmatprep.subr.mxu0 0.0
    %9045 = vmatpush1.msra.mxu0 0.0
    %9046 = vmatprep.subr.mxu0 0.0
    %9047 = vmatpush1.msra.mxu0 0.0
    %9048 = vmatprep.subr.mxu0 0.0
    %9049 = vmatpush1.msra.mxu0 0.0
    %9050 = vmatprep.subr.mxu0 0.0
    %9051 = vmatpush1.msra.mxu0 0.0
    %9052 = vmatprep.subr.mxu0 0.0
    %9053 = vmatpush1.msra.mxu0 0.0
    %9054 = vmatprep.subr.mxu0 0.0
    %9055 = vmatpush1.msra.mxu0 0.0
    %9056 = vmatprep.subr.mxu0 0.0
    %9057 = vmatpush1.msra.mxu0 0.0
    %9058 = vmatprep.subr.mxu0 0.0
    %9059 = vmatpush1.msra.mxu0 0.0
    %9060 = vmatprep.subr.mxu0 0.0
    %9061 = vmatpush1.msra.mxu0 0.0
    %9062 = vmatprep.subr.mxu0 0.0
    %9063 = vmatpush1.msra.mxu0 0.0
    %9064 = vmatprep.subr.mxu0 0.0
    %9065 = vmatpush1.msra.mxu0 0.0
    %9066 = vmatprep.subr.mxu0 0.0
    %9067 = vmatpush1.msra.mxu0 %v9027
    %9068 = vmatprep.subr.mxu0 0.0
    %9069 = vmatpush1.msra.mxu0 %v9026
    %9070 = vmatprep.subr.mxu0 0.0
    %9071 = vmatpush1.msra.mxu0 %v9025
    %9072 = vmatprep.subr.mxu0 0.0
    %9073 = vmatpush1.msra.mxu0 %v9024
    %9074 = vmatprep.subr.mxu0 0.0
    %9075 = vmatpush2.msra.mxu0 0.0
    %9076 = vmatprep.subr.mxu0 0.0
    %9077 = vmatpush2.msra.mxu0 0.0
    %9078 = vmatprep.subr.mxu0 0.0
    %9079 = vmatpush2.msra.mxu0 0.0
    %9080 = vmatprep.subr.mxu0 0.0
    %9081 = vmatpush2.msra.mxu0 0.0
    %9082 = vmatprep.subr.mxu0 0.0
    %9083 = vmatpush2.msra.mxu0 0.0
    %9084 = vmatprep.subr.mxu0 0.0
    %9085 = vmatpush2.msra.mxu0 0.0
    %9086 = vmatprep.subr.mxu0 0.0
    %9087 = vmatpush2.msra.mxu0 0.0
    %9088 = vmatprep.subr.mxu0 0.0
    %9089 = vmatpush2.msra.mxu0 0.0
    %9090 = vmatprep.subr.mxu0 0.0
    %9091 = vmatpush2.msra.mxu0 0.0
    %9092 = vmatprep.subr.mxu0 0.0
    %9093 = vmatpush2.msra.mxu0 0.0
    %9094 = vmatprep.subr.mxu0 0.0
    %9095 = vmatpush2.msra.mxu0 0.0
    %9096 = vmatprep.subr.mxu0 0.0
    %9097 = vmatpush2.msra.mxu0 0.0
    %9098 = vmatprep.subr.mxu0 0.0
    %9099 = vmatpush2.msra.mxu0 0.0
    %9100 = vmatprep.subr.mxu0 0.0
    %9101 = vmatpush2.msra.mxu0 0.0
    %9102 = vmatprep.subr.mxu0 0.0
    %9103 = vmatpush2.msra.mxu0 0.0
    %9104 = vmatprep.subr.mxu0 0.0
    %9105 = vmatpush2.msra.mxu0 0.0
    %9106 = vmatprep.mubr.f32.mxu0 0.0
    %9107 = vmatmul.mubr.f32.gmra.mxu0 %v9037
    %v9108 = vpop.f32.mrf.mxu0
    %v9109 = vadd.f32 %v9034, %v9108
    %v9110 = vpop.f32.mrf.mxu0
    %9111 = vmatprep.mubr.f32.mxu0 0.0
    %9112 = vmatmul.mubr.f32.gmra.mxu0 %v9040
    %v9113 = vpop.f32.mrf.mxu0
    %v9114 = vadd.f32 %v9034, %v9113
    %v9115 = vpop.f32.mrf.mxu0
    %9116 = vdwg.mxu0
    %v9117 = vmax.f32 %v9109, 0.0
    %v9118 = vmax.f32 %v9114, 0.0
    %s9119 = scalar_lea.vmem %s53, 64
    %v9120 = vld [vmem:[%s9119] sm:$0xff]
    %v9121 = vld [vmem:[%s9119 + $0x8] sm:$0xff]
    %v9122 = vld [vmem:[%s9119 + $0x10] sm:$0xff]
    %v9123 = vld [vmem:[%s9119 + $0x18] sm:$0xff]
    %v9124 = vld [vmem:[%s9119 + $0x20] sm:$0xff]
    %v9125 = vld [vmem:[%s9119 + $0x28] sm:$0xff]
    %v9126 = vld [vmem:[%s9119 + $0x30] sm:$0xff]
    %v9127 = vld [vmem:[%s9119 + $0x38] sm:$0xff]
    %s9128 = scalar_lea.vmem [#allocation22], 1
    %v9129 = vld [vmem:[%s9128] sm:$0x1]
    %v9131 = vlaneseq
    %v9132 = vshrl.u32 %v9131, 7
    %v9133 = vsub.s32 0, %v9132
    %v9134 = vrot.slane %v9129, %v9133
    %v9137 = vsel %vm2948, %v9117, 0
    %v9140 = vsel %vm2948, %v9118, 0
    %9142 = vmatprep.subr.mxu0 0.0
    %9143 = vmatpush1.msra.mxu0 0.0
    %9144 = vmatprep.subr.mxu0 0.0
    %9145 = vmatpush1.msra.mxu0 0.0
    %9146 = vmatprep.subr.mxu0 0.0
    %9147 = vmatpush1.msra.mxu0 0.0
    %9148 = vmatprep.subr.mxu0 0.0
    %9149 = vmatpush1.msra.mxu0 0.0
    %9150 = vmatprep.subr.mxu0 0.0
    %9151 = vmatpush1.msra.mxu0 0.0
    %9152 = vmatprep.subr.mxu0 0.0
    %9153 = vmatpush1.msra.mxu0 0.0
    %9154 = vmatprep.subr.mxu0 0.0
    %9155 = vmatpush1.msra.mxu0 0.0
    %9156 = vmatprep.subr.mxu0 0.0
    %9157 = vmatpush1.msra.mxu0 0.0
    %9158 = vmatprep.subr.mxu0 0.0
    %9159 = vmatpush1.msra.mxu0 %v9127
    %9160 = vmatprep.subr.mxu0 0.0
    %9161 = vmatpush1.msra.mxu0 %v9126
    %9162 = vmatprep.subr.mxu0 0.0
    %9163 = vmatpush1.msra.mxu0 %v9125
    %9164 = vmatprep.subr.mxu0 0.0
    %9165 = vmatpush1.msra.mxu0 %v9124
    %9166 = vmatprep.subr.mxu0 0.0
    %9167 = vmatpush1.msra.mxu0 %v9123
    %9168 = vmatprep.subr.mxu0 0.0
    %9169 = vmatpush1.msra.mxu0 %v9122
    %9170 = vmatprep.subr.mxu0 0.0
    %9171 = vmatpush1.msra.mxu0 %v9121
    %9172 = vmatprep.subr.mxu0 0.0
    %9173 = vmatpush1.msra.mxu0 %v9120
    %9174 = vmatprep.subr.mxu0 0.0
    %9175 = vmatpush2.msra.mxu0 0.0
    %9176 = vmatprep.subr.mxu0 0.0
    %9177 = vmatpush2.msra.mxu0 0.0
    %9178 = vmatprep.subr.mxu0 0.0
    %9179 = vmatpush2.msra.mxu0 0.0
    %9180 = vmatprep.subr.mxu0 0.0
    %9181 = vmatpush2.msra.mxu0 0.0
    %9182 = vmatprep.subr.mxu0 0.0
    %9183 = vmatpush2.msra.mxu0 0.0
    %9184 = vmatprep.subr.mxu0 0.0
    %9185 = vmatpush2.msra.mxu0 0.0
    %9186 = vmatprep.subr.mxu0 0.0
    %9187 = vmatpush2.msra.mxu0 0.0
    %9188 = vmatprep.subr.mxu0 0.0
    %9189 = vmatpush2.msra.mxu0 0.0
    %9190 = vmatprep.subr.mxu0 0.0
    %9191 = vmatpush2.msra.mxu0 0.0
    %9192 = vmatprep.subr.mxu0 0.0
    %9193 = vmatpush2.msra.mxu0 0.0
    %9194 = vmatprep.subr.mxu0 0.0
    %9195 = vmatpush2.msra.mxu0 0.0
    %9196 = vmatprep.subr.mxu0 0.0
    %9197 = vmatpush2.msra.mxu0 0.0
    %9198 = vmatprep.subr.mxu0 0.0
    %9199 = vmatpush2.msra.mxu0 0.0
    %9200 = vmatprep.subr.mxu0 0.0
    %9201 = vmatpush2.msra.mxu0 0.0
    %9202 = vmatprep.subr.mxu0 0.0
    %9203 = vmatpush2.msra.mxu0 0.0
    %9204 = vmatprep.subr.mxu0 0.0
    %9205 = vmatpush2.msra.mxu0 0.0
    %9206 = vmatprep.mubr.f32.mxu0 0.0
    %9207 = vmatmul.mubr.f32.gmra.mxu0 %v9137
    %v9208 = vpop.f32.mrf.mxu0
    %v9209 = vadd.f32 %v9134, %v9208
    %v9210 = vpop.f32.mrf.mxu0
    %9211 = vmatprep.mubr.f32.mxu0 0.0
    %9212 = vmatmul.mubr.f32.gmra.mxu0 %v9140
    %v9213 = vpop.f32.mrf.mxu0
    %v9214 = vadd.f32 %v9134, %v9213
    %v9215 = vpop.f32.mrf.mxu0
    %9216 = vdwg.mxu0
    %v9217 = vadd.f32 %v9021, %v9209
    %v9218 = vadd.f32 %v9022, %v9214
    %v9219 = vsel %vm2450, %v9217, 0.0
    %9220 = vadd.xlane.f32.xlu0 %v9219
    %v9221 = vpop.xlane.xlu0 %9220
    %v9222 = vsel %vm2454, %v9218, 0.0
    %9223 = vadd.xlane.f32.xlu0 %v9222
    %v9224 = vpop.xlane.xlu0 %9223
    %v9225 = vmul.f32 %v9221, %v2458
    %v9226 = vmul.f32 %v9224, %v2458
    %v9227 = vsub.f32 %v9217, %v9225
    %v9228 = vsub.f32 %v9218, %v9226
    %v9229 = vmul.f32 %v9227, %v9227
    %v9230 = vmul.f32 %v9228, %v9228
    %v9231 = vsel %vm2450, %v9229, 0.0
    %9232 = vadd.xlane.f32.xlu0 %v9231
    %v9233 = vpop.xlane.xlu0 %9232
    %v9234 = vsel %vm2454, %v9230, 0.0
    %9235 = vadd.xlane.f32.xlu0 %v9234
    %v9236 = vpop.xlane.xlu0 %9235
    %v9237 = vmul.f32 %v9233, %v2458
    %v9238 = vmul.f32 %v9236, %v2458
    %v9239 = vadd.f32 %v9237, 1e-05
    %v9240 = vadd.f32 %v9238, 1e-05
    %v9241 = vrsqrt.pop %v9239
    %v9242 = vrsqrt.pop %v9240
    %v9243 = vmul.f32 %v9227, %v9241
    %v9244 = vmul.f32 %v9228, %v9242
    %v9245 = vlaneseq
    %v9246 = vshrl.u32 %v9245, 7
    %v9247 = vsub.s32 4, %v9246
    %v9248 = vrot.slane %v6425, %v9247
    %v9249 = vmul.f32 %v9243, %v9248
    %v9250 = vmul.f32 %v9244, %v9248
    %v9251 = vlaneseq
    %v9252 = vshrl.u32 %v9251, 7
    %v9253 = vsub.s32 5, %v9252
    %v9254 = vrot.slane %v6425, %v9253
    %v9255 = vadd.f32 %v9249, %v9254
    %v9256 = vadd.f32 %v9250, %v9254
    %v9257 = vsel %vm2450, %v9255, 0.0
    %9258 = vadd.xlane.f32.xlu0 %v9257
    %v9259 = vpop.xlane.xlu0 %9258
    %v9260 = vsel %vm2454, %v9256, 0.0
    %9261 = vadd.xlane.f32.xlu0 %v9260
    %v9262 = vpop.xlane.xlu0 %9261
    %v9263 = vmul.f32 %v9259, %v2458
    %v9264 = vmul.f32 %v9262, %v2458
    %v9265 = vsub.f32 %v9255, %v9263
    %v9266 = vsub.f32 %v9256, %v9264
    %v9267 = vmul.f32 %v9265, %v9265
    %v9268 = vmul.f32 %v9266, %v9266
    %v9269 = vsel %vm2450, %v9267, 0.0
    %9270 = vadd.xlane.f32.xlu0 %v9269
    %v9271 = vpop.xlane.xlu0 %9270
    %v9272 = vsel %vm2454, %v9268, 0.0
    %9273 = vadd.xlane.f32.xlu0 %v9272
    %v9274 = vpop.xlane.xlu0 %9273
    %v9275 = vmul.f32 %v9271, %v2458
    %v9276 = vmul.f32 %v9274, %v2458
    %v9277 = vadd.f32 %v9275, 1e-05
    %v9278 = vadd.f32 %v9276, 1e-05
    %v9279 = vrsqrt.pop %v9277
    %v9280 = vrsqrt.pop %v9278
    %v9281 = vmul.f32 %v9265, %v9279
    %v9282 = vmul.f32 %v9266, %v9280
    %v9283 = vmul.f32 %v9281, %v2482
    %v9284 = vmul.f32 %v9282, %v2482
    %v9285 = vadd.f32 %v9283, %v2488
    %v9286 = vadd.f32 %v9284, %v2488
    %v9288 = vsel %vm2450, %v9285, 0
    %v9291 = vsel %vm2450, %v9286, 0
    %9293 = vmatprep.subr.mxu0 0.0
    %9294 = vmatpush1.msra.mxu0 0.0
    %9295 = vmatprep.subr.mxu0 0.0
    %9296 = vmatpush1.msra.mxu0 0.0
    %9297 = vmatprep.subr.mxu0 0.0
    %9298 = vmatpush1.msra.mxu0 0.0
    %9299 = vmatprep.subr.mxu0 0.0
    %9300 = vmatpush1.msra.mxu0 0.0
    %9301 = vmatprep.subr.mxu0 0.0
    %9302 = vmatpush1.msra.mxu0 0.0
    %9303 = vmatprep.subr.mxu0 0.0
    %9304 = vmatpush1.msra.mxu0 0.0
    %9305 = vmatprep.subr.mxu0 0.0
    %9306 = vmatpush1.msra.mxu0 0.0
    %9307 = vmatprep.subr.mxu0 0.0
    %9308 = vmatpush1.msra.mxu0 0.0
    %9309 = vmatprep.subr.mxu0 0.0
    %9310 = vmatpush1.msra.mxu0 0.0
    %9311 = vmatprep.subr.mxu0 0.0
    %9312 = vmatpush1.msra.mxu0 0.0
    %9313 = vmatprep.subr.mxu0 0.0
    %9314 = vmatpush1.msra.mxu0 0.0
    %9315 = vmatprep.subr.mxu0 0.0
    %9316 = vmatpush1.msra.mxu0 0.0
    %9317 = vmatprep.subr.mxu0 0.0
    %9318 = vmatpush1.msra.mxu0 %v2435
    %9319 = vmatprep.subr.mxu0 0.0
    %9320 = vmatpush1.msra.mxu0 %v2434
    %9321 = vmatprep.subr.mxu0 0.0
    %9322 = vmatpush1.msra.mxu0 %v2433
    %9323 = vmatprep.subr.mxu0 0.0
    %9324 = vmatpush1.msra.mxu0 %v2432
    %9325 = vmatprep.subr.mxu0 0.0
    %9326 = vmatpush2.msra.mxu0 0.0
    %9327 = vmatprep.subr.mxu0 0.0
    %9328 = vmatpush2.msra.mxu0 0.0
    %9329 = vmatprep.subr.mxu0 0.0
    %9330 = vmatpush2.msra.mxu0 0.0
    %9331 = vmatprep.subr.mxu0 0.0
    %9332 = vmatpush2.msra.mxu0 0.0
    %9333 = vmatprep.subr.mxu0 0.0
    %9334 = vmatpush2.msra.mxu0 0.0
    %9335 = vmatprep.subr.mxu0 0.0
    %9336 = vmatpush2.msra.mxu0 0.0
    %9337 = vmatprep.subr.mxu0 0.0
    %9338 = vmatpush2.msra.mxu0 0.0
    %9339 = vmatprep.subr.mxu0 0.0
    %9340 = vmatpush2.msra.mxu0 0.0
    %9341 = vmatprep.subr.mxu0 0.0
    %9342 = vmatpush2.msra.mxu0 0.0
    %9343 = vmatprep.subr.mxu0 0.0
    %9344 = vmatpush2.msra.mxu0 0.0
    %9345 = vmatprep.subr.mxu0 0.0
    %9346 = vmatpush2.msra.mxu0 0.0
    %9347 = vmatprep.subr.mxu0 0.0
    %9348 = vmatpush2.msra.mxu0 0.0
    %9349 = vmatprep.subr.mxu0 0.0
    %9350 = vmatpush2.msra.mxu0 0.0
    %9351 = vmatprep.subr.mxu0 0.0
    %9352 = vmatpush2.msra.mxu0 0.0
    %9353 = vmatprep.subr.mxu0 0.0
    %9354 = vmatpush2.msra.mxu0 0.0
    %9355 = vmatprep.subr.mxu0 0.0
    %9356 = vmatpush2.msra.mxu0 0.0
    %9357 = vmatprep.mubr.f32.mxu0 0.0
    %9358 = vmatmul.mubr.f32.gmra.mxu0 %v9288
    %v9359 = vpop.f32.mrf.mxu0
    %v9360 = vadd.f32 %v2495, %v9359
    %v9361 = vpop.f32.mrf.mxu0
    %9362 = vmatprep.mubr.f32.mxu0 0.0
    %9363 = vmatmul.mubr.f32.gmra.mxu0 %v9291
    %v9364 = vpop.f32.mrf.mxu0
    %v9365 = vadd.f32 %v2495, %v9364
    %v9366 = vpop.f32.mrf.mxu0
    %9367 = vdwg.mxu0
    %9368 = vmatprep.subr.mxu0 0.0
    %9369 = vmatpush1.msra.mxu0 0.0
    %9370 = vmatprep.subr.mxu0 0.0
    %9371 = vmatpush1.msra.mxu0 0.0
    %9372 = vmatprep.subr.mxu0 0.0
    %9373 = vmatpush1.msra.mxu0 0.0
    %9374 = vmatprep.subr.mxu0 0.0
    %9375 = vmatpush1.msra.mxu0 0.0
    %9376 = vmatprep.subr.mxu0 0.0
    %9377 = vmatpush1.msra.mxu0 0.0
    %9378 = vmatprep.subr.mxu0 0.0
    %9379 = vmatpush1.msra.mxu0 0.0
    %9380 = vmatprep.subr.mxu0 0.0
    %9381 = vmatpush1.msra.mxu0 0.0
    %9382 = vmatprep.subr.mxu0 0.0
    %9383 = vmatpush1.msra.mxu0 0.0
    %9384 = vmatprep.subr.mxu0 0.0
    %9385 = vmatpush1.msra.mxu0 0.0
    %9386 = vmatprep.subr.mxu0 0.0
    %9387 = vmatpush1.msra.mxu0 0.0
    %9388 = vmatprep.subr.mxu0 0.0
    %9389 = vmatpush1.msra.mxu0 0.0
    %9390 = vmatprep.subr.mxu0 0.0
    %9391 = vmatpush1.msra.mxu0 0.0
    %9392 = vmatprep.subr.mxu0 0.0
    %9393 = vmatpush1.msra.mxu0 %v2440
    %9394 = vmatprep.subr.mxu0 0.0
    %9395 = vmatpush1.msra.mxu0 %v2439
    %9396 = vmatprep.subr.mxu0 0.0
    %9397 = vmatpush1.msra.mxu0 %v2438
    %9398 = vmatprep.subr.mxu0 0.0
    %9399 = vmatpush1.msra.mxu0 %v2437
    %9400 = vmatprep.subr.mxu0 0.0
    %9401 = vmatpush2.msra.mxu0 0.0
    %9402 = vmatprep.subr.mxu0 0.0
    %9403 = vmatpush2.msra.mxu0 0.0
    %9404 = vmatprep.subr.mxu0 0.0
    %9405 = vmatpush2.msra.mxu0 0.0
    %9406 = vmatprep.subr.mxu0 0.0
    %9407 = vmatpush2.msra.mxu0 0.0
    %9408 = vmatprep.subr.mxu0 0.0
    %9409 = vmatpush2.msra.mxu0 0.0
    %9410 = vmatprep.subr.mxu0 0.0
    %9411 = vmatpush2.msra.mxu0 0.0
    %9412 = vmatprep.subr.mxu0 0.0
    %9413 = vmatpush2.msra.mxu0 0.0
    %9414 = vmatprep.subr.mxu0 0.0
    %9415 = vmatpush2.msra.mxu0 0.0
    %9416 = vmatprep.subr.mxu0 0.0
    %9417 = vmatpush2.msra.mxu0 0.0
    %9418 = vmatprep.subr.mxu0 0.0
    %9419 = vmatpush2.msra.mxu0 0.0
    %9420 = vmatprep.subr.mxu0 0.0
    %9421 = vmatpush2.msra.mxu0 0.0
    %9422 = vmatprep.subr.mxu0 0.0
    %9423 = vmatpush2.msra.mxu0 0.0
    %9424 = vmatprep.subr.mxu0 0.0
    %9425 = vmatpush2.msra.mxu0 0.0
    %9426 = vmatprep.subr.mxu0 0.0
    %9427 = vmatpush2.msra.mxu0 0.0
    %9428 = vmatprep.subr.mxu0 0.0
    %9429 = vmatpush2.msra.mxu0 0.0
    %9430 = vmatprep.subr.mxu0 0.0
    %9431 = vmatpush2.msra.mxu0 0.0
    %9432 = vmatprep.mubr.f32.mxu0 0.0
    %9433 = vmatmul.mubr.f32.gmra.mxu0 %v9288
    %v9434 = vpop.f32.mrf.mxu0
    %v9435 = vadd.f32 %v2581, %v9434
    %v9436 = vpop.f32.mrf.mxu0
    %9437 = vmatprep.mubr.f32.mxu0 0.0
    %9438 = vmatmul.mubr.f32.gmra.mxu0 %v9291
    %v9439 = vpop.f32.mrf.mxu0
    %v9440 = vadd.f32 %v2581, %v9439
    %v9441 = vpop.f32.mrf.mxu0
    %9442 = vdwg.mxu0
    %v9443 = vmax.f32 %v9435, 0.0
    %v9444 = vmax.f32 %v9440, 0.0
    %v9446 = vsel %vm2450, %v9443, 0
    %v9449 = vsel %vm2450, %v9444, 0
    %9451 = vmatprep.subr.mxu0 0.0
    %9452 = vmatpush1.msra.mxu0 0.0
    %9453 = vmatprep.subr.mxu0 0.0
    %9454 = vmatpush1.msra.mxu0 0.0
    %9455 = vmatprep.subr.mxu0 0.0
    %9456 = vmatpush1.msra.mxu0 0.0
    %9457 = vmatprep.subr.mxu0 0.0
    %9458 = vmatpush1.msra.mxu0 0.0
    %9459 = vmatprep.subr.mxu0 0.0
    %9460 = vmatpush1.msra.mxu0 0.0
    %9461 = vmatprep.subr.mxu0 0.0
    %9462 = vmatpush1.msra.mxu0 0.0
    %9463 = vmatprep.subr.mxu0 0.0
    %9464 = vmatpush1.msra.mxu0 0.0
    %9465 = vmatprep.subr.mxu0 0.0
    %9466 = vmatpush1.msra.mxu0 0.0
    %9467 = vmatprep.subr.mxu0 0.0
    %9468 = vmatpush1.msra.mxu0 0.0
    %9469 = vmatprep.subr.mxu0 0.0
    %9470 = vmatpush1.msra.mxu0 0.0
    %9471 = vmatprep.subr.mxu0 0.0
    %9472 = vmatpush1.msra.mxu0 0.0
    %9473 = vmatprep.subr.mxu0 0.0
    %9474 = vmatpush1.msra.mxu0 0.0
    %9475 = vmatprep.subr.mxu0 0.0
    %9476 = vmatpush1.msra.mxu0 %v2444
    %9477 = vmatprep.subr.mxu0 0.0
    %9478 = vmatpush1.msra.mxu0 %v2443
    %9479 = vmatprep.subr.mxu0 0.0
    %9480 = vmatpush1.msra.mxu0 %v2442
    %9481 = vmatprep.subr.mxu0 0.0
    %9482 = vmatpush1.msra.mxu0 %v2441
    %9483 = vmatprep.subr.mxu0 0.0
    %9484 = vmatpush2.msra.mxu0 0.0
    %9485 = vmatprep.subr.mxu0 0.0
    %9486 = vmatpush2.msra.mxu0 0.0
    %9487 = vmatprep.subr.mxu0 0.0
    %9488 = vmatpush2.msra.mxu0 0.0
    %9489 = vmatprep.subr.mxu0 0.0
    %9490 = vmatpush2.msra.mxu0 0.0
    %9491 = vmatprep.subr.mxu0 0.0
    %9492 = vmatpush2.msra.mxu0 0.0
    %9493 = vmatprep.subr.mxu0 0.0
    %9494 = vmatpush2.msra.mxu0 0.0
    %9495 = vmatprep.subr.mxu0 0.0
    %9496 = vmatpush2.msra.mxu0 0.0
    %9497 = vmatprep.subr.mxu0 0.0
    %9498 = vmatpush2.msra.mxu0 0.0
    %9499 = vmatprep.subr.mxu0 0.0
    %9500 = vmatpush2.msra.mxu0 0.0
    %9501 = vmatprep.subr.mxu0 0.0
    %9502 = vmatpush2.msra.mxu0 0.0
    %9503 = vmatprep.subr.mxu0 0.0
    %9504 = vmatpush2.msra.mxu0 0.0
    %9505 = vmatprep.subr.mxu0 0.0
    %9506 = vmatpush2.msra.mxu0 0.0
    %9507 = vmatprep.subr.mxu0 0.0
    %9508 = vmatpush2.msra.mxu0 0.0
    %9509 = vmatprep.subr.mxu0 0.0
    %9510 = vmatpush2.msra.mxu0 0.0
    %9511 = vmatprep.subr.mxu0 0.0
    %9512 = vmatpush2.msra.mxu0 0.0
    %9513 = vmatprep.subr.mxu0 0.0
    %9514 = vmatpush2.msra.mxu0 0.0
    %9515 = vmatprep.mubr.f32.mxu0 0.0
    %9516 = vmatmul.mubr.f32.gmra.mxu0 %v9446
    %v9517 = vpop.f32.mrf.mxu0
    %v9518 = vadd.f32 %v2662, %v9517
    %v9519 = vpop.f32.mrf.mxu0
    %9520 = vmatprep.mubr.f32.mxu0 0.0
    %9521 = vmatmul.mubr.f32.gmra.mxu0 %v9449
    %v9522 = vpop.f32.mrf.mxu0
    %v9523 = vadd.f32 %v2662, %v9522
    %v9524 = vpop.f32.mrf.mxu0
    %9525 = vdwg.mxu0
    %v9526 = vmax.f32 %v9518, 0.0
    %v9527 = vmax.f32 %v9523, 0.0
    %v9529 = vsel %vm2450, %v9526, 0
    %v9532 = vsel %vm2450, %v9527, 0
    %9534 = vmatprep.subr.mxu0 0.0
    %9535 = vmatpush1.msra.mxu0 0.0
    %9536 = vmatprep.subr.mxu0 0.0
    %9537 = vmatpush1.msra.mxu0 0.0
    %9538 = vmatprep.subr.mxu0 0.0
    %9539 = vmatpush1.msra.mxu0 0.0
    %9540 = vmatprep.subr.mxu0 0.0
    %9541 = vmatpush1.msra.mxu0 0.0
    %9542 = vmatprep.subr.mxu0 0.0
    %9543 = vmatpush1.msra.mxu0 0.0
    %9544 = vmatprep.subr.mxu0 0.0
    %9545 = vmatpush1.msra.mxu0 0.0
    %9546 = vmatprep.subr.mxu0 0.0
    %9547 = vmatpush1.msra.mxu0 0.0
    %9548 = vmatprep.subr.mxu0 0.0
    %9549 = vmatpush1.msra.mxu0 0.0
    %9550 = vmatprep.subr.mxu0 0.0
    %9551 = vmatpush1.msra.mxu0 0.0
    %9552 = vmatprep.subr.mxu0 0.0
    %9553 = vmatpush1.msra.mxu0 0.0
    %9554 = vmatprep.subr.mxu0 0.0
    %9555 = vmatpush1.msra.mxu0 0.0
    %9556 = vmatprep.subr.mxu0 0.0
    %9557 = vmatpush1.msra.mxu0 0.0
    %9558 = vmatprep.subr.mxu0 0.0
    %9559 = vmatpush1.msra.mxu0 %v2448
    %9560 = vmatprep.subr.mxu0 0.0
    %9561 = vmatpush1.msra.mxu0 %v2447
    %9562 = vmatprep.subr.mxu0 0.0
    %9563 = vmatpush1.msra.mxu0 %v2446
    %9564 = vmatprep.subr.mxu0 0.0
    %9565 = vmatpush1.msra.mxu0 %v2445
    %9566 = vmatprep.subr.mxu0 0.0
    %9567 = vmatpush2.msra.mxu0 0.0
    %9568 = vmatprep.subr.mxu0 0.0
    %9569 = vmatpush2.msra.mxu0 0.0
    %9570 = vmatprep.subr.mxu0 0.0
    %9571 = vmatpush2.msra.mxu0 0.0
    %9572 = vmatprep.subr.mxu0 0.0
    %9573 = vmatpush2.msra.mxu0 0.0
    %9574 = vmatprep.subr.mxu0 0.0
    %9575 = vmatpush2.msra.mxu0 0.0
    %9576 = vmatprep.subr.mxu0 0.0
    %9577 = vmatpush2.msra.mxu0 0.0
    %9578 = vmatprep.subr.mxu0 0.0
    %9579 = vmatpush2.msra.mxu0 0.0
    %9580 = vmatprep.subr.mxu0 0.0
    %9581 = vmatpush2.msra.mxu0 0.0
    %9582 = vmatprep.subr.mxu0 0.0
    %9583 = vmatpush2.msra.mxu0 0.0
    %9584 = vmatprep.subr.mxu0 0.0
    %9585 = vmatpush2.msra.mxu0 0.0
    %9586 = vmatprep.subr.mxu0 0.0
    %9587 = vmatpush2.msra.mxu0 0.0
    %9588 = vmatprep.subr.mxu0 0.0
    %9589 = vmatpush2.msra.mxu0 0.0
    %9590 = vmatprep.subr.mxu0 0.0
    %9591 = vmatpush2.msra.mxu0 0.0
    %9592 = vmatprep.subr.mxu0 0.0
    %9593 = vmatpush2.msra.mxu0 0.0
    %9594 = vmatprep.subr.mxu0 0.0
    %9595 = vmatpush2.msra.mxu0 0.0
    %9596 = vmatprep.subr.mxu0 0.0
    %9597 = vmatpush2.msra.mxu0 0.0
    %9598 = vmatprep.mubr.f32.mxu0 0.0
    %9599 = vmatmul.mubr.f32.gmra.mxu0 %v9529
    %v9600 = vpop.f32.mrf.mxu0
    %v9601 = vadd.f32 %v2749, %v9600
    %v9602 = vpop.f32.mrf.mxu0
    %9603 = vmatprep.mubr.f32.mxu0 0.0
    %9604 = vmatmul.mubr.f32.gmra.mxu0 %v9532
    %v9605 = vpop.f32.mrf.mxu0
    %v9606 = vadd.f32 %v2749, %v9605
    %v9607 = vpop.f32.mrf.mxu0
    %9608 = vdwg.mxu0
    %v9610 = vsel %vm2450, %v9601, 0
    %v9613 = vsel %vm2450, %v9606, 0
    %9615 = vmatprep.subr.mxu0 0.0
    %9616 = vmatpush1.xpose.msra.mxu0 0.0
    %9617 = vmatprep.subr.mxu0 0.0
    %9618 = vmatpush1.xpose.msra.mxu0 0.0
    %9619 = vmatprep.subr.mxu0 0.0
    %9620 = vmatpush1.xpose.msra.mxu0 0.0
    %9621 = vmatprep.subr.mxu0 0.0
    %9622 = vmatpush1.xpose.msra.mxu0 0.0
    %9623 = vmatprep.subr.mxu0 0.0
    %9624 = vmatpush1.xpose.msra.mxu0 0.0
    %9625 = vmatprep.subr.mxu0 0.0
    %9626 = vmatpush1.xpose.msra.mxu0 0.0
    %9627 = vmatprep.subr.mxu0 0.0
    %9628 = vmatpush1.xpose.msra.mxu0 0.0
    %9629 = vmatprep.subr.mxu0 0.0
    %9630 = vmatpush1.xpose.msra.mxu0 0.0
    %9631 = vmatprep.subr.mxu0 0.0
    %9632 = vmatpush1.xpose.msra.mxu0 %v2859
    %9633 = vmatprep.subr.mxu0 0.0
    %9634 = vmatpush1.xpose.msra.mxu0 %v2856
    %9635 = vmatprep.subr.mxu0 0.0
    %9636 = vmatpush1.xpose.msra.mxu0 %v2853
    %9637 = vmatprep.subr.mxu0 0.0
    %9638 = vmatpush1.xpose.msra.mxu0 %v2850
    %9639 = vmatprep.subr.mxu0 0.0
    %9640 = vmatpush1.xpose.msra.mxu0 %v2847
    %9641 = vmatprep.subr.mxu0 0.0
    %9642 = vmatpush1.xpose.msra.mxu0 %v2844
    %9643 = vmatprep.subr.mxu0 0.0
    %9644 = vmatpush1.xpose.msra.mxu0 %v2841
    %9645 = vmatprep.subr.mxu0 0.0
    %9646 = vmatpush1.xpose.msra.mxu0 %v2838
    %9647 = vmatprep.subr.mxu0 0.0
    %9648 = vmatpush2.xpose.msra.mxu0 0.0
    %9649 = vmatprep.subr.mxu0 0.0
    %9650 = vmatpush2.xpose.msra.mxu0 0.0
    %9651 = vmatprep.subr.mxu0 0.0
    %9652 = vmatpush2.xpose.msra.mxu0 0.0
    %9653 = vmatprep.subr.mxu0 0.0
    %9654 = vmatpush2.xpose.msra.mxu0 0.0
    %9655 = vmatprep.subr.mxu0 0.0
    %9656 = vmatpush2.xpose.msra.mxu0 0.0
    %9657 = vmatprep.subr.mxu0 0.0
    %9658 = vmatpush2.xpose.msra.mxu0 0.0
    %9659 = vmatprep.subr.mxu0 0.0
    %9660 = vmatpush2.xpose.msra.mxu0 0.0
    %9661 = vmatprep.subr.mxu0 0.0
    %9662 = vmatpush2.xpose.msra.mxu0 0.0
    %9663 = vmatprep.subr.mxu0 0.0
    %9664 = vmatpush2.xpose.msra.mxu0 0.0
    %9665 = vmatprep.subr.mxu0 0.0
    %9666 = vmatpush2.xpose.msra.mxu0 0.0
    %9667 = vmatprep.subr.mxu0 0.0
    %9668 = vmatpush2.xpose.msra.mxu0 0.0
    %9669 = vmatprep.subr.mxu0 0.0
    %9670 = vmatpush2.xpose.msra.mxu0 0.0
    %9671 = vmatprep.subr.mxu0 0.0
    %9672 = vmatpush2.xpose.msra.mxu0 0.0
    %9673 = vmatprep.subr.mxu0 0.0
    %9674 = vmatpush2.xpose.msra.mxu0 0.0
    %9675 = vmatprep.subr.mxu0 0.0
    %9676 = vmatpush2.xpose.msra.mxu0 0.0
    %9677 = vmatprep.subr.mxu0 0.0
    %9678 = vmatpush2.xpose.msra.mxu0 0.0
    %9679 = vmatprep.mubr.f32.mxu0 0.0
    %9680 = vmatmul.mubr.f32.gmra.mxu0 %v9610
    %v9681 = vpop.f32.mrf.mxu0
    %v9682 = vadd.f32 0.0, %v9681
    %v9683 = vpop.f32.mrf.mxu0
    %9684 = vmatprep.mubr.f32.mxu0 0.0
    %9685 = vmatmul.mubr.f32.gmra.mxu0 %v9613
    %v9686 = vpop.f32.mrf.mxu0
    %v9687 = vadd.f32 0.0, %v9686
    %v9688 = vpop.f32.mrf.mxu0
    %9689 = vdwg.mxu0
    %s9690 = scalar_lea.vmem %s59, 32
    %9691 = vst.msk [vmem:[%s9690] sm:$0xff] %vm2948, %v9682
    %9692 = vst.msk [vmem:[%s9690 + $0x8] sm:$0xf] %vm2952, %v9687
    %9695 = vrot.lane.b32.xlu0 %v9360, 32
    %v9696 = vpop.permute.xlu0 %9695
    %9697 = vrot.lane.b32.xlu0 %v9365, 32
    %v9698 = vpop.permute.xlu0 %9697
    %v9701 = vsel %vm2450, %v9255, %v9696
    %v9702 = vsel %vm2450, %v9256, %v9698
    %s9703 = scalar_lea.vmem %s61, 32
    %9704 = vst.msk [vmem:[%s9703] sm:$0xff] %vm3002, %v9701
    %9705 = vst.msk [vmem:[%s9703 + $0x8] sm:$0xf] %vm3004, %v9702
    // Predicated region
    $region174: #{run.1} parent=1 // pred_check
      _
    $region175: #{run.1} parent=1 // pred_check_branch
      %9707 = sbr.rel (0) target = $region177
    $region176: #{run.1} parent=1 // pred_region
      _
    $region177: #{run.1} parent=1 // pred_fallthru
      _
    // Predicated region
    $region178: #{run.1} parent=1 // pred_check
      _
    $region179: #{run.1} parent=1 // pred_check_branch
      %9709 = sbr.rel (0) target = $region181
    $region180: #{run.1} parent=1 // pred_region
      _
    $region181: #{run.1} parent=1 // pred_fallthru
      _
    // Predicated region
    $region182: #{run.1} parent=1 // pred_check
      _
    $region183: #{run.1} parent=1 // pred_check_branch
      %9711 = sbr.rel (0) target = $region185
    $region184: #{run.1} parent=1 // pred_region
      _
    $region185: #{run.1} parent=1 // pred_fallthru
      _
    // Predicated region
    $region186: #{run.1} parent=1 // pred_check
      _
    $region187: #{run.1} parent=1 // pred_check_branch
      %9713 = sbr.rel (0) target = $region189
    $region188: #{run.1} parent=1 // pred_region
      _
    $region189: #{run.1} parent=1 // pred_fallthru
      _
    %9714 = vsyncpa [#allocation3], 1
    %9715 = vsyncpa [#allocation5], 1
    %9716 = vsyncpa [#allocation8], 1
    %9717 = vsyncpa [#allocation11], 1
    %9718 = vsyncpa [#allocation14], 1
    %9719 = vsyncpa [#allocation17], 1
    %9720 = vsyncpa [#allocation20], 1
    %9721 = vsyncpa [#allocation23], 1

</llo_original>
